<compile_context>
chip_gen: v5e
topology: v5e:2x2
jax: 0.10.0
libtpu: 0.0.40
codegen_flags: <defaults>
</compile_context>

<pallas_src>
import functools

import jax
import jax.numpy as jnp
from jax.experimental import pallas as pl
from jax.experimental.pallas import tpu as pltpu


# ------------------------------ fused Pallas kernel ------------------------------

def _dcnn_fused_kernel(x_ref, d_ref, w1_ref, b1_ref, w2_ref, b2_ref,
                       wlx_ref, wld_ref, bl_ref, wo_ref, bo_ref,
                       o_ref,
                       xpad1, full1, xpad2, full2, pooled2,
                       *, nb, h, w):
    """One fused forward step for a block of `nb` images; everything stays in VMEM."""
    h1, w1 = h // 2, w // 2          # spatial dims after pool1
    h2, w2 = h1 // 2, w1 // 2        # spatial dims after pool2

    def conv_pool(xpad_ref, full_ref, w_ref, k, hh, ww):
        # full-resolution im2col (contiguous ref slices + lane concat) -> ONE matmul
        cols = [xpad_ref[:, pl.ds(kh, hh), pl.ds(kw, ww), :]
                for kh in range(k) for kw in range(k)]
        patches = jnp.concatenate(cols, axis=-1)               # (nb, hh, ww, k*k*cin)
        kfeat = patches.shape[-1]
        lhs = patches.reshape(nb * hh * ww, kfeat).astype(jnp.bfloat16)
        y = jnp.dot(lhs, w_ref[...], preferred_element_type=jnp.float32)
        cout = y.shape[-1]
        full_ref[...] = y.reshape(nb, hh, ww, cout)            # full-res conv, in VMEM
        # 2x2 max-pool via strided VMEM reads (bias/ReLU commute with the max)
        ph, pw = hh // 2, ww // 2
        p = full_ref[:, pl.ds(0, ph, stride=2), pl.ds(0, pw, stride=2), :]
        for dh, dw in ((0, 1), (1, 0), (1, 1)):
            p = jnp.maximum(
                p, full_ref[:, pl.ds(dh, ph, stride=2), pl.ds(dw, pw, stride=2), :])
        return p                                               # (nb, ph, pw, cout) f32

    # ---- conv1: 5x5 'same' (3 -> 10) + maxpool2 ---------------------------------
    xpad1[...] = jnp.zeros_like(xpad1)                          # zero 'same' padding
    xpad1[:, pl.ds(2, h), pl.ds(2, w), :] = x_ref[...]
    p1 = conv_pool(xpad1, full1, w1_ref, 5, h, w) + b1_ref[...]   # (nb, h1, w1, 10)

    # ---- conv2: 3x3 'same' (10 -> 20) + maxpool2 + ReLU -------------------------
    xpad2[...] = jnp.zeros_like(xpad2)
    xpad2[:, pl.ds(1, h1), pl.ds(1, w1), :] = p1
    p2 = conv_pool(xpad2, full2, w2_ref, 3, h1, w1) + b2_ref[...]
    pooled2[...] = jnp.maximum(p2, 0.0)                           # (nb, h2, w2, 20)

    # ---- flatten (NHWC order; wl rows were pre-permuted to match) + MLP head ----
    feat = jnp.concatenate(
        [pooled2[:, i, j, :] for i in range(h2) for j in range(w2)], axis=-1)
    feat = feat.astype(jnp.bfloat16)                              # (nb, h2*w2*20)
    hidden = (jnp.dot(feat, wlx_ref[...], preferred_element_type=jnp.float32)
              + jnp.dot(d_ref[...].astype(jnp.bfloat16), wld_ref[...],
                        preferred_element_type=jnp.float32)
              + bl_ref[...])
    hidden = jnp.maximum(hidden, 0.0).astype(jnp.bfloat16)        # (nb, 200)
    o_ref[...] = (jnp.dot(hidden, wo_ref[...], preferred_element_type=jnp.float32)
                  + bo_ref[...])


# ----------------------------------- wrapper -------------------------------------

def dcnn_forward(prepared, img_nchw, data, *, block_n=None):
    """Fused Pallas forward. img_nchw: (N, 3, H, W) like PyTorch; data: (N, D)."""
    n, _, h, w = (int(s) for s in img_nchw.shape)
    if h % 4 or w % 4:
        raise ValueError("H and W must be divisible by 4 (two 2x2 max-pools).")
    nb = n if block_n is None else int(block_n)
    if n % nb or (nb != n and nb % 8):
        raise ValueError("block_n must divide N (and be a multiple of 8 if < N).")
    h1, w1, h2, w2 = h // 2, w // 2, h // 4, w // 4

    # NCHW -> NHWC (channels on the lane axis): the only XLA glue op in the forward.
    x = jnp.transpose(img_nchw, (0, 2, 3, 1)).astype(jnp.float32)
    d = data.astype(jnp.float32)

    kernel = functools.partial(_dcnn_fused_kernel, nb=nb, h=h, w=w)
    resident = lambda i: (0, 0)     # whole-array weight blocks, DMA'd once

    out = pl.pallas_call(
        kernel,
        out_shape=jax.ShapeDtypeStruct((n, prepared["wo"].shape[1]), jnp.float32),
        grid_spec=pltpu.PrefetchScalarGridSpec(
            num_scalar_prefetch=0,
            grid=(n // nb,),
            in_specs=[
                pl.BlockSpec((nb, h, w, 3), lambda i: (i, 0, 0, 0)),
                pl.BlockSpec((nb, d.shape[1]), lambda i: (i, 0)),
                pl.BlockSpec(prepared["w1m"].shape, resident),
                pl.BlockSpec(prepared["b1"].shape, resident),
                pl.BlockSpec(prepared["w2m"].shape, resident),
                pl.BlockSpec(prepared["b2"].shape, resident),
                pl.BlockSpec(prepared["wl_img"].shape, resident),
                pl.BlockSpec(prepared["wl_dat"].shape, resident),
                pl.BlockSpec(prepared["bl"].shape, resident),
                pl.BlockSpec(prepared["wo"].shape, resident),
                pl.BlockSpec(prepared["bo"].shape, resident),
            ],
            out_specs=pl.BlockSpec((nb, prepared["wo"].shape[1]), lambda i: (i, 0)),
            scratch_shapes=[
                pltpu.VMEM((nb, h + 4, w + 4, 3), jnp.float32),     # padded conv1 in
                pltpu.VMEM((nb, h, w, 10), jnp.float32),            # conv1 full-res
                pltpu.VMEM((nb, h1 + 2, w1 + 2, 10), jnp.float32),  # padded conv2 in
                pltpu.VMEM((nb, h1, w1, 20), jnp.float32),          # conv2 full-res
                pltpu.VMEM((nb, h2, w2, 20), jnp.float32),          # pooled+ReLU feats
            ],
        ),
        compiler_params=pltpu.CompilerParams(
            dimension_semantics=("parallel",)),   # batch blocks shard across v7x TCs
    )(x, d,
      prepared["w1m"], prepared["b1"], prepared["w2m"], prepared["b2"],
      prepared["wl_img"], prepared["wl_dat"], prepared["bl"],
      prepared["wo"], prepared["bo"])
    return out


# --------------------------- parameters & reference ------------------------------

def init_params(key, img_hw=16, data_dim=8):
    """Canonical (PyTorch-equivalent) params: conv weights HWIO, linear weights
    (in, out) with the first Linear's rows in torch NCHW-flatten order + data."""
    ks = jax.random.split(key, 8)
    flat = 20 * (img_hw // 4) * (img_hw // 4)
    in_ll = flat + data_dim                       # LazyLinear infers this
    s = 0.05
    return dict(
        w1=jax.random.normal(ks[0], (5, 5, 3, 10), jnp.float32) * s,   # HWIO
        b1=jax.random.normal(ks[1], (10,), jnp.float32) * s,
        w2=jax.random.normal(ks[2], (3, 3, 10, 20), jnp.float32) * s,  # HWIO
        b2=jax.random.normal(ks[3], (20,), jnp.float32) * s,
        wl=jax.random.normal(ks[4], (in_ll, 200), jnp.float32) * s,
        bl=jax.random.normal(ks[5], (200,), jnp.float32) * s,
        wo=jax.random.normal(ks[6], (200, 7), jnp.float32) * s,
        bo=jax.random.normal(ks[7], (7,), jnp.float32) * s,
    )


def prepare_params(params, *, h=16, w=16):
    """One-time host-side repack: flatten conv weights for im2col, permute the first
    Linear's image rows from torch NCHW-flatten order to the kernel's NHWC order,
    split off the `data` rows, and cast matmul operands to bf16 (biases stay f32).
    NOTE: torch Conv2d weights (OIHW) must be converted to HWIO (w.permute(2,3,1,0))
    and imported `wl` must receive the exact same row permutation."""
    h2, w2, c2 = h // 4, w // 4, 20
    n_img = c2 * h2 * w2
    wl = params["wl"]
    wl_img = jnp.transpose(wl[:n_img].reshape(c2, h2, w2, -1),   # rows (c, i, j)
                           (1, 2, 0, 3)).reshape(n_img, -1)      # -> rows (i, j, c)
    return dict(
        w1m=params["w1"].reshape(5 * 5 * 3, 10).astype(jnp.bfloat16),
        b1=params["b1"].reshape(1, -1).astype(jnp.float32),
        w2m=params["w2"].reshape(3 * 3 * 10, 20).astype(jnp.bfloat16),
        b2=params["b2"].reshape(1, -1).astype(jnp.float32),
        wl_img=wl_img.astype(jnp.bfloat16),
        wl_dat=wl[n_img:].astype(jnp.bfloat16),
        bl=params["bl"].reshape(1, -1).astype(jnp.float32),
        wo=params["wo"].astype(jnp.bfloat16),
        bo=params["bo"].reshape(1, -1).astype(jnp.float32),
    )


def reference_forward(params, img_nchw, data):
    """Pure-JAX f32 reference replicating the PyTorch module exactly."""
    x = jnp.transpose(img_nchw, (0, 2, 3, 1)).astype(jnp.float32)
    dn = ("NHWC", "HWIO", "NHWC")
    y = jax.lax.conv_general_dilated(x, params["w1"], (1, 1), "SAME",
                                     dimension_numbers=dn) + params["b1"]
    y = jax.lax.reduce_window(y, -jnp.inf, jax.lax.max,
                              (1, 2, 2, 1), (1, 2, 2, 1), "VALID")
    y = jax.lax.conv_general_dilated(y, params["w2"], (1, 1), "SAME",
                                     dimension_numbers=dn) + params["b2"]
    y = jax.lax.reduce_window(y, -jnp.inf, jax.lax.max,
                              (1, 2, 2, 1), (1, 2, 2, 1), "VALID")
    y = jnp.maximum(y, 0.0)
    feat = jnp.transpose(y, (0, 3, 1, 2)).reshape(y.shape[0], -1)  # torch NCHW flatten
    xcat = jnp.concatenate([feat, data.astype(jnp.float32)], axis=1)
    hid = jnp.maximum(xcat @ params["wl"] + params["bl"], 0.0)
    return hid @ params["wo"] + params["bo"]


# ------------------------------------- main ---------------------------------------

if __name__ == "__main__":
    key = jax.random.PRNGKey(0)
    kp, ki, kd = jax.random.split(key, 3)

    N, H, W, DATA_DIM = 2, 16, 16, 8
    params = init_params(kp, img_hw=H, data_dim=DATA_DIM)
    prepared = prepare_params(params, h=H, w=W)
    img = jax.random.normal(ki, (N, 3, H, W), jnp.float32)    # NCHW like PyTorch
    data = jax.random.normal(kd, (N, DATA_DIM), jnp.float32)

    fwd = jax.jit(dcnn_forward)
    out = jax.block_until_ready(fwd(prepared, img, data))
    assert out.shape == (N, 7), out.shape

    # sanity check vs a pure-JAX f32 reference (kernel matmuls run bf16, f32 accum)
    ref = jax.block_until_ready(reference_forward(params, img, data))
    assert float(jnp.max(jnp.abs(out - ref))) < 5e-2

    print("KERNEL_OK")
</pallas_src>

<mosaic_0001>
module attributes {stable_mosaic.version = 11 : i64} {
  func.func @_dcnn_fused_kernel(%arg0: i32, %arg1: memref<2x16x16x3xf32, #tpu.memory_space<vmem>>, %arg2: memref<2x8xf32, #tpu.memory_space<vmem>>, %arg3: memref<75x10xbf16, #tpu.memory_space<vmem>>, %arg4: memref<1x10xf32, #tpu.memory_space<vmem>>, %arg5: memref<90x20xbf16, #tpu.memory_space<vmem>>, %arg6: memref<1x20xf32, #tpu.memory_space<vmem>>, %arg7: memref<320x200xbf16, #tpu.memory_space<vmem>>, %arg8: memref<8x200xbf16, #tpu.memory_space<vmem>>, %arg9: memref<1x200xf32, #tpu.memory_space<vmem>>, %arg10: memref<200x7xbf16, #tpu.memory_space<vmem>>, %arg11: memref<1x7xf32, #tpu.memory_space<vmem>>, %arg12: memref<2x7xf32, #tpu.memory_space<vmem>>, %arg13: memref<2x20x20x3xf32, #tpu.memory_space<vmem>>, %arg14: memref<2x16x16x10xf32, #tpu.memory_space<vmem>>, %arg15: memref<2x10x10x10xf32, #tpu.memory_space<vmem>>, %arg16: memref<2x8x8x20xf32, #tpu.memory_space<vmem>>, %arg17: memref<2x4x4x20xf32, #tpu.memory_space<vmem>>) attributes {dimension_semantics = [#tpu.dimension_semantics<parallel>], iteration_bounds = array<i64: 1>, scalar_prefetch = 0 : i64, scratch_operands = 5 : i64, tpu.core_type = #tpu.core_type<tc>, window_params = [{transform_indices = @transform_0, window_bounds = array<i64: 2, 16, 16, 3>}, {transform_indices = @transform_1, window_bounds = array<i64: 2, 8>}, {pipeline_mode = #tpu.pipeline_mode<synchronous>, transform_indices = @transform_2, window_bounds = array<i64: 75, 10>}, {pipeline_mode = #tpu.pipeline_mode<synchronous>, transform_indices = @transform_3, window_bounds = array<i64: 1, 10>}, {pipeline_mode = #tpu.pipeline_mode<synchronous>, transform_indices = @transform_4, window_bounds = array<i64: 90, 20>}, {pipeline_mode = #tpu.pipeline_mode<synchronous>, transform_indices = @transform_5, window_bounds = array<i64: 1, 20>}, {pipeline_mode = #tpu.pipeline_mode<synchronous>, transform_indices = @transform_6, window_bounds = array<i64: 320, 200>}, {pipeline_mode = #tpu.pipeline_mode<synchronous>, transform_indices = @transform_7, window_bounds = array<i64: 8, 200>}, {pipeline_mode = #tpu.pipeline_mode<synchronous>, transform_indices = @transform_8, window_bounds = array<i64: 1, 200>}, {pipeline_mode = #tpu.pipeline_mode<synchronous>, transform_indices = @transform_9, window_bounds = array<i64: 200, 7>}, {pipeline_mode = #tpu.pipeline_mode<synchronous>, transform_indices = @transform_10, window_bounds = array<i64: 1, 7>}, {transform_indices = @transform_11, window_bounds = array<i64: 2, 7>}]} {
    %cst = arith.constant 0.000000e+00 : f32
    %0 = vector.broadcast %cst : f32 to vector<2x20x20x3xf32>
    %c0 = arith.constant 0 : index
    %c0_0 = arith.constant 0 : index
    %c0_1 = arith.constant 0 : index
    %c0_2 = arith.constant 0 : index
    %1 = vector.load %arg13[%c0, %c0_0, %c0_1, %c0_2] : memref<2x20x20x3xf32, #tpu.memory_space<vmem>>, vector<2x20x20x3xf32>
    tpu.vector_store %arg13[%c0, %c0_0, %c0_1, %c0_2], %0 {strides = array<i32>} : memref<2x20x20x3xf32, #tpu.memory_space<vmem>>, vector<2x20x20x3xf32>,
    %c0_3 = arith.constant 0 : index
    %c0_4 = arith.constant 0 : index
    %c0_5 = arith.constant 0 : index
    %c0_6 = arith.constant 0 : index
    %2 = vector.load %arg1[%c0_3, %c0_4, %c0_5, %c0_6] : memref<2x16x16x3xf32, #tpu.memory_space<vmem>>, vector<2x16x16x3xf32>
    %c0_7 = arith.constant 0 : index
    %c2 = arith.constant 2 : index
    %c2_8 = arith.constant 2 : index
    %c0_9 = arith.constant 0 : index
    %3 = vector.load %arg13[%c0_7, %c2, %c2_8, %c0_9] : memref<2x20x20x3xf32, #tpu.memory_space<vmem>>, vector<2x16x16x3xf32>
    tpu.vector_store %arg13[%c0_7, %c2, %c2_8, %c0_9], %2 {strides = array<i32>} : memref<2x20x20x3xf32, #tpu.memory_space<vmem>>, vector<2x16x16x3xf32>,
    %c0_10 = arith.constant 0 : index
    %c0_11 = arith.constant 0 : index
    %c0_12 = arith.constant 0 : index
    %c0_13 = arith.constant 0 : index
    %4 = vector.load %arg13[%c0_10, %c0_11, %c0_12, %c0_13] : memref<2x20x20x3xf32, #tpu.memory_space<vmem>>, vector<2x16x16x3xf32>
    %c0_14 = arith.constant 0 : index
    %c0_15 = arith.constant 0 : index
    %c1 = arith.constant 1 : index
    %c0_16 = arith.constant 0 : index
    %5 = vector.load %arg13[%c0_14, %c0_15, %c1, %c0_16] : memref<2x20x20x3xf32, #tpu.memory_space<vmem>>, vector<2x16x16x3xf32>
    %c0_17 = arith.constant 0 : index
    %c0_18 = arith.constant 0 : index
    %c2_19 = arith.constant 2 : index
    %c0_20 = arith.constant 0 : index
    %6 = vector.load %arg13[%c0_17, %c0_18, %c2_19, %c0_20] : memref<2x20x20x3xf32, #tpu.memory_space<vmem>>, vector<2x16x16x3xf32>
    %c0_21 = arith.constant 0 : index
    %c0_22 = arith.constant 0 : index
    %c3 = arith.constant 3 : index
    %c0_23 = arith.constant 0 : index
    %7 = vector.load %arg13[%c0_21, %c0_22, %c3, %c0_23] : memref<2x20x20x3xf32, #tpu.memory_space<vmem>>, vector<2x16x16x3xf32>
    %c0_24 = arith.constant 0 : index
    %c0_25 = arith.constant 0 : index
    %c4 = arith.constant 4 : index
    %c0_26 = arith.constant 0 : index
    %8 = vector.load %arg13[%c0_24, %c0_25, %c4, %c0_26] : memref<2x20x20x3xf32, #tpu.memory_space<vmem>>, vector<2x16x16x3xf32>
    %c0_27 = arith.constant 0 : index
    %c1_28 = arith.constant 1 : index
    %c0_29 = arith.constant 0 : index
    %c0_30 = arith.constant 0 : index
    %9 = vector.load %arg13[%c0_27, %c1_28, %c0_29, %c0_30] : memref<2x20x20x3xf32, #tpu.memory_space<vmem>>, vector<2x16x16x3xf32>
    %c0_31 = arith.constant 0 : index
    %c1_32 = arith.constant 1 : index
    %c1_33 = arith.constant 1 : index
    %c0_34 = arith.constant 0 : index
    %10 = vector.load %arg13[%c0_31, %c1_32, %c1_33, %c0_34] : memref<2x20x20x3xf32, #tpu.memory_space<vmem>>, vector<2x16x16x3xf32>
    %c0_35 = arith.constant 0 : index
    %c1_36 = arith.constant 1 : index
    %c2_37 = arith.constant 2 : index
    %c0_38 = arith.constant 0 : index
    %11 = vector.load %arg13[%c0_35, %c1_36, %c2_37, %c0_38] : memref<2x20x20x3xf32, #tpu.memory_space<vmem>>, vector<2x16x16x3xf32>
    %c0_39 = arith.constant 0 : index
    %c1_40 = arith.constant 1 : index
    %c3_41 = arith.constant 3 : index
    %c0_42 = arith.constant 0 : index
    %12 = vector.load %arg13[%c0_39, %c1_40, %c3_41, %c0_42] : memref<2x20x20x3xf32, #tpu.memory_space<vmem>>, vector<2x16x16x3xf32>
    %c0_43 = arith.constant 0 : index
    %c1_44 = arith.constant 1 : index
    %c4_45 = arith.constant 4 : index
    %c0_46 = arith.constant 0 : index
    %13 = vector.load %arg13[%c0_43, %c1_44, %c4_45, %c0_46] : memref<2x20x20x3xf32, #tpu.memory_space<vmem>>, vector<2x16x16x3xf32>
    %c0_47 = arith.constant 0 : index
    %c2_48 = arith.constant 2 : index
    %c0_49 = arith.constant 0 : index
    %c0_50 = arith.constant 0 : index
    %14 = vector.load %arg13[%c0_47, %c2_48, %c0_49, %c0_50] : memref<2x20x20x3xf32, #tpu.memory_space<vmem>>, vector<2x16x16x3xf32>
    %c0_51 = arith.constant 0 : index
    %c2_52 = arith.constant 2 : index
    %c1_53 = arith.constant 1 : index
    %c0_54 = arith.constant 0 : index
    %15 = vector.load %arg13[%c0_51, %c2_52, %c1_53, %c0_54] : memref<2x20x20x3xf32, #tpu.memory_space<vmem>>, vector<2x16x16x3xf32>
    %c0_55 = arith.constant 0 : index
    %c2_56 = arith.constant 2 : index
    %c2_57 = arith.constant 2 : index
    %c0_58 = arith.constant 0 : index
    %16 = vector.load %arg13[%c0_55, %c2_56, %c2_57, %c0_58] : memref<2x20x20x3xf32, #tpu.memory_space<vmem>>, vector<2x16x16x3xf32>
    %c0_59 = arith.constant 0 : index
    %c2_60 = arith.constant 2 : index
    %c3_61 = arith.constant 3 : index
    %c0_62 = arith.constant 0 : index
    %17 = vector.load %arg13[%c0_59, %c2_60, %c3_61, %c0_62] : memref<2x20x20x3xf32, #tpu.memory_space<vmem>>, vector<2x16x16x3xf32>
    %c0_63 = arith.constant 0 : index
    %c2_64 = arith.constant 2 : index
    %c4_65 = arith.constant 4 : index
    %c0_66 = arith.constant 0 : index
    %18 = vector.load %arg13[%c0_63, %c2_64, %c4_65, %c0_66] : memref<2x20x20x3xf32, #tpu.memory_space<vmem>>, vector<2x16x16x3xf32>
    %c0_67 = arith.constant 0 : index
    %c3_68 = arith.constant 3 : index
    %c0_69 = arith.constant 0 : index
    %c0_70 = arith.constant 0 : index
    %19 = vector.load %arg13[%c0_67, %c3_68, %c0_69, %c0_70] : memref<2x20x20x3xf32, #tpu.memory_space<vmem>>, vector<2x16x16x3xf32>
    %c0_71 = arith.constant 0 : index
    %c3_72 = arith.constant 3 : index
    %c1_73 = arith.constant 1 : index
    %c0_74 = arith.constant 0 : index
    %20 = vector.load %arg13[%c0_71, %c3_72, %c1_73, %c0_74] : memref<2x20x20x3xf32, #tpu.memory_space<vmem>>, vector<2x16x16x3xf32>
    %c0_75 = arith.constant 0 : index
    %c3_76 = arith.constant 3 : index
    %c2_77 = arith.constant 2 : index
    %c0_78 = arith.constant 0 : index
    %21 = vector.load %arg13[%c0_75, %c3_76, %c2_77, %c0_78] : memref<2x20x20x3xf32, #tpu.memory_space<vmem>>, vector<2x16x16x3xf32>
    %c0_79 = arith.constant 0 : index
    %c3_80 = arith.constant 3 : index
    %c3_81 = arith.constant 3 : index
    %c0_82 = arith.constant 0 : index
    %22 = vector.load %arg13[%c0_79, %c3_80, %c3_81, %c0_82] : memref<2x20x20x3xf32, #tpu.memory_space<vmem>>, vector<2x16x16x3xf32>
    %c0_83 = arith.constant 0 : index
    %c3_84 = arith.constant 3 : index
    %c4_85 = arith.constant 4 : index
    %c0_86 = arith.constant 0 : index
    %23 = vector.load %arg13[%c0_83, %c3_84, %c4_85, %c0_86] : memref<2x20x20x3xf32, #tpu.memory_space<vmem>>, vector<2x16x16x3xf32>
    %c0_87 = arith.constant 0 : index
    %c4_88 = arith.constant 4 : index
    %c0_89 = arith.constant 0 : index
    %c0_90 = arith.constant 0 : index
    %24 = vector.load %arg13[%c0_87, %c4_88, %c0_89, %c0_90] : memref<2x20x20x3xf32, #tpu.memory_space<vmem>>, vector<2x16x16x3xf32>
    %c0_91 = arith.constant 0 : index
    %c4_92 = arith.constant 4 : index
    %c1_93 = arith.constant 1 : index
    %c0_94 = arith.constant 0 : index
    %25 = vector.load %arg13[%c0_91, %c4_92, %c1_93, %c0_94] : memref<2x20x20x3xf32, #tpu.memory_space<vmem>>, vector<2x16x16x3xf32>
    %c0_95 = arith.constant 0 : index
    %c4_96 = arith.constant 4 : index
    %c2_97 = arith.constant 2 : index
    %c0_98 = arith.constant 0 : index
    %26 = vector.load %arg13[%c0_95, %c4_96, %c2_97, %c0_98] : memref<2x20x20x3xf32, #tpu.memory_space<vmem>>, vector<2x16x16x3xf32>
    %c0_99 = arith.constant 0 : index
    %c4_100 = arith.constant 4 : index
    %c3_101 = arith.constant 3 : index
    %c0_102 = arith.constant 0 : index
    %27 = vector.load %arg13[%c0_99, %c4_100, %c3_101, %c0_102] : memref<2x20x20x3xf32, #tpu.memory_space<vmem>>, vector<2x16x16x3xf32>
    %c0_103 = arith.constant 0 : index
    %c4_104 = arith.constant 4 : index
    %c4_105 = arith.constant 4 : index
    %c0_106 = arith.constant 0 : index
    %28 = vector.load %arg13[%c0_103, %c4_104, %c4_105, %c0_106] : memref<2x20x20x3xf32, #tpu.memory_space<vmem>>, vector<2x16x16x3xf32>
    %29 = tpu.concatenate %4, %5, %6, %7, %8, %9, %10, %11, %12, %13, %14, %15, %16, %17, %18, %19 in 3 : vector<2x16x16x3xf32>, vector<2x16x16x3xf32>, vector<2x16x16x3xf32>, vector<2x16x16x3xf32>, vector<2x16x16x3xf32>, vector<2x16x16x3xf32>, vector<2x16x16x3xf32>, vector<2x16x16x3xf32>, vector<2x16x16x3xf32>, vector<2x16x16x3xf32>, vector<2x16x16x3xf32>, vector<2x16x16x3xf32>, vector<2x16x16x3xf32>, vector<2x16x16x3xf32>, vector<2x16x16x3xf32>, vector<2x16x16x3xf32> -> vector<2x16x16x48xf32>
    %30 = tpu.concatenate %20, %21, %22, %23, %24, %25, %26, %27, %28 in 3 : vector<2x16x16x3xf32>, vector<2x16x16x3xf32>, vector<2x16x16x3xf32>, vector<2x16x16x3xf32>, vector<2x16x16x3xf32>, vector<2x16x16x3xf32>, vector<2x16x16x3xf32>, vector<2x16x16x3xf32>, vector<2x16x16x3xf32> -> vector<2x16x16x27xf32>
    %31 = tpu.concatenate %29, %30 in 3 : vector<2x16x16x48xf32>, vector<2x16x16x27xf32> -> vector<2x16x16x75xf32>
    %32 = vector.shape_cast %31 : vector<2x16x16x75xf32> to vector<512x75xf32>
    %33 = arith.truncf %32 : vector<512x75xf32> to vector<512x75xbf16>
    %c0_107 = arith.constant 0 : index
    %c0_108 = arith.constant 0 : index
    %34 = vector.load %arg3[%c0_107, %c0_108] : memref<75x10xbf16, #tpu.memory_space<vmem>>, vector<75x10xbf16>
    %cst_109 = arith.constant dense<0.000000e+00> : vector<512x10xf32>
    %35 = tpu.matmul %33, %34, %cst_109 {dimension_numbers = #tpu.dot_dimension_numbers<[1], [0], [0], [1], [0, 0, 1, 1], [], []>} : vector<512x75xbf16>, vector<75x10xbf16>, vector<512x10xf32> -> vector<512x10xf32>
    %36 = vector.shape_cast %35 : vector<512x10xf32> to vector<2x16x16x10xf32>
    %c0_110 = arith.constant 0 : index
    %c0_111 = arith.constant 0 : index
    %c0_112 = arith.constant 0 : index
    %c0_113 = arith.constant 0 : index
    %37 = vector.load %arg14[%c0_110, %c0_111, %c0_112, %c0_113] : memref<2x16x16x10xf32, #tpu.memory_space<vmem>>, vector<2x16x16x10xf32>
    tpu.vector_store %arg14[%c0_110, %c0_111, %c0_112, %c0_113], %36 {strides = array<i32>} : memref<2x16x16x10xf32, #tpu.memory_space<vmem>>, vector<2x16x16x10xf32>,
    %c0_114 = arith.constant 0 : index
    %c0_115 = arith.constant 0 : index
    %c0_116 = arith.constant 0 : index
    %c0_117 = arith.constant 0 : index
    %38 = tpu.strided_load %arg14[%c0_114, %c0_115, %c0_116, %c0_117] {strides = array<i32: 1, 2, 2, 1>} : memref<2x16x16x10xf32, #tpu.memory_space<vmem>>, vector<2x8x8x10xf32>
    %c0_118 = arith.constant 0 : index
    %c0_119 = arith.constant 0 : index
    %c1_120 = arith.constant 1 : index
    %c0_121 = arith.constant 0 : index
    %39 = tpu.strided_load %arg14[%c0_118, %c0_119, %c1_120, %c0_121] {strides = array<i32: 1, 2, 2, 1>} : memref<2x16x16x10xf32, #tpu.memory_space<vmem>>, vector<2x8x8x10xf32>
    %40 = arith.maximumf %38, %39 : vector<2x8x8x10xf32>
    %c0_122 = arith.constant 0 : index
    %c1_123 = arith.constant 1 : index
    %c0_124 = arith.constant 0 : index
    %c0_125 = arith.constant 0 : index
    %41 = tpu.strided_load %arg14[%c0_122, %c1_123, %c0_124, %c0_125] {strides = array<i32: 1, 2, 2, 1>} : memref<2x16x16x10xf32, #tpu.memory_space<vmem>>, vector<2x8x8x10xf32>
    %42 = arith.maximumf %40, %41 : vector<2x8x8x10xf32>
    %c0_126 = arith.constant 0 : index
    %c1_127 = arith.constant 1 : index
    %c1_128 = arith.constant 1 : index
    %c0_129 = arith.constant 0 : index
    %43 = tpu.strided_load %arg14[%c0_126, %c1_127, %c1_128, %c0_129] {strides = array<i32: 1, 2, 2, 1>} : memref<2x16x16x10xf32, #tpu.memory_space<vmem>>, vector<2x8x8x10xf32>
    %44 = arith.maximumf %42, %43 : vector<2x8x8x10xf32>
    %c0_130 = arith.constant 0 : index
    %c0_131 = arith.constant 0 : index
    %45 = vector.load %arg4[%c0_130, %c0_131] : memref<1x10xf32, #tpu.memory_space<vmem>>, vector<1x10xf32>
    %46 = vector.shape_cast %45 : vector<1x10xf32> to vector<1x1x1x10xf32>
    %47 = vector.broadcast %46 : vector<1x1x1x10xf32> to vector<2x8x8x10xf32>
    %48 = arith.addf %44, %47 : vector<2x8x8x10xf32>
    %cst_132 = arith.constant 0.000000e+00 : f32
    %49 = vector.broadcast %cst_132 : f32 to vector<2x10x10x10xf32>
    %c0_133 = arith.constant 0 : index
    %c0_134 = arith.constant 0 : index
    %c0_135 = arith.constant 0 : index
    %c0_136 = arith.constant 0 : index
    %50 = vector.load %arg15[%c0_133, %c0_134, %c0_135, %c0_136] : memref<2x10x10x10xf32, #tpu.memory_space<vmem>>, vector<2x10x10x10xf32>
    tpu.vector_store %arg15[%c0_133, %c0_134, %c0_135, %c0_136], %49 {strides = array<i32>} : memref<2x10x10x10xf32, #tpu.memory_space<vmem>>, vector<2x10x10x10xf32>,
    %c0_137 = arith.constant 0 : index
    %c1_138 = arith.constant 1 : index
    %c1_139 = arith.constant 1 : index
    %c0_140 = arith.constant 0 : index
    %51 = vector.load %arg15[%c0_137, %c1_138, %c1_139, %c0_140] : memref<2x10x10x10xf32, #tpu.memory_space<vmem>>, vector<2x8x8x10xf32>
    tpu.vector_store %arg15[%c0_137, %c1_138, %c1_139, %c0_140], %48 {strides = array<i32>} : memref<2x10x10x10xf32, #tpu.memory_space<vmem>>, vector<2x8x8x10xf32>,
    %c0_141 = arith.constant 0 : index
    %c0_142 = arith.constant 0 : index
    %c0_143 = arith.constant 0 : index
    %c0_144 = arith.constant 0 : index
    %52 = vector.load %arg15[%c0_141, %c0_142, %c0_143, %c0_144] : memref<2x10x10x10xf32, #tpu.memory_space<vmem>>, vector<2x8x8x10xf32>
    %c0_145 = arith.constant 0 : index
    %c0_146 = arith.constant 0 : index
    %c1_147 = arith.constant 1 : index
    %c0_148 = arith.constant 0 : index
    %53 = vector.load %arg15[%c0_145, %c0_146, %c1_147, %c0_148] : memref<2x10x10x10xf32, #tpu.memory_space<vmem>>, vector<2x8x8x10xf32>
    %c0_149 = arith.constant 0 : index
    %c0_150 = arith.constant 0 : index
    %c2_151 = arith.constant 2 : index
    %c0_152 = arith.constant 0 : index
    %54 = vector.load %arg15[%c0_149, %c0_150, %c2_151, %c0_152] : memref<2x10x10x10xf32, #tpu.memory_space<vmem>>, vector<2x8x8x10xf32>
    %c0_153 = arith.constant 0 : index
    %c1_154 = arith.constant 1 : index
    %c0_155 = arith.constant 0 : index
    %c0_156 = arith.constant 0 : index
    %55 = vector.load %arg15[%c0_153, %c1_154, %c0_155, %c0_156] : memref<2x10x10x10xf32, #tpu.memory_space<vmem>>, vector<2x8x8x10xf32>
    %c0_157 = arith.constant 0 : index
    %c1_158 = arith.constant 1 : index
    %c1_159 = arith.constant 1 : index
    %c0_160 = arith.constant 0 : index
    %56 = vector.load %arg15[%c0_157, %c1_158, %c1_159, %c0_160] : memref<2x10x10x10xf32, #tpu.memory_space<vmem>>, vector<2x8x8x10xf32>
    %c0_161 = arith.constant 0 : index
    %c1_162 = arith.constant 1 : index
    %c2_163 = arith.constant 2 : index
    %c0_164 = arith.constant 0 : index
    %57 = vector.load %arg15[%c0_161, %c1_162, %c2_163, %c0_164] : memref<2x10x10x10xf32, #tpu.memory_space<vmem>>, vector<2x8x8x10xf32>
    %c0_165 = arith.constant 0 : index
    %c2_166 = arith.constant 2 : index
    %c0_167 = arith.constant 0 : index
    %c0_168 = arith.constant 0 : index
    %58 = vector.load %arg15[%c0_165, %c2_166, %c0_167, %c0_168] : memref<2x10x10x10xf32, #tpu.memory_space<vmem>>, vector<2x8x8x10xf32>
    %c0_169 = arith.constant 0 : index
    %c2_170 = arith.constant 2 : index
    %c1_171 = arith.constant 1 : index
    %c0_172 = arith.constant 0 : index
    %59 = vector.load %arg15[%c0_169, %c2_170, %c1_171, %c0_172] : memref<2x10x10x10xf32, #tpu.memory_space<vmem>>, vector<2x8x8x10xf32>
    %c0_173 = arith.constant 0 : index
    %c2_174 = arith.constant 2 : index
    %c2_175 = arith.constant 2 : index
    %c0_176 = arith.constant 0 : index
    %60 = vector.load %arg15[%c0_173, %c2_174, %c2_175, %c0_176] : memref<2x10x10x10xf32, #tpu.memory_space<vmem>>, vector<2x8x8x10xf32>
    %61 = tpu.concatenate %52, %53, %54, %55, %56, %57, %58, %59, %60 in 3 : vector<2x8x8x10xf32>, vector<2x8x8x10xf32>, vector<2x8x8x10xf32>, vector<2x8x8x10xf32>, vector<2x8x8x10xf32>, vector<2x8x8x10xf32>, vector<2x8x8x10xf32>, vector<2x8x8x10xf32>, vector<2x8x8x10xf32> -> vector<2x8x8x90xf32>
    %62 = vector.shape_cast %61 : vector<2x8x8x90xf32> to vector<128x90xf32>
    %63 = arith.truncf %62 : vector<128x90xf32> to vector<128x90xbf16>
    %c0_177 = arith.constant 0 : index
    %c0_178 = arith.constant 0 : index
    %64 = vector.load %arg5[%c0_177, %c0_178] : memref<90x20xbf16, #tpu.memory_space<vmem>>, vector<90x20xbf16>
    %cst_179 = arith.constant dense<0.000000e+00> : vector<128x20xf32>
    %65 = tpu.matmul %63, %64, %cst_179 {dimension_numbers = #tpu.dot_dimension_numbers<[1], [0], [0], [1], [0, 0, 1, 1], [], []>} : vector<128x90xbf16>, vector<90x20xbf16>, vector<128x20xf32> -> vector<128x20xf32>
    %66 = vector.shape_cast %65 : vector<128x20xf32> to vector<2x8x8x20xf32>
    %c0_180 = arith.constant 0 : index
    %c0_181 = arith.constant 0 : index
    %c0_182 = arith.constant 0 : index
    %c0_183 = arith.constant 0 : index
    %67 = vector.load %arg16[%c0_180, %c0_181, %c0_182, %c0_183] : memref<2x8x8x20xf32, #tpu.memory_space<vmem>>, vector<2x8x8x20xf32>
    tpu.vector_store %arg16[%c0_180, %c0_181, %c0_182, %c0_183], %66 {strides = array<i32>} : memref<2x8x8x20xf32, #tpu.memory_space<vmem>>, vector<2x8x8x20xf32>,
    %c0_184 = arith.constant 0 : index
    %c0_185 = arith.constant 0 : index
    %c0_186 = arith.constant 0 : index
    %c0_187 = arith.constant 0 : index
    %68 = tpu.strided_load %arg16[%c0_184, %c0_185, %c0_186, %c0_187] {strides = array<i32: 1, 2, 2, 1>} : memref<2x8x8x20xf32, #tpu.memory_space<vmem>>, vector<2x4x4x20xf32>
    %c0_188 = arith.constant 0 : index
    %c0_189 = arith.constant 0 : index
    %c1_190 = arith.constant 1 : index
    %c0_191 = arith.constant 0 : index
    %69 = tpu.strided_load %arg16[%c0_188, %c0_189, %c1_190, %c0_191] {strides = array<i32: 1, 2, 2, 1>} : memref<2x8x8x20xf32, #tpu.memory_space<vmem>>, vector<2x4x4x20xf32>
    %70 = arith.maximumf %68, %69 : vector<2x4x4x20xf32>
    %c0_192 = arith.constant 0 : index
    %c1_193 = arith.constant 1 : index
    %c0_194 = arith.constant 0 : index
    %c0_195 = arith.constant 0 : index
    %71 = tpu.strided_load %arg16[%c0_192, %c1_193, %c0_194, %c0_195] {strides = array<i32: 1, 2, 2, 1>} : memref<2x8x8x20xf32, #tpu.memory_space<vmem>>, vector<2x4x4x20xf32>
    %72 = arith.maximumf %70, %71 : vector<2x4x4x20xf32>
    %c0_196 = arith.constant 0 : index
    %c1_197 = arith.constant 1 : index
    %c1_198 = arith.constant 1 : index
    %c0_199 = arith.constant 0 : index
    %73 = tpu.strided_load %arg16[%c0_196, %c1_197, %c1_198, %c0_199] {strides = array<i32: 1, 2, 2, 1>} : memref<2x8x8x20xf32, #tpu.memory_space<vmem>>, vector<2x4x4x20xf32>
    %74 = arith.maximumf %72, %73 : vector<2x4x4x20xf32>
    %c0_200 = arith.constant 0 : index
    %c0_201 = arith.constant 0 : index
    %75 = vector.load %arg6[%c0_200, %c0_201] : memref<1x20xf32, #tpu.memory_space<vmem>>, vector<1x20xf32>
    %76 = vector.shape_cast %75 : vector<1x20xf32> to vector<1x1x1x20xf32>
    %77 = vector.broadcast %76 : vector<1x1x1x20xf32> to vector<2x4x4x20xf32>
    %78 = arith.addf %74, %77 : vector<2x4x4x20xf32>
    %cst_202 = arith.constant 0.000000e+00 : f32
    %79 = vector.broadcast %cst_202 : f32 to vector<2x4x4x20xf32>
    %80 = arith.maximumf %78, %79 : vector<2x4x4x20xf32>
    %c0_203 = arith.constant 0 : index
    %c0_204 = arith.constant 0 : index
    %c0_205 = arith.constant 0 : index
    %c0_206 = arith.constant 0 : index
    %81 = vector.load %arg17[%c0_203, %c0_204, %c0_205, %c0_206] : memref<2x4x4x20xf32, #tpu.memory_space<vmem>>, vector<2x4x4x20xf32>
    tpu.vector_store %arg17[%c0_203, %c0_204, %c0_205, %c0_206], %80 {strides = array<i32>} : memref<2x4x4x20xf32, #tpu.memory_space<vmem>>, vector<2x4x4x20xf32>,
    %c0_207 = arith.constant 0 : index
    %c0_208 = arith.constant 0 : index
    %c0_209 = arith.constant 0 : index
    %c0_210 = arith.constant 0 : index
    %82 = vector.load %arg17[%c0_207, %c0_208, %c0_209, %c0_210] : memref<2x4x4x20xf32, #tpu.memory_space<vmem>>, vector<2x1x1x20xf32>
    %83 = vector.shape_cast %82 : vector<2x1x1x20xf32> to vector<2x20xf32>
    %c0_211 = arith.constant 0 : index
    %c0_212 = arith.constant 0 : index
    %c1_213 = arith.constant 1 : index
    %c0_214 = arith.constant 0 : index
    %84 = vector.load %arg17[%c0_211, %c0_212, %c1_213, %c0_214] : memref<2x4x4x20xf32, #tpu.memory_space<vmem>>, vector<2x1x1x20xf32>
    %85 = vector.shape_cast %84 : vector<2x1x1x20xf32> to vector<2x20xf32>
    %c0_215 = arith.constant 0 : index
    %c0_216 = arith.constant 0 : index
    %c2_217 = arith.constant 2 : index
    %c0_218 = arith.constant 0 : index
    %86 = vector.load %arg17[%c0_215, %c0_216, %c2_217, %c0_218] : memref<2x4x4x20xf32, #tpu.memory_space<vmem>>, vector<2x1x1x20xf32>
    %87 = vector.shape_cast %86 : vector<2x1x1x20xf32> to vector<2x20xf32>
    %c0_219 = arith.constant 0 : index
    %c0_220 = arith.constant 0 : index
    %c3_221 = arith.constant 3 : index
    %c0_222 = arith.constant 0 : index
    %88 = vector.load %arg17[%c0_219, %c0_220, %c3_221, %c0_222] : memref<2x4x4x20xf32, #tpu.memory_space<vmem>>, vector<2x1x1x20xf32>
    %89 = vector.shape_cast %88 : vector<2x1x1x20xf32> to vector<2x20xf32>
    %c0_223 = arith.constant 0 : index
    %c1_224 = arith.constant 1 : index
    %c0_225 = arith.constant 0 : index
    %c0_226 = arith.constant 0 : index
    %90 = vector.load %arg17[%c0_223, %c1_224, %c0_225, %c0_226] : memref<2x4x4x20xf32, #tpu.memory_space<vmem>>, vector<2x1x1x20xf32>
    %91 = vector.shape_cast %90 : vector<2x1x1x20xf32> to vector<2x20xf32>
    %c0_227 = arith.constant 0 : index
    %c1_228 = arith.constant 1 : index
    %c1_229 = arith.constant 1 : index
    %c0_230 = arith.constant 0 : index
    %92 = vector.load %arg17[%c0_227, %c1_228, %c1_229, %c0_230] : memref<2x4x4x20xf32, #tpu.memory_space<vmem>>, vector<2x1x1x20xf32>
    %93 = vector.shape_cast %92 : vector<2x1x1x20xf32> to vector<2x20xf32>
    %c0_231 = arith.constant 0 : index
    %c1_232 = arith.constant 1 : index
    %c2_233 = arith.constant 2 : index
    %c0_234 = arith.constant 0 : index
    %94 = vector.load %arg17[%c0_231, %c1_232, %c2_233, %c0_234] : memref<2x4x4x20xf32, #tpu.memory_space<vmem>>, vector<2x1x1x20xf32>
    %95 = vector.shape_cast %94 : vector<2x1x1x20xf32> to vector<2x20xf32>
    %c0_235 = arith.constant 0 : index
    %c1_236 = arith.constant 1 : index
    %c3_237 = arith.constant 3 : index
    %c0_238 = arith.constant 0 : index
    %96 = vector.load %arg17[%c0_235, %c1_236, %c3_237, %c0_238] : memref<2x4x4x20xf32, #tpu.memory_space<vmem>>, vector<2x1x1x20xf32>
    %97 = vector.shape_cast %96 : vector<2x1x1x20xf32> to vector<2x20xf32>
    %c0_239 = arith.constant 0 : index
    %c2_240 = arith.constant 2 : index
    %c0_241 = arith.constant 0 : index
    %c0_242 = arith.constant 0 : index
    %98 = vector.load %arg17[%c0_239, %c2_240, %c0_241, %c0_242] : memref<2x4x4x20xf32, #tpu.memory_space<vmem>>, vector<2x1x1x20xf32>
    %99 = vector.shape_cast %98 : vector<2x1x1x20xf32> to vector<2x20xf32>
    %c0_243 = arith.constant 0 : index
    %c2_244 = arith.constant 2 : index
    %c1_245 = arith.constant 1 : index
    %c0_246 = arith.constant 0 : index
    %100 = vector.load %arg17[%c0_243, %c2_244, %c1_245, %c0_246] : memref<2x4x4x20xf32, #tpu.memory_space<vmem>>, vector<2x1x1x20xf32>
    %101 = vector.shape_cast %100 : vector<2x1x1x20xf32> to vector<2x20xf32>
    %c0_247 = arith.constant 0 : index
    %c2_248 = arith.constant 2 : index
    %c2_249 = arith.constant 2 : index
    %c0_250 = arith.constant 0 : index
    %102 = vector.load %arg17[%c0_247, %c2_248, %c2_249, %c0_250] : memref<2x4x4x20xf32, #tpu.memory_space<vmem>>, vector<2x1x1x20xf32>
    %103 = vector.shape_cast %102 : vector<2x1x1x20xf32> to vector<2x20xf32>
    %c0_251 = arith.constant 0 : index
    %c2_252 = arith.constant 2 : index
    %c3_253 = arith.constant 3 : index
    %c0_254 = arith.constant 0 : index
    %104 = vector.load %arg17[%c0_251, %c2_252, %c3_253, %c0_254] : memref<2x4x4x20xf32, #tpu.memory_space<vmem>>, vector<2x1x1x20xf32>
    %105 = vector.shape_cast %104 : vector<2x1x1x20xf32> to vector<2x20xf32>
    %c0_255 = arith.constant 0 : index
    %c3_256 = arith.constant 3 : index
    %c0_257 = arith.constant 0 : index
    %c0_258 = arith.constant 0 : index
    %106 = vector.load %arg17[%c0_255, %c3_256, %c0_257, %c0_258] : memref<2x4x4x20xf32, #tpu.memory_space<vmem>>, vector<2x1x1x20xf32>
    %107 = vector.shape_cast %106 : vector<2x1x1x20xf32> to vector<2x20xf32>
    %c0_259 = arith.constant 0 : index
    %c3_260 = arith.constant 3 : index
    %c1_261 = arith.constant 1 : index
    %c0_262 = arith.constant 0 : index
    %108 = vector.load %arg17[%c0_259, %c3_260, %c1_261, %c0_262] : memref<2x4x4x20xf32, #tpu.memory_space<vmem>>, vector<2x1x1x20xf32>
    %109 = vector.shape_cast %108 : vector<2x1x1x20xf32> to vector<2x20xf32>
    %c0_263 = arith.constant 0 : index
    %c3_264 = arith.constant 3 : index
    %c2_265 = arith.constant 2 : index
    %c0_266 = arith.constant 0 : index
    %110 = vector.load %arg17[%c0_263, %c3_264, %c2_265, %c0_266] : memref<2x4x4x20xf32, #tpu.memory_space<vmem>>, vector<2x1x1x20xf32>
    %111 = vector.shape_cast %110 : vector<2x1x1x20xf32> to vector<2x20xf32>
    %c0_267 = arith.constant 0 : index
    %c3_268 = arith.constant 3 : index
    %c3_269 = arith.constant 3 : index
    %c0_270 = arith.constant 0 : index
    %112 = vector.load %arg17[%c0_267, %c3_268, %c3_269, %c0_270] : memref<2x4x4x20xf32, #tpu.memory_space<vmem>>, vector<2x1x1x20xf32>
    %113 = vector.shape_cast %112 : vector<2x1x1x20xf32> to vector<2x20xf32>
    %114 = tpu.concatenate %83, %85, %87, %89, %91, %93, %95, %97, %99, %101, %103, %105, %107, %109, %111, %113 in 1 : vector<2x20xf32>, vector<2x20xf32>, vector<2x20xf32>, vector<2x20xf32>, vector<2x20xf32>, vector<2x20xf32>, vector<2x20xf32>, vector<2x20xf32>, vector<2x20xf32>, vector<2x20xf32>, vector<2x20xf32>, vector<2x20xf32>, vector<2x20xf32>, vector<2x20xf32>, vector<2x20xf32>, vector<2x20xf32> -> vector<2x320xf32>
    %115 = arith.truncf %114 : vector<2x320xf32> to vector<2x320xbf16>
    %c0_271 = arith.constant 0 : index
    %c0_272 = arith.constant 0 : index
    %116 = vector.load %arg7[%c0_271, %c0_272] : memref<320x200xbf16, #tpu.memory_space<vmem>>, vector<320x200xbf16>
    %cst_273 = arith.constant dense<0.000000e+00> : vector<2x200xf32>
    %117 = tpu.matmul %115, %116, %cst_273 {dimension_numbers = #tpu.dot_dimension_numbers<[1], [0], [0], [1], [0, 0, 1, 1], [], []>} : vector<2x320xbf16>, vector<320x200xbf16>, vector<2x200xf32> -> vector<2x200xf32>
    %c0_274 = arith.constant 0 : index
    %c0_275 = arith.constant 0 : index
    %118 = vector.load %arg2[%c0_274, %c0_275] : memref<2x8xf32, #tpu.memory_space<vmem>>, vector<2x8xf32>
    %119 = arith.truncf %118 : vector<2x8xf32> to vector<2x8xbf16>
    %c0_276 = arith.constant 0 : index
    %c0_277 = arith.constant 0 : index
    %120 = vector.load %arg8[%c0_276, %c0_277] : memref<8x200xbf16, #tpu.memory_space<vmem>>, vector<8x200xbf16>
    %cst_278 = arith.constant dense<0.000000e+00> : vector<2x200xf32>
    %121 = tpu.matmul %119, %120, %cst_278 {dimension_numbers = #tpu.dot_dimension_numbers<[1], [0], [0], [1], [0, 0, 1, 1], [], []>} : vector<2x8xbf16>, vector<8x200xbf16>, vector<2x200xf32> -> vector<2x200xf32>
    %122 = arith.addf %117, %121 : vector<2x200xf32>
    %c0_279 = arith.constant 0 : index
    %c0_280 = arith.constant 0 : index
    %123 = vector.load %arg9[%c0_279, %c0_280] : memref<1x200xf32, #tpu.memory_space<vmem>>, vector<1x200xf32>
    %124 = vector.broadcast %123 : vector<1x200xf32> to vector<2x200xf32>
    %125 = arith.addf %122, %124 : vector<2x200xf32>
    %cst_281 = arith.constant 0.000000e+00 : f32
    %126 = vector.broadcast %cst_281 : f32 to vector<2x200xf32>
    %127 = arith.maximumf %125, %126 : vector<2x200xf32>
    %128 = arith.truncf %127 : vector<2x200xf32> to vector<2x200xbf16>
    %c0_282 = arith.constant 0 : index
    %c0_283 = arith.constant 0 : index
    %129 = vector.load %arg10[%c0_282, %c0_283] : memref<200x7xbf16, #tpu.memory_space<vmem>>, vector<200x7xbf16>
    %cst_284 = arith.constant dense<0.000000e+00> : vector<2x7xf32>
    %130 = tpu.matmul %128, %129, %cst_284 {dimension_numbers = #tpu.dot_dimension_numbers<[1], [0], [0], [1], [0, 0, 1, 1], [], []>} : vector<2x200xbf16>, vector<200x7xbf16>, vector<2x7xf32> -> vector<2x7xf32>
    %c0_285 = arith.constant 0 : index
    %c0_286 = arith.constant 0 : index
    %131 = vector.load %arg11[%c0_285, %c0_286] : memref<1x7xf32, #tpu.memory_space<vmem>>, vector<1x7xf32>
    %132 = vector.broadcast %131 : vector<1x7xf32> to vector<2x7xf32>
    %133 = arith.addf %130, %132 : vector<2x7xf32>
    %c0_287 = arith.constant 0 : index
    %c0_288 = arith.constant 0 : index
    %134 = vector.load %arg12[%c0_287, %c0_288] : memref<2x7xf32, #tpu.memory_space<vmem>>, vector<2x7xf32>
    tpu.vector_store %arg12[%c0_287, %c0_288], %133 {strides = array<i32>} : memref<2x7xf32, #tpu.memory_space<vmem>>, vector<2x7xf32>,
    return
  }
  func.func @transform_0(%arg0: i32) -> (i32, i32, i32, i32) {
    %c0_i32 = arith.constant 0 : i32
    %c0_i32_0 = arith.constant 0 : i32
    %c0_i32_1 = arith.constant 0 : i32
    %c0_i32_2 = arith.constant 0 : i32
    return %arg0, %c0_i32, %c0_i32_0, %c0_i32_1 : i32, i32, i32, i32
  }
  func.func @transform_1(%arg0: i32) -> (i32, i32) {
    %c0_i32 = arith.constant 0 : i32
    %c0_i32_0 = arith.constant 0 : i32
    return %arg0, %c0_i32 : i32, i32
  }
  func.func @transform_2(%arg0: i32) -> (i32, i32) {
    %c0_i32 = arith.constant 0 : i32
    %c0_i32_0 = arith.constant 0 : i32
    %c0_i32_1 = arith.constant 0 : i32
    return %c0_i32, %c0_i32_0 : i32, i32
  }
  func.func @transform_3(%arg0: i32) -> (i32, i32) {
    %c0_i32 = arith.constant 0 : i32
    %c0_i32_0 = arith.constant 0 : i32
    %c0_i32_1 = arith.constant 0 : i32
    return %c0_i32, %c0_i32_0 : i32, i32
  }
  func.func @transform_4(%arg0: i32) -> (i32, i32) {
    %c0_i32 = arith.constant 0 : i32
    %c0_i32_0 = arith.constant 0 : i32
    %c0_i32_1 = arith.constant 0 : i32
    return %c0_i32, %c0_i32_0 : i32, i32
  }
  func.func @transform_5(%arg0: i32) -> (i32, i32) {
    %c0_i32 = arith.constant 0 : i32
    %c0_i32_0 = arith.constant 0 : i32
    %c0_i32_1 = arith.constant 0 : i32
    return %c0_i32, %c0_i32_0 : i32, i32
  }
  func.func @transform_6(%arg0: i32) -> (i32, i32) {
    %c0_i32 = arith.constant 0 : i32
    %c0_i32_0 = arith.constant 0 : i32
    %c0_i32_1 = arith.constant 0 : i32
    return %c0_i32, %c0_i32_0 : i32, i32
  }
  func.func @transform_7(%arg0: i32) -> (i32, i32) {
    %c0_i32 = arith.constant 0 : i32
    %c0_i32_0 = arith.constant 0 : i32
    %c0_i32_1 = arith.constant 0 : i32
    return %c0_i32, %c0_i32_0 : i32, i32
  }
  func.func @transform_8(%arg0: i32) -> (i32, i32) {
    %c0_i32 = arith.constant 0 : i32
    %c0_i32_0 = arith.constant 0 : i32
    %c0_i32_1 = arith.constant 0 : i32
    return %c0_i32, %c0_i32_0 : i32, i32
  }
  func.func @transform_9(%arg0: i32) -> (i32, i32) {
    %c0_i32 = arith.constant 0 : i32
    %c0_i32_0 = arith.constant 0 : i32
    %c0_i32_1 = arith.constant 0 : i32
    return %c0_i32, %c0_i32_0 : i32, i32
  }
  func.func @transform_10(%arg0: i32) -> (i32, i32) {
    %c0_i32 = arith.constant 0 : i32
    %c0_i32_0 = arith.constant 0 : i32
    %c0_i32_1 = arith.constant 0 : i32
    return %c0_i32, %c0_i32_0 : i32, i32
  }
  func.func @transform_11(%arg0: i32) -> (i32, i32) {
    %c0_i32 = arith.constant 0 : i32
    %c0_i32_0 = arith.constant 0 : i32
    return %arg0, %c0_i32 : i32, i32
  }
}

</mosaic_0001>

<llo_original>
// kernel: dcnn_forward.1
$region0: #{dcnn_forward.1}
  #allocation0 [shape = 'u32[]', space=smem, size = 0x4, offset = 0x4, fixed_abs, tag = 'smem constant byte address 0x4 - core index']
  #allocation1 [shape = 'u32[72,128]{1,0:T(1,128)}', space=vmem, size = 0x9000, scoped, tag = 'internal scratch']
  #allocation2 [shape = 'f32[2,20,20,3]{3,2,1,0:T(8,128)}', space=vmem, size = 0x78000, scoped, tag = 'scratch operand']
  #allocation3 [shape = 'f32[2,16,16,10]{3,2,1,0:T(8,128)}', space=vmem, size = 0x40000, scoped, tag = 'scratch operand']
  #allocation4 [shape = 'f32[2,10,10,10]{3,2,1,0:T(8,128)}', space=vmem, size = 0x28000, scoped, tag = 'scratch operand']
  #allocation5 [shape = 'f32[2,8,8,20]{3,2,1,0:T(8,128)}', space=vmem, size = 0x10000, scoped, tag = 'scratch operand']
  #allocation6 [shape = 'f32[2,4,4,20]{3,2,1,0:T(4,128)}', space=vmem, size = 0x4000, scoped, tag = 'scratch operand']
  %s0 = inlined_call_operand.vmem [shape: f32[2,16,16,3], index: 0, kind: input, shape index: {}]
  %s1 = inlined_call_operand.vmem [shape: f32[2,8], index: 1, kind: input, shape index: {}]
  %s2 = inlined_call_operand.vmem [shape: bf16[75,10], index: 2, kind: input, shape index: {}]
  %s3 = inlined_call_operand.vmem [shape: f32[1,10], index: 3, kind: input, shape index: {}]
  %s4 = inlined_call_operand.vmem [shape: bf16[90,20], index: 4, kind: input, shape index: {}]
  %s5 = inlined_call_operand.vmem [shape: f32[1,20], index: 5, kind: input, shape index: {}]
  %s6 = inlined_call_operand.vmem [shape: bf16[320,200], index: 6, kind: input, shape index: {}]
  %s7 = inlined_call_operand.vmem [shape: bf16[8,200], index: 7, kind: input, shape index: {}]
  %s8 = inlined_call_operand.vmem [shape: f32[1,200], index: 8, kind: input, shape index: {}]
  %s9 = inlined_call_operand.vmem [shape: bf16[200,7], index: 9, kind: input, shape index: {}]
  %s10 = inlined_call_operand.vmem [shape: f32[1,7], index: 10, kind: input, shape index: {}]
  %s11 = inlined_call_operand.hbm [shape: f32[2,7], index: 11, kind: output, shape index: {}]
  %s12 = sld [smem:[#allocation0]]
  $region54: #{dcnn_forward.1} parent=0
    _
  %s14 = ssub.s32 1, %s12
  %s15 = scalar_select 0, %s14, %s12
  $region1: #{dcnn_forward.1} parent=0
    #allocation7 [shape = 'u8[1024]{0}', space=vmem, size = 0x400, scoped, tag = 'output window, operand 0, single buffered']
    #allocation8 [shape = 's32[1]{0}', space=sflag, size = 0x4, scoped, tag = 'scoped memory for dcnn_forward.1']
    %16 = vsyncpa [#allocation8], 0
    // Predicated region
    $region2: #{dcnn_forward.1} parent=1 // pred_check
      _
    $region3: #{dcnn_forward.1} parent=1 // pred_check_branch
      %18 = sbr.rel (0) target = $region5
    $region4: #{dcnn_forward.1} parent=1 // pred_region
      _
    $region5: #{dcnn_forward.1} parent=1 // pred_fallthru
      _
    // Predicated region
    $region6: #{dcnn_forward.1} parent=1 // pred_check
      _
    $region7: #{dcnn_forward.1} parent=1 // pred_check_branch
      %20 = sbr.rel (0) target = $region9
    $region8: #{dcnn_forward.1} parent=1 // pred_region
      _
    $region9: #{dcnn_forward.1} parent=1 // pred_fallthru
      _
    // Predicated region
    $region10: #{dcnn_forward.1} parent=1 // pred_check
      _
    $region11: #{dcnn_forward.1} parent=1 // pred_check_branch
      %22 = sbr.rel (0) target = $region13
    $region12: #{dcnn_forward.1} parent=1 // pred_region
      _
    $region13: #{dcnn_forward.1} parent=1 // pred_fallthru
      _
    // Predicated region
    $region14: #{dcnn_forward.1} parent=1 // pred_check
      _
    $region15: #{dcnn_forward.1} parent=1 // pred_check_branch
      %24 = sbr.rel (0) target = $region17
    $region16: #{dcnn_forward.1} parent=1 // pred_region
      _
    $region17: #{dcnn_forward.1} parent=1 // pred_fallthru
      _
    // Predicated region
    $region18: #{dcnn_forward.1} parent=1 // pred_check
      _
    $region19: #{dcnn_forward.1} parent=1 // pred_check_branch
      %26 = sbr.rel (0) target = $region21
    $region20: #{dcnn_forward.1} parent=1 // pred_region
      _
    $region21: #{dcnn_forward.1} parent=1 // pred_fallthru
      _
    // Predicated region
    $region22: #{dcnn_forward.1} parent=1 // pred_check
      _
    $region23: #{dcnn_forward.1} parent=1 // pred_check_branch
      %28 = sbr.rel (0) target = $region25
    $region24: #{dcnn_forward.1} parent=1 // pred_region
      _
    $region25: #{dcnn_forward.1} parent=1 // pred_fallthru
      _
    // Predicated region
    $region26: #{dcnn_forward.1} parent=1 // pred_check
      _
    $region27: #{dcnn_forward.1} parent=1 // pred_check_branch
      %30 = sbr.rel (0) target = $region29
    $region28: #{dcnn_forward.1} parent=1 // pred_region
      _
    $region29: #{dcnn_forward.1} parent=1 // pred_fallthru
      _
    // Predicated region
    $region30: #{dcnn_forward.1} parent=1 // pred_check
      _
    $region31: #{dcnn_forward.1} parent=1 // pred_check_branch
      %32 = sbr.rel (0) target = $region33
    $region32: #{dcnn_forward.1} parent=1 // pred_region
      _
    $region33: #{dcnn_forward.1} parent=1 // pred_fallthru
      _
    // Predicated region
    $region34: #{dcnn_forward.1} parent=1 // pred_check
      _
    $region35: #{dcnn_forward.1} parent=1 // pred_check_branch
      %34 = sbr.rel (0) target = $region37
    $region36: #{dcnn_forward.1} parent=1 // pred_region
      _
    $region37: #{dcnn_forward.1} parent=1 // pred_fallthru
      _
    // Predicated region
    $region38: #{dcnn_forward.1} parent=1 // pred_check
      _
    $region39: #{dcnn_forward.1} parent=1 // pred_check_branch
      %36 = sbr.rel (0) target = $region41
    $region40: #{dcnn_forward.1} parent=1 // pred_region
      _
    $region41: #{dcnn_forward.1} parent=1 // pred_fallthru
      _
    // Predicated region
    $region42: #{dcnn_forward.1} parent=1 // pred_check
      _
    $region43: #{dcnn_forward.1} parent=1 // pred_check_branch
      %38 = sbr.rel (0) target = $region45
    $region44: #{dcnn_forward.1} parent=1 // pred_region
      _
    $region45: #{dcnn_forward.1} parent=1 // pred_fallthru
      _
    %vm40 = vcmask 23552
    %41 = vst.msk [vmem:[#allocation2] sm:$0xff] %vm40, 0.0
    %42 = vst.msk [vmem:[#allocation2 + $0x8] sm:$0xff] %vm40, 0.0
    %vm43 = vcmask 19456
    %44 = vst.msk [vmem:[#allocation2 + $0x10] sm:$0xf] %vm43, 0.0
    %45 = vst.msk [vmem:[#allocation2 + $0x18] sm:$0xff] %vm40, 0.0
    %46 = vst.msk [vmem:[#allocation2 + $0x20] sm:$0xff] %vm40, 0.0
    %47 = vst.msk [vmem:[#allocation2 + $0x28] sm:$0xf] %vm43, 0.0
    %48 = vst.msk [vmem:[#allocation2 + $0x30] sm:$0xff] %vm40, 0.0
    %49 = vst.msk [vmem:[#allocation2 + $0x38] sm:$0xff] %vm40, 0.0
    %50 = vst.msk [vmem:[#allocation2 + $0x40] sm:$0xf] %vm43, 0.0
    %51 = vst.msk [vmem:[#allocation2 + $0x48] sm:$0xff] %vm40, 0.0
    %52 = vst.msk [vmem:[#allocation2 + $0x50] sm:$0xff] %vm40, 0.0
    %53 = vst.msk [vmem:[#allocation2 + $0x58] sm:$0xf] %vm43, 0.0
    %54 = vst.msk [vmem:[#allocation2 + $0x60] sm:$0xff] %vm40, 0.0
    %55 = vst.msk [vmem:[#allocation2 + $0x68] sm:$0xff] %vm40, 0.0
    %56 = vst.msk [vmem:[#allocation2 + $0x70] sm:$0xf] %vm43, 0.0
    %57 = vst.msk [vmem:[#allocation2 + $0x78] sm:$0xff] %vm40, 0.0
    %58 = vst.msk [vmem:[#allocation2 + $0x80] sm:$0xff] %vm40, 0.0
    %59 = vst.msk [vmem:[#allocation2 + $0x88] sm:$0xf] %vm43, 0.0
    %60 = vst.msk [vmem:[#allocation2 + $0x90] sm:$0xff] %vm40, 0.0
    %61 = vst.msk [vmem:[#allocation2 + $0x98] sm:$0xff] %vm40, 0.0
    %62 = vst.msk [vmem:[#allocation2 + $0xa0] sm:$0xf] %vm43, 0.0
    %63 = vst.msk [vmem:[#allocation2 + $0xa8] sm:$0xff] %vm40, 0.0
    %64 = vst.msk [vmem:[#allocation2 + $0xb0] sm:$0xff] %vm40, 0.0
    %65 = vst.msk [vmem:[#allocation2 + $0xb8] sm:$0xf] %vm43, 0.0
    %66 = vst.msk [vmem:[#allocation2 + $0xc0] sm:$0xff] %vm40, 0.0
    %67 = vst.msk [vmem:[#allocation2 + $0xc8] sm:$0xff] %vm40, 0.0
    %68 = vst.msk [vmem:[#allocation2 + $0xd0] sm:$0xf] %vm43, 0.0
    %69 = vst.msk [vmem:[#allocation2 + $0xd8] sm:$0xff] %vm40, 0.0
    %70 = vst.msk [vmem:[#allocation2 + $0xe0] sm:$0xff] %vm40, 0.0
    %71 = vst.msk [vmem:[#allocation2 + $0xe8] sm:$0xf] %vm43, 0.0
    %72 = vst.msk [vmem:[#allocation2 + $0xf0] sm:$0xff] %vm40, 0.0
    %73 = vst.msk [vmem:[#allocation2 + $0xf8] sm:$0xff] %vm40, 0.0
    %74 = vst.msk [vmem:[#allocation2 + $0x100] sm:$0xf] %vm43, 0.0
    %75 = vst.msk [vmem:[#allocation2 + $0x108] sm:$0xff] %vm40, 0.0
    %76 = vst.msk [vmem:[#allocation2 + $0x110] sm:$0xff] %vm40, 0.0
    %77 = vst.msk [vmem:[#allocation2 + $0x118] sm:$0xf] %vm43, 0.0
    %78 = vst.msk [vmem:[#allocation2 + $0x120] sm:$0xff] %vm40, 0.0
    %79 = vst.msk [vmem:[#allocation2 + $0x128] sm:$0xff] %vm40, 0.0
    %80 = vst.msk [vmem:[#allocation2 + $0x130] sm:$0xf] %vm43, 0.0
    %81 = vst.msk [vmem:[#allocation2 + $0x138] sm:$0xff] %vm40, 0.0
    %82 = vst.msk [vmem:[#allocation2 + $0x140] sm:$0xff] %vm40, 0.0
    %83 = vst.msk [vmem:[#allocation2 + $0x148] sm:$0xf] %vm43, 0.0
    %84 = vst.msk [vmem:[#allocation2 + $0x150] sm:$0xff] %vm40, 0.0
    %85 = vst.msk [vmem:[#allocation2 + $0x158] sm:$0xff] %vm40, 0.0
    %86 = vst.msk [vmem:[#allocation2 + $0x160] sm:$0xf] %vm43, 0.0
    %87 = vst.msk [vmem:[#allocation2 + $0x168] sm:$0xff] %vm40, 0.0
    %88 = vst.msk [vmem:[#allocation2 + $0x170] sm:$0xff] %vm40, 0.0
    %89 = vst.msk [vmem:[#allocation2 + $0x178] sm:$0xf] %vm43, 0.0
    %90 = vst.msk [vmem:[#allocation2 + $0x180] sm:$0xff] %vm40, 0.0
    %91 = vst.msk [vmem:[#allocation2 + $0x188] sm:$0xff] %vm40, 0.0
    %92 = vst.msk [vmem:[#allocation2 + $0x190] sm:$0xf] %vm43, 0.0
    %93 = vst.msk [vmem:[#allocation2 + $0x198] sm:$0xff] %vm40, 0.0
    %94 = vst.msk [vmem:[#allocation2 + $0x1a0] sm:$0xff] %vm40, 0.0
    %95 = vst.msk [vmem:[#allocation2 + $0x1a8] sm:$0xf] %vm43, 0.0
    %96 = vst.msk [vmem:[#allocation2 + $0x1b0] sm:$0xff] %vm40, 0.0
    %97 = vst.msk [vmem:[#allocation2 + $0x1b8] sm:$0xff] %vm40, 0.0
    %98 = vst.msk [vmem:[#allocation2 + $0x1c0] sm:$0xf] %vm43, 0.0
    %99 = vst.msk [vmem:[#allocation2 + $0x1c8] sm:$0xff] %vm40, 0.0
    %100 = vst.msk [vmem:[#allocation2 + $0x1d0] sm:$0xff] %vm40, 0.0
    %101 = vst.msk [vmem:[#allocation2 + $0x1d8] sm:$0xf] %vm43, 0.0
    %102 = vst.msk [vmem:[#allocation2 + $0x1e0] sm:$0xff] %vm40, 0.0
    %103 = vst.msk [vmem:[#allocation2 + $0x1e8] sm:$0xff] %vm40, 0.0
    %104 = vst.msk [vmem:[#allocation2 + $0x1f0] sm:$0xf] %vm43, 0.0
    %105 = vst.msk [vmem:[#allocation2 + $0x1f8] sm:$0xff] %vm40, 0.0
    %106 = vst.msk [vmem:[#allocation2 + $0x200] sm:$0xff] %vm40, 0.0
    %107 = vst.msk [vmem:[#allocation2 + $0x208] sm:$0xf] %vm43, 0.0
    %108 = vst.msk [vmem:[#allocation2 + $0x210] sm:$0xff] %vm40, 0.0
    %109 = vst.msk [vmem:[#allocation2 + $0x218] sm:$0xff] %vm40, 0.0
    %110 = vst.msk [vmem:[#allocation2 + $0x220] sm:$0xf] %vm43, 0.0
    %111 = vst.msk [vmem:[#allocation2 + $0x228] sm:$0xff] %vm40, 0.0
    %112 = vst.msk [vmem:[#allocation2 + $0x230] sm:$0xff] %vm40, 0.0
    %113 = vst.msk [vmem:[#allocation2 + $0x238] sm:$0xf] %vm43, 0.0
    %114 = vst.msk [vmem:[#allocation2 + $0x240] sm:$0xff] %vm40, 0.0
    %115 = vst.msk [vmem:[#allocation2 + $0x248] sm:$0xff] %vm40, 0.0
    %116 = vst.msk [vmem:[#allocation2 + $0x250] sm:$0xf] %vm43, 0.0
    %117 = vst.msk [vmem:[#allocation2 + $0x258] sm:$0xff] %vm40, 0.0
    %118 = vst.msk [vmem:[#allocation2 + $0x260] sm:$0xff] %vm40, 0.0
    %119 = vst.msk [vmem:[#allocation2 + $0x268] sm:$0xf] %vm43, 0.0
    %120 = vst.msk [vmem:[#allocation2 + $0x270] sm:$0xff] %vm40, 0.0
    %121 = vst.msk [vmem:[#allocation2 + $0x278] sm:$0xff] %vm40, 0.0
    %122 = vst.msk [vmem:[#allocation2 + $0x280] sm:$0xf] %vm43, 0.0
    %123 = vst.msk [vmem:[#allocation2 + $0x288] sm:$0xff] %vm40, 0.0
    %124 = vst.msk [vmem:[#allocation2 + $0x290] sm:$0xff] %vm40, 0.0
    %125 = vst.msk [vmem:[#allocation2 + $0x298] sm:$0xf] %vm43, 0.0
    %126 = vst.msk [vmem:[#allocation2 + $0x2a0] sm:$0xff] %vm40, 0.0
    %127 = vst.msk [vmem:[#allocation2 + $0x2a8] sm:$0xff] %vm40, 0.0
    %128 = vst.msk [vmem:[#allocation2 + $0x2b0] sm:$0xf] %vm43, 0.0
    %129 = vst.msk [vmem:[#allocation2 + $0x2b8] sm:$0xff] %vm40, 0.0
    %130 = vst.msk [vmem:[#allocation2 + $0x2c0] sm:$0xff] %vm40, 0.0
    %131 = vst.msk [vmem:[#allocation2 + $0x2c8] sm:$0xf] %vm43, 0.0
    %132 = vst.msk [vmem:[#allocation2 + $0x2d0] sm:$0xff] %vm40, 0.0
    %133 = vst.msk [vmem:[#allocation2 + $0x2d8] sm:$0xff] %vm40, 0.0
    %134 = vst.msk [vmem:[#allocation2 + $0x2e0] sm:$0xf] %vm43, 0.0
    %135 = vst.msk [vmem:[#allocation2 + $0x2e8] sm:$0xff] %vm40, 0.0
    %136 = vst.msk [vmem:[#allocation2 + $0x2f0] sm:$0xff] %vm40, 0.0
    %137 = vst.msk [vmem:[#allocation2 + $0x2f8] sm:$0xf] %vm43, 0.0
    %138 = vst.msk [vmem:[#allocation2 + $0x300] sm:$0xff] %vm40, 0.0
    %139 = vst.msk [vmem:[#allocation2 + $0x308] sm:$0xff] %vm40, 0.0
    %140 = vst.msk [vmem:[#allocation2 + $0x310] sm:$0xf] %vm43, 0.0
    %141 = vst.msk [vmem:[#allocation2 + $0x318] sm:$0xff] %vm40, 0.0
    %142 = vst.msk [vmem:[#allocation2 + $0x320] sm:$0xff] %vm40, 0.0
    %143 = vst.msk [vmem:[#allocation2 + $0x328] sm:$0xf] %vm43, 0.0
    %144 = vst.msk [vmem:[#allocation2 + $0x330] sm:$0xff] %vm40, 0.0
    %145 = vst.msk [vmem:[#allocation2 + $0x338] sm:$0xff] %vm40, 0.0
    %146 = vst.msk [vmem:[#allocation2 + $0x340] sm:$0xf] %vm43, 0.0
    %147 = vst.msk [vmem:[#allocation2 + $0x348] sm:$0xff] %vm40, 0.0
    %148 = vst.msk [vmem:[#allocation2 + $0x350] sm:$0xff] %vm40, 0.0
    %149 = vst.msk [vmem:[#allocation2 + $0x358] sm:$0xf] %vm43, 0.0
    %150 = vst.msk [vmem:[#allocation2 + $0x360] sm:$0xff] %vm40, 0.0
    %151 = vst.msk [vmem:[#allocation2 + $0x368] sm:$0xff] %vm40, 0.0
    %152 = vst.msk [vmem:[#allocation2 + $0x370] sm:$0xf] %vm43, 0.0
    %153 = vst.msk [vmem:[#allocation2 + $0x378] sm:$0xff] %vm40, 0.0
    %154 = vst.msk [vmem:[#allocation2 + $0x380] sm:$0xff] %vm40, 0.0
    %155 = vst.msk [vmem:[#allocation2 + $0x388] sm:$0xf] %vm43, 0.0
    %156 = vst.msk [vmem:[#allocation2 + $0x390] sm:$0xff] %vm40, 0.0
    %157 = vst.msk [vmem:[#allocation2 + $0x398] sm:$0xff] %vm40, 0.0
    %158 = vst.msk [vmem:[#allocation2 + $0x3a0] sm:$0xf] %vm43, 0.0
    %159 = vst.msk [vmem:[#allocation2 + $0x3a8] sm:$0xff] %vm40, 0.0
    %160 = vst.msk [vmem:[#allocation2 + $0x3b0] sm:$0xff] %vm40, 0.0
    %161 = vst.msk [vmem:[#allocation2 + $0x3b8] sm:$0xf] %vm43, 0.0
    %v162 = vld [vmem:[%s0] sm:$0xff]
    %v163 = vld [vmem:[%s0 + $0x8] sm:$0xff]
    %v164 = vld [vmem:[%s0 + $0x10] sm:$0xff]
    %v165 = vld [vmem:[%s0 + $0x18] sm:$0xff]
    %v166 = vld [vmem:[%s0 + $0x20] sm:$0xff]
    %v167 = vld [vmem:[%s0 + $0x28] sm:$0xff]
    %v168 = vld [vmem:[%s0 + $0x30] sm:$0xff]
    %v169 = vld [vmem:[%s0 + $0x38] sm:$0xff]
    %v170 = vld [vmem:[%s0 + $0x40] sm:$0xff]
    %v171 = vld [vmem:[%s0 + $0x48] sm:$0xff]
    %v172 = vld [vmem:[%s0 + $0x50] sm:$0xff]
    %v173 = vld [vmem:[%s0 + $0x58] sm:$0xff]
    %v174 = vld [vmem:[%s0 + $0x60] sm:$0xff]
    %v175 = vld [vmem:[%s0 + $0x68] sm:$0xff]
    %v176 = vld [vmem:[%s0 + $0x70] sm:$0xff]
    %v177 = vld [vmem:[%s0 + $0x78] sm:$0xff]
    %v178 = vld [vmem:[%s0 + $0x80] sm:$0xff]
    %v179 = vld [vmem:[%s0 + $0x88] sm:$0xff]
    %v180 = vld [vmem:[%s0 + $0x90] sm:$0xff]
    %v181 = vld [vmem:[%s0 + $0x98] sm:$0xff]
    %v182 = vld [vmem:[%s0 + $0xa0] sm:$0xff]
    %v183 = vld [vmem:[%s0 + $0xa8] sm:$0xff]
    %v184 = vld [vmem:[%s0 + $0xb0] sm:$0xff]
    %v185 = vld [vmem:[%s0 + $0xb8] sm:$0xff]
    %v186 = vld [vmem:[%s0 + $0xc0] sm:$0xff]
    %v187 = vld [vmem:[%s0 + $0xc8] sm:$0xff]
    %v188 = vld [vmem:[%s0 + $0xd0] sm:$0xff]
    %v189 = vld [vmem:[%s0 + $0xd8] sm:$0xff]
    %v190 = vld [vmem:[%s0 + $0xe0] sm:$0xff]
    %v191 = vld [vmem:[%s0 + $0xe8] sm:$0xff]
    %v192 = vld [vmem:[%s0 + $0xf0] sm:$0xff]
    %v193 = vld [vmem:[%s0 + $0xf8] sm:$0xff]
    %v194 = vld [vmem:[%s0 + $0x100] sm:$0xff]
    %v195 = vld [vmem:[%s0 + $0x108] sm:$0xff]
    %v196 = vld [vmem:[%s0 + $0x110] sm:$0xff]
    %v197 = vld [vmem:[%s0 + $0x118] sm:$0xff]
    %v198 = vld [vmem:[%s0 + $0x120] sm:$0xff]
    %v199 = vld [vmem:[%s0 + $0x128] sm:$0xff]
    %v200 = vld [vmem:[%s0 + $0x130] sm:$0xff]
    %v201 = vld [vmem:[%s0 + $0x138] sm:$0xff]
    %v202 = vld [vmem:[%s0 + $0x140] sm:$0xff]
    %v203 = vld [vmem:[%s0 + $0x148] sm:$0xff]
    %v204 = vld [vmem:[%s0 + $0x150] sm:$0xff]
    %v205 = vld [vmem:[%s0 + $0x158] sm:$0xff]
    %v206 = vld [vmem:[%s0 + $0x160] sm:$0xff]
    %v207 = vld [vmem:[%s0 + $0x168] sm:$0xff]
    %v208 = vld [vmem:[%s0 + $0x170] sm:$0xff]
    %v209 = vld [vmem:[%s0 + $0x178] sm:$0xff]
    %v210 = vld [vmem:[%s0 + $0x180] sm:$0xff]
    %v211 = vld [vmem:[%s0 + $0x188] sm:$0xff]
    %v212 = vld [vmem:[%s0 + $0x190] sm:$0xff]
    %v213 = vld [vmem:[%s0 + $0x198] sm:$0xff]
    %v214 = vld [vmem:[%s0 + $0x1a0] sm:$0xff]
    %v215 = vld [vmem:[%s0 + $0x1a8] sm:$0xff]
    %v216 = vld [vmem:[%s0 + $0x1b0] sm:$0xff]
    %v217 = vld [vmem:[%s0 + $0x1b8] sm:$0xff]
    %v218 = vld [vmem:[%s0 + $0x1c0] sm:$0xff]
    %v219 = vld [vmem:[%s0 + $0x1c8] sm:$0xff]
    %v220 = vld [vmem:[%s0 + $0x1d0] sm:$0xff]
    %v221 = vld [vmem:[%s0 + $0x1d8] sm:$0xff]
    %v222 = vld [vmem:[%s0 + $0x1e0] sm:$0xff]
    %v223 = vld [vmem:[%s0 + $0x1e8] sm:$0xff]
    %v224 = vld [vmem:[%s0 + $0x1f0] sm:$0xff]
    %v225 = vld [vmem:[%s0 + $0x1f8] sm:$0xff]
    %s226 = scalar_lea.vmem [#allocation2], 48
    %227 = vst.msk [vmem:[%s226 + $0x2] sm:$0xff] %vm40, %v162
    %228 = vst.msk [vmem:[%s226 + $0xa] sm:$0xff] %vm40, %v163
    %229 = vst.msk [vmem:[%s226 + $0x1a] sm:$0xff] %vm40, %v164
    %230 = vst.msk [vmem:[%s226 + $0x22] sm:$0xff] %vm40, %v165
    %231 = vst.msk [vmem:[%s226 + $0x32] sm:$0xff] %vm40, %v166
    %232 = vst.msk [vmem:[%s226 + $0x3a] sm:$0xff] %vm40, %v167
    %233 = vst.msk [vmem:[%s226 + $0x4a] sm:$0xff] %vm40, %v168
    %234 = vst.msk [vmem:[%s226 + $0x52] sm:$0xff] %vm40, %v169
    %235 = vst.msk [vmem:[%s226 + $0x62] sm:$0xff] %vm40, %v170
    %236 = vst.msk [vmem:[%s226 + $0x6a] sm:$0xff] %vm40, %v171
    %237 = vst.msk [vmem:[%s226 + $0x7a] sm:$0xff] %vm40, %v172
    %238 = vst.msk [vmem:[%s226 + $0x82] sm:$0xff] %vm40, %v173
    %239 = vst.msk [vmem:[%s226 + $0x92] sm:$0xff] %vm40, %v174
    %240 = vst.msk [vmem:[%s226 + $0x9a] sm:$0xff] %vm40, %v175
    %241 = vst.msk [vmem:[%s226 + $0xaa] sm:$0xff] %vm40, %v176
    %242 = vst.msk [vmem:[%s226 + $0xb2] sm:$0xff] %vm40, %v177
    %243 = vst.msk [vmem:[%s226 + $0xc2] sm:$0xff] %vm40, %v178
    %244 = vst.msk [vmem:[%s226 + $0xca] sm:$0xff] %vm40, %v179
    %245 = vst.msk [vmem:[%s226 + $0xda] sm:$0xff] %vm40, %v180
    %246 = vst.msk [vmem:[%s226 + $0xe2] sm:$0xff] %vm40, %v181
    %247 = vst.msk [vmem:[%s226 + $0xf2] sm:$0xff] %vm40, %v182
    %248 = vst.msk [vmem:[%s226 + $0xfa] sm:$0xff] %vm40, %v183
    %249 = vst.msk [vmem:[%s226 + $0x10a] sm:$0xff] %vm40, %v184
    %250 = vst.msk [vmem:[%s226 + $0x112] sm:$0xff] %vm40, %v185
    %251 = vst.msk [vmem:[%s226 + $0x122] sm:$0xff] %vm40, %v186
    %252 = vst.msk [vmem:[%s226 + $0x12a] sm:$0xff] %vm40, %v187
    %253 = vst.msk [vmem:[%s226 + $0x13a] sm:$0xff] %vm40, %v188
    %254 = vst.msk [vmem:[%s226 + $0x142] sm:$0xff] %vm40, %v189
    %255 = vst.msk [vmem:[%s226 + $0x152] sm:$0xff] %vm40, %v190
    %256 = vst.msk [vmem:[%s226 + $0x15a] sm:$0xff] %vm40, %v191
    %257 = vst.msk [vmem:[%s226 + $0x16a] sm:$0xff] %vm40, %v192
    %258 = vst.msk [vmem:[%s226 + $0x172] sm:$0xff] %vm40, %v193
    %259 = vst.msk [vmem:[%s226 + $0x1e2] sm:$0xff] %vm40, %v194
    %260 = vst.msk [vmem:[%s226 + $0x1ea] sm:$0xff] %vm40, %v195
    %261 = vst.msk [vmem:[%s226 + $0x1fa] sm:$0xff] %vm40, %v196
    %262 = vst.msk [vmem:[%s226 + $0x202] sm:$0xff] %vm40, %v197
    %263 = vst.msk [vmem:[%s226 + $0x212] sm:$0xff] %vm40, %v198
    %264 = vst.msk [vmem:[%s226 + $0x21a] sm:$0xff] %vm40, %v199
    %265 = vst.msk [vmem:[%s226 + $0x22a] sm:$0xff] %vm40, %v200
    %266 = vst.msk [vmem:[%s226 + $0x232] sm:$0xff] %vm40, %v201
    %267 = vst.msk [vmem:[%s226 + $0x242] sm:$0xff] %vm40, %v202
    %268 = vst.msk [vmem:[%s226 + $0x24a] sm:$0xff] %vm40, %v203
    %269 = vst.msk [vmem:[%s226 + $0x25a] sm:$0xff] %vm40, %v204
    %270 = vst.msk [vmem:[%s226 + $0x262] sm:$0xff] %vm40, %v205
    %271 = vst.msk [vmem:[%s226 + $0x272] sm:$0xff] %vm40, %v206
    %272 = vst.msk [vmem:[%s226 + $0x27a] sm:$0xff] %vm40, %v207
    %273 = vst.msk [vmem:[%s226 + $0x28a] sm:$0xff] %vm40, %v208
    %274 = vst.msk [vmem:[%s226 + $0x292] sm:$0xff] %vm40, %v209
    %275 = vst.msk [vmem:[%s226 + $0x2a2] sm:$0xff] %vm40, %v210
    %276 = vst.msk [vmem:[%s226 + $0x2aa] sm:$0xff] %vm40, %v211
    %277 = vst.msk [vmem:[%s226 + $0x2ba] sm:$0xff] %vm40, %v212
    %278 = vst.msk [vmem:[%s226 + $0x2c2] sm:$0xff] %vm40, %v213
    %279 = vst.msk [vmem:[%s226 + $0x2d2] sm:$0xff] %vm40, %v214
    %280 = vst.msk [vmem:[%s226 + $0x2da] sm:$0xff] %vm40, %v215
    %281 = vst.msk [vmem:[%s226 + $0x2ea] sm:$0xff] %vm40, %v216
    %282 = vst.msk [vmem:[%s226 + $0x2f2] sm:$0xff] %vm40, %v217
    %283 = vst.msk [vmem:[%s226 + $0x302] sm:$0xff] %vm40, %v218
    %284 = vst.msk [vmem:[%s226 + $0x30a] sm:$0xff] %vm40, %v219
    %285 = vst.msk [vmem:[%s226 + $0x31a] sm:$0xff] %vm40, %v220
    %286 = vst.msk [vmem:[%s226 + $0x322] sm:$0xff] %vm40, %v221
    %287 = vst.msk [vmem:[%s226 + $0x332] sm:$0xff] %vm40, %v222
    %288 = vst.msk [vmem:[%s226 + $0x33a] sm:$0xff] %vm40, %v223
    %289 = vst.msk [vmem:[%s226 + $0x34a] sm:$0xff] %vm40, %v224
    %290 = vst.msk [vmem:[%s226 + $0x352] sm:$0xff] %vm40, %v225
    %v291 = vld [vmem:[#allocation2] sm:$0xff]
    %v292 = vld [vmem:[#allocation2 + $0x8] sm:$0xff]
    %v293 = vld [vmem:[#allocation2 + $0x18] sm:$0xff]
    %v294 = vld [vmem:[#allocation2 + $0x20] sm:$0xff]
    %v295 = vld [vmem:[#allocation2 + $0x30] sm:$0xff]
    %v296 = vld [vmem:[#allocation2 + $0x38] sm:$0xff]
    %v297 = vld [vmem:[#allocation2 + $0x48] sm:$0xff]
    %v298 = vld [vmem:[#allocation2 + $0x50] sm:$0xff]
    %v299 = vld [vmem:[#allocation2 + $0x60] sm:$0xff]
    %v300 = vld [vmem:[#allocation2 + $0x68] sm:$0xff]
    %v301 = vld [vmem:[#allocation2 + $0x78] sm:$0xff]
    %v302 = vld [vmem:[#allocation2 + $0x80] sm:$0xff]
    %v303 = vld [vmem:[#allocation2 + $0x90] sm:$0xff]
    %v304 = vld [vmem:[#allocation2 + $0x98] sm:$0xff]
    %v305 = vld [vmem:[#allocation2 + $0xa8] sm:$0xff]
    %v306 = vld [vmem:[#allocation2 + $0xb0] sm:$0xff]
    %v307 = vld [vmem:[#allocation2 + $0xc0] sm:$0xff]
    %v308 = vld [vmem:[#allocation2 + $0xc8] sm:$0xff]
    %v309 = vld [vmem:[#allocation2 + $0xd8] sm:$0xff]
    %v310 = vld [vmem:[#allocation2 + $0xe0] sm:$0xff]
    %v311 = vld [vmem:[#allocation2 + $0xf0] sm:$0xff]
    %v312 = vld [vmem:[#allocation2 + $0xf8] sm:$0xff]
    %v313 = vld [vmem:[#allocation2 + $0x108] sm:$0xff]
    %v314 = vld [vmem:[#allocation2 + $0x110] sm:$0xff]
    %v315 = vld [vmem:[#allocation2 + $0x120] sm:$0xff]
    %v316 = vld [vmem:[#allocation2 + $0x128] sm:$0xff]
    %v317 = vld [vmem:[#allocation2 + $0x138] sm:$0xff]
    %v318 = vld [vmem:[#allocation2 + $0x140] sm:$0xff]
    %v319 = vld [vmem:[#allocation2 + $0x150] sm:$0xff]
    %v320 = vld [vmem:[#allocation2 + $0x158] sm:$0xff]
    %v321 = vld [vmem:[#allocation2 + $0x168] sm:$0xff]
    %v322 = vld [vmem:[#allocation2 + $0x170] sm:$0xff]
    %v323 = vld [vmem:[#allocation2 + $0x1e0] sm:$0xff]
    %v324 = vld [vmem:[#allocation2 + $0x1e8] sm:$0xff]
    %v325 = vld [vmem:[#allocation2 + $0x1f8] sm:$0xff]
    %v326 = vld [vmem:[#allocation2 + $0x200] sm:$0xff]
    %v327 = vld [vmem:[#allocation2 + $0x210] sm:$0xff]
    %v328 = vld [vmem:[#allocation2 + $0x218] sm:$0xff]
    %v329 = vld [vmem:[#allocation2 + $0x228] sm:$0xff]
    %v330 = vld [vmem:[#allocation2 + $0x230] sm:$0xff]
    %v331 = vld [vmem:[#allocation2 + $0x240] sm:$0xff]
    %v332 = vld [vmem:[#allocation2 + $0x248] sm:$0xff]
    %v333 = vld [vmem:[#allocation2 + $0x258] sm:$0xff]
    %v334 = vld [vmem:[#allocation2 + $0x260] sm:$0xff]
    %v335 = vld [vmem:[#allocation2 + $0x270] sm:$0xff]
    %v336 = vld [vmem:[#allocation2 + $0x278] sm:$0xff]
    %v337 = vld [vmem:[#allocation2 + $0x288] sm:$0xff]
    %v338 = vld [vmem:[#allocation2 + $0x290] sm:$0xff]
    %v339 = vld [vmem:[#allocation2 + $0x2a0] sm:$0xff]
    %v340 = vld [vmem:[#allocation2 + $0x2a8] sm:$0xff]
    %v341 = vld [vmem:[#allocation2 + $0x2b8] sm:$0xff]
    %v342 = vld [vmem:[#allocation2 + $0x2c0] sm:$0xff]
    %v343 = vld [vmem:[#allocation2 + $0x2d0] sm:$0xff]
    %v344 = vld [vmem:[#allocation2 + $0x2d8] sm:$0xff]
    %v345 = vld [vmem:[#allocation2 + $0x2e8] sm:$0xff]
    %v346 = vld [vmem:[#allocation2 + $0x2f0] sm:$0xff]
    %v347 = vld [vmem:[#allocation2 + $0x300] sm:$0xff]
    %v348 = vld [vmem:[#allocation2 + $0x308] sm:$0xff]
    %v349 = vld [vmem:[#allocation2 + $0x318] sm:$0xff]
    %v350 = vld [vmem:[#allocation2 + $0x320] sm:$0xff]
    %v351 = vld [vmem:[#allocation2 + $0x330] sm:$0xff]
    %v352 = vld [vmem:[#allocation2 + $0x338] sm:$0xff]
    %v353 = vld [vmem:[#allocation2 + $0x348] sm:$0xff]
    %v354 = vld [vmem:[#allocation2 + $0x350] sm:$0xff]
    %v355 = vld [vmem:[#allocation2 + $0x1] sm:$0xff]
    %v356 = vld [vmem:[#allocation2 + $0x9] sm:$0xff]
    %v357 = vld [vmem:[#allocation2 + $0x19] sm:$0xff]
    %v358 = vld [vmem:[#allocation2 + $0x21] sm:$0xff]
    %v359 = vld [vmem:[#allocation2 + $0x31] sm:$0xff]
    %v360 = vld [vmem:[#allocation2 + $0x39] sm:$0xff]
    %v361 = vld [vmem:[#allocation2 + $0x49] sm:$0xff]
    %v362 = vld [vmem:[#allocation2 + $0x51] sm:$0xff]
    %v363 = vld [vmem:[#allocation2 + $0x61] sm:$0xff]
    %v364 = vld [vmem:[#allocation2 + $0x69] sm:$0xff]
    %v365 = vld [vmem:[#allocation2 + $0x79] sm:$0xff]
    %v366 = vld [vmem:[#allocation2 + $0x81] sm:$0xff]
    %v367 = vld [vmem:[#allocation2 + $0x91] sm:$0xff]
    %v368 = vld [vmem:[#allocation2 + $0x99] sm:$0xff]
    %v369 = vld [vmem:[#allocation2 + $0xa9] sm:$0xff]
    %v370 = vld [vmem:[#allocation2 + $0xb1] sm:$0xff]
    %v371 = vld [vmem:[#allocation2 + $0xc1] sm:$0xff]
    %v372 = vld [vmem:[#allocation2 + $0xc9] sm:$0xff]
    %v373 = vld [vmem:[#allocation2 + $0xd9] sm:$0xff]
    %v374 = vld [vmem:[#allocation2 + $0xe1] sm:$0xff]
    %v375 = vld [vmem:[#allocation2 + $0xf1] sm:$0xff]
    %v376 = vld [vmem:[#allocation2 + $0xf9] sm:$0xff]
    %v377 = vld [vmem:[#allocation2 + $0x109] sm:$0xff]
    %v378 = vld [vmem:[#allocation2 + $0x111] sm:$0xff]
    %v379 = vld [vmem:[#allocation2 + $0x121] sm:$0xff]
    %v380 = vld [vmem:[#allocation2 + $0x129] sm:$0xff]
    %v381 = vld [vmem:[#allocation2 + $0x139] sm:$0xff]
    %v382 = vld [vmem:[#allocation2 + $0x141] sm:$0xff]
    %v383 = vld [vmem:[#allocation2 + $0x151] sm:$0xff]
    %v384 = vld [vmem:[#allocation2 + $0x159] sm:$0xff]
    %v385 = vld [vmem:[#allocation2 + $0x169] sm:$0xff]
    %v386 = vld [vmem:[#allocation2 + $0x171] sm:$0xff]
    %v387 = vld [vmem:[#allocation2 + $0x1e1] sm:$0xff]
    %v388 = vld [vmem:[#allocation2 + $0x1e9] sm:$0xff]
    %v389 = vld [vmem:[#allocation2 + $0x1f9] sm:$0xff]
    %v390 = vld [vmem:[#allocation2 + $0x201] sm:$0xff]
    %v391 = vld [vmem:[#allocation2 + $0x211] sm:$0xff]
    %v392 = vld [vmem:[#allocation2 + $0x219] sm:$0xff]
    %v393 = vld [vmem:[#allocation2 + $0x229] sm:$0xff]
    %v394 = vld [vmem:[#allocation2 + $0x231] sm:$0xff]
    %v395 = vld [vmem:[#allocation2 + $0x241] sm:$0xff]
    %v396 = vld [vmem:[#allocation2 + $0x249] sm:$0xff]
    %v397 = vld [vmem:[#allocation2 + $0x259] sm:$0xff]
    %v398 = vld [vmem:[#allocation2 + $0x261] sm:$0xff]
    %v399 = vld [vmem:[#allocation2 + $0x271] sm:$0xff]
    %v400 = vld [vmem:[#allocation2 + $0x279] sm:$0xff]
    %v401 = vld [vmem:[#allocation2 + $0x289] sm:$0xff]
    %v402 = vld [vmem:[#allocation2 + $0x291] sm:$0xff]
    %v403 = vld [vmem:[#allocation2 + $0x2a1] sm:$0xff]
    %v404 = vld [vmem:[#allocation2 + $0x2a9] sm:$0xff]
    %v405 = vld [vmem:[#allocation2 + $0x2b9] sm:$0xff]
    %v406 = vld [vmem:[#allocation2 + $0x2c1] sm:$0xff]
    %v407 = vld [vmem:[#allocation2 + $0x2d1] sm:$0xff]
    %v408 = vld [vmem:[#allocation2 + $0x2d9] sm:$0xff]
    %v409 = vld [vmem:[#allocation2 + $0x2e9] sm:$0xff]
    %v410 = vld [vmem:[#allocation2 + $0x2f1] sm:$0xff]
    %v411 = vld [vmem:[#allocation2 + $0x301] sm:$0xff]
    %v412 = vld [vmem:[#allocation2 + $0x309] sm:$0xff]
    %v413 = vld [vmem:[#allocation2 + $0x319] sm:$0xff]
    %v414 = vld [vmem:[#allocation2 + $0x321] sm:$0xff]
    %v415 = vld [vmem:[#allocation2 + $0x331] sm:$0xff]
    %v416 = vld [vmem:[#allocation2 + $0x339] sm:$0xff]
    %v417 = vld [vmem:[#allocation2 + $0x349] sm:$0xff]
    %v418 = vld [vmem:[#allocation2 + $0x351] sm:$0xff]
    %v419 = vld [vmem:[#allocation2 + $0x2] sm:$0xff]
    %v420 = vld [vmem:[#allocation2 + $0xa] sm:$0xff]
    %v421 = vld [vmem:[#allocation2 + $0x1a] sm:$0xff]
    %v422 = vld [vmem:[#allocation2 + $0x22] sm:$0xff]
    %v423 = vld [vmem:[#allocation2 + $0x32] sm:$0xff]
    %v424 = vld [vmem:[#allocation2 + $0x3a] sm:$0xff]
    %v425 = vld [vmem:[#allocation2 + $0x4a] sm:$0xff]
    %v426 = vld [vmem:[#allocation2 + $0x52] sm:$0xff]
    %v427 = vld [vmem:[#allocation2 + $0x62] sm:$0xff]
    %v428 = vld [vmem:[#allocation2 + $0x6a] sm:$0xff]
    %v429 = vld [vmem:[#allocation2 + $0x7a] sm:$0xff]
    %v430 = vld [vmem:[#allocation2 + $0x82] sm:$0xff]
    %v431 = vld [vmem:[#allocation2 + $0x92] sm:$0xff]
    %v432 = vld [vmem:[#allocation2 + $0x9a] sm:$0xff]
    %v433 = vld [vmem:[#allocation2 + $0xaa] sm:$0xff]
    %v434 = vld [vmem:[#allocation2 + $0xb2] sm:$0xff]
    %v435 = vld [vmem:[#allocation2 + $0xc2] sm:$0xff]
    %v436 = vld [vmem:[#allocation2 + $0xca] sm:$0xff]
    %v437 = vld [vmem:[#allocation2 + $0xda] sm:$0xff]
    %v438 = vld [vmem:[#allocation2 + $0xe2] sm:$0xff]
    %v439 = vld [vmem:[#allocation2 + $0xf2] sm:$0xff]
    %v440 = vld [vmem:[#allocation2 + $0xfa] sm:$0xff]
    %v441 = vld [vmem:[#allocation2 + $0x10a] sm:$0xff]
    %v442 = vld [vmem:[#allocation2 + $0x112] sm:$0xff]
    %v443 = vld [vmem:[#allocation2 + $0x122] sm:$0xff]
    %v444 = vld [vmem:[#allocation2 + $0x12a] sm:$0xff]
    %v445 = vld [vmem:[#allocation2 + $0x13a] sm:$0xff]
    %v446 = vld [vmem:[#allocation2 + $0x142] sm:$0xff]
    %v447 = vld [vmem:[#allocation2 + $0x152] sm:$0xff]
    %v448 = vld [vmem:[#allocation2 + $0x15a] sm:$0xff]
    %v449 = vld [vmem:[#allocation2 + $0x16a] sm:$0xff]
    %v450 = vld [vmem:[#allocation2 + $0x172] sm:$0xff]
    %v451 = vld [vmem:[#allocation2 + $0x1e2] sm:$0xff]
    %v452 = vld [vmem:[#allocation2 + $0x1ea] sm:$0xff]
    %v453 = vld [vmem:[#allocation2 + $0x1fa] sm:$0xff]
    %v454 = vld [vmem:[#allocation2 + $0x202] sm:$0xff]
    %v455 = vld [vmem:[#allocation2 + $0x212] sm:$0xff]
    %v456 = vld [vmem:[#allocation2 + $0x21a] sm:$0xff]
    %v457 = vld [vmem:[#allocation2 + $0x22a] sm:$0xff]
    %v458 = vld [vmem:[#allocation2 + $0x232] sm:$0xff]
    %v459 = vld [vmem:[#allocation2 + $0x242] sm:$0xff]
    %v460 = vld [vmem:[#allocation2 + $0x24a] sm:$0xff]
    %v461 = vld [vmem:[#allocation2 + $0x25a] sm:$0xff]
    %v462 = vld [vmem:[#allocation2 + $0x262] sm:$0xff]
    %v463 = vld [vmem:[#allocation2 + $0x272] sm:$0xff]
    %v464 = vld [vmem:[#allocation2 + $0x27a] sm:$0xff]
    %v465 = vld [vmem:[#allocation2 + $0x28a] sm:$0xff]
    %v466 = vld [vmem:[#allocation2 + $0x292] sm:$0xff]
    %v467 = vld [vmem:[#allocation2 + $0x2a2] sm:$0xff]
    %v468 = vld [vmem:[#allocation2 + $0x2aa] sm:$0xff]
    %v469 = vld [vmem:[#allocation2 + $0x2ba] sm:$0xff]
    %v470 = vld [vmem:[#allocation2 + $0x2c2] sm:$0xff]
    %v471 = vld [vmem:[#allocation2 + $0x2d2] sm:$0xff]
    %v472 = vld [vmem:[#allocation2 + $0x2da] sm:$0xff]
    %v473 = vld [vmem:[#allocation2 + $0x2ea] sm:$0xff]
    %v474 = vld [vmem:[#allocation2 + $0x2f2] sm:$0xff]
    %v475 = vld [vmem:[#allocation2 + $0x302] sm:$0xff]
    %v476 = vld [vmem:[#allocation2 + $0x30a] sm:$0xff]
    %v477 = vld [vmem:[#allocation2 + $0x31a] sm:$0xff]
    %v478 = vld [vmem:[#allocation2 + $0x322] sm:$0xff]
    %v479 = vld [vmem:[#allocation2 + $0x332] sm:$0xff]
    %v480 = vld [vmem:[#allocation2 + $0x33a] sm:$0xff]
    %v481 = vld [vmem:[#allocation2 + $0x34a] sm:$0xff]
    %v482 = vld [vmem:[#allocation2 + $0x352] sm:$0xff]
    %v483 = vld [vmem:[#allocation2 + $0x3] sm:$0xff]
    %v484 = vld [vmem:[#allocation2 + $0xb] sm:$0xff]
    %v485 = vld [vmem:[#allocation2 + $0x1b] sm:$0xff]
    %v486 = vld [vmem:[#allocation2 + $0x23] sm:$0xff]
    %v487 = vld [vmem:[#allocation2 + $0x33] sm:$0xff]
    %v488 = vld [vmem:[#allocation2 + $0x3b] sm:$0xff]
    %v489 = vld [vmem:[#allocation2 + $0x4b] sm:$0xff]
    %v490 = vld [vmem:[#allocation2 + $0x53] sm:$0xff]
    %v491 = vld [vmem:[#allocation2 + $0x63] sm:$0xff]
    %v492 = vld [vmem:[#allocation2 + $0x6b] sm:$0xff]
    %v493 = vld [vmem:[#allocation2 + $0x7b] sm:$0xff]
    %v494 = vld [vmem:[#allocation2 + $0x83] sm:$0xff]
    %v495 = vld [vmem:[#allocation2 + $0x93] sm:$0xff]
    %v496 = vld [vmem:[#allocation2 + $0x9b] sm:$0xff]
    %v497 = vld [vmem:[#allocation2 + $0xab] sm:$0xff]
    %v498 = vld [vmem:[#allocation2 + $0xb3] sm:$0xff]
    %v499 = vld [vmem:[#allocation2 + $0xc3] sm:$0xff]
    %v500 = vld [vmem:[#allocation2 + $0xcb] sm:$0xff]
    %v501 = vld [vmem:[#allocation2 + $0xdb] sm:$0xff]
    %v502 = vld [vmem:[#allocation2 + $0xe3] sm:$0xff]
    %v503 = vld [vmem:[#allocation2 + $0xf3] sm:$0xff]
    %v504 = vld [vmem:[#allocation2 + $0xfb] sm:$0xff]
    %v505 = vld [vmem:[#allocation2 + $0x10b] sm:$0xff]
    %v506 = vld [vmem:[#allocation2 + $0x113] sm:$0xff]
    %v507 = vld [vmem:[#allocation2 + $0x123] sm:$0xff]
    %v508 = vld [vmem:[#allocation2 + $0x12b] sm:$0xff]
    %v509 = vld [vmem:[#allocation2 + $0x13b] sm:$0xff]
    %v510 = vld [vmem:[#allocation2 + $0x143] sm:$0xff]
    %v511 = vld [vmem:[#allocation2 + $0x153] sm:$0xff]
    %v512 = vld [vmem:[#allocation2 + $0x15b] sm:$0xff]
    %v513 = vld [vmem:[#allocation2 + $0x16b] sm:$0xff]
    %v514 = vld [vmem:[#allocation2 + $0x173] sm:$0xff]
    %v515 = vld [vmem:[#allocation2 + $0x1e3] sm:$0xff]
    %v516 = vld [vmem:[#allocation2 + $0x1eb] sm:$0xff]
    %v517 = vld [vmem:[#allocation2 + $0x1fb] sm:$0xff]
    %v518 = vld [vmem:[#allocation2 + $0x203] sm:$0xff]
    %v519 = vld [vmem:[#allocation2 + $0x213] sm:$0xff]
    %v520 = vld [vmem:[#allocation2 + $0x21b] sm:$0xff]
    %v521 = vld [vmem:[#allocation2 + $0x22b] sm:$0xff]
    %v522 = vld [vmem:[#allocation2 + $0x233] sm:$0xff]
    %v523 = vld [vmem:[#allocation2 + $0x243] sm:$0xff]
    %v524 = vld [vmem:[#allocation2 + $0x24b] sm:$0xff]
    %v525 = vld [vmem:[#allocation2 + $0x25b] sm:$0xff]
    %v526 = vld [vmem:[#allocation2 + $0x263] sm:$0xff]
    %v527 = vld [vmem:[#allocation2 + $0x273] sm:$0xff]
    %v528 = vld [vmem:[#allocation2 + $0x27b] sm:$0xff]
    %v529 = vld [vmem:[#allocation2 + $0x28b] sm:$0xff]
    %v530 = vld [vmem:[#allocation2 + $0x293] sm:$0xff]
    %v531 = vld [vmem:[#allocation2 + $0x2a3] sm:$0xff]
    %v532 = vld [vmem:[#allocation2 + $0x2ab] sm:$0xff]
    %v533 = vld [vmem:[#allocation2 + $0x2bb] sm:$0xff]
    %v534 = vld [vmem:[#allocation2 + $0x2c3] sm:$0xff]
    %v535 = vld [vmem:[#allocation2 + $0x2d3] sm:$0xff]
    %v536 = vld [vmem:[#allocation2 + $0x2db] sm:$0xff]
    %v537 = vld [vmem:[#allocation2 + $0x2eb] sm:$0xff]
    %v538 = vld [vmem:[#allocation2 + $0x2f3] sm:$0xff]
    %v539 = vld [vmem:[#allocation2 + $0x303] sm:$0xff]
    %v540 = vld [vmem:[#allocation2 + $0x30b] sm:$0xff]
    %v541 = vld [vmem:[#allocation2 + $0x31b] sm:$0xff]
    %v542 = vld [vmem:[#allocation2 + $0x323] sm:$0xff]
    %v543 = vld [vmem:[#allocation2 + $0x333] sm:$0xff]
    %v544 = vld [vmem:[#allocation2 + $0x33b] sm:$0xff]
    %v545 = vld [vmem:[#allocation2 + $0x34b] sm:$0xff]
    %v546 = vld [vmem:[#allocation2 + $0x353] sm:$0xff]
    %v547 = vld [vmem:[#allocation2 + $0x4] sm:$0xff]
    %v548 = vld [vmem:[#allocation2 + $0xc] sm:$0xff]
    %v549 = vld [vmem:[#allocation2 + $0x1c] sm:$0xff]
    %v550 = vld [vmem:[#allocation2 + $0x24] sm:$0xff]
    %v551 = vld [vmem:[#allocation2 + $0x34] sm:$0xff]
    %v552 = vld [vmem:[#allocation2 + $0x3c] sm:$0xff]
    %v553 = vld [vmem:[#allocation2 + $0x4c] sm:$0xff]
    %v554 = vld [vmem:[#allocation2 + $0x54] sm:$0xff]
    %v555 = vld [vmem:[#allocation2 + $0x64] sm:$0xff]
    %v556 = vld [vmem:[#allocation2 + $0x6c] sm:$0xff]
    %v557 = vld [vmem:[#allocation2 + $0x7c] sm:$0xff]
    %v558 = vld [vmem:[#allocation2 + $0x84] sm:$0xff]
    %v559 = vld [vmem:[#allocation2 + $0x94] sm:$0xff]
    %v560 = vld [vmem:[#allocation2 + $0x9c] sm:$0xff]
    %v561 = vld [vmem:[#allocation2 + $0xac] sm:$0xff]
    %v562 = vld [vmem:[#allocation2 + $0xb4] sm:$0xff]
    %v563 = vld [vmem:[#allocation2 + $0xc4] sm:$0xff]
    %v564 = vld [vmem:[#allocation2 + $0xcc] sm:$0xff]
    %v565 = vld [vmem:[#allocation2 + $0xdc] sm:$0xff]
    %v566 = vld [vmem:[#allocation2 + $0xe4] sm:$0xff]
    %v567 = vld [vmem:[#allocation2 + $0xf4] sm:$0xff]
    %v568 = vld [vmem:[#allocation2 + $0xfc] sm:$0xff]
    %v569 = vld [vmem:[#allocation2 + $0x10c] sm:$0xff]
    %v570 = vld [vmem:[#allocation2 + $0x114] sm:$0xff]
    %v571 = vld [vmem:[#allocation2 + $0x124] sm:$0xff]
    %v572 = vld [vmem:[#allocation2 + $0x12c] sm:$0xff]
    %v573 = vld [vmem:[#allocation2 + $0x13c] sm:$0xff]
    %v574 = vld [vmem:[#allocation2 + $0x144] sm:$0xff]
    %v575 = vld [vmem:[#allocation2 + $0x154] sm:$0xff]
    %v576 = vld [vmem:[#allocation2 + $0x15c] sm:$0xff]
    %v577 = vld [vmem:[#allocation2 + $0x16c] sm:$0xff]
    %v578 = vld [vmem:[#allocation2 + $0x174] sm:$0xff]
    %v579 = vld [vmem:[#allocation2 + $0x1e4] sm:$0xff]
    %v580 = vld [vmem:[#allocation2 + $0x1ec] sm:$0xff]
    %v581 = vld [vmem:[#allocation2 + $0x1fc] sm:$0xff]
    %v582 = vld [vmem:[#allocation2 + $0x204] sm:$0xff]
    %v583 = vld [vmem:[#allocation2 + $0x214] sm:$0xff]
    %v584 = vld [vmem:[#allocation2 + $0x21c] sm:$0xff]
    %v585 = vld [vmem:[#allocation2 + $0x22c] sm:$0xff]
    %v586 = vld [vmem:[#allocation2 + $0x234] sm:$0xff]
    %v587 = vld [vmem:[#allocation2 + $0x244] sm:$0xff]
    %v588 = vld [vmem:[#allocation2 + $0x24c] sm:$0xff]
    %v589 = vld [vmem:[#allocation2 + $0x25c] sm:$0xff]
    %v590 = vld [vmem:[#allocation2 + $0x264] sm:$0xff]
    %v591 = vld [vmem:[#allocation2 + $0x274] sm:$0xff]
    %v592 = vld [vmem:[#allocation2 + $0x27c] sm:$0xff]
    %v593 = vld [vmem:[#allocation2 + $0x28c] sm:$0xff]
    %v594 = vld [vmem:[#allocation2 + $0x294] sm:$0xff]
    %v595 = vld [vmem:[#allocation2 + $0x2a4] sm:$0xff]
    %v596 = vld [vmem:[#allocation2 + $0x2ac] sm:$0xff]
    %v597 = vld [vmem:[#allocation2 + $0x2bc] sm:$0xff]
    %v598 = vld [vmem:[#allocation2 + $0x2c4] sm:$0xff]
    %v599 = vld [vmem:[#allocation2 + $0x2d4] sm:$0xff]
    %v600 = vld [vmem:[#allocation2 + $0x2dc] sm:$0xff]
    %v601 = vld [vmem:[#allocation2 + $0x2ec] sm:$0xff]
    %v602 = vld [vmem:[#allocation2 + $0x2f4] sm:$0xff]
    %v603 = vld [vmem:[#allocation2 + $0x304] sm:$0xff]
    %v604 = vld [vmem:[#allocation2 + $0x30c] sm:$0xff]
    %v605 = vld [vmem:[#allocation2 + $0x31c] sm:$0xff]
    %v606 = vld [vmem:[#allocation2 + $0x324] sm:$0xff]
    %v607 = vld [vmem:[#allocation2 + $0x334] sm:$0xff]
    %v608 = vld [vmem:[#allocation2 + $0x33c] sm:$0xff]
    %v609 = vld [vmem:[#allocation2 + $0x34c] sm:$0xff]
    %v610 = vld [vmem:[#allocation2 + $0x354] sm:$0xff]
    %s611 = scalar_lea.vmem [#allocation2], 24
    %v612 = vld [vmem:[%s611] sm:$0xff]
    %v613 = vld [vmem:[%s611 + $0x8] sm:$0xff]
    %v614 = vld [vmem:[%s611 + $0x18] sm:$0xff]
    %v615 = vld [vmem:[%s611 + $0x20] sm:$0xff]
    %v616 = vld [vmem:[%s611 + $0x30] sm:$0xff]
    %v617 = vld [vmem:[%s611 + $0x38] sm:$0xff]
    %v618 = vld [vmem:[%s611 + $0x48] sm:$0xff]
    %v619 = vld [vmem:[%s611 + $0x50] sm:$0xff]
    %v620 = vld [vmem:[%s611 + $0x60] sm:$0xff]
    %v621 = vld [vmem:[%s611 + $0x68] sm:$0xff]
    %v622 = vld [vmem:[%s611 + $0x78] sm:$0xff]
    %v623 = vld [vmem:[%s611 + $0x80] sm:$0xff]
    %v624 = vld [vmem:[%s611 + $0x90] sm:$0xff]
    %v625 = vld [vmem:[%s611 + $0x98] sm:$0xff]
    %v626 = vld [vmem:[%s611 + $0xa8] sm:$0xff]
    %v627 = vld [vmem:[%s611 + $0xb0] sm:$0xff]
    %v628 = vld [vmem:[%s611 + $0xc0] sm:$0xff]
    %v629 = vld [vmem:[%s611 + $0xc8] sm:$0xff]
    %v630 = vld [vmem:[%s611 + $0xd8] sm:$0xff]
    %v631 = vld [vmem:[%s611 + $0xe0] sm:$0xff]
    %v632 = vld [vmem:[%s611 + $0xf0] sm:$0xff]
    %v633 = vld [vmem:[%s611 + $0xf8] sm:$0xff]
    %v634 = vld [vmem:[%s611 + $0x108] sm:$0xff]
    %v635 = vld [vmem:[%s611 + $0x110] sm:$0xff]
    %v636 = vld [vmem:[%s611 + $0x120] sm:$0xff]
    %v637 = vld [vmem:[%s611 + $0x128] sm:$0xff]
    %v638 = vld [vmem:[%s611 + $0x138] sm:$0xff]
    %v639 = vld [vmem:[%s611 + $0x140] sm:$0xff]
    %v640 = vld [vmem:[%s611 + $0x150] sm:$0xff]
    %v641 = vld [vmem:[%s611 + $0x158] sm:$0xff]
    %v642 = vld [vmem:[%s611 + $0x168] sm:$0xff]
    %v643 = vld [vmem:[%s611 + $0x170] sm:$0xff]
    %v644 = vld [vmem:[%s611 + $0x1e0] sm:$0xff]
    %v645 = vld [vmem:[%s611 + $0x1e8] sm:$0xff]
    %v646 = vld [vmem:[%s611 + $0x1f8] sm:$0xff]
    %v647 = vld [vmem:[%s611 + $0x200] sm:$0xff]
    %v648 = vld [vmem:[%s611 + $0x210] sm:$0xff]
    %v649 = vld [vmem:[%s611 + $0x218] sm:$0xff]
    %v650 = vld [vmem:[%s611 + $0x228] sm:$0xff]
    %v651 = vld [vmem:[%s611 + $0x230] sm:$0xff]
    %v652 = vld [vmem:[%s611 + $0x240] sm:$0xff]
    %v653 = vld [vmem:[%s611 + $0x248] sm:$0xff]
    %v654 = vld [vmem:[%s611 + $0x258] sm:$0xff]
    %v655 = vld [vmem:[%s611 + $0x260] sm:$0xff]
    %v656 = vld [vmem:[%s611 + $0x270] sm:$0xff]
    %v657 = vld [vmem:[%s611 + $0x278] sm:$0xff]
    %v658 = vld [vmem:[%s611 + $0x288] sm:$0xff]
    %v659 = vld [vmem:[%s611 + $0x290] sm:$0xff]
    %v660 = vld [vmem:[%s611 + $0x2a0] sm:$0xff]
    %v661 = vld [vmem:[%s611 + $0x2a8] sm:$0xff]
    %v662 = vld [vmem:[%s611 + $0x2b8] sm:$0xff]
    %v663 = vld [vmem:[%s611 + $0x2c0] sm:$0xff]
    %v664 = vld [vmem:[%s611 + $0x2d0] sm:$0xff]
    %v665 = vld [vmem:[%s611 + $0x2d8] sm:$0xff]
    %v666 = vld [vmem:[%s611 + $0x2e8] sm:$0xff]
    %v667 = vld [vmem:[%s611 + $0x2f0] sm:$0xff]
    %v668 = vld [vmem:[%s611 + $0x300] sm:$0xff]
    %v669 = vld [vmem:[%s611 + $0x308] sm:$0xff]
    %v670 = vld [vmem:[%s611 + $0x318] sm:$0xff]
    %v671 = vld [vmem:[%s611 + $0x320] sm:$0xff]
    %v672 = vld [vmem:[%s611 + $0x330] sm:$0xff]
    %v673 = vld [vmem:[%s611 + $0x338] sm:$0xff]
    %v674 = vld [vmem:[%s611 + $0x348] sm:$0xff]
    %v675 = vld [vmem:[%s611 + $0x350] sm:$0xff]
    %v676 = vld [vmem:[%s611 + $0x1] sm:$0xff]
    %v677 = vld [vmem:[%s611 + $0x9] sm:$0xff]
    %v678 = vld [vmem:[%s611 + $0x19] sm:$0xff]
    %v679 = vld [vmem:[%s611 + $0x21] sm:$0xff]
    %v680 = vld [vmem:[%s611 + $0x31] sm:$0xff]
    %v681 = vld [vmem:[%s611 + $0x39] sm:$0xff]
    %v682 = vld [vmem:[%s611 + $0x49] sm:$0xff]
    %v683 = vld [vmem:[%s611 + $0x51] sm:$0xff]
    %v684 = vld [vmem:[%s611 + $0x61] sm:$0xff]
    %v685 = vld [vmem:[%s611 + $0x69] sm:$0xff]
    %v686 = vld [vmem:[%s611 + $0x79] sm:$0xff]
    %v687 = vld [vmem:[%s611 + $0x81] sm:$0xff]
    %v688 = vld [vmem:[%s611 + $0x91] sm:$0xff]
    %v689 = vld [vmem:[%s611 + $0x99] sm:$0xff]
    %v690 = vld [vmem:[%s611 + $0xa9] sm:$0xff]
    %v691 = vld [vmem:[%s611 + $0xb1] sm:$0xff]
    %v692 = vld [vmem:[%s611 + $0xc1] sm:$0xff]
    %v693 = vld [vmem:[%s611 + $0xc9] sm:$0xff]
    %v694 = vld [vmem:[%s611 + $0xd9] sm:$0xff]
    %v695 = vld [vmem:[%s611 + $0xe1] sm:$0xff]
    %v696 = vld [vmem:[%s611 + $0xf1] sm:$0xff]
    %v697 = vld [vmem:[%s611 + $0xf9] sm:$0xff]
    %v698 = vld [vmem:[%s611 + $0x109] sm:$0xff]
    %v699 = vld [vmem:[%s611 + $0x111] sm:$0xff]
    %v700 = vld [vmem:[%s611 + $0x121] sm:$0xff]
    %v701 = vld [vmem:[%s611 + $0x129] sm:$0xff]
    %v702 = vld [vmem:[%s611 + $0x139] sm:$0xff]
    %v703 = vld [vmem:[%s611 + $0x141] sm:$0xff]
    %v704 = vld [vmem:[%s611 + $0x151] sm:$0xff]
    %v705 = vld [vmem:[%s611 + $0x159] sm:$0xff]
    %v706 = vld [vmem:[%s611 + $0x169] sm:$0xff]
    %v707 = vld [vmem:[%s611 + $0x171] sm:$0xff]
    %v708 = vld [vmem:[%s611 + $0x1e1] sm:$0xff]
    %v709 = vld [vmem:[%s611 + $0x1e9] sm:$0xff]
    %v710 = vld [vmem:[%s611 + $0x1f9] sm:$0xff]
    %v711 = vld [vmem:[%s611 + $0x201] sm:$0xff]
    %v712 = vld [vmem:[%s611 + $0x211] sm:$0xff]
    %v713 = vld [vmem:[%s611 + $0x219] sm:$0xff]
    %v714 = vld [vmem:[%s611 + $0x229] sm:$0xff]
    %v715 = vld [vmem:[%s611 + $0x231] sm:$0xff]
    %v716 = vld [vmem:[%s611 + $0x241] sm:$0xff]
    %v717 = vld [vmem:[%s611 + $0x249] sm:$0xff]
    %v718 = vld [vmem:[%s611 + $0x259] sm:$0xff]
    %v719 = vld [vmem:[%s611 + $0x261] sm:$0xff]
    %v720 = vld [vmem:[%s611 + $0x271] sm:$0xff]
    %v721 = vld [vmem:[%s611 + $0x279] sm:$0xff]
    %v722 = vld [vmem:[%s611 + $0x289] sm:$0xff]
    %v723 = vld [vmem:[%s611 + $0x291] sm:$0xff]
    %v724 = vld [vmem:[%s611 + $0x2a1] sm:$0xff]
    %v725 = vld [vmem:[%s611 + $0x2a9] sm:$0xff]
    %v726 = vld [vmem:[%s611 + $0x2b9] sm:$0xff]
    %v727 = vld [vmem:[%s611 + $0x2c1] sm:$0xff]
    %v728 = vld [vmem:[%s611 + $0x2d1] sm:$0xff]
    %v729 = vld [vmem:[%s611 + $0x2d9] sm:$0xff]
    %v730 = vld [vmem:[%s611 + $0x2e9] sm:$0xff]
    %v731 = vld [vmem:[%s611 + $0x2f1] sm:$0xff]
    %v732 = vld [vmem:[%s611 + $0x301] sm:$0xff]
    %v733 = vld [vmem:[%s611 + $0x309] sm:$0xff]
    %v734 = vld [vmem:[%s611 + $0x319] sm:$0xff]
    %v735 = vld [vmem:[%s611 + $0x321] sm:$0xff]
    %v736 = vld [vmem:[%s611 + $0x331] sm:$0xff]
    %v737 = vld [vmem:[%s611 + $0x339] sm:$0xff]
    %v738 = vld [vmem:[%s611 + $0x349] sm:$0xff]
    %v739 = vld [vmem:[%s611 + $0x351] sm:$0xff]
    %v740 = vld [vmem:[%s611 + $0x2] sm:$0xff]
    %v741 = vld [vmem:[%s611 + $0xa] sm:$0xff]
    %v742 = vld [vmem:[%s611 + $0x1a] sm:$0xff]
    %v743 = vld [vmem:[%s611 + $0x22] sm:$0xff]
    %v744 = vld [vmem:[%s611 + $0x32] sm:$0xff]
    %v745 = vld [vmem:[%s611 + $0x3a] sm:$0xff]
    %v746 = vld [vmem:[%s611 + $0x4a] sm:$0xff]
    %v747 = vld [vmem:[%s611 + $0x52] sm:$0xff]
    %v748 = vld [vmem:[%s611 + $0x62] sm:$0xff]
    %v749 = vld [vmem:[%s611 + $0x6a] sm:$0xff]
    %v750 = vld [vmem:[%s611 + $0x7a] sm:$0xff]
    %v751 = vld [vmem:[%s611 + $0x82] sm:$0xff]
    %v752 = vld [vmem:[%s611 + $0x92] sm:$0xff]
    %v753 = vld [vmem:[%s611 + $0x9a] sm:$0xff]
    %v754 = vld [vmem:[%s611 + $0xaa] sm:$0xff]
    %v755 = vld [vmem:[%s611 + $0xb2] sm:$0xff]
    %v756 = vld [vmem:[%s611 + $0xc2] sm:$0xff]
    %v757 = vld [vmem:[%s611 + $0xca] sm:$0xff]
    %v758 = vld [vmem:[%s611 + $0xda] sm:$0xff]
    %v759 = vld [vmem:[%s611 + $0xe2] sm:$0xff]
    %v760 = vld [vmem:[%s611 + $0xf2] sm:$0xff]
    %v761 = vld [vmem:[%s611 + $0xfa] sm:$0xff]
    %v762 = vld [vmem:[%s611 + $0x10a] sm:$0xff]
    %v763 = vld [vmem:[%s611 + $0x112] sm:$0xff]
    %v764 = vld [vmem:[%s611 + $0x122] sm:$0xff]
    %v765 = vld [vmem:[%s611 + $0x12a] sm:$0xff]
    %v766 = vld [vmem:[%s611 + $0x13a] sm:$0xff]
    %v767 = vld [vmem:[%s611 + $0x142] sm:$0xff]
    %v768 = vld [vmem:[%s611 + $0x152] sm:$0xff]
    %v769 = vld [vmem:[%s611 + $0x15a] sm:$0xff]
    %v770 = vld [vmem:[%s611 + $0x16a] sm:$0xff]
    %v771 = vld [vmem:[%s611 + $0x172] sm:$0xff]
    %v772 = vld [vmem:[%s611 + $0x1e2] sm:$0xff]
    %v773 = vld [vmem:[%s611 + $0x1ea] sm:$0xff]
    %v774 = vld [vmem:[%s611 + $0x1fa] sm:$0xff]
    %v775 = vld [vmem:[%s611 + $0x202] sm:$0xff]
    %v776 = vld [vmem:[%s611 + $0x212] sm:$0xff]
    %v777 = vld [vmem:[%s611 + $0x21a] sm:$0xff]
    %v778 = vld [vmem:[%s611 + $0x22a] sm:$0xff]
    %v779 = vld [vmem:[%s611 + $0x232] sm:$0xff]
    %v780 = vld [vmem:[%s611 + $0x242] sm:$0xff]
    %v781 = vld [vmem:[%s611 + $0x24a] sm:$0xff]
    %v782 = vld [vmem:[%s611 + $0x25a] sm:$0xff]
    %v783 = vld [vmem:[%s611 + $0x262] sm:$0xff]
    %v784 = vld [vmem:[%s611 + $0x272] sm:$0xff]
    %v785 = vld [vmem:[%s611 + $0x27a] sm:$0xff]
    %v786 = vld [vmem:[%s611 + $0x28a] sm:$0xff]
    %v787 = vld [vmem:[%s611 + $0x292] sm:$0xff]
    %v788 = vld [vmem:[%s611 + $0x2a2] sm:$0xff]
    %v789 = vld [vmem:[%s611 + $0x2aa] sm:$0xff]
    %v790 = vld [vmem:[%s611 + $0x2ba] sm:$0xff]
    %v791 = vld [vmem:[%s611 + $0x2c2] sm:$0xff]
    %v792 = vld [vmem:[%s611 + $0x2d2] sm:$0xff]
    %v793 = vld [vmem:[%s611 + $0x2da] sm:$0xff]
    %v794 = vld [vmem:[%s611 + $0x2ea] sm:$0xff]
    %v795 = vld [vmem:[%s611 + $0x2f2] sm:$0xff]
    %v796 = vld [vmem:[%s611 + $0x302] sm:$0xff]
    %v797 = vld [vmem:[%s611 + $0x30a] sm:$0xff]
    %v798 = vld [vmem:[%s611 + $0x31a] sm:$0xff]
    %v799 = vld [vmem:[%s611 + $0x322] sm:$0xff]
    %v800 = vld [vmem:[%s611 + $0x332] sm:$0xff]
    %v801 = vld [vmem:[%s611 + $0x33a] sm:$0xff]
    %v802 = vld [vmem:[%s611 + $0x34a] sm:$0xff]
    %v803 = vld [vmem:[%s611 + $0x352] sm:$0xff]
    %v804 = vld [vmem:[%s611 + $0x3] sm:$0xff]
    %v805 = vld [vmem:[%s611 + $0xb] sm:$0xff]
    %v806 = vld [vmem:[%s611 + $0x1b] sm:$0xff]
    %v807 = vld [vmem:[%s611 + $0x23] sm:$0xff]
    %v808 = vld [vmem:[%s611 + $0x33] sm:$0xff]
    %v809 = vld [vmem:[%s611 + $0x3b] sm:$0xff]
    %v810 = vld [vmem:[%s611 + $0x4b] sm:$0xff]
    %v811 = vld [vmem:[%s611 + $0x53] sm:$0xff]
    %v812 = vld [vmem:[%s611 + $0x63] sm:$0xff]
    %v813 = vld [vmem:[%s611 + $0x6b] sm:$0xff]
    %v814 = vld [vmem:[%s611 + $0x7b] sm:$0xff]
    %v815 = vld [vmem:[%s611 + $0x83] sm:$0xff]
    %v816 = vld [vmem:[%s611 + $0x93] sm:$0xff]
    %v817 = vld [vmem:[%s611 + $0x9b] sm:$0xff]
    %v818 = vld [vmem:[%s611 + $0xab] sm:$0xff]
    %v819 = vld [vmem:[%s611 + $0xb3] sm:$0xff]
    %v820 = vld [vmem:[%s611 + $0xc3] sm:$0xff]
    %v821 = vld [vmem:[%s611 + $0xcb] sm:$0xff]
    %v822 = vld [vmem:[%s611 + $0xdb] sm:$0xff]
    %v823 = vld [vmem:[%s611 + $0xe3] sm:$0xff]
    %v824 = vld [vmem:[%s611 + $0xf3] sm:$0xff]
    %v825 = vld [vmem:[%s611 + $0xfb] sm:$0xff]
    %v826 = vld [vmem:[%s611 + $0x10b] sm:$0xff]
    %v827 = vld [vmem:[%s611 + $0x113] sm:$0xff]
    %v828 = vld [vmem:[%s611 + $0x123] sm:$0xff]
    %v829 = vld [vmem:[%s611 + $0x12b] sm:$0xff]
    %v830 = vld [vmem:[%s611 + $0x13b] sm:$0xff]
    %v831 = vld [vmem:[%s611 + $0x143] sm:$0xff]
    %v832 = vld [vmem:[%s611 + $0x153] sm:$0xff]
    %v833 = vld [vmem:[%s611 + $0x15b] sm:$0xff]
    %v834 = vld [vmem:[%s611 + $0x16b] sm:$0xff]
    %v835 = vld [vmem:[%s611 + $0x173] sm:$0xff]
    %v836 = vld [vmem:[%s611 + $0x1e3] sm:$0xff]
    %v837 = vld [vmem:[%s611 + $0x1eb] sm:$0xff]
    %v838 = vld [vmem:[%s611 + $0x1fb] sm:$0xff]
    %v839 = vld [vmem:[%s611 + $0x203] sm:$0xff]
    %v840 = vld [vmem:[%s611 + $0x213] sm:$0xff]
    %v841 = vld [vmem:[%s611 + $0x21b] sm:$0xff]
    %v842 = vld [vmem:[%s611 + $0x22b] sm:$0xff]
    %v843 = vld [vmem:[%s611 + $0x233] sm:$0xff]
    %v844 = vld [vmem:[%s611 + $0x243] sm:$0xff]
    %v845 = vld [vmem:[%s611 + $0x24b] sm:$0xff]
    %v846 = vld [vmem:[%s611 + $0x25b] sm:$0xff]
    %v847 = vld [vmem:[%s611 + $0x263] sm:$0xff]
    %v848 = vld [vmem:[%s611 + $0x273] sm:$0xff]
    %v849 = vld [vmem:[%s611 + $0x27b] sm:$0xff]
    %v850 = vld [vmem:[%s611 + $0x28b] sm:$0xff]
    %v851 = vld [vmem:[%s611 + $0x293] sm:$0xff]
    %v852 = vld [vmem:[%s611 + $0x2a3] sm:$0xff]
    %v853 = vld [vmem:[%s611 + $0x2ab] sm:$0xff]
    %v854 = vld [vmem:[%s611 + $0x2bb] sm:$0xff]
    %v855 = vld [vmem:[%s611 + $0x2c3] sm:$0xff]
    %v856 = vld [vmem:[%s611 + $0x2d3] sm:$0xff]
    %v857 = vld [vmem:[%s611 + $0x2db] sm:$0xff]
    %v858 = vld [vmem:[%s611 + $0x2eb] sm:$0xff]
    %v859 = vld [vmem:[%s611 + $0x2f3] sm:$0xff]
    %v860 = vld [vmem:[%s611 + $0x303] sm:$0xff]
    %v861 = vld [vmem:[%s611 + $0x30b] sm:$0xff]
    %v862 = vld [vmem:[%s611 + $0x31b] sm:$0xff]
    %v863 = vld [vmem:[%s611 + $0x323] sm:$0xff]
    %v864 = vld [vmem:[%s611 + $0x333] sm:$0xff]
    %v865 = vld [vmem:[%s611 + $0x33b] sm:$0xff]
    %v866 = vld [vmem:[%s611 + $0x34b] sm:$0xff]
    %v867 = vld [vmem:[%s611 + $0x353] sm:$0xff]
    %v868 = vld [vmem:[%s611 + $0x4] sm:$0xff]
    %v869 = vld [vmem:[%s611 + $0xc] sm:$0xff]
    %v870 = vld [vmem:[%s611 + $0x1c] sm:$0xff]
    %v871 = vld [vmem:[%s611 + $0x24] sm:$0xff]
    %v872 = vld [vmem:[%s611 + $0x34] sm:$0xff]
    %v873 = vld [vmem:[%s611 + $0x3c] sm:$0xff]
    %v874 = vld [vmem:[%s611 + $0x4c] sm:$0xff]
    %v875 = vld [vmem:[%s611 + $0x54] sm:$0xff]
    %v876 = vld [vmem:[%s611 + $0x64] sm:$0xff]
    %v877 = vld [vmem:[%s611 + $0x6c] sm:$0xff]
    %v878 = vld [vmem:[%s611 + $0x7c] sm:$0xff]
    %v879 = vld [vmem:[%s611 + $0x84] sm:$0xff]
    %v880 = vld [vmem:[%s611 + $0x94] sm:$0xff]
    %v881 = vld [vmem:[%s611 + $0x9c] sm:$0xff]
    %v882 = vld [vmem:[%s611 + $0xac] sm:$0xff]
    %v883 = vld [vmem:[%s611 + $0xb4] sm:$0xff]
    %v884 = vld [vmem:[%s611 + $0xc4] sm:$0xff]
    %v885 = vld [vmem:[%s611 + $0xcc] sm:$0xff]
    %v886 = vld [vmem:[%s611 + $0xdc] sm:$0xff]
    %v887 = vld [vmem:[%s611 + $0xe4] sm:$0xff]
    %v888 = vld [vmem:[%s611 + $0xf4] sm:$0xff]
    %v889 = vld [vmem:[%s611 + $0xfc] sm:$0xff]
    %v890 = vld [vmem:[%s611 + $0x10c] sm:$0xff]
    %v891 = vld [vmem:[%s611 + $0x114] sm:$0xff]
    %v892 = vld [vmem:[%s611 + $0x124] sm:$0xff]
    %v893 = vld [vmem:[%s611 + $0x12c] sm:$0xff]
    %v894 = vld [vmem:[%s611 + $0x13c] sm:$0xff]
    %v895 = vld [vmem:[%s611 + $0x144] sm:$0xff]
    %v896 = vld [vmem:[%s611 + $0x154] sm:$0xff]
    %v897 = vld [vmem:[%s611 + $0x15c] sm:$0xff]
    %v898 = vld [vmem:[%s611 + $0x16c] sm:$0xff]
    %v899 = vld [vmem:[%s611 + $0x174] sm:$0xff]
    %v900 = vld [vmem:[%s611 + $0x1e4] sm:$0xff]
    %v901 = vld [vmem:[%s611 + $0x1ec] sm:$0xff]
    %v902 = vld [vmem:[%s611 + $0x1fc] sm:$0xff]
    %v903 = vld [vmem:[%s611 + $0x204] sm:$0xff]
    %v904 = vld [vmem:[%s611 + $0x214] sm:$0xff]
    %v905 = vld [vmem:[%s611 + $0x21c] sm:$0xff]
    %v906 = vld [vmem:[%s611 + $0x22c] sm:$0xff]
    %v907 = vld [vmem:[%s611 + $0x234] sm:$0xff]
    %v908 = vld [vmem:[%s611 + $0x244] sm:$0xff]
    %v909 = vld [vmem:[%s611 + $0x24c] sm:$0xff]
    %v910 = vld [vmem:[%s611 + $0x25c] sm:$0xff]
    %v911 = vld [vmem:[%s611 + $0x264] sm:$0xff]
    %v912 = vld [vmem:[%s611 + $0x274] sm:$0xff]
    %v913 = vld [vmem:[%s611 + $0x27c] sm:$0xff]
    %v914 = vld [vmem:[%s611 + $0x28c] sm:$0xff]
    %v915 = vld [vmem:[%s611 + $0x294] sm:$0xff]
    %v916 = vld [vmem:[%s611 + $0x2a4] sm:$0xff]
    %v917 = vld [vmem:[%s611 + $0x2ac] sm:$0xff]
    %v918 = vld [vmem:[%s611 + $0x2bc] sm:$0xff]
    %v919 = vld [vmem:[%s611 + $0x2c4] sm:$0xff]
    %v920 = vld [vmem:[%s611 + $0x2d4] sm:$0xff]
    %v921 = vld [vmem:[%s611 + $0x2dc] sm:$0xff]
    %v922 = vld [vmem:[%s611 + $0x2ec] sm:$0xff]
    %v923 = vld [vmem:[%s611 + $0x2f4] sm:$0xff]
    %v924 = vld [vmem:[%s611 + $0x304] sm:$0xff]
    %v925 = vld [vmem:[%s611 + $0x30c] sm:$0xff]
    %v926 = vld [vmem:[%s611 + $0x31c] sm:$0xff]
    %v927 = vld [vmem:[%s611 + $0x324] sm:$0xff]
    %v928 = vld [vmem:[%s611 + $0x334] sm:$0xff]
    %v929 = vld [vmem:[%s611 + $0x33c] sm:$0xff]
    %v930 = vld [vmem:[%s611 + $0x34c] sm:$0xff]
    %v931 = vld [vmem:[%s611 + $0x354] sm:$0xff]
    %v932 = vld [vmem:[%s226] sm:$0xff]
    %v933 = vld [vmem:[%s226 + $0x8] sm:$0xff]
    %v934 = vld [vmem:[%s226 + $0x18] sm:$0xff]
    %v935 = vld [vmem:[%s226 + $0x20] sm:$0xff]
    %v936 = vld [vmem:[%s226 + $0x30] sm:$0xff]
    %v937 = vld [vmem:[%s226 + $0x38] sm:$0xff]
    %v938 = vld [vmem:[%s226 + $0x48] sm:$0xff]
    %v939 = vld [vmem:[%s226 + $0x50] sm:$0xff]
    %v940 = vld [vmem:[%s226 + $0x60] sm:$0xff]
    %v941 = vld [vmem:[%s226 + $0x68] sm:$0xff]
    %v942 = vld [vmem:[%s226 + $0x78] sm:$0xff]
    %v943 = vld [vmem:[%s226 + $0x80] sm:$0xff]
    %v944 = vld [vmem:[%s226 + $0x90] sm:$0xff]
    %v945 = vld [vmem:[%s226 + $0x98] sm:$0xff]
    %v946 = vld [vmem:[%s226 + $0xa8] sm:$0xff]
    %v947 = vld [vmem:[%s226 + $0xb0] sm:$0xff]
    %v948 = vld [vmem:[%s226 + $0xc0] sm:$0xff]
    %v949 = vld [vmem:[%s226 + $0xc8] sm:$0xff]
    %v950 = vld [vmem:[%s226 + $0xd8] sm:$0xff]
    %v951 = vld [vmem:[%s226 + $0xe0] sm:$0xff]
    %v952 = vld [vmem:[%s226 + $0xf0] sm:$0xff]
    %v953 = vld [vmem:[%s226 + $0xf8] sm:$0xff]
    %v954 = vld [vmem:[%s226 + $0x108] sm:$0xff]
    %v955 = vld [vmem:[%s226 + $0x110] sm:$0xff]
    %v956 = vld [vmem:[%s226 + $0x120] sm:$0xff]
    %v957 = vld [vmem:[%s226 + $0x128] sm:$0xff]
    %v958 = vld [vmem:[%s226 + $0x138] sm:$0xff]
    %v959 = vld [vmem:[%s226 + $0x140] sm:$0xff]
    %v960 = vld [vmem:[%s226 + $0x150] sm:$0xff]
    %v961 = vld [vmem:[%s226 + $0x158] sm:$0xff]
    %v962 = vld [vmem:[%s226 + $0x168] sm:$0xff]
    %v963 = vld [vmem:[%s226 + $0x170] sm:$0xff]
    %v964 = vld [vmem:[%s226 + $0x1e0] sm:$0xff]
    %v965 = vld [vmem:[%s226 + $0x1e8] sm:$0xff]
    %v966 = vld [vmem:[%s226 + $0x1f8] sm:$0xff]
    %v967 = vld [vmem:[%s226 + $0x200] sm:$0xff]
    %v968 = vld [vmem:[%s226 + $0x210] sm:$0xff]
    %v969 = vld [vmem:[%s226 + $0x218] sm:$0xff]
    %v970 = vld [vmem:[%s226 + $0x228] sm:$0xff]
    %v971 = vld [vmem:[%s226 + $0x230] sm:$0xff]
    %v972 = vld [vmem:[%s226 + $0x240] sm:$0xff]
    %v973 = vld [vmem:[%s226 + $0x248] sm:$0xff]
    %v974 = vld [vmem:[%s226 + $0x258] sm:$0xff]
    %v975 = vld [vmem:[%s226 + $0x260] sm:$0xff]
    %v976 = vld [vmem:[%s226 + $0x270] sm:$0xff]
    %v977 = vld [vmem:[%s226 + $0x278] sm:$0xff]
    %v978 = vld [vmem:[%s226 + $0x288] sm:$0xff]
    %v979 = vld [vmem:[%s226 + $0x290] sm:$0xff]
    %v980 = vld [vmem:[%s226 + $0x2a0] sm:$0xff]
    %v981 = vld [vmem:[%s226 + $0x2a8] sm:$0xff]
    %v982 = vld [vmem:[%s226 + $0x2b8] sm:$0xff]
    %v983 = vld [vmem:[%s226 + $0x2c0] sm:$0xff]
    %v984 = vld [vmem:[%s226 + $0x2d0] sm:$0xff]
    %v985 = vld [vmem:[%s226 + $0x2d8] sm:$0xff]
    %v986 = vld [vmem:[%s226 + $0x2e8] sm:$0xff]
    %v987 = vld [vmem:[%s226 + $0x2f0] sm:$0xff]
    %v988 = vld [vmem:[%s226 + $0x300] sm:$0xff]
    %v989 = vld [vmem:[%s226 + $0x308] sm:$0xff]
    %v990 = vld [vmem:[%s226 + $0x318] sm:$0xff]
    %v991 = vld [vmem:[%s226 + $0x320] sm:$0xff]
    %v992 = vld [vmem:[%s226 + $0x330] sm:$0xff]
    %v993 = vld [vmem:[%s226 + $0x338] sm:$0xff]
    %v994 = vld [vmem:[%s226 + $0x348] sm:$0xff]
    %v995 = vld [vmem:[%s226 + $0x350] sm:$0xff]
    %v996 = vld [vmem:[%s226 + $0x1] sm:$0xff]
    %v997 = vld [vmem:[%s226 + $0x9] sm:$0xff]
    %v998 = vld [vmem:[%s226 + $0x19] sm:$0xff]
    %v999 = vld [vmem:[%s226 + $0x21] sm:$0xff]
    %v1000 = vld [vmem:[%s226 + $0x31] sm:$0xff]
    %v1001 = vld [vmem:[%s226 + $0x39] sm:$0xff]
    %v1002 = vld [vmem:[%s226 + $0x49] sm:$0xff]
    %v1003 = vld [vmem:[%s226 + $0x51] sm:$0xff]
    %v1004 = vld [vmem:[%s226 + $0x61] sm:$0xff]
    %v1005 = vld [vmem:[%s226 + $0x69] sm:$0xff]
    %v1006 = vld [vmem:[%s226 + $0x79] sm:$0xff]
    %v1007 = vld [vmem:[%s226 + $0x81] sm:$0xff]
    %v1008 = vld [vmem:[%s226 + $0x91] sm:$0xff]
    %v1009 = vld [vmem:[%s226 + $0x99] sm:$0xff]
    %v1010 = vld [vmem:[%s226 + $0xa9] sm:$0xff]
    %v1011 = vld [vmem:[%s226 + $0xb1] sm:$0xff]
    %v1012 = vld [vmem:[%s226 + $0xc1] sm:$0xff]
    %v1013 = vld [vmem:[%s226 + $0xc9] sm:$0xff]
    %v1014 = vld [vmem:[%s226 + $0xd9] sm:$0xff]
    %v1015 = vld [vmem:[%s226 + $0xe1] sm:$0xff]
    %v1016 = vld [vmem:[%s226 + $0xf1] sm:$0xff]
    %v1017 = vld [vmem:[%s226 + $0xf9] sm:$0xff]
    %v1018 = vld [vmem:[%s226 + $0x109] sm:$0xff]
    %v1019 = vld [vmem:[%s226 + $0x111] sm:$0xff]
    %v1020 = vld [vmem:[%s226 + $0x121] sm:$0xff]
    %v1021 = vld [vmem:[%s226 + $0x129] sm:$0xff]
    %v1022 = vld [vmem:[%s226 + $0x139] sm:$0xff]
    %v1023 = vld [vmem:[%s226 + $0x141] sm:$0xff]
    %v1024 = vld [vmem:[%s226 + $0x151] sm:$0xff]
    %v1025 = vld [vmem:[%s226 + $0x159] sm:$0xff]
    %v1026 = vld [vmem:[%s226 + $0x169] sm:$0xff]
    %v1027 = vld [vmem:[%s226 + $0x171] sm:$0xff]
    %v1028 = vld [vmem:[%s226 + $0x1e1] sm:$0xff]
    %v1029 = vld [vmem:[%s226 + $0x1e9] sm:$0xff]
    %v1030 = vld [vmem:[%s226 + $0x1f9] sm:$0xff]
    %v1031 = vld [vmem:[%s226 + $0x201] sm:$0xff]
    %v1032 = vld [vmem:[%s226 + $0x211] sm:$0xff]
    %v1033 = vld [vmem:[%s226 + $0x219] sm:$0xff]
    %v1034 = vld [vmem:[%s226 + $0x229] sm:$0xff]
    %v1035 = vld [vmem:[%s226 + $0x231] sm:$0xff]
    %v1036 = vld [vmem:[%s226 + $0x241] sm:$0xff]
    %v1037 = vld [vmem:[%s226 + $0x249] sm:$0xff]
    %v1038 = vld [vmem:[%s226 + $0x259] sm:$0xff]
    %v1039 = vld [vmem:[%s226 + $0x261] sm:$0xff]
    %v1040 = vld [vmem:[%s226 + $0x271] sm:$0xff]
    %v1041 = vld [vmem:[%s226 + $0x279] sm:$0xff]
    %v1042 = vld [vmem:[%s226 + $0x289] sm:$0xff]
    %v1043 = vld [vmem:[%s226 + $0x291] sm:$0xff]
    %v1044 = vld [vmem:[%s226 + $0x2a1] sm:$0xff]
    %v1045 = vld [vmem:[%s226 + $0x2a9] sm:$0xff]
    %v1046 = vld [vmem:[%s226 + $0x2b9] sm:$0xff]
    %v1047 = vld [vmem:[%s226 + $0x2c1] sm:$0xff]
    %v1048 = vld [vmem:[%s226 + $0x2d1] sm:$0xff]
    %v1049 = vld [vmem:[%s226 + $0x2d9] sm:$0xff]
    %v1050 = vld [vmem:[%s226 + $0x2e9] sm:$0xff]
    %v1051 = vld [vmem:[%s226 + $0x2f1] sm:$0xff]
    %v1052 = vld [vmem:[%s226 + $0x301] sm:$0xff]
    %v1053 = vld [vmem:[%s226 + $0x309] sm:$0xff]
    %v1054 = vld [vmem:[%s226 + $0x319] sm:$0xff]
    %v1055 = vld [vmem:[%s226 + $0x321] sm:$0xff]
    %v1056 = vld [vmem:[%s226 + $0x331] sm:$0xff]
    %v1057 = vld [vmem:[%s226 + $0x339] sm:$0xff]
    %v1058 = vld [vmem:[%s226 + $0x349] sm:$0xff]
    %v1059 = vld [vmem:[%s226 + $0x351] sm:$0xff]
    %v1060 = vld [vmem:[%s226 + $0x2] sm:$0xff]
    %v1061 = vld [vmem:[%s226 + $0xa] sm:$0xff]
    %v1062 = vld [vmem:[%s226 + $0x1a] sm:$0xff]
    %v1063 = vld [vmem:[%s226 + $0x22] sm:$0xff]
    %v1064 = vld [vmem:[%s226 + $0x32] sm:$0xff]
    %v1065 = vld [vmem:[%s226 + $0x3a] sm:$0xff]
    %v1066 = vld [vmem:[%s226 + $0x4a] sm:$0xff]
    %v1067 = vld [vmem:[%s226 + $0x52] sm:$0xff]
    %v1068 = vld [vmem:[%s226 + $0x62] sm:$0xff]
    %v1069 = vld [vmem:[%s226 + $0x6a] sm:$0xff]
    %v1070 = vld [vmem:[%s226 + $0x7a] sm:$0xff]
    %v1071 = vld [vmem:[%s226 + $0x82] sm:$0xff]
    %v1072 = vld [vmem:[%s226 + $0x92] sm:$0xff]
    %v1073 = vld [vmem:[%s226 + $0x9a] sm:$0xff]
    %v1074 = vld [vmem:[%s226 + $0xaa] sm:$0xff]
    %v1075 = vld [vmem:[%s226 + $0xb2] sm:$0xff]
    %v1076 = vld [vmem:[%s226 + $0xc2] sm:$0xff]
    %v1077 = vld [vmem:[%s226 + $0xca] sm:$0xff]
    %v1078 = vld [vmem:[%s226 + $0xda] sm:$0xff]
    %v1079 = vld [vmem:[%s226 + $0xe2] sm:$0xff]
    %v1080 = vld [vmem:[%s226 + $0xf2] sm:$0xff]
    %v1081 = vld [vmem:[%s226 + $0xfa] sm:$0xff]
    %v1082 = vld [vmem:[%s226 + $0x10a] sm:$0xff]
    %v1083 = vld [vmem:[%s226 + $0x112] sm:$0xff]
    %v1084 = vld [vmem:[%s226 + $0x122] sm:$0xff]
    %v1085 = vld [vmem:[%s226 + $0x12a] sm:$0xff]
    %v1086 = vld [vmem:[%s226 + $0x13a] sm:$0xff]
    %v1087 = vld [vmem:[%s226 + $0x142] sm:$0xff]
    %v1088 = vld [vmem:[%s226 + $0x152] sm:$0xff]
    %v1089 = vld [vmem:[%s226 + $0x15a] sm:$0xff]
    %v1090 = vld [vmem:[%s226 + $0x16a] sm:$0xff]
    %v1091 = vld [vmem:[%s226 + $0x172] sm:$0xff]
    %v1092 = vld [vmem:[%s226 + $0x1e2] sm:$0xff]
    %v1093 = vld [vmem:[%s226 + $0x1ea] sm:$0xff]
    %v1094 = vld [vmem:[%s226 + $0x1fa] sm:$0xff]
    %v1095 = vld [vmem:[%s226 + $0x202] sm:$0xff]
    %v1096 = vld [vmem:[%s226 + $0x212] sm:$0xff]
    %v1097 = vld [vmem:[%s226 + $0x21a] sm:$0xff]
    %v1098 = vld [vmem:[%s226 + $0x22a] sm:$0xff]
    %v1099 = vld [vmem:[%s226 + $0x232] sm:$0xff]
    %v1100 = vld [vmem:[%s226 + $0x242] sm:$0xff]
    %v1101 = vld [vmem:[%s226 + $0x24a] sm:$0xff]
    %v1102 = vld [vmem:[%s226 + $0x25a] sm:$0xff]
    %v1103 = vld [vmem:[%s226 + $0x262] sm:$0xff]
    %v1104 = vld [vmem:[%s226 + $0x272] sm:$0xff]
    %v1105 = vld [vmem:[%s226 + $0x27a] sm:$0xff]
    %v1106 = vld [vmem:[%s226 + $0x28a] sm:$0xff]
    %v1107 = vld [vmem:[%s226 + $0x292] sm:$0xff]
    %v1108 = vld [vmem:[%s226 + $0x2a2] sm:$0xff]
    %v1109 = vld [vmem:[%s226 + $0x2aa] sm:$0xff]
    %v1110 = vld [vmem:[%s226 + $0x2ba] sm:$0xff]
    %v1111 = vld [vmem:[%s226 + $0x2c2] sm:$0xff]
    %v1112 = vld [vmem:[%s226 + $0x2d2] sm:$0xff]
    %v1113 = vld [vmem:[%s226 + $0x2da] sm:$0xff]
    %v1114 = vld [vmem:[%s226 + $0x2ea] sm:$0xff]
    %v1115 = vld [vmem:[%s226 + $0x2f2] sm:$0xff]
    %v1116 = vld [vmem:[%s226 + $0x302] sm:$0xff]
    %v1117 = vld [vmem:[%s226 + $0x30a] sm:$0xff]
    %v1118 = vld [vmem:[%s226 + $0x31a] sm:$0xff]
    %v1119 = vld [vmem:[%s226 + $0x322] sm:$0xff]
    %v1120 = vld [vmem:[%s226 + $0x332] sm:$0xff]
    %v1121 = vld [vmem:[%s226 + $0x33a] sm:$0xff]
    %v1122 = vld [vmem:[%s226 + $0x34a] sm:$0xff]
    %v1123 = vld [vmem:[%s226 + $0x352] sm:$0xff]
    %v1124 = vld [vmem:[%s226 + $0x3] sm:$0xff]
    %v1125 = vld [vmem:[%s226 + $0xb] sm:$0xff]
    %v1126 = vld [vmem:[%s226 + $0x1b] sm:$0xff]
    %v1127 = vld [vmem:[%s226 + $0x23] sm:$0xff]
    %v1128 = vld [vmem:[%s226 + $0x33] sm:$0xff]
    %v1129 = vld [vmem:[%s226 + $0x3b] sm:$0xff]
    %v1130 = vld [vmem:[%s226 + $0x4b] sm:$0xff]
    %v1131 = vld [vmem:[%s226 + $0x53] sm:$0xff]
    %v1132 = vld [vmem:[%s226 + $0x63] sm:$0xff]
    %v1133 = vld [vmem:[%s226 + $0x6b] sm:$0xff]
    %v1134 = vld [vmem:[%s226 + $0x7b] sm:$0xff]
    %v1135 = vld [vmem:[%s226 + $0x83] sm:$0xff]
    %v1136 = vld [vmem:[%s226 + $0x93] sm:$0xff]
    %v1137 = vld [vmem:[%s226 + $0x9b] sm:$0xff]
    %v1138 = vld [vmem:[%s226 + $0xab] sm:$0xff]
    %v1139 = vld [vmem:[%s226 + $0xb3] sm:$0xff]
    %v1140 = vld [vmem:[%s226 + $0xc3] sm:$0xff]
    %v1141 = vld [vmem:[%s226 + $0xcb] sm:$0xff]
    %v1142 = vld [vmem:[%s226 + $0xdb] sm:$0xff]
    %v1143 = vld [vmem:[%s226 + $0xe3] sm:$0xff]
    %v1144 = vld [vmem:[%s226 + $0xf3] sm:$0xff]
    %v1145 = vld [vmem:[%s226 + $0xfb] sm:$0xff]
    %v1146 = vld [vmem:[%s226 + $0x10b] sm:$0xff]
    %v1147 = vld [vmem:[%s226 + $0x113] sm:$0xff]
    %v1148 = vld [vmem:[%s226 + $0x123] sm:$0xff]
    %v1149 = vld [vmem:[%s226 + $0x12b] sm:$0xff]
    %v1150 = vld [vmem:[%s226 + $0x13b] sm:$0xff]
    %v1151 = vld [vmem:[%s226 + $0x143] sm:$0xff]
    %v1152 = vld [vmem:[%s226 + $0x153] sm:$0xff]
    %v1153 = vld [vmem:[%s226 + $0x15b] sm:$0xff]
    %v1154 = vld [vmem:[%s226 + $0x16b] sm:$0xff]
    %v1155 = vld [vmem:[%s226 + $0x173] sm:$0xff]
    %v1156 = vld [vmem:[%s226 + $0x1e3] sm:$0xff]
    %v1157 = vld [vmem:[%s226 + $0x1eb] sm:$0xff]
    %v1158 = vld [vmem:[%s226 + $0x1fb] sm:$0xff]
    %v1159 = vld [vmem:[%s226 + $0x203] sm:$0xff]
    %v1160 = vld [vmem:[%s226 + $0x213] sm:$0xff]
    %v1161 = vld [vmem:[%s226 + $0x21b] sm:$0xff]
    %v1162 = vld [vmem:[%s226 + $0x22b] sm:$0xff]
    %v1163 = vld [vmem:[%s226 + $0x233] sm:$0xff]
    %v1164 = vld [vmem:[%s226 + $0x243] sm:$0xff]
    %v1165 = vld [vmem:[%s226 + $0x24b] sm:$0xff]
    %v1166 = vld [vmem:[%s226 + $0x25b] sm:$0xff]
    %v1167 = vld [vmem:[%s226 + $0x263] sm:$0xff]
    %v1168 = vld [vmem:[%s226 + $0x273] sm:$0xff]
    %v1169 = vld [vmem:[%s226 + $0x27b] sm:$0xff]
    %v1170 = vld [vmem:[%s226 + $0x28b] sm:$0xff]
    %v1171 = vld [vmem:[%s226 + $0x293] sm:$0xff]
    %v1172 = vld [vmem:[%s226 + $0x2a3] sm:$0xff]
    %v1173 = vld [vmem:[%s226 + $0x2ab] sm:$0xff]
    %v1174 = vld [vmem:[%s226 + $0x2bb] sm:$0xff]
    %v1175 = vld [vmem:[%s226 + $0x2c3] sm:$0xff]
    %v1176 = vld [vmem:[%s226 + $0x2d3] sm:$0xff]
    %v1177 = vld [vmem:[%s226 + $0x2db] sm:$0xff]
    %v1178 = vld [vmem:[%s226 + $0x2eb] sm:$0xff]
    %v1179 = vld [vmem:[%s226 + $0x2f3] sm:$0xff]
    %v1180 = vld [vmem:[%s226 + $0x303] sm:$0xff]
    %v1181 = vld [vmem:[%s226 + $0x30b] sm:$0xff]
    %v1182 = vld [vmem:[%s226 + $0x31b] sm:$0xff]
    %v1183 = vld [vmem:[%s226 + $0x323] sm:$0xff]
    %v1184 = vld [vmem:[%s226 + $0x333] sm:$0xff]
    %v1185 = vld [vmem:[%s226 + $0x33b] sm:$0xff]
    %v1186 = vld [vmem:[%s226 + $0x34b] sm:$0xff]
    %v1187 = vld [vmem:[%s226 + $0x353] sm:$0xff]
    %v1188 = vld [vmem:[%s226 + $0x4] sm:$0xff]
    %v1189 = vld [vmem:[%s226 + $0xc] sm:$0xff]
    %v1190 = vld [vmem:[%s226 + $0x1c] sm:$0xff]
    %v1191 = vld [vmem:[%s226 + $0x24] sm:$0xff]
    %v1192 = vld [vmem:[%s226 + $0x34] sm:$0xff]
    %v1193 = vld [vmem:[%s226 + $0x3c] sm:$0xff]
    %v1194 = vld [vmem:[%s226 + $0x4c] sm:$0xff]
    %v1195 = vld [vmem:[%s226 + $0x54] sm:$0xff]
    %v1196 = vld [vmem:[%s226 + $0x64] sm:$0xff]
    %v1197 = vld [vmem:[%s226 + $0x6c] sm:$0xff]
    %v1198 = vld [vmem:[%s226 + $0x7c] sm:$0xff]
    %v1199 = vld [vmem:[%s226 + $0x84] sm:$0xff]
    %v1200 = vld [vmem:[%s226 + $0x94] sm:$0xff]
    %v1201 = vld [vmem:[%s226 + $0x9c] sm:$0xff]
    %v1202 = vld [vmem:[%s226 + $0xac] sm:$0xff]
    %v1203 = vld [vmem:[%s226 + $0xb4] sm:$0xff]
    %v1204 = vld [vmem:[%s226 + $0xc4] sm:$0xff]
    %v1205 = vld [vmem:[%s226 + $0xcc] sm:$0xff]
    %v1206 = vld [vmem:[%s226 + $0xdc] sm:$0xff]
    %v1207 = vld [vmem:[%s226 + $0xe4] sm:$0xff]
    %v1208 = vld [vmem:[%s226 + $0xf4] sm:$0xff]
    %v1209 = vld [vmem:[%s226 + $0xfc] sm:$0xff]
    %v1210 = vld [vmem:[%s226 + $0x10c] sm:$0xff]
    %v1211 = vld [vmem:[%s226 + $0x114] sm:$0xff]
    %v1212 = vld [vmem:[%s226 + $0x124] sm:$0xff]
    %v1213 = vld [vmem:[%s226 + $0x12c] sm:$0xff]
    %v1214 = vld [vmem:[%s226 + $0x13c] sm:$0xff]
    %v1215 = vld [vmem:[%s226 + $0x144] sm:$0xff]
    %v1216 = vld [vmem:[%s226 + $0x154] sm:$0xff]
    %v1217 = vld [vmem:[%s226 + $0x15c] sm:$0xff]
    %v1218 = vld [vmem:[%s226 + $0x16c] sm:$0xff]
    %v1219 = vld [vmem:[%s226 + $0x174] sm:$0xff]
    %v1220 = vld [vmem:[%s226 + $0x1e4] sm:$0xff]
    %v1221 = vld [vmem:[%s226 + $0x1ec] sm:$0xff]
    %v1222 = vld [vmem:[%s226 + $0x1fc] sm:$0xff]
    %v1223 = vld [vmem:[%s226 + $0x204] sm:$0xff]
    %v1224 = vld [vmem:[%s226 + $0x214] sm:$0xff]
    %v1225 = vld [vmem:[%s226 + $0x21c] sm:$0xff]
    %v1226 = vld [vmem:[%s226 + $0x22c] sm:$0xff]
    %v1227 = vld [vmem:[%s226 + $0x234] sm:$0xff]
    %v1228 = vld [vmem:[%s226 + $0x244] sm:$0xff]
    %v1229 = vld [vmem:[%s226 + $0x24c] sm:$0xff]
    %v1230 = vld [vmem:[%s226 + $0x25c] sm:$0xff]
    %v1231 = vld [vmem:[%s226 + $0x264] sm:$0xff]
    %v1232 = vld [vmem:[%s226 + $0x274] sm:$0xff]
    %v1233 = vld [vmem:[%s226 + $0x27c] sm:$0xff]
    %v1234 = vld [vmem:[%s226 + $0x28c] sm:$0xff]
    %v1235 = vld [vmem:[%s226 + $0x294] sm:$0xff]
    %v1236 = vld [vmem:[%s226 + $0x2a4] sm:$0xff]
    %v1237 = vld [vmem:[%s226 + $0x2ac] sm:$0xff]
    %v1238 = vld [vmem:[%s226 + $0x2bc] sm:$0xff]
    %v1239 = vld [vmem:[%s226 + $0x2c4] sm:$0xff]
    %v1240 = vld [vmem:[%s226 + $0x2d4] sm:$0xff]
    %v1241 = vld [vmem:[%s226 + $0x2dc] sm:$0xff]
    %v1242 = vld [vmem:[%s226 + $0x2ec] sm:$0xff]
    %v1243 = vld [vmem:[%s226 + $0x2f4] sm:$0xff]
    %v1244 = vld [vmem:[%s226 + $0x304] sm:$0xff]
    %v1245 = vld [vmem:[%s226 + $0x30c] sm:$0xff]
    %v1246 = vld [vmem:[%s226 + $0x31c] sm:$0xff]
    %v1247 = vld [vmem:[%s226 + $0x324] sm:$0xff]
    %v1248 = vld [vmem:[%s226 + $0x334] sm:$0xff]
    %v1249 = vld [vmem:[%s226 + $0x33c] sm:$0xff]
    %v1250 = vld [vmem:[%s226 + $0x34c] sm:$0xff]
    %v1251 = vld [vmem:[%s226 + $0x354] sm:$0xff]
    %s1252 = scalar_lea.vmem [#allocation2], 72
    %v1253 = vld [vmem:[%s1252] sm:$0xff]
    %v1254 = vld [vmem:[%s1252 + $0x8] sm:$0xff]
    %v1255 = vld [vmem:[%s1252 + $0x18] sm:$0xff]
    %v1256 = vld [vmem:[%s1252 + $0x20] sm:$0xff]
    %v1257 = vld [vmem:[%s1252 + $0x30] sm:$0xff]
    %v1258 = vld [vmem:[%s1252 + $0x38] sm:$0xff]
    %v1259 = vld [vmem:[%s1252 + $0x48] sm:$0xff]
    %v1260 = vld [vmem:[%s1252 + $0x50] sm:$0xff]
    %v1261 = vld [vmem:[%s1252 + $0x60] sm:$0xff]
    %v1262 = vld [vmem:[%s1252 + $0x68] sm:$0xff]
    %v1263 = vld [vmem:[%s1252 + $0x78] sm:$0xff]
    %v1264 = vld [vmem:[%s1252 + $0x80] sm:$0xff]
    %v1265 = vld [vmem:[%s1252 + $0x90] sm:$0xff]
    %v1266 = vld [vmem:[%s1252 + $0x98] sm:$0xff]
    %v1267 = vld [vmem:[%s1252 + $0xa8] sm:$0xff]
    %v1268 = vld [vmem:[%s1252 + $0xb0] sm:$0xff]
    %v1269 = vld [vmem:[%s1252 + $0xc0] sm:$0xff]
    %v1270 = vld [vmem:[%s1252 + $0xc8] sm:$0xff]
    %v1271 = vld [vmem:[%s1252 + $0xd8] sm:$0xff]
    %v1272 = vld [vmem:[%s1252 + $0xe0] sm:$0xff]
    %v1273 = vld [vmem:[%s1252 + $0xf0] sm:$0xff]
    %v1274 = vld [vmem:[%s1252 + $0xf8] sm:$0xff]
    %v1275 = vld [vmem:[%s1252 + $0x108] sm:$0xff]
    %v1276 = vld [vmem:[%s1252 + $0x110] sm:$0xff]
    %v1277 = vld [vmem:[%s1252 + $0x120] sm:$0xff]
    %v1278 = vld [vmem:[%s1252 + $0x128] sm:$0xff]
    %v1279 = vld [vmem:[%s1252 + $0x138] sm:$0xff]
    %v1280 = vld [vmem:[%s1252 + $0x140] sm:$0xff]
    %v1281 = vld [vmem:[%s1252 + $0x150] sm:$0xff]
    %v1282 = vld [vmem:[%s1252 + $0x158] sm:$0xff]
    %v1283 = vld [vmem:[%s1252 + $0x168] sm:$0xff]
    %v1284 = vld [vmem:[%s1252 + $0x170] sm:$0xff]
    %v1285 = vld [vmem:[%s1252 + $0x1e0] sm:$0xff]
    %v1286 = vld [vmem:[%s1252 + $0x1e8] sm:$0xff]
    %v1287 = vld [vmem:[%s1252 + $0x1f8] sm:$0xff]
    %v1288 = vld [vmem:[%s1252 + $0x200] sm:$0xff]
    %v1289 = vld [vmem:[%s1252 + $0x210] sm:$0xff]
    %v1290 = vld [vmem:[%s1252 + $0x218] sm:$0xff]
    %v1291 = vld [vmem:[%s1252 + $0x228] sm:$0xff]
    %v1292 = vld [vmem:[%s1252 + $0x230] sm:$0xff]
    %v1293 = vld [vmem:[%s1252 + $0x240] sm:$0xff]
    %v1294 = vld [vmem:[%s1252 + $0x248] sm:$0xff]
    %v1295 = vld [vmem:[%s1252 + $0x258] sm:$0xff]
    %v1296 = vld [vmem:[%s1252 + $0x260] sm:$0xff]
    %v1297 = vld [vmem:[%s1252 + $0x270] sm:$0xff]
    %v1298 = vld [vmem:[%s1252 + $0x278] sm:$0xff]
    %v1299 = vld [vmem:[%s1252 + $0x288] sm:$0xff]
    %v1300 = vld [vmem:[%s1252 + $0x290] sm:$0xff]
    %v1301 = vld [vmem:[%s1252 + $0x2a0] sm:$0xff]
    %v1302 = vld [vmem:[%s1252 + $0x2a8] sm:$0xff]
    %v1303 = vld [vmem:[%s1252 + $0x2b8] sm:$0xff]
    %v1304 = vld [vmem:[%s1252 + $0x2c0] sm:$0xff]
    %v1305 = vld [vmem:[%s1252 + $0x2d0] sm:$0xff]
    %v1306 = vld [vmem:[%s1252 + $0x2d8] sm:$0xff]
    %v1307 = vld [vmem:[%s1252 + $0x2e8] sm:$0xff]
    %v1308 = vld [vmem:[%s1252 + $0x2f0] sm:$0xff]
    %v1309 = vld [vmem:[%s1252 + $0x300] sm:$0xff]
    %v1310 = vld [vmem:[%s1252 + $0x308] sm:$0xff]
    %v1311 = vld [vmem:[%s1252 + $0x318] sm:$0xff]
    %v1312 = vld [vmem:[%s1252 + $0x320] sm:$0xff]
    %v1313 = vld [vmem:[%s1252 + $0x330] sm:$0xff]
    %v1314 = vld [vmem:[%s1252 + $0x338] sm:$0xff]
    %v1315 = vld [vmem:[%s1252 + $0x348] sm:$0xff]
    %v1316 = vld [vmem:[%s1252 + $0x350] sm:$0xff]
    %v1317 = vld [vmem:[%s1252 + $0x1] sm:$0xff]
    %v1318 = vld [vmem:[%s1252 + $0x9] sm:$0xff]
    %v1319 = vld [vmem:[%s1252 + $0x19] sm:$0xff]
    %v1320 = vld [vmem:[%s1252 + $0x21] sm:$0xff]
    %v1321 = vld [vmem:[%s1252 + $0x31] sm:$0xff]
    %v1322 = vld [vmem:[%s1252 + $0x39] sm:$0xff]
    %v1323 = vld [vmem:[%s1252 + $0x49] sm:$0xff]
    %v1324 = vld [vmem:[%s1252 + $0x51] sm:$0xff]
    %v1325 = vld [vmem:[%s1252 + $0x61] sm:$0xff]
    %v1326 = vld [vmem:[%s1252 + $0x69] sm:$0xff]
    %v1327 = vld [vmem:[%s1252 + $0x79] sm:$0xff]
    %v1328 = vld [vmem:[%s1252 + $0x81] sm:$0xff]
    %v1329 = vld [vmem:[%s1252 + $0x91] sm:$0xff]
    %v1330 = vld [vmem:[%s1252 + $0x99] sm:$0xff]
    %v1331 = vld [vmem:[%s1252 + $0xa9] sm:$0xff]
    %v1332 = vld [vmem:[%s1252 + $0xb1] sm:$0xff]
    %v1333 = vld [vmem:[%s1252 + $0xc1] sm:$0xff]
    %v1334 = vld [vmem:[%s1252 + $0xc9] sm:$0xff]
    %v1335 = vld [vmem:[%s1252 + $0xd9] sm:$0xff]
    %v1336 = vld [vmem:[%s1252 + $0xe1] sm:$0xff]
    %v1337 = vld [vmem:[%s1252 + $0xf1] sm:$0xff]
    %v1338 = vld [vmem:[%s1252 + $0xf9] sm:$0xff]
    %v1339 = vld [vmem:[%s1252 + $0x109] sm:$0xff]
    %v1340 = vld [vmem:[%s1252 + $0x111] sm:$0xff]
    %v1341 = vld [vmem:[%s1252 + $0x121] sm:$0xff]
    %v1342 = vld [vmem:[%s1252 + $0x129] sm:$0xff]
    %v1343 = vld [vmem:[%s1252 + $0x139] sm:$0xff]
    %v1344 = vld [vmem:[%s1252 + $0x141] sm:$0xff]
    %v1345 = vld [vmem:[%s1252 + $0x151] sm:$0xff]
    %v1346 = vld [vmem:[%s1252 + $0x159] sm:$0xff]
    %v1347 = vld [vmem:[%s1252 + $0x169] sm:$0xff]
    %v1348 = vld [vmem:[%s1252 + $0x171] sm:$0xff]
    %v1349 = vld [vmem:[%s1252 + $0x1e1] sm:$0xff]
    %v1350 = vld [vmem:[%s1252 + $0x1e9] sm:$0xff]
    %v1351 = vld [vmem:[%s1252 + $0x1f9] sm:$0xff]
    %v1352 = vld [vmem:[%s1252 + $0x201] sm:$0xff]
    %v1353 = vld [vmem:[%s1252 + $0x211] sm:$0xff]
    %v1354 = vld [vmem:[%s1252 + $0x219] sm:$0xff]
    %v1355 = vld [vmem:[%s1252 + $0x229] sm:$0xff]
    %v1356 = vld [vmem:[%s1252 + $0x231] sm:$0xff]
    %v1357 = vld [vmem:[%s1252 + $0x241] sm:$0xff]
    %v1358 = vld [vmem:[%s1252 + $0x249] sm:$0xff]
    %v1359 = vld [vmem:[%s1252 + $0x259] sm:$0xff]
    %v1360 = vld [vmem:[%s1252 + $0x261] sm:$0xff]
    %v1361 = vld [vmem:[%s1252 + $0x271] sm:$0xff]
    %v1362 = vld [vmem:[%s1252 + $0x279] sm:$0xff]
    %v1363 = vld [vmem:[%s1252 + $0x289] sm:$0xff]
    %v1364 = vld [vmem:[%s1252 + $0x291] sm:$0xff]
    %v1365 = vld [vmem:[%s1252 + $0x2a1] sm:$0xff]
    %v1366 = vld [vmem:[%s1252 + $0x2a9] sm:$0xff]
    %v1367 = vld [vmem:[%s1252 + $0x2b9] sm:$0xff]
    %v1368 = vld [vmem:[%s1252 + $0x2c1] sm:$0xff]
    %v1369 = vld [vmem:[%s1252 + $0x2d1] sm:$0xff]
    %v1370 = vld [vmem:[%s1252 + $0x2d9] sm:$0xff]
    %v1371 = vld [vmem:[%s1252 + $0x2e9] sm:$0xff]
    %v1372 = vld [vmem:[%s1252 + $0x2f1] sm:$0xff]
    %v1373 = vld [vmem:[%s1252 + $0x301] sm:$0xff]
    %v1374 = vld [vmem:[%s1252 + $0x309] sm:$0xff]
    %v1375 = vld [vmem:[%s1252 + $0x319] sm:$0xff]
    %v1376 = vld [vmem:[%s1252 + $0x321] sm:$0xff]
    %v1377 = vld [vmem:[%s1252 + $0x331] sm:$0xff]
    %v1378 = vld [vmem:[%s1252 + $0x339] sm:$0xff]
    %v1379 = vld [vmem:[%s1252 + $0x349] sm:$0xff]
    %v1380 = vld [vmem:[%s1252 + $0x351] sm:$0xff]
    %v1381 = vld [vmem:[%s1252 + $0x2] sm:$0xff]
    %v1382 = vld [vmem:[%s1252 + $0xa] sm:$0xff]
    %v1383 = vld [vmem:[%s1252 + $0x1a] sm:$0xff]
    %v1384 = vld [vmem:[%s1252 + $0x22] sm:$0xff]
    %v1385 = vld [vmem:[%s1252 + $0x32] sm:$0xff]
    %v1386 = vld [vmem:[%s1252 + $0x3a] sm:$0xff]
    %v1387 = vld [vmem:[%s1252 + $0x4a] sm:$0xff]
    %v1388 = vld [vmem:[%s1252 + $0x52] sm:$0xff]
    %v1389 = vld [vmem:[%s1252 + $0x62] sm:$0xff]
    %v1390 = vld [vmem:[%s1252 + $0x6a] sm:$0xff]
    %v1391 = vld [vmem:[%s1252 + $0x7a] sm:$0xff]
    %v1392 = vld [vmem:[%s1252 + $0x82] sm:$0xff]
    %v1393 = vld [vmem:[%s1252 + $0x92] sm:$0xff]
    %v1394 = vld [vmem:[%s1252 + $0x9a] sm:$0xff]
    %v1395 = vld [vmem:[%s1252 + $0xaa] sm:$0xff]
    %v1396 = vld [vmem:[%s1252 + $0xb2] sm:$0xff]
    %v1397 = vld [vmem:[%s1252 + $0xc2] sm:$0xff]
    %v1398 = vld [vmem:[%s1252 + $0xca] sm:$0xff]
    %v1399 = vld [vmem:[%s1252 + $0xda] sm:$0xff]
    %v1400 = vld [vmem:[%s1252 + $0xe2] sm:$0xff]
    %v1401 = vld [vmem:[%s1252 + $0xf2] sm:$0xff]
    %v1402 = vld [vmem:[%s1252 + $0xfa] sm:$0xff]
    %v1403 = vld [vmem:[%s1252 + $0x10a] sm:$0xff]
    %v1404 = vld [vmem:[%s1252 + $0x112] sm:$0xff]
    %v1405 = vld [vmem:[%s1252 + $0x122] sm:$0xff]
    %v1406 = vld [vmem:[%s1252 + $0x12a] sm:$0xff]
    %v1407 = vld [vmem:[%s1252 + $0x13a] sm:$0xff]
    %v1408 = vld [vmem:[%s1252 + $0x142] sm:$0xff]
    %v1409 = vld [vmem:[%s1252 + $0x152] sm:$0xff]
    %v1410 = vld [vmem:[%s1252 + $0x15a] sm:$0xff]
    %v1411 = vld [vmem:[%s1252 + $0x16a] sm:$0xff]
    %v1412 = vld [vmem:[%s1252 + $0x172] sm:$0xff]
    %v1413 = vld [vmem:[%s1252 + $0x1e2] sm:$0xff]
    %v1414 = vld [vmem:[%s1252 + $0x1ea] sm:$0xff]
    %v1415 = vld [vmem:[%s1252 + $0x1fa] sm:$0xff]
    %v1416 = vld [vmem:[%s1252 + $0x202] sm:$0xff]
    %v1417 = vld [vmem:[%s1252 + $0x212] sm:$0xff]
    %v1418 = vld [vmem:[%s1252 + $0x21a] sm:$0xff]
    %v1419 = vld [vmem:[%s1252 + $0x22a] sm:$0xff]
    %v1420 = vld [vmem:[%s1252 + $0x232] sm:$0xff]
    %v1421 = vld [vmem:[%s1252 + $0x242] sm:$0xff]
    %v1422 = vld [vmem:[%s1252 + $0x24a] sm:$0xff]
    %v1423 = vld [vmem:[%s1252 + $0x25a] sm:$0xff]
    %v1424 = vld [vmem:[%s1252 + $0x262] sm:$0xff]
    %v1425 = vld [vmem:[%s1252 + $0x272] sm:$0xff]
    %v1426 = vld [vmem:[%s1252 + $0x27a] sm:$0xff]
    %v1427 = vld [vmem:[%s1252 + $0x28a] sm:$0xff]
    %v1428 = vld [vmem:[%s1252 + $0x292] sm:$0xff]
    %v1429 = vld [vmem:[%s1252 + $0x2a2] sm:$0xff]
    %v1430 = vld [vmem:[%s1252 + $0x2aa] sm:$0xff]
    %v1431 = vld [vmem:[%s1252 + $0x2ba] sm:$0xff]
    %v1432 = vld [vmem:[%s1252 + $0x2c2] sm:$0xff]
    %v1433 = vld [vmem:[%s1252 + $0x2d2] sm:$0xff]
    %v1434 = vld [vmem:[%s1252 + $0x2da] sm:$0xff]
    %v1435 = vld [vmem:[%s1252 + $0x2ea] sm:$0xff]
    %v1436 = vld [vmem:[%s1252 + $0x2f2] sm:$0xff]
    %v1437 = vld [vmem:[%s1252 + $0x302] sm:$0xff]
    %v1438 = vld [vmem:[%s1252 + $0x30a] sm:$0xff]
    %v1439 = vld [vmem:[%s1252 + $0x31a] sm:$0xff]
    %v1440 = vld [vmem:[%s1252 + $0x322] sm:$0xff]
    %v1441 = vld [vmem:[%s1252 + $0x332] sm:$0xff]
    %v1442 = vld [vmem:[%s1252 + $0x33a] sm:$0xff]
    %v1443 = vld [vmem:[%s1252 + $0x34a] sm:$0xff]
    %v1444 = vld [vmem:[%s1252 + $0x352] sm:$0xff]
    %v1445 = vld [vmem:[%s1252 + $0x3] sm:$0xff]
    %v1446 = vld [vmem:[%s1252 + $0xb] sm:$0xff]
    %v1447 = vld [vmem:[%s1252 + $0x1b] sm:$0xff]
    %v1448 = vld [vmem:[%s1252 + $0x23] sm:$0xff]
    %v1449 = vld [vmem:[%s1252 + $0x33] sm:$0xff]
    %v1450 = vld [vmem:[%s1252 + $0x3b] sm:$0xff]
    %v1451 = vld [vmem:[%s1252 + $0x4b] sm:$0xff]
    %v1452 = vld [vmem:[%s1252 + $0x53] sm:$0xff]
    %v1453 = vld [vmem:[%s1252 + $0x63] sm:$0xff]
    %v1454 = vld [vmem:[%s1252 + $0x6b] sm:$0xff]
    %v1455 = vld [vmem:[%s1252 + $0x7b] sm:$0xff]
    %v1456 = vld [vmem:[%s1252 + $0x83] sm:$0xff]
    %v1457 = vld [vmem:[%s1252 + $0x93] sm:$0xff]
    %v1458 = vld [vmem:[%s1252 + $0x9b] sm:$0xff]
    %v1459 = vld [vmem:[%s1252 + $0xab] sm:$0xff]
    %v1460 = vld [vmem:[%s1252 + $0xb3] sm:$0xff]
    %v1461 = vld [vmem:[%s1252 + $0xc3] sm:$0xff]
    %v1462 = vld [vmem:[%s1252 + $0xcb] sm:$0xff]
    %v1463 = vld [vmem:[%s1252 + $0xdb] sm:$0xff]
    %v1464 = vld [vmem:[%s1252 + $0xe3] sm:$0xff]
    %v1465 = vld [vmem:[%s1252 + $0xf3] sm:$0xff]
    %v1466 = vld [vmem:[%s1252 + $0xfb] sm:$0xff]
    %v1467 = vld [vmem:[%s1252 + $0x10b] sm:$0xff]
    %v1468 = vld [vmem:[%s1252 + $0x113] sm:$0xff]
    %v1469 = vld [vmem:[%s1252 + $0x123] sm:$0xff]
    %v1470 = vld [vmem:[%s1252 + $0x12b] sm:$0xff]
    %v1471 = vld [vmem:[%s1252 + $0x13b] sm:$0xff]
    %v1472 = vld [vmem:[%s1252 + $0x143] sm:$0xff]
    %v1473 = vld [vmem:[%s1252 + $0x153] sm:$0xff]
    %v1474 = vld [vmem:[%s1252 + $0x15b] sm:$0xff]
    %v1475 = vld [vmem:[%s1252 + $0x16b] sm:$0xff]
    %v1476 = vld [vmem:[%s1252 + $0x173] sm:$0xff]
    %v1477 = vld [vmem:[%s1252 + $0x1e3] sm:$0xff]
    %v1478 = vld [vmem:[%s1252 + $0x1eb] sm:$0xff]
    %v1479 = vld [vmem:[%s1252 + $0x1fb] sm:$0xff]
    %v1480 = vld [vmem:[%s1252 + $0x203] sm:$0xff]
    %v1481 = vld [vmem:[%s1252 + $0x213] sm:$0xff]
    %v1482 = vld [vmem:[%s1252 + $0x21b] sm:$0xff]
    %v1483 = vld [vmem:[%s1252 + $0x22b] sm:$0xff]
    %v1484 = vld [vmem:[%s1252 + $0x233] sm:$0xff]
    %v1485 = vld [vmem:[%s1252 + $0x243] sm:$0xff]
    %v1486 = vld [vmem:[%s1252 + $0x24b] sm:$0xff]
    %v1487 = vld [vmem:[%s1252 + $0x25b] sm:$0xff]
    %v1488 = vld [vmem:[%s1252 + $0x263] sm:$0xff]
    %v1489 = vld [vmem:[%s1252 + $0x273] sm:$0xff]
    %v1490 = vld [vmem:[%s1252 + $0x27b] sm:$0xff]
    %v1491 = vld [vmem:[%s1252 + $0x28b] sm:$0xff]
    %v1492 = vld [vmem:[%s1252 + $0x293] sm:$0xff]
    %v1493 = vld [vmem:[%s1252 + $0x2a3] sm:$0xff]
    %v1494 = vld [vmem:[%s1252 + $0x2ab] sm:$0xff]
    %v1495 = vld [vmem:[%s1252 + $0x2bb] sm:$0xff]
    %v1496 = vld [vmem:[%s1252 + $0x2c3] sm:$0xff]
    %v1497 = vld [vmem:[%s1252 + $0x2d3] sm:$0xff]
    %v1498 = vld [vmem:[%s1252 + $0x2db] sm:$0xff]
    %v1499 = vld [vmem:[%s1252 + $0x2eb] sm:$0xff]
    %v1500 = vld [vmem:[%s1252 + $0x2f3] sm:$0xff]
    %v1501 = vld [vmem:[%s1252 + $0x303] sm:$0xff]
    %v1502 = vld [vmem:[%s1252 + $0x30b] sm:$0xff]
    %v1503 = vld [vmem:[%s1252 + $0x31b] sm:$0xff]
    %v1504 = vld [vmem:[%s1252 + $0x323] sm:$0xff]
    %v1505 = vld [vmem:[%s1252 + $0x333] sm:$0xff]
    %v1506 = vld [vmem:[%s1252 + $0x33b] sm:$0xff]
    %v1507 = vld [vmem:[%s1252 + $0x34b] sm:$0xff]
    %v1508 = vld [vmem:[%s1252 + $0x353] sm:$0xff]
    %v1509 = vld [vmem:[%s1252 + $0x4] sm:$0xff]
    %v1510 = vld [vmem:[%s1252 + $0xc] sm:$0xff]
    %v1511 = vld [vmem:[%s1252 + $0x1c] sm:$0xff]
    %v1512 = vld [vmem:[%s1252 + $0x24] sm:$0xff]
    %v1513 = vld [vmem:[%s1252 + $0x34] sm:$0xff]
    %v1514 = vld [vmem:[%s1252 + $0x3c] sm:$0xff]
    %v1515 = vld [vmem:[%s1252 + $0x4c] sm:$0xff]
    %v1516 = vld [vmem:[%s1252 + $0x54] sm:$0xff]
    %v1517 = vld [vmem:[%s1252 + $0x64] sm:$0xff]
    %v1518 = vld [vmem:[%s1252 + $0x6c] sm:$0xff]
    %v1519 = vld [vmem:[%s1252 + $0x7c] sm:$0xff]
    %v1520 = vld [vmem:[%s1252 + $0x84] sm:$0xff]
    %v1521 = vld [vmem:[%s1252 + $0x94] sm:$0xff]
    %v1522 = vld [vmem:[%s1252 + $0x9c] sm:$0xff]
    %v1523 = vld [vmem:[%s1252 + $0xac] sm:$0xff]
    %v1524 = vld [vmem:[%s1252 + $0xb4] sm:$0xff]
    %v1525 = vld [vmem:[%s1252 + $0xc4] sm:$0xff]
    %v1526 = vld [vmem:[%s1252 + $0xcc] sm:$0xff]
    %v1527 = vld [vmem:[%s1252 + $0xdc] sm:$0xff]
    %v1528 = vld [vmem:[%s1252 + $0xe4] sm:$0xff]
    %v1529 = vld [vmem:[%s1252 + $0xf4] sm:$0xff]
    %v1530 = vld [vmem:[%s1252 + $0xfc] sm:$0xff]
    %v1531 = vld [vmem:[%s1252 + $0x10c] sm:$0xff]
    %v1532 = vld [vmem:[%s1252 + $0x114] sm:$0xff]
    %v1533 = vld [vmem:[%s1252 + $0x124] sm:$0xff]
    %v1534 = vld [vmem:[%s1252 + $0x12c] sm:$0xff]
    %v1535 = vld [vmem:[%s1252 + $0x13c] sm:$0xff]
    %v1536 = vld [vmem:[%s1252 + $0x144] sm:$0xff]
    %v1537 = vld [vmem:[%s1252 + $0x154] sm:$0xff]
    %v1538 = vld [vmem:[%s1252 + $0x15c] sm:$0xff]
    %v1539 = vld [vmem:[%s1252 + $0x16c] sm:$0xff]
    %v1540 = vld [vmem:[%s1252 + $0x174] sm:$0xff]
    %v1541 = vld [vmem:[%s1252 + $0x1e4] sm:$0xff]
    %v1542 = vld [vmem:[%s1252 + $0x1ec] sm:$0xff]
    %v1543 = vld [vmem:[%s1252 + $0x1fc] sm:$0xff]
    %v1544 = vld [vmem:[%s1252 + $0x204] sm:$0xff]
    %v1545 = vld [vmem:[%s1252 + $0x214] sm:$0xff]
    %v1546 = vld [vmem:[%s1252 + $0x21c] sm:$0xff]
    %v1547 = vld [vmem:[%s1252 + $0x22c] sm:$0xff]
    %v1548 = vld [vmem:[%s1252 + $0x234] sm:$0xff]
    %v1549 = vld [vmem:[%s1252 + $0x244] sm:$0xff]
    %v1550 = vld [vmem:[%s1252 + $0x24c] sm:$0xff]
    %v1551 = vld [vmem:[%s1252 + $0x25c] sm:$0xff]
    %v1552 = vld [vmem:[%s1252 + $0x264] sm:$0xff]
    %v1553 = vld [vmem:[%s1252 + $0x274] sm:$0xff]
    %v1554 = vld [vmem:[%s1252 + $0x27c] sm:$0xff]
    %v1555 = vld [vmem:[%s1252 + $0x28c] sm:$0xff]
    %v1556 = vld [vmem:[%s1252 + $0x294] sm:$0xff]
    %v1557 = vld [vmem:[%s1252 + $0x2a4] sm:$0xff]
    %v1558 = vld [vmem:[%s1252 + $0x2ac] sm:$0xff]
    %v1559 = vld [vmem:[%s1252 + $0x2bc] sm:$0xff]
    %v1560 = vld [vmem:[%s1252 + $0x2c4] sm:$0xff]
    %v1561 = vld [vmem:[%s1252 + $0x2d4] sm:$0xff]
    %v1562 = vld [vmem:[%s1252 + $0x2dc] sm:$0xff]
    %v1563 = vld [vmem:[%s1252 + $0x2ec] sm:$0xff]
    %v1564 = vld [vmem:[%s1252 + $0x2f4] sm:$0xff]
    %v1565 = vld [vmem:[%s1252 + $0x304] sm:$0xff]
    %v1566 = vld [vmem:[%s1252 + $0x30c] sm:$0xff]
    %v1567 = vld [vmem:[%s1252 + $0x31c] sm:$0xff]
    %v1568 = vld [vmem:[%s1252 + $0x324] sm:$0xff]
    %v1569 = vld [vmem:[%s1252 + $0x334] sm:$0xff]
    %v1570 = vld [vmem:[%s1252 + $0x33c] sm:$0xff]
    %v1571 = vld [vmem:[%s1252 + $0x34c] sm:$0xff]
    %v1572 = vld [vmem:[%s1252 + $0x354] sm:$0xff]
    %s1573 = scalar_lea.vmem [#allocation2], 96
    %v1574 = vld [vmem:[%s1573] sm:$0xff]
    %v1575 = vld [vmem:[%s1573 + $0x8] sm:$0xff]
    %v1576 = vld [vmem:[%s1573 + $0x18] sm:$0xff]
    %v1577 = vld [vmem:[%s1573 + $0x20] sm:$0xff]
    %v1578 = vld [vmem:[%s1573 + $0x30] sm:$0xff]
    %v1579 = vld [vmem:[%s1573 + $0x38] sm:$0xff]
    %v1580 = vld [vmem:[%s1573 + $0x48] sm:$0xff]
    %v1581 = vld [vmem:[%s1573 + $0x50] sm:$0xff]
    %v1582 = vld [vmem:[%s1573 + $0x60] sm:$0xff]
    %v1583 = vld [vmem:[%s1573 + $0x68] sm:$0xff]
    %v1584 = vld [vmem:[%s1573 + $0x78] sm:$0xff]
    %v1585 = vld [vmem:[%s1573 + $0x80] sm:$0xff]
    %v1586 = vld [vmem:[%s1573 + $0x90] sm:$0xff]
    %v1587 = vld [vmem:[%s1573 + $0x98] sm:$0xff]
    %v1588 = vld [vmem:[%s1573 + $0xa8] sm:$0xff]
    %v1589 = vld [vmem:[%s1573 + $0xb0] sm:$0xff]
    %v1590 = vld [vmem:[%s1573 + $0xc0] sm:$0xff]
    %v1591 = vld [vmem:[%s1573 + $0xc8] sm:$0xff]
    %v1592 = vld [vmem:[%s1573 + $0xd8] sm:$0xff]
    %v1593 = vld [vmem:[%s1573 + $0xe0] sm:$0xff]
    %v1594 = vld [vmem:[%s1573 + $0xf0] sm:$0xff]
    %v1595 = vld [vmem:[%s1573 + $0xf8] sm:$0xff]
    %v1596 = vld [vmem:[%s1573 + $0x108] sm:$0xff]
    %v1597 = vld [vmem:[%s1573 + $0x110] sm:$0xff]
    %v1598 = vld [vmem:[%s1573 + $0x120] sm:$0xff]
    %v1599 = vld [vmem:[%s1573 + $0x128] sm:$0xff]
    %v1600 = vld [vmem:[%s1573 + $0x138] sm:$0xff]
    %v1601 = vld [vmem:[%s1573 + $0x140] sm:$0xff]
    %v1602 = vld [vmem:[%s1573 + $0x150] sm:$0xff]
    %v1603 = vld [vmem:[%s1573 + $0x158] sm:$0xff]
    %v1604 = vld [vmem:[%s1573 + $0x168] sm:$0xff]
    %v1605 = vld [vmem:[%s1573 + $0x170] sm:$0xff]
    %v1606 = vld [vmem:[%s1573 + $0x1e0] sm:$0xff]
    %v1607 = vld [vmem:[%s1573 + $0x1e8] sm:$0xff]
    %v1608 = vld [vmem:[%s1573 + $0x1f8] sm:$0xff]
    %v1609 = vld [vmem:[%s1573 + $0x200] sm:$0xff]
    %v1610 = vld [vmem:[%s1573 + $0x210] sm:$0xff]
    %v1611 = vld [vmem:[%s1573 + $0x218] sm:$0xff]
    %v1612 = vld [vmem:[%s1573 + $0x228] sm:$0xff]
    %v1613 = vld [vmem:[%s1573 + $0x230] sm:$0xff]
    %v1614 = vld [vmem:[%s1573 + $0x240] sm:$0xff]
    %v1615 = vld [vmem:[%s1573 + $0x248] sm:$0xff]
    %v1616 = vld [vmem:[%s1573 + $0x258] sm:$0xff]
    %v1617 = vld [vmem:[%s1573 + $0x260] sm:$0xff]
    %v1618 = vld [vmem:[%s1573 + $0x270] sm:$0xff]
    %v1619 = vld [vmem:[%s1573 + $0x278] sm:$0xff]
    %v1620 = vld [vmem:[%s1573 + $0x288] sm:$0xff]
    %v1621 = vld [vmem:[%s1573 + $0x290] sm:$0xff]
    %v1622 = vld [vmem:[%s1573 + $0x2a0] sm:$0xff]
    %v1623 = vld [vmem:[%s1573 + $0x2a8] sm:$0xff]
    %v1624 = vld [vmem:[%s1573 + $0x2b8] sm:$0xff]
    %v1625 = vld [vmem:[%s1573 + $0x2c0] sm:$0xff]
    %v1626 = vld [vmem:[%s1573 + $0x2d0] sm:$0xff]
    %v1627 = vld [vmem:[%s1573 + $0x2d8] sm:$0xff]
    %v1628 = vld [vmem:[%s1573 + $0x2e8] sm:$0xff]
    %v1629 = vld [vmem:[%s1573 + $0x2f0] sm:$0xff]
    %v1630 = vld [vmem:[%s1573 + $0x300] sm:$0xff]
    %v1631 = vld [vmem:[%s1573 + $0x308] sm:$0xff]
    %v1632 = vld [vmem:[%s1573 + $0x318] sm:$0xff]
    %v1633 = vld [vmem:[%s1573 + $0x320] sm:$0xff]
    %v1634 = vld [vmem:[%s1573 + $0x330] sm:$0xff]
    %v1635 = vld [vmem:[%s1573 + $0x338] sm:$0xff]
    %v1636 = vld [vmem:[%s1573 + $0x348] sm:$0xff]
    %v1637 = vld [vmem:[%s1573 + $0x350] sm:$0xff]
    %v1638 = vld [vmem:[%s1573 + $0x1] sm:$0xff]
    %v1639 = vld [vmem:[%s1573 + $0x9] sm:$0xff]
    %v1640 = vld [vmem:[%s1573 + $0x19] sm:$0xff]
    %v1641 = vld [vmem:[%s1573 + $0x21] sm:$0xff]
    %v1642 = vld [vmem:[%s1573 + $0x31] sm:$0xff]
    %v1643 = vld [vmem:[%s1573 + $0x39] sm:$0xff]
    %v1644 = vld [vmem:[%s1573 + $0x49] sm:$0xff]
    %v1645 = vld [vmem:[%s1573 + $0x51] sm:$0xff]
    %v1646 = vld [vmem:[%s1573 + $0x61] sm:$0xff]
    %v1647 = vld [vmem:[%s1573 + $0x69] sm:$0xff]
    %v1648 = vld [vmem:[%s1573 + $0x79] sm:$0xff]
    %v1649 = vld [vmem:[%s1573 + $0x81] sm:$0xff]
    %v1650 = vld [vmem:[%s1573 + $0x91] sm:$0xff]
    %v1651 = vld [vmem:[%s1573 + $0x99] sm:$0xff]
    %v1652 = vld [vmem:[%s1573 + $0xa9] sm:$0xff]
    %v1653 = vld [vmem:[%s1573 + $0xb1] sm:$0xff]
    %v1654 = vld [vmem:[%s1573 + $0xc1] sm:$0xff]
    %v1655 = vld [vmem:[%s1573 + $0xc9] sm:$0xff]
    %v1656 = vld [vmem:[%s1573 + $0xd9] sm:$0xff]
    %v1657 = vld [vmem:[%s1573 + $0xe1] sm:$0xff]
    %v1658 = vld [vmem:[%s1573 + $0xf1] sm:$0xff]
    %v1659 = vld [vmem:[%s1573 + $0xf9] sm:$0xff]
    %v1660 = vld [vmem:[%s1573 + $0x109] sm:$0xff]
    %v1661 = vld [vmem:[%s1573 + $0x111] sm:$0xff]
    %v1662 = vld [vmem:[%s1573 + $0x121] sm:$0xff]
    %v1663 = vld [vmem:[%s1573 + $0x129] sm:$0xff]
    %v1664 = vld [vmem:[%s1573 + $0x139] sm:$0xff]
    %v1665 = vld [vmem:[%s1573 + $0x141] sm:$0xff]
    %v1666 = vld [vmem:[%s1573 + $0x151] sm:$0xff]
    %v1667 = vld [vmem:[%s1573 + $0x159] sm:$0xff]
    %v1668 = vld [vmem:[%s1573 + $0x169] sm:$0xff]
    %v1669 = vld [vmem:[%s1573 + $0x171] sm:$0xff]
    %v1670 = vld [vmem:[%s1573 + $0x1e1] sm:$0xff]
    %v1671 = vld [vmem:[%s1573 + $0x1e9] sm:$0xff]
    %v1672 = vld [vmem:[%s1573 + $0x1f9] sm:$0xff]
    %v1673 = vld [vmem:[%s1573 + $0x201] sm:$0xff]
    %v1674 = vld [vmem:[%s1573 + $0x211] sm:$0xff]
    %v1675 = vld [vmem:[%s1573 + $0x219] sm:$0xff]
    %v1676 = vld [vmem:[%s1573 + $0x229] sm:$0xff]
    %v1677 = vld [vmem:[%s1573 + $0x231] sm:$0xff]
    %v1678 = vld [vmem:[%s1573 + $0x241] sm:$0xff]
    %v1679 = vld [vmem:[%s1573 + $0x249] sm:$0xff]
    %v1680 = vld [vmem:[%s1573 + $0x259] sm:$0xff]
    %v1681 = vld [vmem:[%s1573 + $0x261] sm:$0xff]
    %v1682 = vld [vmem:[%s1573 + $0x271] sm:$0xff]
    %v1683 = vld [vmem:[%s1573 + $0x279] sm:$0xff]
    %v1684 = vld [vmem:[%s1573 + $0x289] sm:$0xff]
    %v1685 = vld [vmem:[%s1573 + $0x291] sm:$0xff]
    %v1686 = vld [vmem:[%s1573 + $0x2a1] sm:$0xff]
    %v1687 = vld [vmem:[%s1573 + $0x2a9] sm:$0xff]
    %v1688 = vld [vmem:[%s1573 + $0x2b9] sm:$0xff]
    %v1689 = vld [vmem:[%s1573 + $0x2c1] sm:$0xff]
    %v1690 = vld [vmem:[%s1573 + $0x2d1] sm:$0xff]
    %v1691 = vld [vmem:[%s1573 + $0x2d9] sm:$0xff]
    %v1692 = vld [vmem:[%s1573 + $0x2e9] sm:$0xff]
    %v1693 = vld [vmem:[%s1573 + $0x2f1] sm:$0xff]
    %v1694 = vld [vmem:[%s1573 + $0x301] sm:$0xff]
    %v1695 = vld [vmem:[%s1573 + $0x309] sm:$0xff]
    %v1696 = vld [vmem:[%s1573 + $0x319] sm:$0xff]
    %v1697 = vld [vmem:[%s1573 + $0x321] sm:$0xff]
    %v1698 = vld [vmem:[%s1573 + $0x331] sm:$0xff]
    %v1699 = vld [vmem:[%s1573 + $0x339] sm:$0xff]
    %v1700 = vld [vmem:[%s1573 + $0x349] sm:$0xff]
    %v1701 = vld [vmem:[%s1573 + $0x351] sm:$0xff]
    %v1702 = vld [vmem:[%s1573 + $0x2] sm:$0xff]
    %v1703 = vld [vmem:[%s1573 + $0xa] sm:$0xff]
    %v1704 = vld [vmem:[%s1573 + $0x1a] sm:$0xff]
    %v1705 = vld [vmem:[%s1573 + $0x22] sm:$0xff]
    %v1706 = vld [vmem:[%s1573 + $0x32] sm:$0xff]
    %v1707 = vld [vmem:[%s1573 + $0x3a] sm:$0xff]
    %v1708 = vld [vmem:[%s1573 + $0x4a] sm:$0xff]
    %v1709 = vld [vmem:[%s1573 + $0x52] sm:$0xff]
    %v1710 = vld [vmem:[%s1573 + $0x62] sm:$0xff]
    %v1711 = vld [vmem:[%s1573 + $0x6a] sm:$0xff]
    %v1712 = vld [vmem:[%s1573 + $0x7a] sm:$0xff]
    %v1713 = vld [vmem:[%s1573 + $0x82] sm:$0xff]
    %v1714 = vld [vmem:[%s1573 + $0x92] sm:$0xff]
    %v1715 = vld [vmem:[%s1573 + $0x9a] sm:$0xff]
    %v1716 = vld [vmem:[%s1573 + $0xaa] sm:$0xff]
    %v1717 = vld [vmem:[%s1573 + $0xb2] sm:$0xff]
    %v1718 = vld [vmem:[%s1573 + $0xc2] sm:$0xff]
    %v1719 = vld [vmem:[%s1573 + $0xca] sm:$0xff]
    %v1720 = vld [vmem:[%s1573 + $0xda] sm:$0xff]
    %v1721 = vld [vmem:[%s1573 + $0xe2] sm:$0xff]
    %v1722 = vld [vmem:[%s1573 + $0xf2] sm:$0xff]
    %v1723 = vld [vmem:[%s1573 + $0xfa] sm:$0xff]
    %v1724 = vld [vmem:[%s1573 + $0x10a] sm:$0xff]
    %v1725 = vld [vmem:[%s1573 + $0x112] sm:$0xff]
    %v1726 = vld [vmem:[%s1573 + $0x122] sm:$0xff]
    %v1727 = vld [vmem:[%s1573 + $0x12a] sm:$0xff]
    %v1728 = vld [vmem:[%s1573 + $0x13a] sm:$0xff]
    %v1729 = vld [vmem:[%s1573 + $0x142] sm:$0xff]
    %v1730 = vld [vmem:[%s1573 + $0x152] sm:$0xff]
    %v1731 = vld [vmem:[%s1573 + $0x15a] sm:$0xff]
    %v1732 = vld [vmem:[%s1573 + $0x16a] sm:$0xff]
    %v1733 = vld [vmem:[%s1573 + $0x172] sm:$0xff]
    %v1734 = vld [vmem:[%s1573 + $0x1e2] sm:$0xff]
    %v1735 = vld [vmem:[%s1573 + $0x1ea] sm:$0xff]
    %v1736 = vld [vmem:[%s1573 + $0x1fa] sm:$0xff]
    %v1737 = vld [vmem:[%s1573 + $0x202] sm:$0xff]
    %v1738 = vld [vmem:[%s1573 + $0x212] sm:$0xff]
    %v1739 = vld [vmem:[%s1573 + $0x21a] sm:$0xff]
    %v1740 = vld [vmem:[%s1573 + $0x22a] sm:$0xff]
    %v1741 = vld [vmem:[%s1573 + $0x232] sm:$0xff]
    %v1742 = vld [vmem:[%s1573 + $0x242] sm:$0xff]
    %v1743 = vld [vmem:[%s1573 + $0x24a] sm:$0xff]
    %v1744 = vld [vmem:[%s1573 + $0x25a] sm:$0xff]
    %v1745 = vld [vmem:[%s1573 + $0x262] sm:$0xff]
    %v1746 = vld [vmem:[%s1573 + $0x272] sm:$0xff]
    %v1747 = vld [vmem:[%s1573 + $0x27a] sm:$0xff]
    %v1748 = vld [vmem:[%s1573 + $0x28a] sm:$0xff]
    %v1749 = vld [vmem:[%s1573 + $0x292] sm:$0xff]
    %v1750 = vld [vmem:[%s1573 + $0x2a2] sm:$0xff]
    %v1751 = vld [vmem:[%s1573 + $0x2aa] sm:$0xff]
    %v1752 = vld [vmem:[%s1573 + $0x2ba] sm:$0xff]
    %v1753 = vld [vmem:[%s1573 + $0x2c2] sm:$0xff]
    %v1754 = vld [vmem:[%s1573 + $0x2d2] sm:$0xff]
    %v1755 = vld [vmem:[%s1573 + $0x2da] sm:$0xff]
    %v1756 = vld [vmem:[%s1573 + $0x2ea] sm:$0xff]
    %v1757 = vld [vmem:[%s1573 + $0x2f2] sm:$0xff]
    %v1758 = vld [vmem:[%s1573 + $0x302] sm:$0xff]
    %v1759 = vld [vmem:[%s1573 + $0x30a] sm:$0xff]
    %v1760 = vld [vmem:[%s1573 + $0x31a] sm:$0xff]
    %v1761 = vld [vmem:[%s1573 + $0x322] sm:$0xff]
    %v1762 = vld [vmem:[%s1573 + $0x332] sm:$0xff]
    %v1763 = vld [vmem:[%s1573 + $0x33a] sm:$0xff]
    %v1764 = vld [vmem:[%s1573 + $0x34a] sm:$0xff]
    %v1765 = vld [vmem:[%s1573 + $0x352] sm:$0xff]
    %v1766 = vld [vmem:[%s1573 + $0x3] sm:$0xff]
    %v1767 = vld [vmem:[%s1573 + $0xb] sm:$0xff]
    %v1768 = vld [vmem:[%s1573 + $0x1b] sm:$0xff]
    %v1769 = vld [vmem:[%s1573 + $0x23] sm:$0xff]
    %v1770 = vld [vmem:[%s1573 + $0x33] sm:$0xff]
    %v1771 = vld [vmem:[%s1573 + $0x3b] sm:$0xff]
    %v1772 = vld [vmem:[%s1573 + $0x4b] sm:$0xff]
    %v1773 = vld [vmem:[%s1573 + $0x53] sm:$0xff]
    %v1774 = vld [vmem:[%s1573 + $0x63] sm:$0xff]
    %v1775 = vld [vmem:[%s1573 + $0x6b] sm:$0xff]
    %v1776 = vld [vmem:[%s1573 + $0x7b] sm:$0xff]
    %v1777 = vld [vmem:[%s1573 + $0x83] sm:$0xff]
    %v1778 = vld [vmem:[%s1573 + $0x93] sm:$0xff]
    %v1779 = vld [vmem:[%s1573 + $0x9b] sm:$0xff]
    %v1780 = vld [vmem:[%s1573 + $0xab] sm:$0xff]
    %v1781 = vld [vmem:[%s1573 + $0xb3] sm:$0xff]
    %v1782 = vld [vmem:[%s1573 + $0xc3] sm:$0xff]
    %v1783 = vld [vmem:[%s1573 + $0xcb] sm:$0xff]
    %v1784 = vld [vmem:[%s1573 + $0xdb] sm:$0xff]
    %v1785 = vld [vmem:[%s1573 + $0xe3] sm:$0xff]
    %v1786 = vld [vmem:[%s1573 + $0xf3] sm:$0xff]
    %v1787 = vld [vmem:[%s1573 + $0xfb] sm:$0xff]
    %v1788 = vld [vmem:[%s1573 + $0x10b] sm:$0xff]
    %v1789 = vld [vmem:[%s1573 + $0x113] sm:$0xff]
    %v1790 = vld [vmem:[%s1573 + $0x123] sm:$0xff]
    %v1791 = vld [vmem:[%s1573 + $0x12b] sm:$0xff]
    %v1792 = vld [vmem:[%s1573 + $0x13b] sm:$0xff]
    %v1793 = vld [vmem:[%s1573 + $0x143] sm:$0xff]
    %v1794 = vld [vmem:[%s1573 + $0x153] sm:$0xff]
    %v1795 = vld [vmem:[%s1573 + $0x15b] sm:$0xff]
    %v1796 = vld [vmem:[%s1573 + $0x16b] sm:$0xff]
    %v1797 = vld [vmem:[%s1573 + $0x173] sm:$0xff]
    %v1798 = vld [vmem:[%s1573 + $0x1e3] sm:$0xff]
    %v1799 = vld [vmem:[%s1573 + $0x1eb] sm:$0xff]
    %v1800 = vld [vmem:[%s1573 + $0x1fb] sm:$0xff]
    %v1801 = vld [vmem:[%s1573 + $0x203] sm:$0xff]
    %v1802 = vld [vmem:[%s1573 + $0x213] sm:$0xff]
    %v1803 = vld [vmem:[%s1573 + $0x21b] sm:$0xff]
    %v1804 = vld [vmem:[%s1573 + $0x22b] sm:$0xff]
    %v1805 = vld [vmem:[%s1573 + $0x233] sm:$0xff]
    %v1806 = vld [vmem:[%s1573 + $0x243] sm:$0xff]
    %v1807 = vld [vmem:[%s1573 + $0x24b] sm:$0xff]
    %v1808 = vld [vmem:[%s1573 + $0x25b] sm:$0xff]
    %v1809 = vld [vmem:[%s1573 + $0x263] sm:$0xff]
    %v1810 = vld [vmem:[%s1573 + $0x273] sm:$0xff]
    %v1811 = vld [vmem:[%s1573 + $0x27b] sm:$0xff]
    %v1812 = vld [vmem:[%s1573 + $0x28b] sm:$0xff]
    %v1813 = vld [vmem:[%s1573 + $0x293] sm:$0xff]
    %v1814 = vld [vmem:[%s1573 + $0x2a3] sm:$0xff]
    %v1815 = vld [vmem:[%s1573 + $0x2ab] sm:$0xff]
    %v1816 = vld [vmem:[%s1573 + $0x2bb] sm:$0xff]
    %v1817 = vld [vmem:[%s1573 + $0x2c3] sm:$0xff]
    %v1818 = vld [vmem:[%s1573 + $0x2d3] sm:$0xff]
    %v1819 = vld [vmem:[%s1573 + $0x2db] sm:$0xff]
    %v1820 = vld [vmem:[%s1573 + $0x2eb] sm:$0xff]
    %v1821 = vld [vmem:[%s1573 + $0x2f3] sm:$0xff]
    %v1822 = vld [vmem:[%s1573 + $0x303] sm:$0xff]
    %v1823 = vld [vmem:[%s1573 + $0x30b] sm:$0xff]
    %v1824 = vld [vmem:[%s1573 + $0x31b] sm:$0xff]
    %v1825 = vld [vmem:[%s1573 + $0x323] sm:$0xff]
    %v1826 = vld [vmem:[%s1573 + $0x333] sm:$0xff]
    %v1827 = vld [vmem:[%s1573 + $0x33b] sm:$0xff]
    %v1828 = vld [vmem:[%s1573 + $0x34b] sm:$0xff]
    %v1829 = vld [vmem:[%s1573 + $0x353] sm:$0xff]
    %v1830 = vld [vmem:[%s1573 + $0x4] sm:$0xff]
    %v1831 = vld [vmem:[%s1573 + $0xc] sm:$0xff]
    %v1832 = vld [vmem:[%s1573 + $0x1c] sm:$0xff]
    %v1833 = vld [vmem:[%s1573 + $0x24] sm:$0xff]
    %v1834 = vld [vmem:[%s1573 + $0x34] sm:$0xff]
    %v1835 = vld [vmem:[%s1573 + $0x3c] sm:$0xff]
    %v1836 = vld [vmem:[%s1573 + $0x4c] sm:$0xff]
    %v1837 = vld [vmem:[%s1573 + $0x54] sm:$0xff]
    %v1838 = vld [vmem:[%s1573 + $0x64] sm:$0xff]
    %v1839 = vld [vmem:[%s1573 + $0x6c] sm:$0xff]
    %v1840 = vld [vmem:[%s1573 + $0x7c] sm:$0xff]
    %v1841 = vld [vmem:[%s1573 + $0x84] sm:$0xff]
    %v1842 = vld [vmem:[%s1573 + $0x94] sm:$0xff]
    %v1843 = vld [vmem:[%s1573 + $0x9c] sm:$0xff]
    %v1844 = vld [vmem:[%s1573 + $0xac] sm:$0xff]
    %v1845 = vld [vmem:[%s1573 + $0xb4] sm:$0xff]
    %v1846 = vld [vmem:[%s1573 + $0xc4] sm:$0xff]
    %v1847 = vld [vmem:[%s1573 + $0xcc] sm:$0xff]
    %v1848 = vld [vmem:[%s1573 + $0xdc] sm:$0xff]
    %v1849 = vld [vmem:[%s1573 + $0xe4] sm:$0xff]
    %v1850 = vld [vmem:[%s1573 + $0xf4] sm:$0xff]
    %v1851 = vld [vmem:[%s1573 + $0xfc] sm:$0xff]
    %v1852 = vld [vmem:[%s1573 + $0x10c] sm:$0xff]
    %v1853 = vld [vmem:[%s1573 + $0x114] sm:$0xff]
    %v1854 = vld [vmem:[%s1573 + $0x124] sm:$0xff]
    %v1855 = vld [vmem:[%s1573 + $0x12c] sm:$0xff]
    %v1856 = vld [vmem:[%s1573 + $0x13c] sm:$0xff]
    %v1857 = vld [vmem:[%s1573 + $0x144] sm:$0xff]
    %v1858 = vld [vmem:[%s1573 + $0x154] sm:$0xff]
    %v1859 = vld [vmem:[%s1573 + $0x15c] sm:$0xff]
    %v1860 = vld [vmem:[%s1573 + $0x16c] sm:$0xff]
    %v1861 = vld [vmem:[%s1573 + $0x174] sm:$0xff]
    %v1862 = vld [vmem:[%s1573 + $0x1e4] sm:$0xff]
    %v1863 = vld [vmem:[%s1573 + $0x1ec] sm:$0xff]
    %v1864 = vld [vmem:[%s1573 + $0x1fc] sm:$0xff]
    %v1865 = vld [vmem:[%s1573 + $0x204] sm:$0xff]
    %v1866 = vld [vmem:[%s1573 + $0x214] sm:$0xff]
    %v1867 = vld [vmem:[%s1573 + $0x21c] sm:$0xff]
    %v1868 = vld [vmem:[%s1573 + $0x22c] sm:$0xff]
    %v1869 = vld [vmem:[%s1573 + $0x234] sm:$0xff]
    %v1870 = vld [vmem:[%s1573 + $0x244] sm:$0xff]
    %v1871 = vld [vmem:[%s1573 + $0x24c] sm:$0xff]
    %v1872 = vld [vmem:[%s1573 + $0x25c] sm:$0xff]
    %v1873 = vld [vmem:[%s1573 + $0x264] sm:$0xff]
    %v1874 = vld [vmem:[%s1573 + $0x274] sm:$0xff]
    %v1875 = vld [vmem:[%s1573 + $0x27c] sm:$0xff]
    %v1876 = vld [vmem:[%s1573 + $0x28c] sm:$0xff]
    %v1877 = vld [vmem:[%s1573 + $0x294] sm:$0xff]
    %v1878 = vld [vmem:[%s1573 + $0x2a4] sm:$0xff]
    %v1879 = vld [vmem:[%s1573 + $0x2ac] sm:$0xff]
    %v1880 = vld [vmem:[%s1573 + $0x2bc] sm:$0xff]
    %v1881 = vld [vmem:[%s1573 + $0x2c4] sm:$0xff]
    %v1882 = vld [vmem:[%s1573 + $0x2d4] sm:$0xff]
    %v1883 = vld [vmem:[%s1573 + $0x2dc] sm:$0xff]
    %v1884 = vld [vmem:[%s1573 + $0x2ec] sm:$0xff]
    %v1885 = vld [vmem:[%s1573 + $0x2f4] sm:$0xff]
    %v1886 = vld [vmem:[%s1573 + $0x304] sm:$0xff]
    %v1887 = vld [vmem:[%s1573 + $0x30c] sm:$0xff]
    %v1888 = vld [vmem:[%s1573 + $0x31c] sm:$0xff]
    %v1889 = vld [vmem:[%s1573 + $0x324] sm:$0xff]
    %v1890 = vld [vmem:[%s1573 + $0x334] sm:$0xff]
    %v1891 = vld [vmem:[%s1573 + $0x33c] sm:$0xff]
    %v1892 = vld [vmem:[%s1573 + $0x34c] sm:$0xff]
    %v1893 = vld [vmem:[%s1573 + $0x354] sm:$0xff]
    %1958 = vrot.lane.b32.xlu0 %v355, 3
    %v1959 = vpop.permute.xlu0 %1958
    %1960 = vrot.lane.b32.xlu0 %v356, 3
    %v1961 = vpop.permute.xlu0 %1960
    %1962 = vrot.lane.b32.xlu0 %v357, 3
    %v1963 = vpop.permute.xlu0 %1962
    %1964 = vrot.lane.b32.xlu0 %v358, 3
    %v1965 = vpop.permute.xlu0 %1964
    %1966 = vrot.lane.b32.xlu0 %v359, 3
    %v1967 = vpop.permute.xlu0 %1966
    %1968 = vrot.lane.b32.xlu0 %v360, 3
    %v1969 = vpop.permute.xlu0 %1968
    %1970 = vrot.lane.b32.xlu0 %v361, 3
    %v1971 = vpop.permute.xlu0 %1970
    %1972 = vrot.lane.b32.xlu0 %v362, 3
    %v1973 = vpop.permute.xlu0 %1972
    %1974 = vrot.lane.b32.xlu0 %v363, 3
    %v1975 = vpop.permute.xlu0 %1974
    %1976 = vrot.lane.b32.xlu0 %v364, 3
    %v1977 = vpop.permute.xlu0 %1976
    %1978 = vrot.lane.b32.xlu0 %v365, 3
    %v1979 = vpop.permute.xlu0 %1978
    %1980 = vrot.lane.b32.xlu0 %v366, 3
    %v1981 = vpop.permute.xlu0 %1980
    %1982 = vrot.lane.b32.xlu0 %v367, 3
    %v1983 = vpop.permute.xlu0 %1982
    %1984 = vrot.lane.b32.xlu0 %v368, 3
    %v1985 = vpop.permute.xlu0 %1984
    %1986 = vrot.lane.b32.xlu0 %v369, 3
    %v1987 = vpop.permute.xlu0 %1986
    %1988 = vrot.lane.b32.xlu0 %v370, 3
    %v1989 = vpop.permute.xlu0 %1988
    %1990 = vrot.lane.b32.xlu0 %v371, 3
    %v1991 = vpop.permute.xlu0 %1990
    %1992 = vrot.lane.b32.xlu0 %v372, 3
    %v1993 = vpop.permute.xlu0 %1992
    %1994 = vrot.lane.b32.xlu0 %v373, 3
    %v1995 = vpop.permute.xlu0 %1994
    %1996 = vrot.lane.b32.xlu0 %v374, 3
    %v1997 = vpop.permute.xlu0 %1996
    %1998 = vrot.lane.b32.xlu0 %v375, 3
    %v1999 = vpop.permute.xlu0 %1998
    %2000 = vrot.lane.b32.xlu0 %v376, 3
    %v2001 = vpop.permute.xlu0 %2000
    %2002 = vrot.lane.b32.xlu0 %v377, 3
    %v2003 = vpop.permute.xlu0 %2002
    %2004 = vrot.lane.b32.xlu0 %v378, 3
    %v2005 = vpop.permute.xlu0 %2004
    %2006 = vrot.lane.b32.xlu0 %v379, 3
    %v2007 = vpop.permute.xlu0 %2006
    %2008 = vrot.lane.b32.xlu0 %v380, 3
    %v2009 = vpop.permute.xlu0 %2008
    %2010 = vrot.lane.b32.xlu0 %v381, 3
    %v2011 = vpop.permute.xlu0 %2010
    %2012 = vrot.lane.b32.xlu0 %v382, 3
    %v2013 = vpop.permute.xlu0 %2012
    %2014 = vrot.lane.b32.xlu0 %v383, 3
    %v2015 = vpop.permute.xlu0 %2014
    %2016 = vrot.lane.b32.xlu0 %v384, 3
    %v2017 = vpop.permute.xlu0 %2016
    %2018 = vrot.lane.b32.xlu0 %v385, 3
    %v2019 = vpop.permute.xlu0 %2018
    %2020 = vrot.lane.b32.xlu0 %v386, 3
    %v2021 = vpop.permute.xlu0 %2020
    %2022 = vrot.lane.b32.xlu0 %v387, 3
    %v2023 = vpop.permute.xlu0 %2022
    %2024 = vrot.lane.b32.xlu0 %v388, 3
    %v2025 = vpop.permute.xlu0 %2024
    %2026 = vrot.lane.b32.xlu0 %v389, 3
    %v2027 = vpop.permute.xlu0 %2026
    %2028 = vrot.lane.b32.xlu0 %v390, 3
    %v2029 = vpop.permute.xlu0 %2028
    %2030 = vrot.lane.b32.xlu0 %v391, 3
    %v2031 = vpop.permute.xlu0 %2030
    %2032 = vrot.lane.b32.xlu0 %v392, 3
    %v2033 = vpop.permute.xlu0 %2032
    %2034 = vrot.lane.b32.xlu0 %v393, 3
    %v2035 = vpop.permute.xlu0 %2034
    %2036 = vrot.lane.b32.xlu0 %v394, 3
    %v2037 = vpop.permute.xlu0 %2036
    %2038 = vrot.lane.b32.xlu0 %v395, 3
    %v2039 = vpop.permute.xlu0 %2038
    %2040 = vrot.lane.b32.xlu0 %v396, 3
    %v2041 = vpop.permute.xlu0 %2040
    %2042 = vrot.lane.b32.xlu0 %v397, 3
    %v2043 = vpop.permute.xlu0 %2042
    %2044 = vrot.lane.b32.xlu0 %v398, 3
    %v2045 = vpop.permute.xlu0 %2044
    %2046 = vrot.lane.b32.xlu0 %v399, 3
    %v2047 = vpop.permute.xlu0 %2046
    %2048 = vrot.lane.b32.xlu0 %v400, 3
    %v2049 = vpop.permute.xlu0 %2048
    %2050 = vrot.lane.b32.xlu0 %v401, 3
    %v2051 = vpop.permute.xlu0 %2050
    %2052 = vrot.lane.b32.xlu0 %v402, 3
    %v2053 = vpop.permute.xlu0 %2052
    %2054 = vrot.lane.b32.xlu0 %v403, 3
    %v2055 = vpop.permute.xlu0 %2054
    %2056 = vrot.lane.b32.xlu0 %v404, 3
    %v2057 = vpop.permute.xlu0 %2056
    %2058 = vrot.lane.b32.xlu0 %v405, 3
    %v2059 = vpop.permute.xlu0 %2058
    %2060 = vrot.lane.b32.xlu0 %v406, 3
    %v2061 = vpop.permute.xlu0 %2060
    %2062 = vrot.lane.b32.xlu0 %v407, 3
    %v2063 = vpop.permute.xlu0 %2062
    %2064 = vrot.lane.b32.xlu0 %v408, 3
    %v2065 = vpop.permute.xlu0 %2064
    %2066 = vrot.lane.b32.xlu0 %v409, 3
    %v2067 = vpop.permute.xlu0 %2066
    %2068 = vrot.lane.b32.xlu0 %v410, 3
    %v2069 = vpop.permute.xlu0 %2068
    %2070 = vrot.lane.b32.xlu0 %v411, 3
    %v2071 = vpop.permute.xlu0 %2070
    %2072 = vrot.lane.b32.xlu0 %v412, 3
    %v2073 = vpop.permute.xlu0 %2072
    %2074 = vrot.lane.b32.xlu0 %v413, 3
    %v2075 = vpop.permute.xlu0 %2074
    %2076 = vrot.lane.b32.xlu0 %v414, 3
    %v2077 = vpop.permute.xlu0 %2076
    %2078 = vrot.lane.b32.xlu0 %v415, 3
    %v2079 = vpop.permute.xlu0 %2078
    %2080 = vrot.lane.b32.xlu0 %v416, 3
    %v2081 = vpop.permute.xlu0 %2080
    %2082 = vrot.lane.b32.xlu0 %v417, 3
    %v2083 = vpop.permute.xlu0 %2082
    %2084 = vrot.lane.b32.xlu0 %v418, 3
    %v2085 = vpop.permute.xlu0 %2084
    %2214 = vrot.lane.b32.xlu0 %v419, 6
    %v2215 = vpop.permute.xlu0 %2214
    %2216 = vrot.lane.b32.xlu0 %v420, 6
    %v2217 = vpop.permute.xlu0 %2216
    %2218 = vrot.lane.b32.xlu0 %v421, 6
    %v2219 = vpop.permute.xlu0 %2218
    %2220 = vrot.lane.b32.xlu0 %v422, 6
    %v2221 = vpop.permute.xlu0 %2220
    %2222 = vrot.lane.b32.xlu0 %v423, 6
    %v2223 = vpop.permute.xlu0 %2222
    %2224 = vrot.lane.b32.xlu0 %v424, 6
    %v2225 = vpop.permute.xlu0 %2224
    %2226 = vrot.lane.b32.xlu0 %v425, 6
    %v2227 = vpop.permute.xlu0 %2226
    %2228 = vrot.lane.b32.xlu0 %v426, 6
    %v2229 = vpop.permute.xlu0 %2228
    %2230 = vrot.lane.b32.xlu0 %v427, 6
    %v2231 = vpop.permute.xlu0 %2230
    %2232 = vrot.lane.b32.xlu0 %v428, 6
    %v2233 = vpop.permute.xlu0 %2232
    %2234 = vrot.lane.b32.xlu0 %v429, 6
    %v2235 = vpop.permute.xlu0 %2234
    %2236 = vrot.lane.b32.xlu0 %v430, 6
    %v2237 = vpop.permute.xlu0 %2236
    %2238 = vrot.lane.b32.xlu0 %v431, 6
    %v2239 = vpop.permute.xlu0 %2238
    %2240 = vrot.lane.b32.xlu0 %v432, 6
    %v2241 = vpop.permute.xlu0 %2240
    %2242 = vrot.lane.b32.xlu0 %v433, 6
    %v2243 = vpop.permute.xlu0 %2242
    %2244 = vrot.lane.b32.xlu0 %v434, 6
    %v2245 = vpop.permute.xlu0 %2244
    %2246 = vrot.lane.b32.xlu0 %v435, 6
    %v2247 = vpop.permute.xlu0 %2246
    %2248 = vrot.lane.b32.xlu0 %v436, 6
    %v2249 = vpop.permute.xlu0 %2248
    %2250 = vrot.lane.b32.xlu0 %v437, 6
    %v2251 = vpop.permute.xlu0 %2250
    %2252 = vrot.lane.b32.xlu0 %v438, 6
    %v2253 = vpop.permute.xlu0 %2252
    %2254 = vrot.lane.b32.xlu0 %v439, 6
    %v2255 = vpop.permute.xlu0 %2254
    %2256 = vrot.lane.b32.xlu0 %v440, 6
    %v2257 = vpop.permute.xlu0 %2256
    %2258 = vrot.lane.b32.xlu0 %v441, 6
    %v2259 = vpop.permute.xlu0 %2258
    %2260 = vrot.lane.b32.xlu0 %v442, 6
    %v2261 = vpop.permute.xlu0 %2260
    %2262 = vrot.lane.b32.xlu0 %v443, 6
    %v2263 = vpop.permute.xlu0 %2262
    %2264 = vrot.lane.b32.xlu0 %v444, 6
    %v2265 = vpop.permute.xlu0 %2264
    %2266 = vrot.lane.b32.xlu0 %v445, 6
    %v2267 = vpop.permute.xlu0 %2266
    %2268 = vrot.lane.b32.xlu0 %v446, 6
    %v2269 = vpop.permute.xlu0 %2268
    %2270 = vrot.lane.b32.xlu0 %v447, 6
    %v2271 = vpop.permute.xlu0 %2270
    %2272 = vrot.lane.b32.xlu0 %v448, 6
    %v2273 = vpop.permute.xlu0 %2272
    %2274 = vrot.lane.b32.xlu0 %v449, 6
    %v2275 = vpop.permute.xlu0 %2274
    %2276 = vrot.lane.b32.xlu0 %v450, 6
    %v2277 = vpop.permute.xlu0 %2276
    %2278 = vrot.lane.b32.xlu0 %v451, 6
    %v2279 = vpop.permute.xlu0 %2278
    %2280 = vrot.lane.b32.xlu0 %v452, 6
    %v2281 = vpop.permute.xlu0 %2280
    %2282 = vrot.lane.b32.xlu0 %v453, 6
    %v2283 = vpop.permute.xlu0 %2282
    %2284 = vrot.lane.b32.xlu0 %v454, 6
    %v2285 = vpop.permute.xlu0 %2284
    %2286 = vrot.lane.b32.xlu0 %v455, 6
    %v2287 = vpop.permute.xlu0 %2286
    %2288 = vrot.lane.b32.xlu0 %v456, 6
    %v2289 = vpop.permute.xlu0 %2288
    %2290 = vrot.lane.b32.xlu0 %v457, 6
    %v2291 = vpop.permute.xlu0 %2290
    %2292 = vrot.lane.b32.xlu0 %v458, 6
    %v2293 = vpop.permute.xlu0 %2292
    %2294 = vrot.lane.b32.xlu0 %v459, 6
    %v2295 = vpop.permute.xlu0 %2294
    %2296 = vrot.lane.b32.xlu0 %v460, 6
    %v2297 = vpop.permute.xlu0 %2296
    %2298 = vrot.lane.b32.xlu0 %v461, 6
    %v2299 = vpop.permute.xlu0 %2298
    %2300 = vrot.lane.b32.xlu0 %v462, 6
    %v2301 = vpop.permute.xlu0 %2300
    %2302 = vrot.lane.b32.xlu0 %v463, 6
    %v2303 = vpop.permute.xlu0 %2302
    %2304 = vrot.lane.b32.xlu0 %v464, 6
    %v2305 = vpop.permute.xlu0 %2304
    %2306 = vrot.lane.b32.xlu0 %v465, 6
    %v2307 = vpop.permute.xlu0 %2306
    %2308 = vrot.lane.b32.xlu0 %v466, 6
    %v2309 = vpop.permute.xlu0 %2308
    %2310 = vrot.lane.b32.xlu0 %v467, 6
    %v2311 = vpop.permute.xlu0 %2310
    %2312 = vrot.lane.b32.xlu0 %v468, 6
    %v2313 = vpop.permute.xlu0 %2312
    %2314 = vrot.lane.b32.xlu0 %v469, 6
    %v2315 = vpop.permute.xlu0 %2314
    %2316 = vrot.lane.b32.xlu0 %v470, 6
    %v2317 = vpop.permute.xlu0 %2316
    %2318 = vrot.lane.b32.xlu0 %v471, 6
    %v2319 = vpop.permute.xlu0 %2318
    %2320 = vrot.lane.b32.xlu0 %v472, 6
    %v2321 = vpop.permute.xlu0 %2320
    %2322 = vrot.lane.b32.xlu0 %v473, 6
    %v2323 = vpop.permute.xlu0 %2322
    %2324 = vrot.lane.b32.xlu0 %v474, 6
    %v2325 = vpop.permute.xlu0 %2324
    %2326 = vrot.lane.b32.xlu0 %v475, 6
    %v2327 = vpop.permute.xlu0 %2326
    %2328 = vrot.lane.b32.xlu0 %v476, 6
    %v2329 = vpop.permute.xlu0 %2328
    %2330 = vrot.lane.b32.xlu0 %v477, 6
    %v2331 = vpop.permute.xlu0 %2330
    %2332 = vrot.lane.b32.xlu0 %v478, 6
    %v2333 = vpop.permute.xlu0 %2332
    %2334 = vrot.lane.b32.xlu0 %v479, 6
    %v2335 = vpop.permute.xlu0 %2334
    %2336 = vrot.lane.b32.xlu0 %v480, 6
    %v2337 = vpop.permute.xlu0 %2336
    %2338 = vrot.lane.b32.xlu0 %v481, 6
    %v2339 = vpop.permute.xlu0 %2338
    %2340 = vrot.lane.b32.xlu0 %v482, 6
    %v2341 = vpop.permute.xlu0 %2340
    %2470 = vrot.lane.b32.xlu0 %v483, 9
    %v2471 = vpop.permute.xlu0 %2470
    %2472 = vrot.lane.b32.xlu0 %v484, 9
    %v2473 = vpop.permute.xlu0 %2472
    %2474 = vrot.lane.b32.xlu0 %v485, 9
    %v2475 = vpop.permute.xlu0 %2474
    %2476 = vrot.lane.b32.xlu0 %v486, 9
    %v2477 = vpop.permute.xlu0 %2476
    %2478 = vrot.lane.b32.xlu0 %v487, 9
    %v2479 = vpop.permute.xlu0 %2478
    %2480 = vrot.lane.b32.xlu0 %v488, 9
    %v2481 = vpop.permute.xlu0 %2480
    %2482 = vrot.lane.b32.xlu0 %v489, 9
    %v2483 = vpop.permute.xlu0 %2482
    %2484 = vrot.lane.b32.xlu0 %v490, 9
    %v2485 = vpop.permute.xlu0 %2484
    %2486 = vrot.lane.b32.xlu0 %v491, 9
    %v2487 = vpop.permute.xlu0 %2486
    %2488 = vrot.lane.b32.xlu0 %v492, 9
    %v2489 = vpop.permute.xlu0 %2488
    %2490 = vrot.lane.b32.xlu0 %v493, 9
    %v2491 = vpop.permute.xlu0 %2490
    %2492 = vrot.lane.b32.xlu0 %v494, 9
    %v2493 = vpop.permute.xlu0 %2492
    %2494 = vrot.lane.b32.xlu0 %v495, 9
    %v2495 = vpop.permute.xlu0 %2494
    %2496 = vrot.lane.b32.xlu0 %v496, 9
    %v2497 = vpop.permute.xlu0 %2496
    %2498 = vrot.lane.b32.xlu0 %v497, 9
    %v2499 = vpop.permute.xlu0 %2498
    %2500 = vrot.lane.b32.xlu0 %v498, 9
    %v2501 = vpop.permute.xlu0 %2500
    %2502 = vrot.lane.b32.xlu0 %v499, 9
    %v2503 = vpop.permute.xlu0 %2502
    %2504 = vrot.lane.b32.xlu0 %v500, 9
    %v2505 = vpop.permute.xlu0 %2504
    %2506 = vrot.lane.b32.xlu0 %v501, 9
    %v2507 = vpop.permute.xlu0 %2506
    %2508 = vrot.lane.b32.xlu0 %v502, 9
    %v2509 = vpop.permute.xlu0 %2508
    %2510 = vrot.lane.b32.xlu0 %v503, 9
    %v2511 = vpop.permute.xlu0 %2510
    %2512 = vrot.lane.b32.xlu0 %v504, 9
    %v2513 = vpop.permute.xlu0 %2512
    %2514 = vrot.lane.b32.xlu0 %v505, 9
    %v2515 = vpop.permute.xlu0 %2514
    %2516 = vrot.lane.b32.xlu0 %v506, 9
    %v2517 = vpop.permute.xlu0 %2516
    %2518 = vrot.lane.b32.xlu0 %v507, 9
    %v2519 = vpop.permute.xlu0 %2518
    %2520 = vrot.lane.b32.xlu0 %v508, 9
    %v2521 = vpop.permute.xlu0 %2520
    %2522 = vrot.lane.b32.xlu0 %v509, 9
    %v2523 = vpop.permute.xlu0 %2522
    %2524 = vrot.lane.b32.xlu0 %v510, 9
    %v2525 = vpop.permute.xlu0 %2524
    %2526 = vrot.lane.b32.xlu0 %v511, 9
    %v2527 = vpop.permute.xlu0 %2526
    %2528 = vrot.lane.b32.xlu0 %v512, 9
    %v2529 = vpop.permute.xlu0 %2528
    %2530 = vrot.lane.b32.xlu0 %v513, 9
    %v2531 = vpop.permute.xlu0 %2530
    %2532 = vrot.lane.b32.xlu0 %v514, 9
    %v2533 = vpop.permute.xlu0 %2532
    %2534 = vrot.lane.b32.xlu0 %v515, 9
    %v2535 = vpop.permute.xlu0 %2534
    %2536 = vrot.lane.b32.xlu0 %v516, 9
    %v2537 = vpop.permute.xlu0 %2536
    %2538 = vrot.lane.b32.xlu0 %v517, 9
    %v2539 = vpop.permute.xlu0 %2538
    %2540 = vrot.lane.b32.xlu0 %v518, 9
    %v2541 = vpop.permute.xlu0 %2540
    %2542 = vrot.lane.b32.xlu0 %v519, 9
    %v2543 = vpop.permute.xlu0 %2542
    %2544 = vrot.lane.b32.xlu0 %v520, 9
    %v2545 = vpop.permute.xlu0 %2544
    %2546 = vrot.lane.b32.xlu0 %v521, 9
    %v2547 = vpop.permute.xlu0 %2546
    %2548 = vrot.lane.b32.xlu0 %v522, 9
    %v2549 = vpop.permute.xlu0 %2548
    %2550 = vrot.lane.b32.xlu0 %v523, 9
    %v2551 = vpop.permute.xlu0 %2550
    %2552 = vrot.lane.b32.xlu0 %v524, 9
    %v2553 = vpop.permute.xlu0 %2552
    %2554 = vrot.lane.b32.xlu0 %v525, 9
    %v2555 = vpop.permute.xlu0 %2554
    %2556 = vrot.lane.b32.xlu0 %v526, 9
    %v2557 = vpop.permute.xlu0 %2556
    %2558 = vrot.lane.b32.xlu0 %v527, 9
    %v2559 = vpop.permute.xlu0 %2558
    %2560 = vrot.lane.b32.xlu0 %v528, 9
    %v2561 = vpop.permute.xlu0 %2560
    %2562 = vrot.lane.b32.xlu0 %v529, 9
    %v2563 = vpop.permute.xlu0 %2562
    %2564 = vrot.lane.b32.xlu0 %v530, 9
    %v2565 = vpop.permute.xlu0 %2564
    %2566 = vrot.lane.b32.xlu0 %v531, 9
    %v2567 = vpop.permute.xlu0 %2566
    %2568 = vrot.lane.b32.xlu0 %v532, 9
    %v2569 = vpop.permute.xlu0 %2568
    %2570 = vrot.lane.b32.xlu0 %v533, 9
    %v2571 = vpop.permute.xlu0 %2570
    %2572 = vrot.lane.b32.xlu0 %v534, 9
    %v2573 = vpop.permute.xlu0 %2572
    %2574 = vrot.lane.b32.xlu0 %v535, 9
    %v2575 = vpop.permute.xlu0 %2574
    %2576 = vrot.lane.b32.xlu0 %v536, 9
    %v2577 = vpop.permute.xlu0 %2576
    %2578 = vrot.lane.b32.xlu0 %v537, 9
    %v2579 = vpop.permute.xlu0 %2578
    %2580 = vrot.lane.b32.xlu0 %v538, 9
    %v2581 = vpop.permute.xlu0 %2580
    %2582 = vrot.lane.b32.xlu0 %v539, 9
    %v2583 = vpop.permute.xlu0 %2582
    %2584 = vrot.lane.b32.xlu0 %v540, 9
    %v2585 = vpop.permute.xlu0 %2584
    %2586 = vrot.lane.b32.xlu0 %v541, 9
    %v2587 = vpop.permute.xlu0 %2586
    %2588 = vrot.lane.b32.xlu0 %v542, 9
    %v2589 = vpop.permute.xlu0 %2588
    %2590 = vrot.lane.b32.xlu0 %v543, 9
    %v2591 = vpop.permute.xlu0 %2590
    %2592 = vrot.lane.b32.xlu0 %v544, 9
    %v2593 = vpop.permute.xlu0 %2592
    %2594 = vrot.lane.b32.xlu0 %v545, 9
    %v2595 = vpop.permute.xlu0 %2594
    %2596 = vrot.lane.b32.xlu0 %v546, 9
    %v2597 = vpop.permute.xlu0 %2596
    %2726 = vrot.lane.b32.xlu0 %v547, 12
    %v2727 = vpop.permute.xlu0 %2726
    %2728 = vrot.lane.b32.xlu0 %v548, 12
    %v2729 = vpop.permute.xlu0 %2728
    %2730 = vrot.lane.b32.xlu0 %v549, 12
    %v2731 = vpop.permute.xlu0 %2730
    %2732 = vrot.lane.b32.xlu0 %v550, 12
    %v2733 = vpop.permute.xlu0 %2732
    %2734 = vrot.lane.b32.xlu0 %v551, 12
    %v2735 = vpop.permute.xlu0 %2734
    %2736 = vrot.lane.b32.xlu0 %v552, 12
    %v2737 = vpop.permute.xlu0 %2736
    %2738 = vrot.lane.b32.xlu0 %v553, 12
    %v2739 = vpop.permute.xlu0 %2738
    %2740 = vrot.lane.b32.xlu0 %v554, 12
    %v2741 = vpop.permute.xlu0 %2740
    %2742 = vrot.lane.b32.xlu0 %v555, 12
    %v2743 = vpop.permute.xlu0 %2742
    %2744 = vrot.lane.b32.xlu0 %v556, 12
    %v2745 = vpop.permute.xlu0 %2744
    %2746 = vrot.lane.b32.xlu0 %v557, 12
    %v2747 = vpop.permute.xlu0 %2746
    %2748 = vrot.lane.b32.xlu0 %v558, 12
    %v2749 = vpop.permute.xlu0 %2748
    %2750 = vrot.lane.b32.xlu0 %v559, 12
    %v2751 = vpop.permute.xlu0 %2750
    %2752 = vrot.lane.b32.xlu0 %v560, 12
    %v2753 = vpop.permute.xlu0 %2752
    %2754 = vrot.lane.b32.xlu0 %v561, 12
    %v2755 = vpop.permute.xlu0 %2754
    %2756 = vrot.lane.b32.xlu0 %v562, 12
    %v2757 = vpop.permute.xlu0 %2756
    %2758 = vrot.lane.b32.xlu0 %v563, 12
    %v2759 = vpop.permute.xlu0 %2758
    %2760 = vrot.lane.b32.xlu0 %v564, 12
    %v2761 = vpop.permute.xlu0 %2760
    %2762 = vrot.lane.b32.xlu0 %v565, 12
    %v2763 = vpop.permute.xlu0 %2762
    %2764 = vrot.lane.b32.xlu0 %v566, 12
    %v2765 = vpop.permute.xlu0 %2764
    %2766 = vrot.lane.b32.xlu0 %v567, 12
    %v2767 = vpop.permute.xlu0 %2766
    %2768 = vrot.lane.b32.xlu0 %v568, 12
    %v2769 = vpop.permute.xlu0 %2768
    %2770 = vrot.lane.b32.xlu0 %v569, 12
    %v2771 = vpop.permute.xlu0 %2770
    %2772 = vrot.lane.b32.xlu0 %v570, 12
    %v2773 = vpop.permute.xlu0 %2772
    %2774 = vrot.lane.b32.xlu0 %v571, 12
    %v2775 = vpop.permute.xlu0 %2774
    %2776 = vrot.lane.b32.xlu0 %v572, 12
    %v2777 = vpop.permute.xlu0 %2776
    %2778 = vrot.lane.b32.xlu0 %v573, 12
    %v2779 = vpop.permute.xlu0 %2778
    %2780 = vrot.lane.b32.xlu0 %v574, 12
    %v2781 = vpop.permute.xlu0 %2780
    %2782 = vrot.lane.b32.xlu0 %v575, 12
    %v2783 = vpop.permute.xlu0 %2782
    %2784 = vrot.lane.b32.xlu0 %v576, 12
    %v2785 = vpop.permute.xlu0 %2784
    %2786 = vrot.lane.b32.xlu0 %v577, 12
    %v2787 = vpop.permute.xlu0 %2786
    %2788 = vrot.lane.b32.xlu0 %v578, 12
    %v2789 = vpop.permute.xlu0 %2788
    %2790 = vrot.lane.b32.xlu0 %v579, 12
    %v2791 = vpop.permute.xlu0 %2790
    %2792 = vrot.lane.b32.xlu0 %v580, 12
    %v2793 = vpop.permute.xlu0 %2792
    %2794 = vrot.lane.b32.xlu0 %v581, 12
    %v2795 = vpop.permute.xlu0 %2794
    %2796 = vrot.lane.b32.xlu0 %v582, 12
    %v2797 = vpop.permute.xlu0 %2796
    %2798 = vrot.lane.b32.xlu0 %v583, 12
    %v2799 = vpop.permute.xlu0 %2798
    %2800 = vrot.lane.b32.xlu0 %v584, 12
    %v2801 = vpop.permute.xlu0 %2800
    %2802 = vrot.lane.b32.xlu0 %v585, 12
    %v2803 = vpop.permute.xlu0 %2802
    %2804 = vrot.lane.b32.xlu0 %v586, 12
    %v2805 = vpop.permute.xlu0 %2804
    %2806 = vrot.lane.b32.xlu0 %v587, 12
    %v2807 = vpop.permute.xlu0 %2806
    %2808 = vrot.lane.b32.xlu0 %v588, 12
    %v2809 = vpop.permute.xlu0 %2808
    %2810 = vrot.lane.b32.xlu0 %v589, 12
    %v2811 = vpop.permute.xlu0 %2810
    %2812 = vrot.lane.b32.xlu0 %v590, 12
    %v2813 = vpop.permute.xlu0 %2812
    %2814 = vrot.lane.b32.xlu0 %v591, 12
    %v2815 = vpop.permute.xlu0 %2814
    %2816 = vrot.lane.b32.xlu0 %v592, 12
    %v2817 = vpop.permute.xlu0 %2816
    %2818 = vrot.lane.b32.xlu0 %v593, 12
    %v2819 = vpop.permute.xlu0 %2818
    %2820 = vrot.lane.b32.xlu0 %v594, 12
    %v2821 = vpop.permute.xlu0 %2820
    %2822 = vrot.lane.b32.xlu0 %v595, 12
    %v2823 = vpop.permute.xlu0 %2822
    %2824 = vrot.lane.b32.xlu0 %v596, 12
    %v2825 = vpop.permute.xlu0 %2824
    %2826 = vrot.lane.b32.xlu0 %v597, 12
    %v2827 = vpop.permute.xlu0 %2826
    %2828 = vrot.lane.b32.xlu0 %v598, 12
    %v2829 = vpop.permute.xlu0 %2828
    %2830 = vrot.lane.b32.xlu0 %v599, 12
    %v2831 = vpop.permute.xlu0 %2830
    %2832 = vrot.lane.b32.xlu0 %v600, 12
    %v2833 = vpop.permute.xlu0 %2832
    %2834 = vrot.lane.b32.xlu0 %v601, 12
    %v2835 = vpop.permute.xlu0 %2834
    %2836 = vrot.lane.b32.xlu0 %v602, 12
    %v2837 = vpop.permute.xlu0 %2836
    %2838 = vrot.lane.b32.xlu0 %v603, 12
    %v2839 = vpop.permute.xlu0 %2838
    %2840 = vrot.lane.b32.xlu0 %v604, 12
    %v2841 = vpop.permute.xlu0 %2840
    %2842 = vrot.lane.b32.xlu0 %v605, 12
    %v2843 = vpop.permute.xlu0 %2842
    %2844 = vrot.lane.b32.xlu0 %v606, 12
    %v2845 = vpop.permute.xlu0 %2844
    %2846 = vrot.lane.b32.xlu0 %v607, 12
    %v2847 = vpop.permute.xlu0 %2846
    %2848 = vrot.lane.b32.xlu0 %v608, 12
    %v2849 = vpop.permute.xlu0 %2848
    %2850 = vrot.lane.b32.xlu0 %v609, 12
    %v2851 = vpop.permute.xlu0 %2850
    %2852 = vrot.lane.b32.xlu0 %v610, 12
    %v2853 = vpop.permute.xlu0 %2852
    %2982 = vrot.lane.b32.xlu0 %v612, 15
    %v2983 = vpop.permute.xlu0 %2982
    %2984 = vrot.lane.b32.xlu0 %v613, 15
    %v2985 = vpop.permute.xlu0 %2984
    %2986 = vrot.lane.b32.xlu0 %v614, 15
    %v2987 = vpop.permute.xlu0 %2986
    %2988 = vrot.lane.b32.xlu0 %v615, 15
    %v2989 = vpop.permute.xlu0 %2988
    %2990 = vrot.lane.b32.xlu0 %v616, 15
    %v2991 = vpop.permute.xlu0 %2990
    %2992 = vrot.lane.b32.xlu0 %v617, 15
    %v2993 = vpop.permute.xlu0 %2992
    %2994 = vrot.lane.b32.xlu0 %v618, 15
    %v2995 = vpop.permute.xlu0 %2994
    %2996 = vrot.lane.b32.xlu0 %v619, 15
    %v2997 = vpop.permute.xlu0 %2996
    %2998 = vrot.lane.b32.xlu0 %v620, 15
    %v2999 = vpop.permute.xlu0 %2998
    %3000 = vrot.lane.b32.xlu0 %v621, 15
    %v3001 = vpop.permute.xlu0 %3000
    %3002 = vrot.lane.b32.xlu0 %v622, 15
    %v3003 = vpop.permute.xlu0 %3002
    %3004 = vrot.lane.b32.xlu0 %v623, 15
    %v3005 = vpop.permute.xlu0 %3004
    %3006 = vrot.lane.b32.xlu0 %v624, 15
    %v3007 = vpop.permute.xlu0 %3006
    %3008 = vrot.lane.b32.xlu0 %v625, 15
    %v3009 = vpop.permute.xlu0 %3008
    %3010 = vrot.lane.b32.xlu0 %v626, 15
    %v3011 = vpop.permute.xlu0 %3010
    %3012 = vrot.lane.b32.xlu0 %v627, 15
    %v3013 = vpop.permute.xlu0 %3012
    %3014 = vrot.lane.b32.xlu0 %v628, 15
    %v3015 = vpop.permute.xlu0 %3014
    %3016 = vrot.lane.b32.xlu0 %v629, 15
    %v3017 = vpop.permute.xlu0 %3016
    %3018 = vrot.lane.b32.xlu0 %v630, 15
    %v3019 = vpop.permute.xlu0 %3018
    %3020 = vrot.lane.b32.xlu0 %v631, 15
    %v3021 = vpop.permute.xlu0 %3020
    %3022 = vrot.lane.b32.xlu0 %v632, 15
    %v3023 = vpop.permute.xlu0 %3022
    %3024 = vrot.lane.b32.xlu0 %v633, 15
    %v3025 = vpop.permute.xlu0 %3024
    %3026 = vrot.lane.b32.xlu0 %v634, 15
    %v3027 = vpop.permute.xlu0 %3026
    %3028 = vrot.lane.b32.xlu0 %v635, 15
    %v3029 = vpop.permute.xlu0 %3028
    %3030 = vrot.lane.b32.xlu0 %v636, 15
    %v3031 = vpop.permute.xlu0 %3030
    %3032 = vrot.lane.b32.xlu0 %v637, 15
    %v3033 = vpop.permute.xlu0 %3032
    %3034 = vrot.lane.b32.xlu0 %v638, 15
    %v3035 = vpop.permute.xlu0 %3034
    %3036 = vrot.lane.b32.xlu0 %v639, 15
    %v3037 = vpop.permute.xlu0 %3036
    %3038 = vrot.lane.b32.xlu0 %v640, 15
    %v3039 = vpop.permute.xlu0 %3038
    %3040 = vrot.lane.b32.xlu0 %v641, 15
    %v3041 = vpop.permute.xlu0 %3040
    %3042 = vrot.lane.b32.xlu0 %v642, 15
    %v3043 = vpop.permute.xlu0 %3042
    %3044 = vrot.lane.b32.xlu0 %v643, 15
    %v3045 = vpop.permute.xlu0 %3044
    %3046 = vrot.lane.b32.xlu0 %v644, 15
    %v3047 = vpop.permute.xlu0 %3046
    %3048 = vrot.lane.b32.xlu0 %v645, 15
    %v3049 = vpop.permute.xlu0 %3048
    %3050 = vrot.lane.b32.xlu0 %v646, 15
    %v3051 = vpop.permute.xlu0 %3050
    %3052 = vrot.lane.b32.xlu0 %v647, 15
    %v3053 = vpop.permute.xlu0 %3052
    %3054 = vrot.lane.b32.xlu0 %v648, 15
    %v3055 = vpop.permute.xlu0 %3054
    %3056 = vrot.lane.b32.xlu0 %v649, 15
    %v3057 = vpop.permute.xlu0 %3056
    %3058 = vrot.lane.b32.xlu0 %v650, 15
    %v3059 = vpop.permute.xlu0 %3058
    %3060 = vrot.lane.b32.xlu0 %v651, 15
    %v3061 = vpop.permute.xlu0 %3060
    %3062 = vrot.lane.b32.xlu0 %v652, 15
    %v3063 = vpop.permute.xlu0 %3062
    %3064 = vrot.lane.b32.xlu0 %v653, 15
    %v3065 = vpop.permute.xlu0 %3064
    %3066 = vrot.lane.b32.xlu0 %v654, 15
    %v3067 = vpop.permute.xlu0 %3066
    %3068 = vrot.lane.b32.xlu0 %v655, 15
    %v3069 = vpop.permute.xlu0 %3068
    %3070 = vrot.lane.b32.xlu0 %v656, 15
    %v3071 = vpop.permute.xlu0 %3070
    %3072 = vrot.lane.b32.xlu0 %v657, 15
    %v3073 = vpop.permute.xlu0 %3072
    %3074 = vrot.lane.b32.xlu0 %v658, 15
    %v3075 = vpop.permute.xlu0 %3074
    %3076 = vrot.lane.b32.xlu0 %v659, 15
    %v3077 = vpop.permute.xlu0 %3076
    %3078 = vrot.lane.b32.xlu0 %v660, 15
    %v3079 = vpop.permute.xlu0 %3078
    %3080 = vrot.lane.b32.xlu0 %v661, 15
    %v3081 = vpop.permute.xlu0 %3080
    %3082 = vrot.lane.b32.xlu0 %v662, 15
    %v3083 = vpop.permute.xlu0 %3082
    %3084 = vrot.lane.b32.xlu0 %v663, 15
    %v3085 = vpop.permute.xlu0 %3084
    %3086 = vrot.lane.b32.xlu0 %v664, 15
    %v3087 = vpop.permute.xlu0 %3086
    %3088 = vrot.lane.b32.xlu0 %v665, 15
    %v3089 = vpop.permute.xlu0 %3088
    %3090 = vrot.lane.b32.xlu0 %v666, 15
    %v3091 = vpop.permute.xlu0 %3090
    %3092 = vrot.lane.b32.xlu0 %v667, 15
    %v3093 = vpop.permute.xlu0 %3092
    %3094 = vrot.lane.b32.xlu0 %v668, 15
    %v3095 = vpop.permute.xlu0 %3094
    %3096 = vrot.lane.b32.xlu0 %v669, 15
    %v3097 = vpop.permute.xlu0 %3096
    %3098 = vrot.lane.b32.xlu0 %v670, 15
    %v3099 = vpop.permute.xlu0 %3098
    %3100 = vrot.lane.b32.xlu0 %v671, 15
    %v3101 = vpop.permute.xlu0 %3100
    %3102 = vrot.lane.b32.xlu0 %v672, 15
    %v3103 = vpop.permute.xlu0 %3102
    %3104 = vrot.lane.b32.xlu0 %v673, 15
    %v3105 = vpop.permute.xlu0 %3104
    %3106 = vrot.lane.b32.xlu0 %v674, 15
    %v3107 = vpop.permute.xlu0 %3106
    %3108 = vrot.lane.b32.xlu0 %v675, 15
    %v3109 = vpop.permute.xlu0 %3108
    %3238 = vrot.lane.b32.xlu0 %v676, 18
    %v3239 = vpop.permute.xlu0 %3238
    %3240 = vrot.lane.b32.xlu0 %v677, 18
    %v3241 = vpop.permute.xlu0 %3240
    %3242 = vrot.lane.b32.xlu0 %v678, 18
    %v3243 = vpop.permute.xlu0 %3242
    %3244 = vrot.lane.b32.xlu0 %v679, 18
    %v3245 = vpop.permute.xlu0 %3244
    %3246 = vrot.lane.b32.xlu0 %v680, 18
    %v3247 = vpop.permute.xlu0 %3246
    %3248 = vrot.lane.b32.xlu0 %v681, 18
    %v3249 = vpop.permute.xlu0 %3248
    %3250 = vrot.lane.b32.xlu0 %v682, 18
    %v3251 = vpop.permute.xlu0 %3250
    %3252 = vrot.lane.b32.xlu0 %v683, 18
    %v3253 = vpop.permute.xlu0 %3252
    %3254 = vrot.lane.b32.xlu0 %v684, 18
    %v3255 = vpop.permute.xlu0 %3254
    %3256 = vrot.lane.b32.xlu0 %v685, 18
    %v3257 = vpop.permute.xlu0 %3256
    %3258 = vrot.lane.b32.xlu0 %v686, 18
    %v3259 = vpop.permute.xlu0 %3258
    %3260 = vrot.lane.b32.xlu0 %v687, 18
    %v3261 = vpop.permute.xlu0 %3260
    %3262 = vrot.lane.b32.xlu0 %v688, 18
    %v3263 = vpop.permute.xlu0 %3262
    %3264 = vrot.lane.b32.xlu0 %v689, 18
    %v3265 = vpop.permute.xlu0 %3264
    %3266 = vrot.lane.b32.xlu0 %v690, 18
    %v3267 = vpop.permute.xlu0 %3266
    %3268 = vrot.lane.b32.xlu0 %v691, 18
    %v3269 = vpop.permute.xlu0 %3268
    %3270 = vrot.lane.b32.xlu0 %v692, 18
    %v3271 = vpop.permute.xlu0 %3270
    %3272 = vrot.lane.b32.xlu0 %v693, 18
    %v3273 = vpop.permute.xlu0 %3272
    %3274 = vrot.lane.b32.xlu0 %v694, 18
    %v3275 = vpop.permute.xlu0 %3274
    %3276 = vrot.lane.b32.xlu0 %v695, 18
    %v3277 = vpop.permute.xlu0 %3276
    %3278 = vrot.lane.b32.xlu0 %v696, 18
    %v3279 = vpop.permute.xlu0 %3278
    %3280 = vrot.lane.b32.xlu0 %v697, 18
    %v3281 = vpop.permute.xlu0 %3280
    %3282 = vrot.lane.b32.xlu0 %v698, 18
    %v3283 = vpop.permute.xlu0 %3282
    %3284 = vrot.lane.b32.xlu0 %v699, 18
    %v3285 = vpop.permute.xlu0 %3284
    %3286 = vrot.lane.b32.xlu0 %v700, 18
    %v3287 = vpop.permute.xlu0 %3286
    %3288 = vrot.lane.b32.xlu0 %v701, 18
    %v3289 = vpop.permute.xlu0 %3288
    %3290 = vrot.lane.b32.xlu0 %v702, 18
    %v3291 = vpop.permute.xlu0 %3290
    %3292 = vrot.lane.b32.xlu0 %v703, 18
    %v3293 = vpop.permute.xlu0 %3292
    %3294 = vrot.lane.b32.xlu0 %v704, 18
    %v3295 = vpop.permute.xlu0 %3294
    %3296 = vrot.lane.b32.xlu0 %v705, 18
    %v3297 = vpop.permute.xlu0 %3296
    %3298 = vrot.lane.b32.xlu0 %v706, 18
    %v3299 = vpop.permute.xlu0 %3298
    %3300 = vrot.lane.b32.xlu0 %v707, 18
    %v3301 = vpop.permute.xlu0 %3300
    %3302 = vrot.lane.b32.xlu0 %v708, 18
    %v3303 = vpop.permute.xlu0 %3302
    %3304 = vrot.lane.b32.xlu0 %v709, 18
    %v3305 = vpop.permute.xlu0 %3304
    %3306 = vrot.lane.b32.xlu0 %v710, 18
    %v3307 = vpop.permute.xlu0 %3306
    %3308 = vrot.lane.b32.xlu0 %v711, 18
    %v3309 = vpop.permute.xlu0 %3308
    %3310 = vrot.lane.b32.xlu0 %v712, 18
    %v3311 = vpop.permute.xlu0 %3310
    %3312 = vrot.lane.b32.xlu0 %v713, 18
    %v3313 = vpop.permute.xlu0 %3312
    %3314 = vrot.lane.b32.xlu0 %v714, 18
    %v3315 = vpop.permute.xlu0 %3314
    %3316 = vrot.lane.b32.xlu0 %v715, 18
    %v3317 = vpop.permute.xlu0 %3316
    %3318 = vrot.lane.b32.xlu0 %v716, 18
    %v3319 = vpop.permute.xlu0 %3318
    %3320 = vrot.lane.b32.xlu0 %v717, 18
    %v3321 = vpop.permute.xlu0 %3320
    %3322 = vrot.lane.b32.xlu0 %v718, 18
    %v3323 = vpop.permute.xlu0 %3322
    %3324 = vrot.lane.b32.xlu0 %v719, 18
    %v3325 = vpop.permute.xlu0 %3324
    %3326 = vrot.lane.b32.xlu0 %v720, 18
    %v3327 = vpop.permute.xlu0 %3326
    %3328 = vrot.lane.b32.xlu0 %v721, 18
    %v3329 = vpop.permute.xlu0 %3328
    %3330 = vrot.lane.b32.xlu0 %v722, 18
    %v3331 = vpop.permute.xlu0 %3330
    %3332 = vrot.lane.b32.xlu0 %v723, 18
    %v3333 = vpop.permute.xlu0 %3332
    %3334 = vrot.lane.b32.xlu0 %v724, 18
    %v3335 = vpop.permute.xlu0 %3334
    %3336 = vrot.lane.b32.xlu0 %v725, 18
    %v3337 = vpop.permute.xlu0 %3336
    %3338 = vrot.lane.b32.xlu0 %v726, 18
    %v3339 = vpop.permute.xlu0 %3338
    %3340 = vrot.lane.b32.xlu0 %v727, 18
    %v3341 = vpop.permute.xlu0 %3340
    %3342 = vrot.lane.b32.xlu0 %v728, 18
    %v3343 = vpop.permute.xlu0 %3342
    %3344 = vrot.lane.b32.xlu0 %v729, 18
    %v3345 = vpop.permute.xlu0 %3344
    %3346 = vrot.lane.b32.xlu0 %v730, 18
    %v3347 = vpop.permute.xlu0 %3346
    %3348 = vrot.lane.b32.xlu0 %v731, 18
    %v3349 = vpop.permute.xlu0 %3348
    %3350 = vrot.lane.b32.xlu0 %v732, 18
    %v3351 = vpop.permute.xlu0 %3350
    %3352 = vrot.lane.b32.xlu0 %v733, 18
    %v3353 = vpop.permute.xlu0 %3352
    %3354 = vrot.lane.b32.xlu0 %v734, 18
    %v3355 = vpop.permute.xlu0 %3354
    %3356 = vrot.lane.b32.xlu0 %v735, 18
    %v3357 = vpop.permute.xlu0 %3356
    %3358 = vrot.lane.b32.xlu0 %v736, 18
    %v3359 = vpop.permute.xlu0 %3358
    %3360 = vrot.lane.b32.xlu0 %v737, 18
    %v3361 = vpop.permute.xlu0 %3360
    %3362 = vrot.lane.b32.xlu0 %v738, 18
    %v3363 = vpop.permute.xlu0 %3362
    %3364 = vrot.lane.b32.xlu0 %v739, 18
    %v3365 = vpop.permute.xlu0 %3364
    %3494 = vrot.lane.b32.xlu0 %v740, 21
    %v3495 = vpop.permute.xlu0 %3494
    %3496 = vrot.lane.b32.xlu0 %v741, 21
    %v3497 = vpop.permute.xlu0 %3496
    %3498 = vrot.lane.b32.xlu0 %v742, 21
    %v3499 = vpop.permute.xlu0 %3498
    %3500 = vrot.lane.b32.xlu0 %v743, 21
    %v3501 = vpop.permute.xlu0 %3500
    %3502 = vrot.lane.b32.xlu0 %v744, 21
    %v3503 = vpop.permute.xlu0 %3502
    %3504 = vrot.lane.b32.xlu0 %v745, 21
    %v3505 = vpop.permute.xlu0 %3504
    %3506 = vrot.lane.b32.xlu0 %v746, 21
    %v3507 = vpop.permute.xlu0 %3506
    %3508 = vrot.lane.b32.xlu0 %v747, 21
    %v3509 = vpop.permute.xlu0 %3508
    %3510 = vrot.lane.b32.xlu0 %v748, 21
    %v3511 = vpop.permute.xlu0 %3510
    %3512 = vrot.lane.b32.xlu0 %v749, 21
    %v3513 = vpop.permute.xlu0 %3512
    %3514 = vrot.lane.b32.xlu0 %v750, 21
    %v3515 = vpop.permute.xlu0 %3514
    %3516 = vrot.lane.b32.xlu0 %v751, 21
    %v3517 = vpop.permute.xlu0 %3516
    %3518 = vrot.lane.b32.xlu0 %v752, 21
    %v3519 = vpop.permute.xlu0 %3518
    %3520 = vrot.lane.b32.xlu0 %v753, 21
    %v3521 = vpop.permute.xlu0 %3520
    %3522 = vrot.lane.b32.xlu0 %v754, 21
    %v3523 = vpop.permute.xlu0 %3522
    %3524 = vrot.lane.b32.xlu0 %v755, 21
    %v3525 = vpop.permute.xlu0 %3524
    %3526 = vrot.lane.b32.xlu0 %v756, 21
    %v3527 = vpop.permute.xlu0 %3526
    %3528 = vrot.lane.b32.xlu0 %v757, 21
    %v3529 = vpop.permute.xlu0 %3528
    %3530 = vrot.lane.b32.xlu0 %v758, 21
    %v3531 = vpop.permute.xlu0 %3530
    %3532 = vrot.lane.b32.xlu0 %v759, 21
    %v3533 = vpop.permute.xlu0 %3532
    %3534 = vrot.lane.b32.xlu0 %v760, 21
    %v3535 = vpop.permute.xlu0 %3534
    %3536 = vrot.lane.b32.xlu0 %v761, 21
    %v3537 = vpop.permute.xlu0 %3536
    %3538 = vrot.lane.b32.xlu0 %v762, 21
    %v3539 = vpop.permute.xlu0 %3538
    %3540 = vrot.lane.b32.xlu0 %v763, 21
    %v3541 = vpop.permute.xlu0 %3540
    %3542 = vrot.lane.b32.xlu0 %v764, 21
    %v3543 = vpop.permute.xlu0 %3542
    %3544 = vrot.lane.b32.xlu0 %v765, 21
    %v3545 = vpop.permute.xlu0 %3544
    %3546 = vrot.lane.b32.xlu0 %v766, 21
    %v3547 = vpop.permute.xlu0 %3546
    %3548 = vrot.lane.b32.xlu0 %v767, 21
    %v3549 = vpop.permute.xlu0 %3548
    %3550 = vrot.lane.b32.xlu0 %v768, 21
    %v3551 = vpop.permute.xlu0 %3550
    %3552 = vrot.lane.b32.xlu0 %v769, 21
    %v3553 = vpop.permute.xlu0 %3552
    %3554 = vrot.lane.b32.xlu0 %v770, 21
    %v3555 = vpop.permute.xlu0 %3554
    %3556 = vrot.lane.b32.xlu0 %v771, 21
    %v3557 = vpop.permute.xlu0 %3556
    %3558 = vrot.lane.b32.xlu0 %v772, 21
    %v3559 = vpop.permute.xlu0 %3558
    %3560 = vrot.lane.b32.xlu0 %v773, 21
    %v3561 = vpop.permute.xlu0 %3560
    %3562 = vrot.lane.b32.xlu0 %v774, 21
    %v3563 = vpop.permute.xlu0 %3562
    %3564 = vrot.lane.b32.xlu0 %v775, 21
    %v3565 = vpop.permute.xlu0 %3564
    %3566 = vrot.lane.b32.xlu0 %v776, 21
    %v3567 = vpop.permute.xlu0 %3566
    %3568 = vrot.lane.b32.xlu0 %v777, 21
    %v3569 = vpop.permute.xlu0 %3568
    %3570 = vrot.lane.b32.xlu0 %v778, 21
    %v3571 = vpop.permute.xlu0 %3570
    %3572 = vrot.lane.b32.xlu0 %v779, 21
    %v3573 = vpop.permute.xlu0 %3572
    %3574 = vrot.lane.b32.xlu0 %v780, 21
    %v3575 = vpop.permute.xlu0 %3574
    %3576 = vrot.lane.b32.xlu0 %v781, 21
    %v3577 = vpop.permute.xlu0 %3576
    %3578 = vrot.lane.b32.xlu0 %v782, 21
    %v3579 = vpop.permute.xlu0 %3578
    %3580 = vrot.lane.b32.xlu0 %v783, 21
    %v3581 = vpop.permute.xlu0 %3580
    %3582 = vrot.lane.b32.xlu0 %v784, 21
    %v3583 = vpop.permute.xlu0 %3582
    %3584 = vrot.lane.b32.xlu0 %v785, 21
    %v3585 = vpop.permute.xlu0 %3584
    %3586 = vrot.lane.b32.xlu0 %v786, 21
    %v3587 = vpop.permute.xlu0 %3586
    %3588 = vrot.lane.b32.xlu0 %v787, 21
    %v3589 = vpop.permute.xlu0 %3588
    %3590 = vrot.lane.b32.xlu0 %v788, 21
    %v3591 = vpop.permute.xlu0 %3590
    %3592 = vrot.lane.b32.xlu0 %v789, 21
    %v3593 = vpop.permute.xlu0 %3592
    %3594 = vrot.lane.b32.xlu0 %v790, 21
    %v3595 = vpop.permute.xlu0 %3594
    %3596 = vrot.lane.b32.xlu0 %v791, 21
    %v3597 = vpop.permute.xlu0 %3596
    %3598 = vrot.lane.b32.xlu0 %v792, 21
    %v3599 = vpop.permute.xlu0 %3598
    %3600 = vrot.lane.b32.xlu0 %v793, 21
    %v3601 = vpop.permute.xlu0 %3600
    %3602 = vrot.lane.b32.xlu0 %v794, 21
    %v3603 = vpop.permute.xlu0 %3602
    %3604 = vrot.lane.b32.xlu0 %v795, 21
    %v3605 = vpop.permute.xlu0 %3604
    %3606 = vrot.lane.b32.xlu0 %v796, 21
    %v3607 = vpop.permute.xlu0 %3606
    %3608 = vrot.lane.b32.xlu0 %v797, 21
    %v3609 = vpop.permute.xlu0 %3608
    %3610 = vrot.lane.b32.xlu0 %v798, 21
    %v3611 = vpop.permute.xlu0 %3610
    %3612 = vrot.lane.b32.xlu0 %v799, 21
    %v3613 = vpop.permute.xlu0 %3612
    %3614 = vrot.lane.b32.xlu0 %v800, 21
    %v3615 = vpop.permute.xlu0 %3614
    %3616 = vrot.lane.b32.xlu0 %v801, 21
    %v3617 = vpop.permute.xlu0 %3616
    %3618 = vrot.lane.b32.xlu0 %v802, 21
    %v3619 = vpop.permute.xlu0 %3618
    %3620 = vrot.lane.b32.xlu0 %v803, 21
    %v3621 = vpop.permute.xlu0 %3620
    %3750 = vrot.lane.b32.xlu0 %v804, 24
    %v3751 = vpop.permute.xlu0 %3750
    %3752 = vrot.lane.b32.xlu0 %v805, 24
    %v3753 = vpop.permute.xlu0 %3752
    %3754 = vrot.lane.b32.xlu0 %v806, 24
    %v3755 = vpop.permute.xlu0 %3754
    %3756 = vrot.lane.b32.xlu0 %v807, 24
    %v3757 = vpop.permute.xlu0 %3756
    %3758 = vrot.lane.b32.xlu0 %v808, 24
    %v3759 = vpop.permute.xlu0 %3758
    %3760 = vrot.lane.b32.xlu0 %v809, 24
    %v3761 = vpop.permute.xlu0 %3760
    %3762 = vrot.lane.b32.xlu0 %v810, 24
    %v3763 = vpop.permute.xlu0 %3762
    %3764 = vrot.lane.b32.xlu0 %v811, 24
    %v3765 = vpop.permute.xlu0 %3764
    %3766 = vrot.lane.b32.xlu0 %v812, 24
    %v3767 = vpop.permute.xlu0 %3766
    %3768 = vrot.lane.b32.xlu0 %v813, 24
    %v3769 = vpop.permute.xlu0 %3768
    %3770 = vrot.lane.b32.xlu0 %v814, 24
    %v3771 = vpop.permute.xlu0 %3770
    %3772 = vrot.lane.b32.xlu0 %v815, 24
    %v3773 = vpop.permute.xlu0 %3772
    %3774 = vrot.lane.b32.xlu0 %v816, 24
    %v3775 = vpop.permute.xlu0 %3774
    %3776 = vrot.lane.b32.xlu0 %v817, 24
    %v3777 = vpop.permute.xlu0 %3776
    %3778 = vrot.lane.b32.xlu0 %v818, 24
    %v3779 = vpop.permute.xlu0 %3778
    %3780 = vrot.lane.b32.xlu0 %v819, 24
    %v3781 = vpop.permute.xlu0 %3780
    %3782 = vrot.lane.b32.xlu0 %v820, 24
    %v3783 = vpop.permute.xlu0 %3782
    %3784 = vrot.lane.b32.xlu0 %v821, 24
    %v3785 = vpop.permute.xlu0 %3784
    %3786 = vrot.lane.b32.xlu0 %v822, 24
    %v3787 = vpop.permute.xlu0 %3786
    %3788 = vrot.lane.b32.xlu0 %v823, 24
    %v3789 = vpop.permute.xlu0 %3788
    %3790 = vrot.lane.b32.xlu0 %v824, 24
    %v3791 = vpop.permute.xlu0 %3790
    %3792 = vrot.lane.b32.xlu0 %v825, 24
    %v3793 = vpop.permute.xlu0 %3792
    %3794 = vrot.lane.b32.xlu0 %v826, 24
    %v3795 = vpop.permute.xlu0 %3794
    %3796 = vrot.lane.b32.xlu0 %v827, 24
    %v3797 = vpop.permute.xlu0 %3796
    %3798 = vrot.lane.b32.xlu0 %v828, 24
    %v3799 = vpop.permute.xlu0 %3798
    %3800 = vrot.lane.b32.xlu0 %v829, 24
    %v3801 = vpop.permute.xlu0 %3800
    %3802 = vrot.lane.b32.xlu0 %v830, 24
    %v3803 = vpop.permute.xlu0 %3802
    %3804 = vrot.lane.b32.xlu0 %v831, 24
    %v3805 = vpop.permute.xlu0 %3804
    %3806 = vrot.lane.b32.xlu0 %v832, 24
    %v3807 = vpop.permute.xlu0 %3806
    %3808 = vrot.lane.b32.xlu0 %v833, 24
    %v3809 = vpop.permute.xlu0 %3808
    %3810 = vrot.lane.b32.xlu0 %v834, 24
    %v3811 = vpop.permute.xlu0 %3810
    %3812 = vrot.lane.b32.xlu0 %v835, 24
    %v3813 = vpop.permute.xlu0 %3812
    %3814 = vrot.lane.b32.xlu0 %v836, 24
    %v3815 = vpop.permute.xlu0 %3814
    %3816 = vrot.lane.b32.xlu0 %v837, 24
    %v3817 = vpop.permute.xlu0 %3816
    %3818 = vrot.lane.b32.xlu0 %v838, 24
    %v3819 = vpop.permute.xlu0 %3818
    %3820 = vrot.lane.b32.xlu0 %v839, 24
    %v3821 = vpop.permute.xlu0 %3820
    %3822 = vrot.lane.b32.xlu0 %v840, 24
    %v3823 = vpop.permute.xlu0 %3822
    %3824 = vrot.lane.b32.xlu0 %v841, 24
    %v3825 = vpop.permute.xlu0 %3824
    %3826 = vrot.lane.b32.xlu0 %v842, 24
    %v3827 = vpop.permute.xlu0 %3826
    %3828 = vrot.lane.b32.xlu0 %v843, 24
    %v3829 = vpop.permute.xlu0 %3828
    %3830 = vrot.lane.b32.xlu0 %v844, 24
    %v3831 = vpop.permute.xlu0 %3830
    %3832 = vrot.lane.b32.xlu0 %v845, 24
    %v3833 = vpop.permute.xlu0 %3832
    %3834 = vrot.lane.b32.xlu0 %v846, 24
    %v3835 = vpop.permute.xlu0 %3834
    %3836 = vrot.lane.b32.xlu0 %v847, 24
    %v3837 = vpop.permute.xlu0 %3836
    %3838 = vrot.lane.b32.xlu0 %v848, 24
    %v3839 = vpop.permute.xlu0 %3838
    %3840 = vrot.lane.b32.xlu0 %v849, 24
    %v3841 = vpop.permute.xlu0 %3840
    %3842 = vrot.lane.b32.xlu0 %v850, 24
    %v3843 = vpop.permute.xlu0 %3842
    %3844 = vrot.lane.b32.xlu0 %v851, 24
    %v3845 = vpop.permute.xlu0 %3844
    %3846 = vrot.lane.b32.xlu0 %v852, 24
    %v3847 = vpop.permute.xlu0 %3846
    %3848 = vrot.lane.b32.xlu0 %v853, 24
    %v3849 = vpop.permute.xlu0 %3848
    %3850 = vrot.lane.b32.xlu0 %v854, 24
    %v3851 = vpop.permute.xlu0 %3850
    %3852 = vrot.lane.b32.xlu0 %v855, 24
    %v3853 = vpop.permute.xlu0 %3852
    %3854 = vrot.lane.b32.xlu0 %v856, 24
    %v3855 = vpop.permute.xlu0 %3854
    %3856 = vrot.lane.b32.xlu0 %v857, 24
    %v3857 = vpop.permute.xlu0 %3856
    %3858 = vrot.lane.b32.xlu0 %v858, 24
    %v3859 = vpop.permute.xlu0 %3858
    %3860 = vrot.lane.b32.xlu0 %v859, 24
    %v3861 = vpop.permute.xlu0 %3860
    %3862 = vrot.lane.b32.xlu0 %v860, 24
    %v3863 = vpop.permute.xlu0 %3862
    %3864 = vrot.lane.b32.xlu0 %v861, 24
    %v3865 = vpop.permute.xlu0 %3864
    %3866 = vrot.lane.b32.xlu0 %v862, 24
    %v3867 = vpop.permute.xlu0 %3866
    %3868 = vrot.lane.b32.xlu0 %v863, 24
    %v3869 = vpop.permute.xlu0 %3868
    %3870 = vrot.lane.b32.xlu0 %v864, 24
    %v3871 = vpop.permute.xlu0 %3870
    %3872 = vrot.lane.b32.xlu0 %v865, 24
    %v3873 = vpop.permute.xlu0 %3872
    %3874 = vrot.lane.b32.xlu0 %v866, 24
    %v3875 = vpop.permute.xlu0 %3874
    %3876 = vrot.lane.b32.xlu0 %v867, 24
    %v3877 = vpop.permute.xlu0 %3876
    %4006 = vrot.lane.b32.xlu0 %v868, 27
    %v4007 = vpop.permute.xlu0 %4006
    %4008 = vrot.lane.b32.xlu0 %v869, 27
    %v4009 = vpop.permute.xlu0 %4008
    %4010 = vrot.lane.b32.xlu0 %v870, 27
    %v4011 = vpop.permute.xlu0 %4010
    %4012 = vrot.lane.b32.xlu0 %v871, 27
    %v4013 = vpop.permute.xlu0 %4012
    %4014 = vrot.lane.b32.xlu0 %v872, 27
    %v4015 = vpop.permute.xlu0 %4014
    %4016 = vrot.lane.b32.xlu0 %v873, 27
    %v4017 = vpop.permute.xlu0 %4016
    %4018 = vrot.lane.b32.xlu0 %v874, 27
    %v4019 = vpop.permute.xlu0 %4018
    %4020 = vrot.lane.b32.xlu0 %v875, 27
    %v4021 = vpop.permute.xlu0 %4020
    %4022 = vrot.lane.b32.xlu0 %v876, 27
    %v4023 = vpop.permute.xlu0 %4022
    %4024 = vrot.lane.b32.xlu0 %v877, 27
    %v4025 = vpop.permute.xlu0 %4024
    %4026 = vrot.lane.b32.xlu0 %v878, 27
    %v4027 = vpop.permute.xlu0 %4026
    %4028 = vrot.lane.b32.xlu0 %v879, 27
    %v4029 = vpop.permute.xlu0 %4028
    %4030 = vrot.lane.b32.xlu0 %v880, 27
    %v4031 = vpop.permute.xlu0 %4030
    %4032 = vrot.lane.b32.xlu0 %v881, 27
    %v4033 = vpop.permute.xlu0 %4032
    %4034 = vrot.lane.b32.xlu0 %v882, 27
    %v4035 = vpop.permute.xlu0 %4034
    %4036 = vrot.lane.b32.xlu0 %v883, 27
    %v4037 = vpop.permute.xlu0 %4036
    %4038 = vrot.lane.b32.xlu0 %v884, 27
    %v4039 = vpop.permute.xlu0 %4038
    %4040 = vrot.lane.b32.xlu0 %v885, 27
    %v4041 = vpop.permute.xlu0 %4040
    %4042 = vrot.lane.b32.xlu0 %v886, 27
    %v4043 = vpop.permute.xlu0 %4042
    %4044 = vrot.lane.b32.xlu0 %v887, 27
    %v4045 = vpop.permute.xlu0 %4044
    %4046 = vrot.lane.b32.xlu0 %v888, 27
    %v4047 = vpop.permute.xlu0 %4046
    %4048 = vrot.lane.b32.xlu0 %v889, 27
    %v4049 = vpop.permute.xlu0 %4048
    %4050 = vrot.lane.b32.xlu0 %v890, 27
    %v4051 = vpop.permute.xlu0 %4050
    %4052 = vrot.lane.b32.xlu0 %v891, 27
    %v4053 = vpop.permute.xlu0 %4052
    %4054 = vrot.lane.b32.xlu0 %v892, 27
    %v4055 = vpop.permute.xlu0 %4054
    %4056 = vrot.lane.b32.xlu0 %v893, 27
    %v4057 = vpop.permute.xlu0 %4056
    %4058 = vrot.lane.b32.xlu0 %v894, 27
    %v4059 = vpop.permute.xlu0 %4058
    %4060 = vrot.lane.b32.xlu0 %v895, 27
    %v4061 = vpop.permute.xlu0 %4060
    %4062 = vrot.lane.b32.xlu0 %v896, 27
    %v4063 = vpop.permute.xlu0 %4062
    %4064 = vrot.lane.b32.xlu0 %v897, 27
    %v4065 = vpop.permute.xlu0 %4064
    %4066 = vrot.lane.b32.xlu0 %v898, 27
    %v4067 = vpop.permute.xlu0 %4066
    %4068 = vrot.lane.b32.xlu0 %v899, 27
    %v4069 = vpop.permute.xlu0 %4068
    %4070 = vrot.lane.b32.xlu0 %v900, 27
    %v4071 = vpop.permute.xlu0 %4070
    %4072 = vrot.lane.b32.xlu0 %v901, 27
    %v4073 = vpop.permute.xlu0 %4072
    %4074 = vrot.lane.b32.xlu0 %v902, 27
    %v4075 = vpop.permute.xlu0 %4074
    %4076 = vrot.lane.b32.xlu0 %v903, 27
    %v4077 = vpop.permute.xlu0 %4076
    %4078 = vrot.lane.b32.xlu0 %v904, 27
    %v4079 = vpop.permute.xlu0 %4078
    %4080 = vrot.lane.b32.xlu0 %v905, 27
    %v4081 = vpop.permute.xlu0 %4080
    %4082 = vrot.lane.b32.xlu0 %v906, 27
    %v4083 = vpop.permute.xlu0 %4082
    %4084 = vrot.lane.b32.xlu0 %v907, 27
    %v4085 = vpop.permute.xlu0 %4084
    %4086 = vrot.lane.b32.xlu0 %v908, 27
    %v4087 = vpop.permute.xlu0 %4086
    %4088 = vrot.lane.b32.xlu0 %v909, 27
    %v4089 = vpop.permute.xlu0 %4088
    %4090 = vrot.lane.b32.xlu0 %v910, 27
    %v4091 = vpop.permute.xlu0 %4090
    %4092 = vrot.lane.b32.xlu0 %v911, 27
    %v4093 = vpop.permute.xlu0 %4092
    %4094 = vrot.lane.b32.xlu0 %v912, 27
    %v4095 = vpop.permute.xlu0 %4094
    %4096 = vrot.lane.b32.xlu0 %v913, 27
    %v4097 = vpop.permute.xlu0 %4096
    %4098 = vrot.lane.b32.xlu0 %v914, 27
    %v4099 = vpop.permute.xlu0 %4098
    %4100 = vrot.lane.b32.xlu0 %v915, 27
    %v4101 = vpop.permute.xlu0 %4100
    %4102 = vrot.lane.b32.xlu0 %v916, 27
    %v4103 = vpop.permute.xlu0 %4102
    %4104 = vrot.lane.b32.xlu0 %v917, 27
    %v4105 = vpop.permute.xlu0 %4104
    %4106 = vrot.lane.b32.xlu0 %v918, 27
    %v4107 = vpop.permute.xlu0 %4106
    %4108 = vrot.lane.b32.xlu0 %v919, 27
    %v4109 = vpop.permute.xlu0 %4108
    %4110 = vrot.lane.b32.xlu0 %v920, 27
    %v4111 = vpop.permute.xlu0 %4110
    %4112 = vrot.lane.b32.xlu0 %v921, 27
    %v4113 = vpop.permute.xlu0 %4112
    %4114 = vrot.lane.b32.xlu0 %v922, 27
    %v4115 = vpop.permute.xlu0 %4114
    %4116 = vrot.lane.b32.xlu0 %v923, 27
    %v4117 = vpop.permute.xlu0 %4116
    %4118 = vrot.lane.b32.xlu0 %v924, 27
    %v4119 = vpop.permute.xlu0 %4118
    %4120 = vrot.lane.b32.xlu0 %v925, 27
    %v4121 = vpop.permute.xlu0 %4120
    %4122 = vrot.lane.b32.xlu0 %v926, 27
    %v4123 = vpop.permute.xlu0 %4122
    %4124 = vrot.lane.b32.xlu0 %v927, 27
    %v4125 = vpop.permute.xlu0 %4124
    %4126 = vrot.lane.b32.xlu0 %v928, 27
    %v4127 = vpop.permute.xlu0 %4126
    %4128 = vrot.lane.b32.xlu0 %v929, 27
    %v4129 = vpop.permute.xlu0 %4128
    %4130 = vrot.lane.b32.xlu0 %v930, 27
    %v4131 = vpop.permute.xlu0 %4130
    %4132 = vrot.lane.b32.xlu0 %v931, 27
    %v4133 = vpop.permute.xlu0 %4132
    %4262 = vrot.lane.b32.xlu0 %v932, 30
    %v4263 = vpop.permute.xlu0 %4262
    %4264 = vrot.lane.b32.xlu0 %v933, 30
    %v4265 = vpop.permute.xlu0 %4264
    %4266 = vrot.lane.b32.xlu0 %v934, 30
    %v4267 = vpop.permute.xlu0 %4266
    %4268 = vrot.lane.b32.xlu0 %v935, 30
    %v4269 = vpop.permute.xlu0 %4268
    %4270 = vrot.lane.b32.xlu0 %v936, 30
    %v4271 = vpop.permute.xlu0 %4270
    %4272 = vrot.lane.b32.xlu0 %v937, 30
    %v4273 = vpop.permute.xlu0 %4272
    %4274 = vrot.lane.b32.xlu0 %v938, 30
    %v4275 = vpop.permute.xlu0 %4274
    %4276 = vrot.lane.b32.xlu0 %v939, 30
    %v4277 = vpop.permute.xlu0 %4276
    %4278 = vrot.lane.b32.xlu0 %v940, 30
    %v4279 = vpop.permute.xlu0 %4278
    %4280 = vrot.lane.b32.xlu0 %v941, 30
    %v4281 = vpop.permute.xlu0 %4280
    %4282 = vrot.lane.b32.xlu0 %v942, 30
    %v4283 = vpop.permute.xlu0 %4282
    %4284 = vrot.lane.b32.xlu0 %v943, 30
    %v4285 = vpop.permute.xlu0 %4284
    %4286 = vrot.lane.b32.xlu0 %v944, 30
    %v4287 = vpop.permute.xlu0 %4286
    %4288 = vrot.lane.b32.xlu0 %v945, 30
    %v4289 = vpop.permute.xlu0 %4288
    %4290 = vrot.lane.b32.xlu0 %v946, 30
    %v4291 = vpop.permute.xlu0 %4290
    %4292 = vrot.lane.b32.xlu0 %v947, 30
    %v4293 = vpop.permute.xlu0 %4292
    %4294 = vrot.lane.b32.xlu0 %v948, 30
    %v4295 = vpop.permute.xlu0 %4294
    %4296 = vrot.lane.b32.xlu0 %v949, 30
    %v4297 = vpop.permute.xlu0 %4296
    %4298 = vrot.lane.b32.xlu0 %v950, 30
    %v4299 = vpop.permute.xlu0 %4298
    %4300 = vrot.lane.b32.xlu0 %v951, 30
    %v4301 = vpop.permute.xlu0 %4300
    %4302 = vrot.lane.b32.xlu0 %v952, 30
    %v4303 = vpop.permute.xlu0 %4302
    %4304 = vrot.lane.b32.xlu0 %v953, 30
    %v4305 = vpop.permute.xlu0 %4304
    %4306 = vrot.lane.b32.xlu0 %v954, 30
    %v4307 = vpop.permute.xlu0 %4306
    %4308 = vrot.lane.b32.xlu0 %v955, 30
    %v4309 = vpop.permute.xlu0 %4308
    %4310 = vrot.lane.b32.xlu0 %v956, 30
    %v4311 = vpop.permute.xlu0 %4310
    %4312 = vrot.lane.b32.xlu0 %v957, 30
    %v4313 = vpop.permute.xlu0 %4312
    %4314 = vrot.lane.b32.xlu0 %v958, 30
    %v4315 = vpop.permute.xlu0 %4314
    %4316 = vrot.lane.b32.xlu0 %v959, 30
    %v4317 = vpop.permute.xlu0 %4316
    %4318 = vrot.lane.b32.xlu0 %v960, 30
    %v4319 = vpop.permute.xlu0 %4318
    %4320 = vrot.lane.b32.xlu0 %v961, 30
    %v4321 = vpop.permute.xlu0 %4320
    %4322 = vrot.lane.b32.xlu0 %v962, 30
    %v4323 = vpop.permute.xlu0 %4322
    %4324 = vrot.lane.b32.xlu0 %v963, 30
    %v4325 = vpop.permute.xlu0 %4324
    %4326 = vrot.lane.b32.xlu0 %v964, 30
    %v4327 = vpop.permute.xlu0 %4326
    %4328 = vrot.lane.b32.xlu0 %v965, 30
    %v4329 = vpop.permute.xlu0 %4328
    %4330 = vrot.lane.b32.xlu0 %v966, 30
    %v4331 = vpop.permute.xlu0 %4330
    %4332 = vrot.lane.b32.xlu0 %v967, 30
    %v4333 = vpop.permute.xlu0 %4332
    %4334 = vrot.lane.b32.xlu0 %v968, 30
    %v4335 = vpop.permute.xlu0 %4334
    %4336 = vrot.lane.b32.xlu0 %v969, 30
    %v4337 = vpop.permute.xlu0 %4336
    %4338 = vrot.lane.b32.xlu0 %v970, 30
    %v4339 = vpop.permute.xlu0 %4338
    %4340 = vrot.lane.b32.xlu0 %v971, 30
    %v4341 = vpop.permute.xlu0 %4340
    %4342 = vrot.lane.b32.xlu0 %v972, 30
    %v4343 = vpop.permute.xlu0 %4342
    %4344 = vrot.lane.b32.xlu0 %v973, 30
    %v4345 = vpop.permute.xlu0 %4344
    %4346 = vrot.lane.b32.xlu0 %v974, 30
    %v4347 = vpop.permute.xlu0 %4346
    %4348 = vrot.lane.b32.xlu0 %v975, 30
    %v4349 = vpop.permute.xlu0 %4348
    %4350 = vrot.lane.b32.xlu0 %v976, 30
    %v4351 = vpop.permute.xlu0 %4350
    %4352 = vrot.lane.b32.xlu0 %v977, 30
    %v4353 = vpop.permute.xlu0 %4352
    %4354 = vrot.lane.b32.xlu0 %v978, 30
    %v4355 = vpop.permute.xlu0 %4354
    %4356 = vrot.lane.b32.xlu0 %v979, 30
    %v4357 = vpop.permute.xlu0 %4356
    %4358 = vrot.lane.b32.xlu0 %v980, 30
    %v4359 = vpop.permute.xlu0 %4358
    %4360 = vrot.lane.b32.xlu0 %v981, 30
    %v4361 = vpop.permute.xlu0 %4360
    %4362 = vrot.lane.b32.xlu0 %v982, 30
    %v4363 = vpop.permute.xlu0 %4362
    %4364 = vrot.lane.b32.xlu0 %v983, 30
    %v4365 = vpop.permute.xlu0 %4364
    %4366 = vrot.lane.b32.xlu0 %v984, 30
    %v4367 = vpop.permute.xlu0 %4366
    %4368 = vrot.lane.b32.xlu0 %v985, 30
    %v4369 = vpop.permute.xlu0 %4368
    %4370 = vrot.lane.b32.xlu0 %v986, 30
    %v4371 = vpop.permute.xlu0 %4370
    %4372 = vrot.lane.b32.xlu0 %v987, 30
    %v4373 = vpop.permute.xlu0 %4372
    %4374 = vrot.lane.b32.xlu0 %v988, 30
    %v4375 = vpop.permute.xlu0 %4374
    %4376 = vrot.lane.b32.xlu0 %v989, 30
    %v4377 = vpop.permute.xlu0 %4376
    %4378 = vrot.lane.b32.xlu0 %v990, 30
    %v4379 = vpop.permute.xlu0 %4378
    %4380 = vrot.lane.b32.xlu0 %v991, 30
    %v4381 = vpop.permute.xlu0 %4380
    %4382 = vrot.lane.b32.xlu0 %v992, 30
    %v4383 = vpop.permute.xlu0 %4382
    %4384 = vrot.lane.b32.xlu0 %v993, 30
    %v4385 = vpop.permute.xlu0 %4384
    %4386 = vrot.lane.b32.xlu0 %v994, 30
    %v4387 = vpop.permute.xlu0 %4386
    %4388 = vrot.lane.b32.xlu0 %v995, 30
    %v4389 = vpop.permute.xlu0 %4388
    %4518 = vrot.lane.b32.xlu0 %v996, 33
    %v4519 = vpop.permute.xlu0 %4518
    %4520 = vrot.lane.b32.xlu0 %v997, 33
    %v4521 = vpop.permute.xlu0 %4520
    %4522 = vrot.lane.b32.xlu0 %v998, 33
    %v4523 = vpop.permute.xlu0 %4522
    %4524 = vrot.lane.b32.xlu0 %v999, 33
    %v4525 = vpop.permute.xlu0 %4524
    %4526 = vrot.lane.b32.xlu0 %v1000, 33
    %v4527 = vpop.permute.xlu0 %4526
    %4528 = vrot.lane.b32.xlu0 %v1001, 33
    %v4529 = vpop.permute.xlu0 %4528
    %4530 = vrot.lane.b32.xlu0 %v1002, 33
    %v4531 = vpop.permute.xlu0 %4530
    %4532 = vrot.lane.b32.xlu0 %v1003, 33
    %v4533 = vpop.permute.xlu0 %4532
    %4534 = vrot.lane.b32.xlu0 %v1004, 33
    %v4535 = vpop.permute.xlu0 %4534
    %4536 = vrot.lane.b32.xlu0 %v1005, 33
    %v4537 = vpop.permute.xlu0 %4536
    %4538 = vrot.lane.b32.xlu0 %v1006, 33
    %v4539 = vpop.permute.xlu0 %4538
    %4540 = vrot.lane.b32.xlu0 %v1007, 33
    %v4541 = vpop.permute.xlu0 %4540
    %4542 = vrot.lane.b32.xlu0 %v1008, 33
    %v4543 = vpop.permute.xlu0 %4542
    %4544 = vrot.lane.b32.xlu0 %v1009, 33
    %v4545 = vpop.permute.xlu0 %4544
    %4546 = vrot.lane.b32.xlu0 %v1010, 33
    %v4547 = vpop.permute.xlu0 %4546
    %4548 = vrot.lane.b32.xlu0 %v1011, 33
    %v4549 = vpop.permute.xlu0 %4548
    %4550 = vrot.lane.b32.xlu0 %v1012, 33
    %v4551 = vpop.permute.xlu0 %4550
    %4552 = vrot.lane.b32.xlu0 %v1013, 33
    %v4553 = vpop.permute.xlu0 %4552
    %4554 = vrot.lane.b32.xlu0 %v1014, 33
    %v4555 = vpop.permute.xlu0 %4554
    %4556 = vrot.lane.b32.xlu0 %v1015, 33
    %v4557 = vpop.permute.xlu0 %4556
    %4558 = vrot.lane.b32.xlu0 %v1016, 33
    %v4559 = vpop.permute.xlu0 %4558
    %4560 = vrot.lane.b32.xlu0 %v1017, 33
    %v4561 = vpop.permute.xlu0 %4560
    %4562 = vrot.lane.b32.xlu0 %v1018, 33
    %v4563 = vpop.permute.xlu0 %4562
    %4564 = vrot.lane.b32.xlu0 %v1019, 33
    %v4565 = vpop.permute.xlu0 %4564
    %4566 = vrot.lane.b32.xlu0 %v1020, 33
    %v4567 = vpop.permute.xlu0 %4566
    %4568 = vrot.lane.b32.xlu0 %v1021, 33
    %v4569 = vpop.permute.xlu0 %4568
    %4570 = vrot.lane.b32.xlu0 %v1022, 33
    %v4571 = vpop.permute.xlu0 %4570
    %4572 = vrot.lane.b32.xlu0 %v1023, 33
    %v4573 = vpop.permute.xlu0 %4572
    %4574 = vrot.lane.b32.xlu0 %v1024, 33
    %v4575 = vpop.permute.xlu0 %4574
    %4576 = vrot.lane.b32.xlu0 %v1025, 33
    %v4577 = vpop.permute.xlu0 %4576
    %4578 = vrot.lane.b32.xlu0 %v1026, 33
    %v4579 = vpop.permute.xlu0 %4578
    %4580 = vrot.lane.b32.xlu0 %v1027, 33
    %v4581 = vpop.permute.xlu0 %4580
    %4582 = vrot.lane.b32.xlu0 %v1028, 33
    %v4583 = vpop.permute.xlu0 %4582
    %4584 = vrot.lane.b32.xlu0 %v1029, 33
    %v4585 = vpop.permute.xlu0 %4584
    %4586 = vrot.lane.b32.xlu0 %v1030, 33
    %v4587 = vpop.permute.xlu0 %4586
    %4588 = vrot.lane.b32.xlu0 %v1031, 33
    %v4589 = vpop.permute.xlu0 %4588
    %4590 = vrot.lane.b32.xlu0 %v1032, 33
    %v4591 = vpop.permute.xlu0 %4590
    %4592 = vrot.lane.b32.xlu0 %v1033, 33
    %v4593 = vpop.permute.xlu0 %4592
    %4594 = vrot.lane.b32.xlu0 %v1034, 33
    %v4595 = vpop.permute.xlu0 %4594
    %4596 = vrot.lane.b32.xlu0 %v1035, 33
    %v4597 = vpop.permute.xlu0 %4596
    %4598 = vrot.lane.b32.xlu0 %v1036, 33
    %v4599 = vpop.permute.xlu0 %4598
    %4600 = vrot.lane.b32.xlu0 %v1037, 33
    %v4601 = vpop.permute.xlu0 %4600
    %4602 = vrot.lane.b32.xlu0 %v1038, 33
    %v4603 = vpop.permute.xlu0 %4602
    %4604 = vrot.lane.b32.xlu0 %v1039, 33
    %v4605 = vpop.permute.xlu0 %4604
    %4606 = vrot.lane.b32.xlu0 %v1040, 33
    %v4607 = vpop.permute.xlu0 %4606
    %4608 = vrot.lane.b32.xlu0 %v1041, 33
    %v4609 = vpop.permute.xlu0 %4608
    %4610 = vrot.lane.b32.xlu0 %v1042, 33
    %v4611 = vpop.permute.xlu0 %4610
    %4612 = vrot.lane.b32.xlu0 %v1043, 33
    %v4613 = vpop.permute.xlu0 %4612
    %4614 = vrot.lane.b32.xlu0 %v1044, 33
    %v4615 = vpop.permute.xlu0 %4614
    %4616 = vrot.lane.b32.xlu0 %v1045, 33
    %v4617 = vpop.permute.xlu0 %4616
    %4618 = vrot.lane.b32.xlu0 %v1046, 33
    %v4619 = vpop.permute.xlu0 %4618
    %4620 = vrot.lane.b32.xlu0 %v1047, 33
    %v4621 = vpop.permute.xlu0 %4620
    %4622 = vrot.lane.b32.xlu0 %v1048, 33
    %v4623 = vpop.permute.xlu0 %4622
    %4624 = vrot.lane.b32.xlu0 %v1049, 33
    %v4625 = vpop.permute.xlu0 %4624
    %4626 = vrot.lane.b32.xlu0 %v1050, 33
    %v4627 = vpop.permute.xlu0 %4626
    %4628 = vrot.lane.b32.xlu0 %v1051, 33
    %v4629 = vpop.permute.xlu0 %4628
    %4630 = vrot.lane.b32.xlu0 %v1052, 33
    %v4631 = vpop.permute.xlu0 %4630
    %4632 = vrot.lane.b32.xlu0 %v1053, 33
    %v4633 = vpop.permute.xlu0 %4632
    %4634 = vrot.lane.b32.xlu0 %v1054, 33
    %v4635 = vpop.permute.xlu0 %4634
    %4636 = vrot.lane.b32.xlu0 %v1055, 33
    %v4637 = vpop.permute.xlu0 %4636
    %4638 = vrot.lane.b32.xlu0 %v1056, 33
    %v4639 = vpop.permute.xlu0 %4638
    %4640 = vrot.lane.b32.xlu0 %v1057, 33
    %v4641 = vpop.permute.xlu0 %4640
    %4642 = vrot.lane.b32.xlu0 %v1058, 33
    %v4643 = vpop.permute.xlu0 %4642
    %4644 = vrot.lane.b32.xlu0 %v1059, 33
    %v4645 = vpop.permute.xlu0 %4644
    %4774 = vrot.lane.b32.xlu0 %v1060, 36
    %v4775 = vpop.permute.xlu0 %4774
    %4776 = vrot.lane.b32.xlu0 %v1061, 36
    %v4777 = vpop.permute.xlu0 %4776
    %4778 = vrot.lane.b32.xlu0 %v1062, 36
    %v4779 = vpop.permute.xlu0 %4778
    %4780 = vrot.lane.b32.xlu0 %v1063, 36
    %v4781 = vpop.permute.xlu0 %4780
    %4782 = vrot.lane.b32.xlu0 %v1064, 36
    %v4783 = vpop.permute.xlu0 %4782
    %4784 = vrot.lane.b32.xlu0 %v1065, 36
    %v4785 = vpop.permute.xlu0 %4784
    %4786 = vrot.lane.b32.xlu0 %v1066, 36
    %v4787 = vpop.permute.xlu0 %4786
    %4788 = vrot.lane.b32.xlu0 %v1067, 36
    %v4789 = vpop.permute.xlu0 %4788
    %4790 = vrot.lane.b32.xlu0 %v1068, 36
    %v4791 = vpop.permute.xlu0 %4790
    %4792 = vrot.lane.b32.xlu0 %v1069, 36
    %v4793 = vpop.permute.xlu0 %4792
    %4794 = vrot.lane.b32.xlu0 %v1070, 36
    %v4795 = vpop.permute.xlu0 %4794
    %4796 = vrot.lane.b32.xlu0 %v1071, 36
    %v4797 = vpop.permute.xlu0 %4796
    %4798 = vrot.lane.b32.xlu0 %v1072, 36
    %v4799 = vpop.permute.xlu0 %4798
    %4800 = vrot.lane.b32.xlu0 %v1073, 36
    %v4801 = vpop.permute.xlu0 %4800
    %4802 = vrot.lane.b32.xlu0 %v1074, 36
    %v4803 = vpop.permute.xlu0 %4802
    %4804 = vrot.lane.b32.xlu0 %v1075, 36
    %v4805 = vpop.permute.xlu0 %4804
    %4806 = vrot.lane.b32.xlu0 %v1076, 36
    %v4807 = vpop.permute.xlu0 %4806
    %4808 = vrot.lane.b32.xlu0 %v1077, 36
    %v4809 = vpop.permute.xlu0 %4808
    %4810 = vrot.lane.b32.xlu0 %v1078, 36
    %v4811 = vpop.permute.xlu0 %4810
    %4812 = vrot.lane.b32.xlu0 %v1079, 36
    %v4813 = vpop.permute.xlu0 %4812
    %4814 = vrot.lane.b32.xlu0 %v1080, 36
    %v4815 = vpop.permute.xlu0 %4814
    %4816 = vrot.lane.b32.xlu0 %v1081, 36
    %v4817 = vpop.permute.xlu0 %4816
    %4818 = vrot.lane.b32.xlu0 %v1082, 36
    %v4819 = vpop.permute.xlu0 %4818
    %4820 = vrot.lane.b32.xlu0 %v1083, 36
    %v4821 = vpop.permute.xlu0 %4820
    %4822 = vrot.lane.b32.xlu0 %v1084, 36
    %v4823 = vpop.permute.xlu0 %4822
    %4824 = vrot.lane.b32.xlu0 %v1085, 36
    %v4825 = vpop.permute.xlu0 %4824
    %4826 = vrot.lane.b32.xlu0 %v1086, 36
    %v4827 = vpop.permute.xlu0 %4826
    %4828 = vrot.lane.b32.xlu0 %v1087, 36
    %v4829 = vpop.permute.xlu0 %4828
    %4830 = vrot.lane.b32.xlu0 %v1088, 36
    %v4831 = vpop.permute.xlu0 %4830
    %4832 = vrot.lane.b32.xlu0 %v1089, 36
    %v4833 = vpop.permute.xlu0 %4832
    %4834 = vrot.lane.b32.xlu0 %v1090, 36
    %v4835 = vpop.permute.xlu0 %4834
    %4836 = vrot.lane.b32.xlu0 %v1091, 36
    %v4837 = vpop.permute.xlu0 %4836
    %4838 = vrot.lane.b32.xlu0 %v1092, 36
    %v4839 = vpop.permute.xlu0 %4838
    %4840 = vrot.lane.b32.xlu0 %v1093, 36
    %v4841 = vpop.permute.xlu0 %4840
    %4842 = vrot.lane.b32.xlu0 %v1094, 36
    %v4843 = vpop.permute.xlu0 %4842
    %4844 = vrot.lane.b32.xlu0 %v1095, 36
    %v4845 = vpop.permute.xlu0 %4844
    %4846 = vrot.lane.b32.xlu0 %v1096, 36
    %v4847 = vpop.permute.xlu0 %4846
    %4848 = vrot.lane.b32.xlu0 %v1097, 36
    %v4849 = vpop.permute.xlu0 %4848
    %4850 = vrot.lane.b32.xlu0 %v1098, 36
    %v4851 = vpop.permute.xlu0 %4850
    %4852 = vrot.lane.b32.xlu0 %v1099, 36
    %v4853 = vpop.permute.xlu0 %4852
    %4854 = vrot.lane.b32.xlu0 %v1100, 36
    %v4855 = vpop.permute.xlu0 %4854
    %4856 = vrot.lane.b32.xlu0 %v1101, 36
    %v4857 = vpop.permute.xlu0 %4856
    %4858 = vrot.lane.b32.xlu0 %v1102, 36
    %v4859 = vpop.permute.xlu0 %4858
    %4860 = vrot.lane.b32.xlu0 %v1103, 36
    %v4861 = vpop.permute.xlu0 %4860
    %4862 = vrot.lane.b32.xlu0 %v1104, 36
    %v4863 = vpop.permute.xlu0 %4862
    %4864 = vrot.lane.b32.xlu0 %v1105, 36
    %v4865 = vpop.permute.xlu0 %4864
    %4866 = vrot.lane.b32.xlu0 %v1106, 36
    %v4867 = vpop.permute.xlu0 %4866
    %4868 = vrot.lane.b32.xlu0 %v1107, 36
    %v4869 = vpop.permute.xlu0 %4868
    %4870 = vrot.lane.b32.xlu0 %v1108, 36
    %v4871 = vpop.permute.xlu0 %4870
    %4872 = vrot.lane.b32.xlu0 %v1109, 36
    %v4873 = vpop.permute.xlu0 %4872
    %4874 = vrot.lane.b32.xlu0 %v1110, 36
    %v4875 = vpop.permute.xlu0 %4874
    %4876 = vrot.lane.b32.xlu0 %v1111, 36
    %v4877 = vpop.permute.xlu0 %4876
    %4878 = vrot.lane.b32.xlu0 %v1112, 36
    %v4879 = vpop.permute.xlu0 %4878
    %4880 = vrot.lane.b32.xlu0 %v1113, 36
    %v4881 = vpop.permute.xlu0 %4880
    %4882 = vrot.lane.b32.xlu0 %v1114, 36
    %v4883 = vpop.permute.xlu0 %4882
    %4884 = vrot.lane.b32.xlu0 %v1115, 36
    %v4885 = vpop.permute.xlu0 %4884
    %4886 = vrot.lane.b32.xlu0 %v1116, 36
    %v4887 = vpop.permute.xlu0 %4886
    %4888 = vrot.lane.b32.xlu0 %v1117, 36
    %v4889 = vpop.permute.xlu0 %4888
    %4890 = vrot.lane.b32.xlu0 %v1118, 36
    %v4891 = vpop.permute.xlu0 %4890
    %4892 = vrot.lane.b32.xlu0 %v1119, 36
    %v4893 = vpop.permute.xlu0 %4892
    %4894 = vrot.lane.b32.xlu0 %v1120, 36
    %v4895 = vpop.permute.xlu0 %4894
    %4896 = vrot.lane.b32.xlu0 %v1121, 36
    %v4897 = vpop.permute.xlu0 %4896
    %4898 = vrot.lane.b32.xlu0 %v1122, 36
    %v4899 = vpop.permute.xlu0 %4898
    %4900 = vrot.lane.b32.xlu0 %v1123, 36
    %v4901 = vpop.permute.xlu0 %4900
    %5030 = vrot.lane.b32.xlu0 %v1124, 39
    %v5031 = vpop.permute.xlu0 %5030
    %5032 = vrot.lane.b32.xlu0 %v1125, 39
    %v5033 = vpop.permute.xlu0 %5032
    %5034 = vrot.lane.b32.xlu0 %v1126, 39
    %v5035 = vpop.permute.xlu0 %5034
    %5036 = vrot.lane.b32.xlu0 %v1127, 39
    %v5037 = vpop.permute.xlu0 %5036
    %5038 = vrot.lane.b32.xlu0 %v1128, 39
    %v5039 = vpop.permute.xlu0 %5038
    %5040 = vrot.lane.b32.xlu0 %v1129, 39
    %v5041 = vpop.permute.xlu0 %5040
    %5042 = vrot.lane.b32.xlu0 %v1130, 39
    %v5043 = vpop.permute.xlu0 %5042
    %5044 = vrot.lane.b32.xlu0 %v1131, 39
    %v5045 = vpop.permute.xlu0 %5044
    %5046 = vrot.lane.b32.xlu0 %v1132, 39
    %v5047 = vpop.permute.xlu0 %5046
    %5048 = vrot.lane.b32.xlu0 %v1133, 39
    %v5049 = vpop.permute.xlu0 %5048
    %5050 = vrot.lane.b32.xlu0 %v1134, 39
    %v5051 = vpop.permute.xlu0 %5050
    %5052 = vrot.lane.b32.xlu0 %v1135, 39
    %v5053 = vpop.permute.xlu0 %5052
    %5054 = vrot.lane.b32.xlu0 %v1136, 39
    %v5055 = vpop.permute.xlu0 %5054
    %5056 = vrot.lane.b32.xlu0 %v1137, 39
    %v5057 = vpop.permute.xlu0 %5056
    %5058 = vrot.lane.b32.xlu0 %v1138, 39
    %v5059 = vpop.permute.xlu0 %5058
    %5060 = vrot.lane.b32.xlu0 %v1139, 39
    %v5061 = vpop.permute.xlu0 %5060
    %5062 = vrot.lane.b32.xlu0 %v1140, 39
    %v5063 = vpop.permute.xlu0 %5062
    %5064 = vrot.lane.b32.xlu0 %v1141, 39
    %v5065 = vpop.permute.xlu0 %5064
    %5066 = vrot.lane.b32.xlu0 %v1142, 39
    %v5067 = vpop.permute.xlu0 %5066
    %5068 = vrot.lane.b32.xlu0 %v1143, 39
    %v5069 = vpop.permute.xlu0 %5068
    %5070 = vrot.lane.b32.xlu0 %v1144, 39
    %v5071 = vpop.permute.xlu0 %5070
    %5072 = vrot.lane.b32.xlu0 %v1145, 39
    %v5073 = vpop.permute.xlu0 %5072
    %5074 = vrot.lane.b32.xlu0 %v1146, 39
    %v5075 = vpop.permute.xlu0 %5074
    %5076 = vrot.lane.b32.xlu0 %v1147, 39
    %v5077 = vpop.permute.xlu0 %5076
    %5078 = vrot.lane.b32.xlu0 %v1148, 39
    %v5079 = vpop.permute.xlu0 %5078
    %5080 = vrot.lane.b32.xlu0 %v1149, 39
    %v5081 = vpop.permute.xlu0 %5080
    %5082 = vrot.lane.b32.xlu0 %v1150, 39
    %v5083 = vpop.permute.xlu0 %5082
    %5084 = vrot.lane.b32.xlu0 %v1151, 39
    %v5085 = vpop.permute.xlu0 %5084
    %5086 = vrot.lane.b32.xlu0 %v1152, 39
    %v5087 = vpop.permute.xlu0 %5086
    %5088 = vrot.lane.b32.xlu0 %v1153, 39
    %v5089 = vpop.permute.xlu0 %5088
    %5090 = vrot.lane.b32.xlu0 %v1154, 39
    %v5091 = vpop.permute.xlu0 %5090
    %5092 = vrot.lane.b32.xlu0 %v1155, 39
    %v5093 = vpop.permute.xlu0 %5092
    %5094 = vrot.lane.b32.xlu0 %v1156, 39
    %v5095 = vpop.permute.xlu0 %5094
    %5096 = vrot.lane.b32.xlu0 %v1157, 39
    %v5097 = vpop.permute.xlu0 %5096
    %5098 = vrot.lane.b32.xlu0 %v1158, 39
    %v5099 = vpop.permute.xlu0 %5098
    %5100 = vrot.lane.b32.xlu0 %v1159, 39
    %v5101 = vpop.permute.xlu0 %5100
    %5102 = vrot.lane.b32.xlu0 %v1160, 39
    %v5103 = vpop.permute.xlu0 %5102
    %5104 = vrot.lane.b32.xlu0 %v1161, 39
    %v5105 = vpop.permute.xlu0 %5104
    %5106 = vrot.lane.b32.xlu0 %v1162, 39
    %v5107 = vpop.permute.xlu0 %5106
    %5108 = vrot.lane.b32.xlu0 %v1163, 39
    %v5109 = vpop.permute.xlu0 %5108
    %5110 = vrot.lane.b32.xlu0 %v1164, 39
    %v5111 = vpop.permute.xlu0 %5110
    %5112 = vrot.lane.b32.xlu0 %v1165, 39
    %v5113 = vpop.permute.xlu0 %5112
    %5114 = vrot.lane.b32.xlu0 %v1166, 39
    %v5115 = vpop.permute.xlu0 %5114
    %5116 = vrot.lane.b32.xlu0 %v1167, 39
    %v5117 = vpop.permute.xlu0 %5116
    %5118 = vrot.lane.b32.xlu0 %v1168, 39
    %v5119 = vpop.permute.xlu0 %5118
    %5120 = vrot.lane.b32.xlu0 %v1169, 39
    %v5121 = vpop.permute.xlu0 %5120
    %5122 = vrot.lane.b32.xlu0 %v1170, 39
    %v5123 = vpop.permute.xlu0 %5122
    %5124 = vrot.lane.b32.xlu0 %v1171, 39
    %v5125 = vpop.permute.xlu0 %5124
    %5126 = vrot.lane.b32.xlu0 %v1172, 39
    %v5127 = vpop.permute.xlu0 %5126
    %5128 = vrot.lane.b32.xlu0 %v1173, 39
    %v5129 = vpop.permute.xlu0 %5128
    %5130 = vrot.lane.b32.xlu0 %v1174, 39
    %v5131 = vpop.permute.xlu0 %5130
    %5132 = vrot.lane.b32.xlu0 %v1175, 39
    %v5133 = vpop.permute.xlu0 %5132
    %5134 = vrot.lane.b32.xlu0 %v1176, 39
    %v5135 = vpop.permute.xlu0 %5134
    %5136 = vrot.lane.b32.xlu0 %v1177, 39
    %v5137 = vpop.permute.xlu0 %5136
    %5138 = vrot.lane.b32.xlu0 %v1178, 39
    %v5139 = vpop.permute.xlu0 %5138
    %5140 = vrot.lane.b32.xlu0 %v1179, 39
    %v5141 = vpop.permute.xlu0 %5140
    %5142 = vrot.lane.b32.xlu0 %v1180, 39
    %v5143 = vpop.permute.xlu0 %5142
    %5144 = vrot.lane.b32.xlu0 %v1181, 39
    %v5145 = vpop.permute.xlu0 %5144
    %5146 = vrot.lane.b32.xlu0 %v1182, 39
    %v5147 = vpop.permute.xlu0 %5146
    %5148 = vrot.lane.b32.xlu0 %v1183, 39
    %v5149 = vpop.permute.xlu0 %5148
    %5150 = vrot.lane.b32.xlu0 %v1184, 39
    %v5151 = vpop.permute.xlu0 %5150
    %5152 = vrot.lane.b32.xlu0 %v1185, 39
    %v5153 = vpop.permute.xlu0 %5152
    %5154 = vrot.lane.b32.xlu0 %v1186, 39
    %v5155 = vpop.permute.xlu0 %5154
    %5156 = vrot.lane.b32.xlu0 %v1187, 39
    %v5157 = vpop.permute.xlu0 %5156
    %5286 = vrot.lane.b32.xlu0 %v1188, 42
    %v5287 = vpop.permute.xlu0 %5286
    %5288 = vrot.lane.b32.xlu0 %v1189, 42
    %v5289 = vpop.permute.xlu0 %5288
    %5290 = vrot.lane.b32.xlu0 %v1190, 42
    %v5291 = vpop.permute.xlu0 %5290
    %5292 = vrot.lane.b32.xlu0 %v1191, 42
    %v5293 = vpop.permute.xlu0 %5292
    %5294 = vrot.lane.b32.xlu0 %v1192, 42
    %v5295 = vpop.permute.xlu0 %5294
    %5296 = vrot.lane.b32.xlu0 %v1193, 42
    %v5297 = vpop.permute.xlu0 %5296
    %5298 = vrot.lane.b32.xlu0 %v1194, 42
    %v5299 = vpop.permute.xlu0 %5298
    %5300 = vrot.lane.b32.xlu0 %v1195, 42
    %v5301 = vpop.permute.xlu0 %5300
    %5302 = vrot.lane.b32.xlu0 %v1196, 42
    %v5303 = vpop.permute.xlu0 %5302
    %5304 = vrot.lane.b32.xlu0 %v1197, 42
    %v5305 = vpop.permute.xlu0 %5304
    %5306 = vrot.lane.b32.xlu0 %v1198, 42
    %v5307 = vpop.permute.xlu0 %5306
    %5308 = vrot.lane.b32.xlu0 %v1199, 42
    %v5309 = vpop.permute.xlu0 %5308
    %5310 = vrot.lane.b32.xlu0 %v1200, 42
    %v5311 = vpop.permute.xlu0 %5310
    %5312 = vrot.lane.b32.xlu0 %v1201, 42
    %v5313 = vpop.permute.xlu0 %5312
    %5314 = vrot.lane.b32.xlu0 %v1202, 42
    %v5315 = vpop.permute.xlu0 %5314
    %5316 = vrot.lane.b32.xlu0 %v1203, 42
    %v5317 = vpop.permute.xlu0 %5316
    %5318 = vrot.lane.b32.xlu0 %v1204, 42
    %v5319 = vpop.permute.xlu0 %5318
    %5320 = vrot.lane.b32.xlu0 %v1205, 42
    %v5321 = vpop.permute.xlu0 %5320
    %5322 = vrot.lane.b32.xlu0 %v1206, 42
    %v5323 = vpop.permute.xlu0 %5322
    %5324 = vrot.lane.b32.xlu0 %v1207, 42
    %v5325 = vpop.permute.xlu0 %5324
    %5326 = vrot.lane.b32.xlu0 %v1208, 42
    %v5327 = vpop.permute.xlu0 %5326
    %5328 = vrot.lane.b32.xlu0 %v1209, 42
    %v5329 = vpop.permute.xlu0 %5328
    %5330 = vrot.lane.b32.xlu0 %v1210, 42
    %v5331 = vpop.permute.xlu0 %5330
    %5332 = vrot.lane.b32.xlu0 %v1211, 42
    %v5333 = vpop.permute.xlu0 %5332
    %5334 = vrot.lane.b32.xlu0 %v1212, 42
    %v5335 = vpop.permute.xlu0 %5334
    %5336 = vrot.lane.b32.xlu0 %v1213, 42
    %v5337 = vpop.permute.xlu0 %5336
    %5338 = vrot.lane.b32.xlu0 %v1214, 42
    %v5339 = vpop.permute.xlu0 %5338
    %5340 = vrot.lane.b32.xlu0 %v1215, 42
    %v5341 = vpop.permute.xlu0 %5340
    %5342 = vrot.lane.b32.xlu0 %v1216, 42
    %v5343 = vpop.permute.xlu0 %5342
    %5344 = vrot.lane.b32.xlu0 %v1217, 42
    %v5345 = vpop.permute.xlu0 %5344
    %5346 = vrot.lane.b32.xlu0 %v1218, 42
    %v5347 = vpop.permute.xlu0 %5346
    %5348 = vrot.lane.b32.xlu0 %v1219, 42
    %v5349 = vpop.permute.xlu0 %5348
    %5350 = vrot.lane.b32.xlu0 %v1220, 42
    %v5351 = vpop.permute.xlu0 %5350
    %5352 = vrot.lane.b32.xlu0 %v1221, 42
    %v5353 = vpop.permute.xlu0 %5352
    %5354 = vrot.lane.b32.xlu0 %v1222, 42
    %v5355 = vpop.permute.xlu0 %5354
    %5356 = vrot.lane.b32.xlu0 %v1223, 42
    %v5357 = vpop.permute.xlu0 %5356
    %5358 = vrot.lane.b32.xlu0 %v1224, 42
    %v5359 = vpop.permute.xlu0 %5358
    %5360 = vrot.lane.b32.xlu0 %v1225, 42
    %v5361 = vpop.permute.xlu0 %5360
    %5362 = vrot.lane.b32.xlu0 %v1226, 42
    %v5363 = vpop.permute.xlu0 %5362
    %5364 = vrot.lane.b32.xlu0 %v1227, 42
    %v5365 = vpop.permute.xlu0 %5364
    %5366 = vrot.lane.b32.xlu0 %v1228, 42
    %v5367 = vpop.permute.xlu0 %5366
    %5368 = vrot.lane.b32.xlu0 %v1229, 42
    %v5369 = vpop.permute.xlu0 %5368
    %5370 = vrot.lane.b32.xlu0 %v1230, 42
    %v5371 = vpop.permute.xlu0 %5370
    %5372 = vrot.lane.b32.xlu0 %v1231, 42
    %v5373 = vpop.permute.xlu0 %5372
    %5374 = vrot.lane.b32.xlu0 %v1232, 42
    %v5375 = vpop.permute.xlu0 %5374
    %5376 = vrot.lane.b32.xlu0 %v1233, 42
    %v5377 = vpop.permute.xlu0 %5376
    %5378 = vrot.lane.b32.xlu0 %v1234, 42
    %v5379 = vpop.permute.xlu0 %5378
    %5380 = vrot.lane.b32.xlu0 %v1235, 42
    %v5381 = vpop.permute.xlu0 %5380
    %5382 = vrot.lane.b32.xlu0 %v1236, 42
    %v5383 = vpop.permute.xlu0 %5382
    %5384 = vrot.lane.b32.xlu0 %v1237, 42
    %v5385 = vpop.permute.xlu0 %5384
    %5386 = vrot.lane.b32.xlu0 %v1238, 42
    %v5387 = vpop.permute.xlu0 %5386
    %5388 = vrot.lane.b32.xlu0 %v1239, 42
    %v5389 = vpop.permute.xlu0 %5388
    %5390 = vrot.lane.b32.xlu0 %v1240, 42
    %v5391 = vpop.permute.xlu0 %5390
    %5392 = vrot.lane.b32.xlu0 %v1241, 42
    %v5393 = vpop.permute.xlu0 %5392
    %5394 = vrot.lane.b32.xlu0 %v1242, 42
    %v5395 = vpop.permute.xlu0 %5394
    %5396 = vrot.lane.b32.xlu0 %v1243, 42
    %v5397 = vpop.permute.xlu0 %5396
    %5398 = vrot.lane.b32.xlu0 %v1244, 42
    %v5399 = vpop.permute.xlu0 %5398
    %5400 = vrot.lane.b32.xlu0 %v1245, 42
    %v5401 = vpop.permute.xlu0 %5400
    %5402 = vrot.lane.b32.xlu0 %v1246, 42
    %v5403 = vpop.permute.xlu0 %5402
    %5404 = vrot.lane.b32.xlu0 %v1247, 42
    %v5405 = vpop.permute.xlu0 %5404
    %5406 = vrot.lane.b32.xlu0 %v1248, 42
    %v5407 = vpop.permute.xlu0 %5406
    %5408 = vrot.lane.b32.xlu0 %v1249, 42
    %v5409 = vpop.permute.xlu0 %5408
    %5410 = vrot.lane.b32.xlu0 %v1250, 42
    %v5411 = vpop.permute.xlu0 %5410
    %5412 = vrot.lane.b32.xlu0 %v1251, 42
    %v5413 = vpop.permute.xlu0 %5412
    %5542 = vrot.lane.b32.xlu0 %v1253, 45
    %v5543 = vpop.permute.xlu0 %5542
    %5544 = vrot.lane.b32.xlu0 %v1254, 45
    %v5545 = vpop.permute.xlu0 %5544
    %5546 = vrot.lane.b32.xlu0 %v1255, 45
    %v5547 = vpop.permute.xlu0 %5546
    %5548 = vrot.lane.b32.xlu0 %v1256, 45
    %v5549 = vpop.permute.xlu0 %5548
    %5550 = vrot.lane.b32.xlu0 %v1257, 45
    %v5551 = vpop.permute.xlu0 %5550
    %5552 = vrot.lane.b32.xlu0 %v1258, 45
    %v5553 = vpop.permute.xlu0 %5552
    %5554 = vrot.lane.b32.xlu0 %v1259, 45
    %v5555 = vpop.permute.xlu0 %5554
    %5556 = vrot.lane.b32.xlu0 %v1260, 45
    %v5557 = vpop.permute.xlu0 %5556
    %5558 = vrot.lane.b32.xlu0 %v1261, 45
    %v5559 = vpop.permute.xlu0 %5558
    %5560 = vrot.lane.b32.xlu0 %v1262, 45
    %v5561 = vpop.permute.xlu0 %5560
    %5562 = vrot.lane.b32.xlu0 %v1263, 45
    %v5563 = vpop.permute.xlu0 %5562
    %5564 = vrot.lane.b32.xlu0 %v1264, 45
    %v5565 = vpop.permute.xlu0 %5564
    %5566 = vrot.lane.b32.xlu0 %v1265, 45
    %v5567 = vpop.permute.xlu0 %5566
    %5568 = vrot.lane.b32.xlu0 %v1266, 45
    %v5569 = vpop.permute.xlu0 %5568
    %5570 = vrot.lane.b32.xlu0 %v1267, 45
    %v5571 = vpop.permute.xlu0 %5570
    %5572 = vrot.lane.b32.xlu0 %v1268, 45
    %v5573 = vpop.permute.xlu0 %5572
    %5574 = vrot.lane.b32.xlu0 %v1269, 45
    %v5575 = vpop.permute.xlu0 %5574
    %5576 = vrot.lane.b32.xlu0 %v1270, 45
    %v5577 = vpop.permute.xlu0 %5576
    %5578 = vrot.lane.b32.xlu0 %v1271, 45
    %v5579 = vpop.permute.xlu0 %5578
    %5580 = vrot.lane.b32.xlu0 %v1272, 45
    %v5581 = vpop.permute.xlu0 %5580
    %5582 = vrot.lane.b32.xlu0 %v1273, 45
    %v5583 = vpop.permute.xlu0 %5582
    %5584 = vrot.lane.b32.xlu0 %v1274, 45
    %v5585 = vpop.permute.xlu0 %5584
    %5586 = vrot.lane.b32.xlu0 %v1275, 45
    %v5587 = vpop.permute.xlu0 %5586
    %5588 = vrot.lane.b32.xlu0 %v1276, 45
    %v5589 = vpop.permute.xlu0 %5588
    %5590 = vrot.lane.b32.xlu0 %v1277, 45
    %v5591 = vpop.permute.xlu0 %5590
    %5592 = vrot.lane.b32.xlu0 %v1278, 45
    %v5593 = vpop.permute.xlu0 %5592
    %5594 = vrot.lane.b32.xlu0 %v1279, 45
    %v5595 = vpop.permute.xlu0 %5594
    %5596 = vrot.lane.b32.xlu0 %v1280, 45
    %v5597 = vpop.permute.xlu0 %5596
    %5598 = vrot.lane.b32.xlu0 %v1281, 45
    %v5599 = vpop.permute.xlu0 %5598
    %5600 = vrot.lane.b32.xlu0 %v1282, 45
    %v5601 = vpop.permute.xlu0 %5600
    %5602 = vrot.lane.b32.xlu0 %v1283, 45
    %v5603 = vpop.permute.xlu0 %5602
    %5604 = vrot.lane.b32.xlu0 %v1284, 45
    %v5605 = vpop.permute.xlu0 %5604
    %5606 = vrot.lane.b32.xlu0 %v1285, 45
    %v5607 = vpop.permute.xlu0 %5606
    %5608 = vrot.lane.b32.xlu0 %v1286, 45
    %v5609 = vpop.permute.xlu0 %5608
    %5610 = vrot.lane.b32.xlu0 %v1287, 45
    %v5611 = vpop.permute.xlu0 %5610
    %5612 = vrot.lane.b32.xlu0 %v1288, 45
    %v5613 = vpop.permute.xlu0 %5612
    %5614 = vrot.lane.b32.xlu0 %v1289, 45
    %v5615 = vpop.permute.xlu0 %5614
    %5616 = vrot.lane.b32.xlu0 %v1290, 45
    %v5617 = vpop.permute.xlu0 %5616
    %5618 = vrot.lane.b32.xlu0 %v1291, 45
    %v5619 = vpop.permute.xlu0 %5618
    %5620 = vrot.lane.b32.xlu0 %v1292, 45
    %v5621 = vpop.permute.xlu0 %5620
    %5622 = vrot.lane.b32.xlu0 %v1293, 45
    %v5623 = vpop.permute.xlu0 %5622
    %5624 = vrot.lane.b32.xlu0 %v1294, 45
    %v5625 = vpop.permute.xlu0 %5624
    %5626 = vrot.lane.b32.xlu0 %v1295, 45
    %v5627 = vpop.permute.xlu0 %5626
    %5628 = vrot.lane.b32.xlu0 %v1296, 45
    %v5629 = vpop.permute.xlu0 %5628
    %5630 = vrot.lane.b32.xlu0 %v1297, 45
    %v5631 = vpop.permute.xlu0 %5630
    %5632 = vrot.lane.b32.xlu0 %v1298, 45
    %v5633 = vpop.permute.xlu0 %5632
    %5634 = vrot.lane.b32.xlu0 %v1299, 45
    %v5635 = vpop.permute.xlu0 %5634
    %5636 = vrot.lane.b32.xlu0 %v1300, 45
    %v5637 = vpop.permute.xlu0 %5636
    %5638 = vrot.lane.b32.xlu0 %v1301, 45
    %v5639 = vpop.permute.xlu0 %5638
    %5640 = vrot.lane.b32.xlu0 %v1302, 45
    %v5641 = vpop.permute.xlu0 %5640
    %5642 = vrot.lane.b32.xlu0 %v1303, 45
    %v5643 = vpop.permute.xlu0 %5642
    %5644 = vrot.lane.b32.xlu0 %v1304, 45
    %v5645 = vpop.permute.xlu0 %5644
    %5646 = vrot.lane.b32.xlu0 %v1305, 45
    %v5647 = vpop.permute.xlu0 %5646
    %5648 = vrot.lane.b32.xlu0 %v1306, 45
    %v5649 = vpop.permute.xlu0 %5648
    %5650 = vrot.lane.b32.xlu0 %v1307, 45
    %v5651 = vpop.permute.xlu0 %5650
    %5652 = vrot.lane.b32.xlu0 %v1308, 45
    %v5653 = vpop.permute.xlu0 %5652
    %5654 = vrot.lane.b32.xlu0 %v1309, 45
    %v5655 = vpop.permute.xlu0 %5654
    %5656 = vrot.lane.b32.xlu0 %v1310, 45
    %v5657 = vpop.permute.xlu0 %5656
    %5658 = vrot.lane.b32.xlu0 %v1311, 45
    %v5659 = vpop.permute.xlu0 %5658
    %5660 = vrot.lane.b32.xlu0 %v1312, 45
    %v5661 = vpop.permute.xlu0 %5660
    %5662 = vrot.lane.b32.xlu0 %v1313, 45
    %v5663 = vpop.permute.xlu0 %5662
    %5664 = vrot.lane.b32.xlu0 %v1314, 45
    %v5665 = vpop.permute.xlu0 %5664
    %5666 = vrot.lane.b32.xlu0 %v1315, 45
    %v5667 = vpop.permute.xlu0 %5666
    %5668 = vrot.lane.b32.xlu0 %v1316, 45
    %v5669 = vpop.permute.xlu0 %5668
    %v5734 = vsel %vm40, %v291, %v1959
    %v5735 = vsel %vm40, %v292, %v1961
    %v5736 = vsel %vm40, %v293, %v1963
    %v5737 = vsel %vm40, %v294, %v1965
    %v5738 = vsel %vm40, %v295, %v1967
    %v5739 = vsel %vm40, %v296, %v1969
    %v5740 = vsel %vm40, %v297, %v1971
    %v5741 = vsel %vm40, %v298, %v1973
    %v5742 = vsel %vm40, %v299, %v1975
    %v5743 = vsel %vm40, %v300, %v1977
    %v5744 = vsel %vm40, %v301, %v1979
    %v5745 = vsel %vm40, %v302, %v1981
    %v5746 = vsel %vm40, %v303, %v1983
    %v5747 = vsel %vm40, %v304, %v1985
    %v5748 = vsel %vm40, %v305, %v1987
    %v5749 = vsel %vm40, %v306, %v1989
    %v5750 = vsel %vm40, %v307, %v1991
    %v5751 = vsel %vm40, %v308, %v1993
    %v5752 = vsel %vm40, %v309, %v1995
    %v5753 = vsel %vm40, %v310, %v1997
    %v5754 = vsel %vm40, %v311, %v1999
    %v5755 = vsel %vm40, %v312, %v2001
    %v5756 = vsel %vm40, %v313, %v2003
    %v5757 = vsel %vm40, %v314, %v2005
    %v5758 = vsel %vm40, %v315, %v2007
    %v5759 = vsel %vm40, %v316, %v2009
    %v5760 = vsel %vm40, %v317, %v2011
    %v5761 = vsel %vm40, %v318, %v2013
    %v5762 = vsel %vm40, %v319, %v2015
    %v5763 = vsel %vm40, %v320, %v2017
    %v5764 = vsel %vm40, %v321, %v2019
    %v5765 = vsel %vm40, %v322, %v2021
    %v5766 = vsel %vm40, %v323, %v2023
    %v5767 = vsel %vm40, %v324, %v2025
    %v5768 = vsel %vm40, %v325, %v2027
    %v5769 = vsel %vm40, %v326, %v2029
    %v5770 = vsel %vm40, %v327, %v2031
    %v5771 = vsel %vm40, %v328, %v2033
    %v5772 = vsel %vm40, %v329, %v2035
    %v5773 = vsel %vm40, %v330, %v2037
    %v5774 = vsel %vm40, %v331, %v2039
    %v5775 = vsel %vm40, %v332, %v2041
    %v5776 = vsel %vm40, %v333, %v2043
    %v5777 = vsel %vm40, %v334, %v2045
    %v5778 = vsel %vm40, %v335, %v2047
    %v5779 = vsel %vm40, %v336, %v2049
    %v5780 = vsel %vm40, %v337, %v2051
    %v5781 = vsel %vm40, %v338, %v2053
    %v5782 = vsel %vm40, %v339, %v2055
    %v5783 = vsel %vm40, %v340, %v2057
    %v5784 = vsel %vm40, %v341, %v2059
    %v5785 = vsel %vm40, %v342, %v2061
    %v5786 = vsel %vm40, %v343, %v2063
    %v5787 = vsel %vm40, %v344, %v2065
    %v5788 = vsel %vm40, %v345, %v2067
    %v5789 = vsel %vm40, %v346, %v2069
    %v5790 = vsel %vm40, %v347, %v2071
    %v5791 = vsel %vm40, %v348, %v2073
    %v5792 = vsel %vm40, %v349, %v2075
    %v5793 = vsel %vm40, %v350, %v2077
    %v5794 = vsel %vm40, %v351, %v2079
    %v5795 = vsel %vm40, %v352, %v2081
    %v5796 = vsel %vm40, %v353, %v2083
    %v5797 = vsel %vm40, %v354, %v2085
    %vm5798 = vcmask 48128
    %v5799 = vsel %vm5798, %v5734, %v2215
    %v5800 = vsel %vm5798, %v5735, %v2217
    %v5801 = vsel %vm5798, %v5736, %v2219
    %v5802 = vsel %vm5798, %v5737, %v2221
    %v5803 = vsel %vm5798, %v5738, %v2223
    %v5804 = vsel %vm5798, %v5739, %v2225
    %v5805 = vsel %vm5798, %v5740, %v2227
    %v5806 = vsel %vm5798, %v5741, %v2229
    %v5807 = vsel %vm5798, %v5742, %v2231
    %v5808 = vsel %vm5798, %v5743, %v2233
    %v5809 = vsel %vm5798, %v5744, %v2235
    %v5810 = vsel %vm5798, %v5745, %v2237
    %v5811 = vsel %vm5798, %v5746, %v2239
    %v5812 = vsel %vm5798, %v5747, %v2241
    %v5813 = vsel %vm5798, %v5748, %v2243
    %v5814 = vsel %vm5798, %v5749, %v2245
    %v5815 = vsel %vm5798, %v5750, %v2247
    %v5816 = vsel %vm5798, %v5751, %v2249
    %v5817 = vsel %vm5798, %v5752, %v2251
    %v5818 = vsel %vm5798, %v5753, %v2253
    %v5819 = vsel %vm5798, %v5754, %v2255
    %v5820 = vsel %vm5798, %v5755, %v2257
    %v5821 = vsel %vm5798, %v5756, %v2259
    %v5822 = vsel %vm5798, %v5757, %v2261
    %v5823 = vsel %vm5798, %v5758, %v2263
    %v5824 = vsel %vm5798, %v5759, %v2265
    %v5825 = vsel %vm5798, %v5760, %v2267
    %v5826 = vsel %vm5798, %v5761, %v2269
    %v5827 = vsel %vm5798, %v5762, %v2271
    %v5828 = vsel %vm5798, %v5763, %v2273
    %v5829 = vsel %vm5798, %v5764, %v2275
    %v5830 = vsel %vm5798, %v5765, %v2277
    %v5831 = vsel %vm5798, %v5766, %v2279
    %v5832 = vsel %vm5798, %v5767, %v2281
    %v5833 = vsel %vm5798, %v5768, %v2283
    %v5834 = vsel %vm5798, %v5769, %v2285
    %v5835 = vsel %vm5798, %v5770, %v2287
    %v5836 = vsel %vm5798, %v5771, %v2289
    %v5837 = vsel %vm5798, %v5772, %v2291
    %v5838 = vsel %vm5798, %v5773, %v2293
    %v5839 = vsel %vm5798, %v5774, %v2295
    %v5840 = vsel %vm5798, %v5775, %v2297
    %v5841 = vsel %vm5798, %v5776, %v2299
    %v5842 = vsel %vm5798, %v5777, %v2301
    %v5843 = vsel %vm5798, %v5778, %v2303
    %v5844 = vsel %vm5798, %v5779, %v2305
    %v5845 = vsel %vm5798, %v5780, %v2307
    %v5846 = vsel %vm5798, %v5781, %v2309
    %v5847 = vsel %vm5798, %v5782, %v2311
    %v5848 = vsel %vm5798, %v5783, %v2313
    %v5849 = vsel %vm5798, %v5784, %v2315
    %v5850 = vsel %vm5798, %v5785, %v2317
    %v5851 = vsel %vm5798, %v5786, %v2319
    %v5852 = vsel %vm5798, %v5787, %v2321
    %v5853 = vsel %vm5798, %v5788, %v2323
    %v5854 = vsel %vm5798, %v5789, %v2325
    %v5855 = vsel %vm5798, %v5790, %v2327
    %v5856 = vsel %vm5798, %v5791, %v2329
    %v5857 = vsel %vm5798, %v5792, %v2331
    %v5858 = vsel %vm5798, %v5793, %v2333
    %v5859 = vsel %vm5798, %v5794, %v2335
    %v5860 = vsel %vm5798, %v5795, %v2337
    %v5861 = vsel %vm5798, %v5796, %v2339
    %v5862 = vsel %vm5798, %v5797, %v2341
    %vm5863 = vcmask 72704
    %v5864 = vsel %vm5863, %v5799, %v2471
    %v5865 = vsel %vm5863, %v5800, %v2473
    %v5866 = vsel %vm5863, %v5801, %v2475
    %v5867 = vsel %vm5863, %v5802, %v2477
    %v5868 = vsel %vm5863, %v5803, %v2479
    %v5869 = vsel %vm5863, %v5804, %v2481
    %v5870 = vsel %vm5863, %v5805, %v2483
    %v5871 = vsel %vm5863, %v5806, %v2485
    %v5872 = vsel %vm5863, %v5807, %v2487
    %v5873 = vsel %vm5863, %v5808, %v2489
    %v5874 = vsel %vm5863, %v5809, %v2491
    %v5875 = vsel %vm5863, %v5810, %v2493
    %v5876 = vsel %vm5863, %v5811, %v2495
    %v5877 = vsel %vm5863, %v5812, %v2497
    %v5878 = vsel %vm5863, %v5813, %v2499
    %v5879 = vsel %vm5863, %v5814, %v2501
    %v5880 = vsel %vm5863, %v5815, %v2503
    %v5881 = vsel %vm5863, %v5816, %v2505
    %v5882 = vsel %vm5863, %v5817, %v2507
    %v5883 = vsel %vm5863, %v5818, %v2509
    %v5884 = vsel %vm5863, %v5819, %v2511
    %v5885 = vsel %vm5863, %v5820, %v2513
    %v5886 = vsel %vm5863, %v5821, %v2515
    %v5887 = vsel %vm5863, %v5822, %v2517
    %v5888 = vsel %vm5863, %v5823, %v2519
    %v5889 = vsel %vm5863, %v5824, %v2521
    %v5890 = vsel %vm5863, %v5825, %v2523
    %v5891 = vsel %vm5863, %v5826, %v2525
    %v5892 = vsel %vm5863, %v5827, %v2527
    %v5893 = vsel %vm5863, %v5828, %v2529
    %v5894 = vsel %vm5863, %v5829, %v2531
    %v5895 = vsel %vm5863, %v5830, %v2533
    %v5896 = vsel %vm5863, %v5831, %v2535
    %v5897 = vsel %vm5863, %v5832, %v2537
    %v5898 = vsel %vm5863, %v5833, %v2539
    %v5899 = vsel %vm5863, %v5834, %v2541
    %v5900 = vsel %vm5863, %v5835, %v2543
    %v5901 = vsel %vm5863, %v5836, %v2545
    %v5902 = vsel %vm5863, %v5837, %v2547
    %v5903 = vsel %vm5863, %v5838, %v2549
    %v5904 = vsel %vm5863, %v5839, %v2551
    %v5905 = vsel %vm5863, %v5840, %v2553
    %v5906 = vsel %vm5863, %v5841, %v2555
    %v5907 = vsel %vm5863, %v5842, %v2557
    %v5908 = vsel %vm5863, %v5843, %v2559
    %v5909 = vsel %vm5863, %v5844, %v2561
    %v5910 = vsel %vm5863, %v5845, %v2563
    %v5911 = vsel %vm5863, %v5846, %v2565
    %v5912 = vsel %vm5863, %v5847, %v2567
    %v5913 = vsel %vm5863, %v5848, %v2569
    %v5914 = vsel %vm5863, %v5849, %v2571
    %v5915 = vsel %vm5863, %v5850, %v2573
    %v5916 = vsel %vm5863, %v5851, %v2575
    %v5917 = vsel %vm5863, %v5852, %v2577
    %v5918 = vsel %vm5863, %v5853, %v2579
    %v5919 = vsel %vm5863, %v5854, %v2581
    %v5920 = vsel %vm5863, %v5855, %v2583
    %v5921 = vsel %vm5863, %v5856, %v2585
    %v5922 = vsel %vm5863, %v5857, %v2587
    %v5923 = vsel %vm5863, %v5858, %v2589
    %v5924 = vsel %vm5863, %v5859, %v2591
    %v5925 = vsel %vm5863, %v5860, %v2593
    %v5926 = vsel %vm5863, %v5861, %v2595
    %v5927 = vsel %vm5863, %v5862, %v2597
    %vm5928 = vcmask 97280
    %v5929 = vsel %vm5928, %v5864, %v2727
    %v5930 = vsel %vm5928, %v5865, %v2729
    %v5931 = vsel %vm5928, %v5866, %v2731
    %v5932 = vsel %vm5928, %v5867, %v2733
    %v5933 = vsel %vm5928, %v5868, %v2735
    %v5934 = vsel %vm5928, %v5869, %v2737
    %v5935 = vsel %vm5928, %v5870, %v2739
    %v5936 = vsel %vm5928, %v5871, %v2741
    %v5937 = vsel %vm5928, %v5872, %v2743
    %v5938 = vsel %vm5928, %v5873, %v2745
    %v5939 = vsel %vm5928, %v5874, %v2747
    %v5940 = vsel %vm5928, %v5875, %v2749
    %v5941 = vsel %vm5928, %v5876, %v2751
    %v5942 = vsel %vm5928, %v5877, %v2753
    %v5943 = vsel %vm5928, %v5878, %v2755
    %v5944 = vsel %vm5928, %v5879, %v2757
    %v5945 = vsel %vm5928, %v5880, %v2759
    %v5946 = vsel %vm5928, %v5881, %v2761
    %v5947 = vsel %vm5928, %v5882, %v2763
    %v5948 = vsel %vm5928, %v5883, %v2765
    %v5949 = vsel %vm5928, %v5884, %v2767
    %v5950 = vsel %vm5928, %v5885, %v2769
    %v5951 = vsel %vm5928, %v5886, %v2771
    %v5952 = vsel %vm5928, %v5887, %v2773
    %v5953 = vsel %vm5928, %v5888, %v2775
    %v5954 = vsel %vm5928, %v5889, %v2777
    %v5955 = vsel %vm5928, %v5890, %v2779
    %v5956 = vsel %vm5928, %v5891, %v2781
    %v5957 = vsel %vm5928, %v5892, %v2783
    %v5958 = vsel %vm5928, %v5893, %v2785
    %v5959 = vsel %vm5928, %v5894, %v2787
    %v5960 = vsel %vm5928, %v5895, %v2789
    %v5961 = vsel %vm5928, %v5896, %v2791
    %v5962 = vsel %vm5928, %v5897, %v2793
    %v5963 = vsel %vm5928, %v5898, %v2795
    %v5964 = vsel %vm5928, %v5899, %v2797
    %v5965 = vsel %vm5928, %v5900, %v2799
    %v5966 = vsel %vm5928, %v5901, %v2801
    %v5967 = vsel %vm5928, %v5902, %v2803
    %v5968 = vsel %vm5928, %v5903, %v2805
    %v5969 = vsel %vm5928, %v5904, %v2807
    %v5970 = vsel %vm5928, %v5905, %v2809
    %v5971 = vsel %vm5928, %v5906, %v2811
    %v5972 = vsel %vm5928, %v5907, %v2813
    %v5973 = vsel %vm5928, %v5908, %v2815
    %v5974 = vsel %vm5928, %v5909, %v2817
    %v5975 = vsel %vm5928, %v5910, %v2819
    %v5976 = vsel %vm5928, %v5911, %v2821
    %v5977 = vsel %vm5928, %v5912, %v2823
    %v5978 = vsel %vm5928, %v5913, %v2825
    %v5979 = vsel %vm5928, %v5914, %v2827
    %v5980 = vsel %vm5928, %v5915, %v2829
    %v5981 = vsel %vm5928, %v5916, %v2831
    %v5982 = vsel %vm5928, %v5917, %v2833
    %v5983 = vsel %vm5928, %v5918, %v2835
    %v5984 = vsel %vm5928, %v5919, %v2837
    %v5985 = vsel %vm5928, %v5920, %v2839
    %v5986 = vsel %vm5928, %v5921, %v2841
    %v5987 = vsel %vm5928, %v5922, %v2843
    %v5988 = vsel %vm5928, %v5923, %v2845
    %v5989 = vsel %vm5928, %v5924, %v2847
    %v5990 = vsel %vm5928, %v5925, %v2849
    %v5991 = vsel %vm5928, %v5926, %v2851
    %v5992 = vsel %vm5928, %v5927, %v2853
    %vm5993 = vcmask 121856
    %v5994 = vsel %vm5993, %v5929, %v2983
    %v5995 = vsel %vm5993, %v5930, %v2985
    %v5996 = vsel %vm5993, %v5931, %v2987
    %v5997 = vsel %vm5993, %v5932, %v2989
    %v5998 = vsel %vm5993, %v5933, %v2991
    %v5999 = vsel %vm5993, %v5934, %v2993
    %v6000 = vsel %vm5993, %v5935, %v2995
    %v6001 = vsel %vm5993, %v5936, %v2997
    %v6002 = vsel %vm5993, %v5937, %v2999
    %v6003 = vsel %vm5993, %v5938, %v3001
    %v6004 = vsel %vm5993, %v5939, %v3003
    %v6005 = vsel %vm5993, %v5940, %v3005
    %v6006 = vsel %vm5993, %v5941, %v3007
    %v6007 = vsel %vm5993, %v5942, %v3009
    %v6008 = vsel %vm5993, %v5943, %v3011
    %v6009 = vsel %vm5993, %v5944, %v3013
    %v6010 = vsel %vm5993, %v5945, %v3015
    %v6011 = vsel %vm5993, %v5946, %v3017
    %v6012 = vsel %vm5993, %v5947, %v3019
    %v6013 = vsel %vm5993, %v5948, %v3021
    %v6014 = vsel %vm5993, %v5949, %v3023
    %v6015 = vsel %vm5993, %v5950, %v3025
    %v6016 = vsel %vm5993, %v5951, %v3027
    %v6017 = vsel %vm5993, %v5952, %v3029
    %v6018 = vsel %vm5993, %v5953, %v3031
    %v6019 = vsel %vm5993, %v5954, %v3033
    %v6020 = vsel %vm5993, %v5955, %v3035
    %v6021 = vsel %vm5993, %v5956, %v3037
    %v6022 = vsel %vm5993, %v5957, %v3039
    %v6023 = vsel %vm5993, %v5958, %v3041
    %v6024 = vsel %vm5993, %v5959, %v3043
    %v6025 = vsel %vm5993, %v5960, %v3045
    %v6026 = vsel %vm5993, %v5961, %v3047
    %v6027 = vsel %vm5993, %v5962, %v3049
    %v6028 = vsel %vm5993, %v5963, %v3051
    %v6029 = vsel %vm5993, %v5964, %v3053
    %v6030 = vsel %vm5993, %v5965, %v3055
    %v6031 = vsel %vm5993, %v5966, %v3057
    %v6032 = vsel %vm5993, %v5967, %v3059
    %v6033 = vsel %vm5993, %v5968, %v3061
    %v6034 = vsel %vm5993, %v5969, %v3063
    %v6035 = vsel %vm5993, %v5970, %v3065
    %v6036 = vsel %vm5993, %v5971, %v3067
    %v6037 = vsel %vm5993, %v5972, %v3069
    %v6038 = vsel %vm5993, %v5973, %v3071
    %v6039 = vsel %vm5993, %v5974, %v3073
    %v6040 = vsel %vm5993, %v5975, %v3075
    %v6041 = vsel %vm5993, %v5976, %v3077
    %v6042 = vsel %vm5993, %v5977, %v3079
    %v6043 = vsel %vm5993, %v5978, %v3081
    %v6044 = vsel %vm5993, %v5979, %v3083
    %v6045 = vsel %vm5993, %v5980, %v3085
    %v6046 = vsel %vm5993, %v5981, %v3087
    %v6047 = vsel %vm5993, %v5982, %v3089
    %v6048 = vsel %vm5993, %v5983, %v3091
    %v6049 = vsel %vm5993, %v5984, %v3093
    %v6050 = vsel %vm5993, %v5985, %v3095
    %v6051 = vsel %vm5993, %v5986, %v3097
    %v6052 = vsel %vm5993, %v5987, %v3099
    %v6053 = vsel %vm5993, %v5988, %v3101
    %v6054 = vsel %vm5993, %v5989, %v3103
    %v6055 = vsel %vm5993, %v5990, %v3105
    %v6056 = vsel %vm5993, %v5991, %v3107
    %v6057 = vsel %vm5993, %v5992, %v3109
    %vm6058 = vcmask 146432
    %v6059 = vsel %vm6058, %v5994, %v3239
    %v6060 = vsel %vm6058, %v5995, %v3241
    %v6061 = vsel %vm6058, %v5996, %v3243
    %v6062 = vsel %vm6058, %v5997, %v3245
    %v6063 = vsel %vm6058, %v5998, %v3247
    %v6064 = vsel %vm6058, %v5999, %v3249
    %v6065 = vsel %vm6058, %v6000, %v3251
    %v6066 = vsel %vm6058, %v6001, %v3253
    %v6067 = vsel %vm6058, %v6002, %v3255
    %v6068 = vsel %vm6058, %v6003, %v3257
    %v6069 = vsel %vm6058, %v6004, %v3259
    %v6070 = vsel %vm6058, %v6005, %v3261
    %v6071 = vsel %vm6058, %v6006, %v3263
    %v6072 = vsel %vm6058, %v6007, %v3265
    %v6073 = vsel %vm6058, %v6008, %v3267
    %v6074 = vsel %vm6058, %v6009, %v3269
    %v6075 = vsel %vm6058, %v6010, %v3271
    %v6076 = vsel %vm6058, %v6011, %v3273
    %v6077 = vsel %vm6058, %v6012, %v3275
    %v6078 = vsel %vm6058, %v6013, %v3277
    %v6079 = vsel %vm6058, %v6014, %v3279
    %v6080 = vsel %vm6058, %v6015, %v3281
    %v6081 = vsel %vm6058, %v6016, %v3283
    %v6082 = vsel %vm6058, %v6017, %v3285
    %v6083 = vsel %vm6058, %v6018, %v3287
    %v6084 = vsel %vm6058, %v6019, %v3289
    %v6085 = vsel %vm6058, %v6020, %v3291
    %v6086 = vsel %vm6058, %v6021, %v3293
    %v6087 = vsel %vm6058, %v6022, %v3295
    %v6088 = vsel %vm6058, %v6023, %v3297
    %v6089 = vsel %vm6058, %v6024, %v3299
    %v6090 = vsel %vm6058, %v6025, %v3301
    %v6091 = vsel %vm6058, %v6026, %v3303
    %v6092 = vsel %vm6058, %v6027, %v3305
    %v6093 = vsel %vm6058, %v6028, %v3307
    %v6094 = vsel %vm6058, %v6029, %v3309
    %v6095 = vsel %vm6058, %v6030, %v3311
    %v6096 = vsel %vm6058, %v6031, %v3313
    %v6097 = vsel %vm6058, %v6032, %v3315
    %v6098 = vsel %vm6058, %v6033, %v3317
    %v6099 = vsel %vm6058, %v6034, %v3319
    %v6100 = vsel %vm6058, %v6035, %v3321
    %v6101 = vsel %vm6058, %v6036, %v3323
    %v6102 = vsel %vm6058, %v6037, %v3325
    %v6103 = vsel %vm6058, %v6038, %v3327
    %v6104 = vsel %vm6058, %v6039, %v3329
    %v6105 = vsel %vm6058, %v6040, %v3331
    %v6106 = vsel %vm6058, %v6041, %v3333
    %v6107 = vsel %vm6058, %v6042, %v3335
    %v6108 = vsel %vm6058, %v6043, %v3337
    %v6109 = vsel %vm6058, %v6044, %v3339
    %v6110 = vsel %vm6058, %v6045, %v3341
    %v6111 = vsel %vm6058, %v6046, %v3343
    %v6112 = vsel %vm6058, %v6047, %v3345
    %v6113 = vsel %vm6058, %v6048, %v3347
    %v6114 = vsel %vm6058, %v6049, %v3349
    %v6115 = vsel %vm6058, %v6050, %v3351
    %v6116 = vsel %vm6058, %v6051, %v3353
    %v6117 = vsel %vm6058, %v6052, %v3355
    %v6118 = vsel %vm6058, %v6053, %v3357
    %v6119 = vsel %vm6058, %v6054, %v3359
    %v6120 = vsel %vm6058, %v6055, %v3361
    %v6121 = vsel %vm6058, %v6056, %v3363
    %v6122 = vsel %vm6058, %v6057, %v3365
    %vm6123 = vcmask 171008
    %v6124 = vsel %vm6123, %v6059, %v3495
    %v6125 = vsel %vm6123, %v6060, %v3497
    %v6126 = vsel %vm6123, %v6061, %v3499
    %v6127 = vsel %vm6123, %v6062, %v3501
    %v6128 = vsel %vm6123, %v6063, %v3503
    %v6129 = vsel %vm6123, %v6064, %v3505
    %v6130 = vsel %vm6123, %v6065, %v3507
    %v6131 = vsel %vm6123, %v6066, %v3509
    %v6132 = vsel %vm6123, %v6067, %v3511
    %v6133 = vsel %vm6123, %v6068, %v3513
    %v6134 = vsel %vm6123, %v6069, %v3515
    %v6135 = vsel %vm6123, %v6070, %v3517
    %v6136 = vsel %vm6123, %v6071, %v3519
    %v6137 = vsel %vm6123, %v6072, %v3521
    %v6138 = vsel %vm6123, %v6073, %v3523
    %v6139 = vsel %vm6123, %v6074, %v3525
    %v6140 = vsel %vm6123, %v6075, %v3527
    %v6141 = vsel %vm6123, %v6076, %v3529
    %v6142 = vsel %vm6123, %v6077, %v3531
    %v6143 = vsel %vm6123, %v6078, %v3533
    %v6144 = vsel %vm6123, %v6079, %v3535
    %v6145 = vsel %vm6123, %v6080, %v3537
    %v6146 = vsel %vm6123, %v6081, %v3539
    %v6147 = vsel %vm6123, %v6082, %v3541
    %v6148 = vsel %vm6123, %v6083, %v3543
    %v6149 = vsel %vm6123, %v6084, %v3545
    %v6150 = vsel %vm6123, %v6085, %v3547
    %v6151 = vsel %vm6123, %v6086, %v3549
    %v6152 = vsel %vm6123, %v6087, %v3551
    %v6153 = vsel %vm6123, %v6088, %v3553
    %v6154 = vsel %vm6123, %v6089, %v3555
    %v6155 = vsel %vm6123, %v6090, %v3557
    %v6156 = vsel %vm6123, %v6091, %v3559
    %v6157 = vsel %vm6123, %v6092, %v3561
    %v6158 = vsel %vm6123, %v6093, %v3563
    %v6159 = vsel %vm6123, %v6094, %v3565
    %v6160 = vsel %vm6123, %v6095, %v3567
    %v6161 = vsel %vm6123, %v6096, %v3569
    %v6162 = vsel %vm6123, %v6097, %v3571
    %v6163 = vsel %vm6123, %v6098, %v3573
    %v6164 = vsel %vm6123, %v6099, %v3575
    %v6165 = vsel %vm6123, %v6100, %v3577
    %v6166 = vsel %vm6123, %v6101, %v3579
    %v6167 = vsel %vm6123, %v6102, %v3581
    %v6168 = vsel %vm6123, %v6103, %v3583
    %v6169 = vsel %vm6123, %v6104, %v3585
    %v6170 = vsel %vm6123, %v6105, %v3587
    %v6171 = vsel %vm6123, %v6106, %v3589
    %v6172 = vsel %vm6123, %v6107, %v3591
    %v6173 = vsel %vm6123, %v6108, %v3593
    %v6174 = vsel %vm6123, %v6109, %v3595
    %v6175 = vsel %vm6123, %v6110, %v3597
    %v6176 = vsel %vm6123, %v6111, %v3599
    %v6177 = vsel %vm6123, %v6112, %v3601
    %v6178 = vsel %vm6123, %v6113, %v3603
    %v6179 = vsel %vm6123, %v6114, %v3605
    %v6180 = vsel %vm6123, %v6115, %v3607
    %v6181 = vsel %vm6123, %v6116, %v3609
    %v6182 = vsel %vm6123, %v6117, %v3611
    %v6183 = vsel %vm6123, %v6118, %v3613
    %v6184 = vsel %vm6123, %v6119, %v3615
    %v6185 = vsel %vm6123, %v6120, %v3617
    %v6186 = vsel %vm6123, %v6121, %v3619
    %v6187 = vsel %vm6123, %v6122, %v3621
    %vm6188 = vcmask 195584
    %v6189 = vsel %vm6188, %v6124, %v3751
    %v6190 = vsel %vm6188, %v6125, %v3753
    %v6191 = vsel %vm6188, %v6126, %v3755
    %v6192 = vsel %vm6188, %v6127, %v3757
    %v6193 = vsel %vm6188, %v6128, %v3759
    %v6194 = vsel %vm6188, %v6129, %v3761
    %v6195 = vsel %vm6188, %v6130, %v3763
    %v6196 = vsel %vm6188, %v6131, %v3765
    %v6197 = vsel %vm6188, %v6132, %v3767
    %v6198 = vsel %vm6188, %v6133, %v3769
    %v6199 = vsel %vm6188, %v6134, %v3771
    %v6200 = vsel %vm6188, %v6135, %v3773
    %v6201 = vsel %vm6188, %v6136, %v3775
    %v6202 = vsel %vm6188, %v6137, %v3777
    %v6203 = vsel %vm6188, %v6138, %v3779
    %v6204 = vsel %vm6188, %v6139, %v3781
    %v6205 = vsel %vm6188, %v6140, %v3783
    %v6206 = vsel %vm6188, %v6141, %v3785
    %v6207 = vsel %vm6188, %v6142, %v3787
    %v6208 = vsel %vm6188, %v6143, %v3789
    %v6209 = vsel %vm6188, %v6144, %v3791
    %v6210 = vsel %vm6188, %v6145, %v3793
    %v6211 = vsel %vm6188, %v6146, %v3795
    %v6212 = vsel %vm6188, %v6147, %v3797
    %v6213 = vsel %vm6188, %v6148, %v3799
    %v6214 = vsel %vm6188, %v6149, %v3801
    %v6215 = vsel %vm6188, %v6150, %v3803
    %v6216 = vsel %vm6188, %v6151, %v3805
    %v6217 = vsel %vm6188, %v6152, %v3807
    %v6218 = vsel %vm6188, %v6153, %v3809
    %v6219 = vsel %vm6188, %v6154, %v3811
    %v6220 = vsel %vm6188, %v6155, %v3813
    %v6221 = vsel %vm6188, %v6156, %v3815
    %v6222 = vsel %vm6188, %v6157, %v3817
    %v6223 = vsel %vm6188, %v6158, %v3819
    %v6224 = vsel %vm6188, %v6159, %v3821
    %v6225 = vsel %vm6188, %v6160, %v3823
    %v6226 = vsel %vm6188, %v6161, %v3825
    %v6227 = vsel %vm6188, %v6162, %v3827
    %v6228 = vsel %vm6188, %v6163, %v3829
    %v6229 = vsel %vm6188, %v6164, %v3831
    %v6230 = vsel %vm6188, %v6165, %v3833
    %v6231 = vsel %vm6188, %v6166, %v3835
    %v6232 = vsel %vm6188, %v6167, %v3837
    %v6233 = vsel %vm6188, %v6168, %v3839
    %v6234 = vsel %vm6188, %v6169, %v3841
    %v6235 = vsel %vm6188, %v6170, %v3843
    %v6236 = vsel %vm6188, %v6171, %v3845
    %v6237 = vsel %vm6188, %v6172, %v3847
    %v6238 = vsel %vm6188, %v6173, %v3849
    %v6239 = vsel %vm6188, %v6174, %v3851
    %v6240 = vsel %vm6188, %v6175, %v3853
    %v6241 = vsel %vm6188, %v6176, %v3855
    %v6242 = vsel %vm6188, %v6177, %v3857
    %v6243 = vsel %vm6188, %v6178, %v3859
    %v6244 = vsel %vm6188, %v6179, %v3861
    %v6245 = vsel %vm6188, %v6180, %v3863
    %v6246 = vsel %vm6188, %v6181, %v3865
    %v6247 = vsel %vm6188, %v6182, %v3867
    %v6248 = vsel %vm6188, %v6183, %v3869
    %v6249 = vsel %vm6188, %v6184, %v3871
    %v6250 = vsel %vm6188, %v6185, %v3873
    %v6251 = vsel %vm6188, %v6186, %v3875
    %v6252 = vsel %vm6188, %v6187, %v3877
    %vm6253 = vcmask 220160
    %v6254 = vsel %vm6253, %v6189, %v4007
    %v6255 = vsel %vm6253, %v6190, %v4009
    %v6256 = vsel %vm6253, %v6191, %v4011
    %v6257 = vsel %vm6253, %v6192, %v4013
    %v6258 = vsel %vm6253, %v6193, %v4015
    %v6259 = vsel %vm6253, %v6194, %v4017
    %v6260 = vsel %vm6253, %v6195, %v4019
    %v6261 = vsel %vm6253, %v6196, %v4021
    %v6262 = vsel %vm6253, %v6197, %v4023
    %v6263 = vsel %vm6253, %v6198, %v4025
    %v6264 = vsel %vm6253, %v6199, %v4027
    %v6265 = vsel %vm6253, %v6200, %v4029
    %v6266 = vsel %vm6253, %v6201, %v4031
    %v6267 = vsel %vm6253, %v6202, %v4033
    %v6268 = vsel %vm6253, %v6203, %v4035
    %v6269 = vsel %vm6253, %v6204, %v4037
    %v6270 = vsel %vm6253, %v6205, %v4039
    %v6271 = vsel %vm6253, %v6206, %v4041
    %v6272 = vsel %vm6253, %v6207, %v4043
    %v6273 = vsel %vm6253, %v6208, %v4045
    %v6274 = vsel %vm6253, %v6209, %v4047
    %v6275 = vsel %vm6253, %v6210, %v4049
    %v6276 = vsel %vm6253, %v6211, %v4051
    %v6277 = vsel %vm6253, %v6212, %v4053
    %v6278 = vsel %vm6253, %v6213, %v4055
    %v6279 = vsel %vm6253, %v6214, %v4057
    %v6280 = vsel %vm6253, %v6215, %v4059
    %v6281 = vsel %vm6253, %v6216, %v4061
    %v6282 = vsel %vm6253, %v6217, %v4063
    %v6283 = vsel %vm6253, %v6218, %v4065
    %v6284 = vsel %vm6253, %v6219, %v4067
    %v6285 = vsel %vm6253, %v6220, %v4069
    %v6286 = vsel %vm6253, %v6221, %v4071
    %v6287 = vsel %vm6253, %v6222, %v4073
    %v6288 = vsel %vm6253, %v6223, %v4075
    %v6289 = vsel %vm6253, %v6224, %v4077
    %v6290 = vsel %vm6253, %v6225, %v4079
    %v6291 = vsel %vm6253, %v6226, %v4081
    %v6292 = vsel %vm6253, %v6227, %v4083
    %v6293 = vsel %vm6253, %v6228, %v4085
    %v6294 = vsel %vm6253, %v6229, %v4087
    %v6295 = vsel %vm6253, %v6230, %v4089
    %v6296 = vsel %vm6253, %v6231, %v4091
    %v6297 = vsel %vm6253, %v6232, %v4093
    %v6298 = vsel %vm6253, %v6233, %v4095
    %v6299 = vsel %vm6253, %v6234, %v4097
    %v6300 = vsel %vm6253, %v6235, %v4099
    %v6301 = vsel %vm6253, %v6236, %v4101
    %v6302 = vsel %vm6253, %v6237, %v4103
    %v6303 = vsel %vm6253, %v6238, %v4105
    %v6304 = vsel %vm6253, %v6239, %v4107
    %v6305 = vsel %vm6253, %v6240, %v4109
    %v6306 = vsel %vm6253, %v6241, %v4111
    %v6307 = vsel %vm6253, %v6242, %v4113
    %v6308 = vsel %vm6253, %v6243, %v4115
    %v6309 = vsel %vm6253, %v6244, %v4117
    %v6310 = vsel %vm6253, %v6245, %v4119
    %v6311 = vsel %vm6253, %v6246, %v4121
    %v6312 = vsel %vm6253, %v6247, %v4123
    %v6313 = vsel %vm6253, %v6248, %v4125
    %v6314 = vsel %vm6253, %v6249, %v4127
    %v6315 = vsel %vm6253, %v6250, %v4129
    %v6316 = vsel %vm6253, %v6251, %v4131
    %v6317 = vsel %vm6253, %v6252, %v4133
    %vm6318 = vcmask 244736
    %v6319 = vsel %vm6318, %v6254, %v4263
    %v6320 = vsel %vm6318, %v6255, %v4265
    %v6321 = vsel %vm6318, %v6256, %v4267
    %v6322 = vsel %vm6318, %v6257, %v4269
    %v6323 = vsel %vm6318, %v6258, %v4271
    %v6324 = vsel %vm6318, %v6259, %v4273
    %v6325 = vsel %vm6318, %v6260, %v4275
    %v6326 = vsel %vm6318, %v6261, %v4277
    %v6327 = vsel %vm6318, %v6262, %v4279
    %v6328 = vsel %vm6318, %v6263, %v4281
    %v6329 = vsel %vm6318, %v6264, %v4283
    %v6330 = vsel %vm6318, %v6265, %v4285
    %v6331 = vsel %vm6318, %v6266, %v4287
    %v6332 = vsel %vm6318, %v6267, %v4289
    %v6333 = vsel %vm6318, %v6268, %v4291
    %v6334 = vsel %vm6318, %v6269, %v4293
    %v6335 = vsel %vm6318, %v6270, %v4295
    %v6336 = vsel %vm6318, %v6271, %v4297
    %v6337 = vsel %vm6318, %v6272, %v4299
    %v6338 = vsel %vm6318, %v6273, %v4301
    %v6339 = vsel %vm6318, %v6274, %v4303
    %v6340 = vsel %vm6318, %v6275, %v4305
    %v6341 = vsel %vm6318, %v6276, %v4307
    %v6342 = vsel %vm6318, %v6277, %v4309
    %v6343 = vsel %vm6318, %v6278, %v4311
    %v6344 = vsel %vm6318, %v6279, %v4313
    %v6345 = vsel %vm6318, %v6280, %v4315
    %v6346 = vsel %vm6318, %v6281, %v4317
    %v6347 = vsel %vm6318, %v6282, %v4319
    %v6348 = vsel %vm6318, %v6283, %v4321
    %v6349 = vsel %vm6318, %v6284, %v4323
    %v6350 = vsel %vm6318, %v6285, %v4325
    %v6351 = vsel %vm6318, %v6286, %v4327
    %v6352 = vsel %vm6318, %v6287, %v4329
    %v6353 = vsel %vm6318, %v6288, %v4331
    %v6354 = vsel %vm6318, %v6289, %v4333
    %v6355 = vsel %vm6318, %v6290, %v4335
    %v6356 = vsel %vm6318, %v6291, %v4337
    %v6357 = vsel %vm6318, %v6292, %v4339
    %v6358 = vsel %vm6318, %v6293, %v4341
    %v6359 = vsel %vm6318, %v6294, %v4343
    %v6360 = vsel %vm6318, %v6295, %v4345
    %v6361 = vsel %vm6318, %v6296, %v4347
    %v6362 = vsel %vm6318, %v6297, %v4349
    %v6363 = vsel %vm6318, %v6298, %v4351
    %v6364 = vsel %vm6318, %v6299, %v4353
    %v6365 = vsel %vm6318, %v6300, %v4355
    %v6366 = vsel %vm6318, %v6301, %v4357
    %v6367 = vsel %vm6318, %v6302, %v4359
    %v6368 = vsel %vm6318, %v6303, %v4361
    %v6369 = vsel %vm6318, %v6304, %v4363
    %v6370 = vsel %vm6318, %v6305, %v4365
    %v6371 = vsel %vm6318, %v6306, %v4367
    %v6372 = vsel %vm6318, %v6307, %v4369
    %v6373 = vsel %vm6318, %v6308, %v4371
    %v6374 = vsel %vm6318, %v6309, %v4373
    %v6375 = vsel %vm6318, %v6310, %v4375
    %v6376 = vsel %vm6318, %v6311, %v4377
    %v6377 = vsel %vm6318, %v6312, %v4379
    %v6378 = vsel %vm6318, %v6313, %v4381
    %v6379 = vsel %vm6318, %v6314, %v4383
    %v6380 = vsel %vm6318, %v6315, %v4385
    %v6381 = vsel %vm6318, %v6316, %v4387
    %v6382 = vsel %vm6318, %v6317, %v4389
    %vm6383 = vcmask 269312
    %v6384 = vsel %vm6383, %v6319, %v4519
    %v6385 = vsel %vm6383, %v6320, %v4521
    %v6386 = vsel %vm6383, %v6321, %v4523
    %v6387 = vsel %vm6383, %v6322, %v4525
    %v6388 = vsel %vm6383, %v6323, %v4527
    %v6389 = vsel %vm6383, %v6324, %v4529
    %v6390 = vsel %vm6383, %v6325, %v4531
    %v6391 = vsel %vm6383, %v6326, %v4533
    %v6392 = vsel %vm6383, %v6327, %v4535
    %v6393 = vsel %vm6383, %v6328, %v4537
    %v6394 = vsel %vm6383, %v6329, %v4539
    %v6395 = vsel %vm6383, %v6330, %v4541
    %v6396 = vsel %vm6383, %v6331, %v4543
    %v6397 = vsel %vm6383, %v6332, %v4545
    %v6398 = vsel %vm6383, %v6333, %v4547
    %v6399 = vsel %vm6383, %v6334, %v4549
    %v6400 = vsel %vm6383, %v6335, %v4551
    %v6401 = vsel %vm6383, %v6336, %v4553
    %v6402 = vsel %vm6383, %v6337, %v4555
    %v6403 = vsel %vm6383, %v6338, %v4557
    %v6404 = vsel %vm6383, %v6339, %v4559
    %v6405 = vsel %vm6383, %v6340, %v4561
    %v6406 = vsel %vm6383, %v6341, %v4563
    %v6407 = vsel %vm6383, %v6342, %v4565
    %v6408 = vsel %vm6383, %v6343, %v4567
    %v6409 = vsel %vm6383, %v6344, %v4569
    %v6410 = vsel %vm6383, %v6345, %v4571
    %v6411 = vsel %vm6383, %v6346, %v4573
    %v6412 = vsel %vm6383, %v6347, %v4575
    %v6413 = vsel %vm6383, %v6348, %v4577
    %v6414 = vsel %vm6383, %v6349, %v4579
    %v6415 = vsel %vm6383, %v6350, %v4581
    %v6416 = vsel %vm6383, %v6351, %v4583
    %v6417 = vsel %vm6383, %v6352, %v4585
    %v6418 = vsel %vm6383, %v6353, %v4587
    %v6419 = vsel %vm6383, %v6354, %v4589
    %v6420 = vsel %vm6383, %v6355, %v4591
    %v6421 = vsel %vm6383, %v6356, %v4593
    %v6422 = vsel %vm6383, %v6357, %v4595
    %v6423 = vsel %vm6383, %v6358, %v4597
    %v6424 = vsel %vm6383, %v6359, %v4599
    %v6425 = vsel %vm6383, %v6360, %v4601
    %v6426 = vsel %vm6383, %v6361, %v4603
    %v6427 = vsel %vm6383, %v6362, %v4605
    %v6428 = vsel %vm6383, %v6363, %v4607
    %v6429 = vsel %vm6383, %v6364, %v4609
    %v6430 = vsel %vm6383, %v6365, %v4611
    %v6431 = vsel %vm6383, %v6366, %v4613
    %v6432 = vsel %vm6383, %v6367, %v4615
    %v6433 = vsel %vm6383, %v6368, %v4617
    %v6434 = vsel %vm6383, %v6369, %v4619
    %v6435 = vsel %vm6383, %v6370, %v4621
    %v6436 = vsel %vm6383, %v6371, %v4623
    %v6437 = vsel %vm6383, %v6372, %v4625
    %v6438 = vsel %vm6383, %v6373, %v4627
    %v6439 = vsel %vm6383, %v6374, %v4629
    %v6440 = vsel %vm6383, %v6375, %v4631
    %v6441 = vsel %vm6383, %v6376, %v4633
    %v6442 = vsel %vm6383, %v6377, %v4635
    %v6443 = vsel %vm6383, %v6378, %v4637
    %v6444 = vsel %vm6383, %v6379, %v4639
    %v6445 = vsel %vm6383, %v6380, %v4641
    %v6446 = vsel %vm6383, %v6381, %v4643
    %v6447 = vsel %vm6383, %v6382, %v4645
    %vm6448 = vcmask 293888
    %v6449 = vsel %vm6448, %v6384, %v4775
    %v6450 = vsel %vm6448, %v6385, %v4777
    %v6451 = vsel %vm6448, %v6386, %v4779
    %v6452 = vsel %vm6448, %v6387, %v4781
    %v6453 = vsel %vm6448, %v6388, %v4783
    %v6454 = vsel %vm6448, %v6389, %v4785
    %v6455 = vsel %vm6448, %v6390, %v4787
    %v6456 = vsel %vm6448, %v6391, %v4789
    %v6457 = vsel %vm6448, %v6392, %v4791
    %v6458 = vsel %vm6448, %v6393, %v4793
    %v6459 = vsel %vm6448, %v6394, %v4795
    %v6460 = vsel %vm6448, %v6395, %v4797
    %v6461 = vsel %vm6448, %v6396, %v4799
    %v6462 = vsel %vm6448, %v6397, %v4801
    %v6463 = vsel %vm6448, %v6398, %v4803
    %v6464 = vsel %vm6448, %v6399, %v4805
    %v6465 = vsel %vm6448, %v6400, %v4807
    %v6466 = vsel %vm6448, %v6401, %v4809
    %v6467 = vsel %vm6448, %v6402, %v4811
    %v6468 = vsel %vm6448, %v6403, %v4813
    %v6469 = vsel %vm6448, %v6404, %v4815
    %v6470 = vsel %vm6448, %v6405, %v4817
    %v6471 = vsel %vm6448, %v6406, %v4819
    %v6472 = vsel %vm6448, %v6407, %v4821
    %v6473 = vsel %vm6448, %v6408, %v4823
    %v6474 = vsel %vm6448, %v6409, %v4825
    %v6475 = vsel %vm6448, %v6410, %v4827
    %v6476 = vsel %vm6448, %v6411, %v4829
    %v6477 = vsel %vm6448, %v6412, %v4831
    %v6478 = vsel %vm6448, %v6413, %v4833
    %v6479 = vsel %vm6448, %v6414, %v4835
    %v6480 = vsel %vm6448, %v6415, %v4837
    %v6481 = vsel %vm6448, %v6416, %v4839
    %v6482 = vsel %vm6448, %v6417, %v4841
    %v6483 = vsel %vm6448, %v6418, %v4843
    %v6484 = vsel %vm6448, %v6419, %v4845
    %v6485 = vsel %vm6448, %v6420, %v4847
    %v6486 = vsel %vm6448, %v6421, %v4849
    %v6487 = vsel %vm6448, %v6422, %v4851
    %v6488 = vsel %vm6448, %v6423, %v4853
    %v6489 = vsel %vm6448, %v6424, %v4855
    %v6490 = vsel %vm6448, %v6425, %v4857
    %v6491 = vsel %vm6448, %v6426, %v4859
    %v6492 = vsel %vm6448, %v6427, %v4861
    %v6493 = vsel %vm6448, %v6428, %v4863
    %v6494 = vsel %vm6448, %v6429, %v4865
    %v6495 = vsel %vm6448, %v6430, %v4867
    %v6496 = vsel %vm6448, %v6431, %v4869
    %v6497 = vsel %vm6448, %v6432, %v4871
    %v6498 = vsel %vm6448, %v6433, %v4873
    %v6499 = vsel %vm6448, %v6434, %v4875
    %v6500 = vsel %vm6448, %v6435, %v4877
    %v6501 = vsel %vm6448, %v6436, %v4879
    %v6502 = vsel %vm6448, %v6437, %v4881
    %v6503 = vsel %vm6448, %v6438, %v4883
    %v6504 = vsel %vm6448, %v6439, %v4885
    %v6505 = vsel %vm6448, %v6440, %v4887
    %v6506 = vsel %vm6448, %v6441, %v4889
    %v6507 = vsel %vm6448, %v6442, %v4891
    %v6508 = vsel %vm6448, %v6443, %v4893
    %v6509 = vsel %vm6448, %v6444, %v4895
    %v6510 = vsel %vm6448, %v6445, %v4897
    %v6511 = vsel %vm6448, %v6446, %v4899
    %v6512 = vsel %vm6448, %v6447, %v4901
    %vm6513 = vcmask 318464
    %v6514 = vsel %vm6513, %v6449, %v5031
    %v6515 = vsel %vm6513, %v6450, %v5033
    %v6516 = vsel %vm6513, %v6451, %v5035
    %v6517 = vsel %vm6513, %v6452, %v5037
    %v6518 = vsel %vm6513, %v6453, %v5039
    %v6519 = vsel %vm6513, %v6454, %v5041
    %v6520 = vsel %vm6513, %v6455, %v5043
    %v6521 = vsel %vm6513, %v6456, %v5045
    %v6522 = vsel %vm6513, %v6457, %v5047
    %v6523 = vsel %vm6513, %v6458, %v5049
    %v6524 = vsel %vm6513, %v6459, %v5051
    %v6525 = vsel %vm6513, %v6460, %v5053
    %v6526 = vsel %vm6513, %v6461, %v5055
    %v6527 = vsel %vm6513, %v6462, %v5057
    %v6528 = vsel %vm6513, %v6463, %v5059
    %v6529 = vsel %vm6513, %v6464, %v5061
    %v6530 = vsel %vm6513, %v6465, %v5063
    %v6531 = vsel %vm6513, %v6466, %v5065
    %v6532 = vsel %vm6513, %v6467, %v5067
    %v6533 = vsel %vm6513, %v6468, %v5069
    %v6534 = vsel %vm6513, %v6469, %v5071
    %v6535 = vsel %vm6513, %v6470, %v5073
    %v6536 = vsel %vm6513, %v6471, %v5075
    %v6537 = vsel %vm6513, %v6472, %v5077
    %v6538 = vsel %vm6513, %v6473, %v5079
    %v6539 = vsel %vm6513, %v6474, %v5081
    %v6540 = vsel %vm6513, %v6475, %v5083
    %v6541 = vsel %vm6513, %v6476, %v5085
    %v6542 = vsel %vm6513, %v6477, %v5087
    %v6543 = vsel %vm6513, %v6478, %v5089
    %v6544 = vsel %vm6513, %v6479, %v5091
    %v6545 = vsel %vm6513, %v6480, %v5093
    %v6546 = vsel %vm6513, %v6481, %v5095
    %v6547 = vsel %vm6513, %v6482, %v5097
    %v6548 = vsel %vm6513, %v6483, %v5099
    %v6549 = vsel %vm6513, %v6484, %v5101
    %v6550 = vsel %vm6513, %v6485, %v5103
    %v6551 = vsel %vm6513, %v6486, %v5105
    %v6552 = vsel %vm6513, %v6487, %v5107
    %v6553 = vsel %vm6513, %v6488, %v5109
    %v6554 = vsel %vm6513, %v6489, %v5111
    %v6555 = vsel %vm6513, %v6490, %v5113
    %v6556 = vsel %vm6513, %v6491, %v5115
    %v6557 = vsel %vm6513, %v6492, %v5117
    %v6558 = vsel %vm6513, %v6493, %v5119
    %v6559 = vsel %vm6513, %v6494, %v5121
    %v6560 = vsel %vm6513, %v6495, %v5123
    %v6561 = vsel %vm6513, %v6496, %v5125
    %v6562 = vsel %vm6513, %v6497, %v5127
    %v6563 = vsel %vm6513, %v6498, %v5129
    %v6564 = vsel %vm6513, %v6499, %v5131
    %v6565 = vsel %vm6513, %v6500, %v5133
    %v6566 = vsel %vm6513, %v6501, %v5135
    %v6567 = vsel %vm6513, %v6502, %v5137
    %v6568 = vsel %vm6513, %v6503, %v5139
    %v6569 = vsel %vm6513, %v6504, %v5141
    %v6570 = vsel %vm6513, %v6505, %v5143
    %v6571 = vsel %vm6513, %v6506, %v5145
    %v6572 = vsel %vm6513, %v6507, %v5147
    %v6573 = vsel %vm6513, %v6508, %v5149
    %v6574 = vsel %vm6513, %v6509, %v5151
    %v6575 = vsel %vm6513, %v6510, %v5153
    %v6576 = vsel %vm6513, %v6511, %v5155
    %v6577 = vsel %vm6513, %v6512, %v5157
    %vm6578 = vcmask 343040
    %v6579 = vsel %vm6578, %v6514, %v5287
    %v6580 = vsel %vm6578, %v6515, %v5289
    %v6581 = vsel %vm6578, %v6516, %v5291
    %v6582 = vsel %vm6578, %v6517, %v5293
    %v6583 = vsel %vm6578, %v6518, %v5295
    %v6584 = vsel %vm6578, %v6519, %v5297
    %v6585 = vsel %vm6578, %v6520, %v5299
    %v6586 = vsel %vm6578, %v6521, %v5301
    %v6587 = vsel %vm6578, %v6522, %v5303
    %v6588 = vsel %vm6578, %v6523, %v5305
    %v6589 = vsel %vm6578, %v6524, %v5307
    %v6590 = vsel %vm6578, %v6525, %v5309
    %v6591 = vsel %vm6578, %v6526, %v5311
    %v6592 = vsel %vm6578, %v6527, %v5313
    %v6593 = vsel %vm6578, %v6528, %v5315
    %v6594 = vsel %vm6578, %v6529, %v5317
    %v6595 = vsel %vm6578, %v6530, %v5319
    %v6596 = vsel %vm6578, %v6531, %v5321
    %v6597 = vsel %vm6578, %v6532, %v5323
    %v6598 = vsel %vm6578, %v6533, %v5325
    %v6599 = vsel %vm6578, %v6534, %v5327
    %v6600 = vsel %vm6578, %v6535, %v5329
    %v6601 = vsel %vm6578, %v6536, %v5331
    %v6602 = vsel %vm6578, %v6537, %v5333
    %v6603 = vsel %vm6578, %v6538, %v5335
    %v6604 = vsel %vm6578, %v6539, %v5337
    %v6605 = vsel %vm6578, %v6540, %v5339
    %v6606 = vsel %vm6578, %v6541, %v5341
    %v6607 = vsel %vm6578, %v6542, %v5343
    %v6608 = vsel %vm6578, %v6543, %v5345
    %v6609 = vsel %vm6578, %v6544, %v5347
    %v6610 = vsel %vm6578, %v6545, %v5349
    %v6611 = vsel %vm6578, %v6546, %v5351
    %v6612 = vsel %vm6578, %v6547, %v5353
    %v6613 = vsel %vm6578, %v6548, %v5355
    %v6614 = vsel %vm6578, %v6549, %v5357
    %v6615 = vsel %vm6578, %v6550, %v5359
    %v6616 = vsel %vm6578, %v6551, %v5361
    %v6617 = vsel %vm6578, %v6552, %v5363
    %v6618 = vsel %vm6578, %v6553, %v5365
    %v6619 = vsel %vm6578, %v6554, %v5367
    %v6620 = vsel %vm6578, %v6555, %v5369
    %v6621 = vsel %vm6578, %v6556, %v5371
    %v6622 = vsel %vm6578, %v6557, %v5373
    %v6623 = vsel %vm6578, %v6558, %v5375
    %v6624 = vsel %vm6578, %v6559, %v5377
    %v6625 = vsel %vm6578, %v6560, %v5379
    %v6626 = vsel %vm6578, %v6561, %v5381
    %v6627 = vsel %vm6578, %v6562, %v5383
    %v6628 = vsel %vm6578, %v6563, %v5385
    %v6629 = vsel %vm6578, %v6564, %v5387
    %v6630 = vsel %vm6578, %v6565, %v5389
    %v6631 = vsel %vm6578, %v6566, %v5391
    %v6632 = vsel %vm6578, %v6567, %v5393
    %v6633 = vsel %vm6578, %v6568, %v5395
    %v6634 = vsel %vm6578, %v6569, %v5397
    %v6635 = vsel %vm6578, %v6570, %v5399
    %v6636 = vsel %vm6578, %v6571, %v5401
    %v6637 = vsel %vm6578, %v6572, %v5403
    %v6638 = vsel %vm6578, %v6573, %v5405
    %v6639 = vsel %vm6578, %v6574, %v5407
    %v6640 = vsel %vm6578, %v6575, %v5409
    %v6641 = vsel %vm6578, %v6576, %v5411
    %v6642 = vsel %vm6578, %v6577, %v5413
    %vm6643 = vcmask 367616
    %v6644 = vsel %vm6643, %v6579, %v5543
    %v6645 = vsel %vm6643, %v6580, %v5545
    %v6646 = vsel %vm6643, %v6581, %v5547
    %v6647 = vsel %vm6643, %v6582, %v5549
    %v6648 = vsel %vm6643, %v6583, %v5551
    %v6649 = vsel %vm6643, %v6584, %v5553
    %v6650 = vsel %vm6643, %v6585, %v5555
    %v6651 = vsel %vm6643, %v6586, %v5557
    %v6652 = vsel %vm6643, %v6587, %v5559
    %v6653 = vsel %vm6643, %v6588, %v5561
    %v6654 = vsel %vm6643, %v6589, %v5563
    %v6655 = vsel %vm6643, %v6590, %v5565
    %v6656 = vsel %vm6643, %v6591, %v5567
    %v6657 = vsel %vm6643, %v6592, %v5569
    %v6658 = vsel %vm6643, %v6593, %v5571
    %v6659 = vsel %vm6643, %v6594, %v5573
    %v6660 = vsel %vm6643, %v6595, %v5575
    %v6661 = vsel %vm6643, %v6596, %v5577
    %v6662 = vsel %vm6643, %v6597, %v5579
    %v6663 = vsel %vm6643, %v6598, %v5581
    %v6664 = vsel %vm6643, %v6599, %v5583
    %v6665 = vsel %vm6643, %v6600, %v5585
    %v6666 = vsel %vm6643, %v6601, %v5587
    %v6667 = vsel %vm6643, %v6602, %v5589
    %v6668 = vsel %vm6643, %v6603, %v5591
    %v6669 = vsel %vm6643, %v6604, %v5593
    %v6670 = vsel %vm6643, %v6605, %v5595
    %v6671 = vsel %vm6643, %v6606, %v5597
    %v6672 = vsel %vm6643, %v6607, %v5599
    %v6673 = vsel %vm6643, %v6608, %v5601
    %v6674 = vsel %vm6643, %v6609, %v5603
    %v6675 = vsel %vm6643, %v6610, %v5605
    %v6676 = vsel %vm6643, %v6611, %v5607
    %v6677 = vsel %vm6643, %v6612, %v5609
    %v6678 = vsel %vm6643, %v6613, %v5611
    %v6679 = vsel %vm6643, %v6614, %v5613
    %v6680 = vsel %vm6643, %v6615, %v5615
    %v6681 = vsel %vm6643, %v6616, %v5617
    %v6682 = vsel %vm6643, %v6617, %v5619
    %v6683 = vsel %vm6643, %v6618, %v5621
    %v6684 = vsel %vm6643, %v6619, %v5623
    %v6685 = vsel %vm6643, %v6620, %v5625
    %v6686 = vsel %vm6643, %v6621, %v5627
    %v6687 = vsel %vm6643, %v6622, %v5629
    %v6688 = vsel %vm6643, %v6623, %v5631
    %v6689 = vsel %vm6643, %v6624, %v5633
    %v6690 = vsel %vm6643, %v6625, %v5635
    %v6691 = vsel %vm6643, %v6626, %v5637
    %v6692 = vsel %vm6643, %v6627, %v5639
    %v6693 = vsel %vm6643, %v6628, %v5641
    %v6694 = vsel %vm6643, %v6629, %v5643
    %v6695 = vsel %vm6643, %v6630, %v5645
    %v6696 = vsel %vm6643, %v6631, %v5647
    %v6697 = vsel %vm6643, %v6632, %v5649
    %v6698 = vsel %vm6643, %v6633, %v5651
    %v6699 = vsel %vm6643, %v6634, %v5653
    %v6700 = vsel %vm6643, %v6635, %v5655
    %v6701 = vsel %vm6643, %v6636, %v5657
    %v6702 = vsel %vm6643, %v6637, %v5659
    %v6703 = vsel %vm6643, %v6638, %v5661
    %v6704 = vsel %vm6643, %v6639, %v5663
    %v6705 = vsel %vm6643, %v6640, %v5665
    %v6706 = vsel %vm6643, %v6641, %v5667
    %v6707 = vsel %vm6643, %v6642, %v5669
    %6772 = vrot.lane.b32.xlu0 %v1381, 3
    %v6773 = vpop.permute.xlu0 %6772
    %6774 = vrot.lane.b32.xlu0 %v1382, 3
    %v6775 = vpop.permute.xlu0 %6774
    %6776 = vrot.lane.b32.xlu0 %v1383, 3
    %v6777 = vpop.permute.xlu0 %6776
    %6778 = vrot.lane.b32.xlu0 %v1384, 3
    %v6779 = vpop.permute.xlu0 %6778
    %6780 = vrot.lane.b32.xlu0 %v1385, 3
    %v6781 = vpop.permute.xlu0 %6780
    %6782 = vrot.lane.b32.xlu0 %v1386, 3
    %v6783 = vpop.permute.xlu0 %6782
    %6784 = vrot.lane.b32.xlu0 %v1387, 3
    %v6785 = vpop.permute.xlu0 %6784
    %6786 = vrot.lane.b32.xlu0 %v1388, 3
    %v6787 = vpop.permute.xlu0 %6786
    %6788 = vrot.lane.b32.xlu0 %v1389, 3
    %v6789 = vpop.permute.xlu0 %6788
    %6790 = vrot.lane.b32.xlu0 %v1390, 3
    %v6791 = vpop.permute.xlu0 %6790
    %6792 = vrot.lane.b32.xlu0 %v1391, 3
    %v6793 = vpop.permute.xlu0 %6792
    %6794 = vrot.lane.b32.xlu0 %v1392, 3
    %v6795 = vpop.permute.xlu0 %6794
    %6796 = vrot.lane.b32.xlu0 %v1393, 3
    %v6797 = vpop.permute.xlu0 %6796
    %6798 = vrot.lane.b32.xlu0 %v1394, 3
    %v6799 = vpop.permute.xlu0 %6798
    %6800 = vrot.lane.b32.xlu0 %v1395, 3
    %v6801 = vpop.permute.xlu0 %6800
    %6802 = vrot.lane.b32.xlu0 %v1396, 3
    %v6803 = vpop.permute.xlu0 %6802
    %6804 = vrot.lane.b32.xlu0 %v1397, 3
    %v6805 = vpop.permute.xlu0 %6804
    %6806 = vrot.lane.b32.xlu0 %v1398, 3
    %v6807 = vpop.permute.xlu0 %6806
    %6808 = vrot.lane.b32.xlu0 %v1399, 3
    %v6809 = vpop.permute.xlu0 %6808
    %6810 = vrot.lane.b32.xlu0 %v1400, 3
    %v6811 = vpop.permute.xlu0 %6810
    %6812 = vrot.lane.b32.xlu0 %v1401, 3
    %v6813 = vpop.permute.xlu0 %6812
    %6814 = vrot.lane.b32.xlu0 %v1402, 3
    %v6815 = vpop.permute.xlu0 %6814
    %6816 = vrot.lane.b32.xlu0 %v1403, 3
    %v6817 = vpop.permute.xlu0 %6816
    %6818 = vrot.lane.b32.xlu0 %v1404, 3
    %v6819 = vpop.permute.xlu0 %6818
    %6820 = vrot.lane.b32.xlu0 %v1405, 3
    %v6821 = vpop.permute.xlu0 %6820
    %6822 = vrot.lane.b32.xlu0 %v1406, 3
    %v6823 = vpop.permute.xlu0 %6822
    %6824 = vrot.lane.b32.xlu0 %v1407, 3
    %v6825 = vpop.permute.xlu0 %6824
    %6826 = vrot.lane.b32.xlu0 %v1408, 3
    %v6827 = vpop.permute.xlu0 %6826
    %6828 = vrot.lane.b32.xlu0 %v1409, 3
    %v6829 = vpop.permute.xlu0 %6828
    %6830 = vrot.lane.b32.xlu0 %v1410, 3
    %v6831 = vpop.permute.xlu0 %6830
    %6832 = vrot.lane.b32.xlu0 %v1411, 3
    %v6833 = vpop.permute.xlu0 %6832
    %6834 = vrot.lane.b32.xlu0 %v1412, 3
    %v6835 = vpop.permute.xlu0 %6834
    %6836 = vrot.lane.b32.xlu0 %v1413, 3
    %v6837 = vpop.permute.xlu0 %6836
    %6838 = vrot.lane.b32.xlu0 %v1414, 3
    %v6839 = vpop.permute.xlu0 %6838
    %6840 = vrot.lane.b32.xlu0 %v1415, 3
    %v6841 = vpop.permute.xlu0 %6840
    %6842 = vrot.lane.b32.xlu0 %v1416, 3
    %v6843 = vpop.permute.xlu0 %6842
    %6844 = vrot.lane.b32.xlu0 %v1417, 3
    %v6845 = vpop.permute.xlu0 %6844
    %6846 = vrot.lane.b32.xlu0 %v1418, 3
    %v6847 = vpop.permute.xlu0 %6846
    %6848 = vrot.lane.b32.xlu0 %v1419, 3
    %v6849 = vpop.permute.xlu0 %6848
    %6850 = vrot.lane.b32.xlu0 %v1420, 3
    %v6851 = vpop.permute.xlu0 %6850
    %6852 = vrot.lane.b32.xlu0 %v1421, 3
    %v6853 = vpop.permute.xlu0 %6852
    %6854 = vrot.lane.b32.xlu0 %v1422, 3
    %v6855 = vpop.permute.xlu0 %6854
    %6856 = vrot.lane.b32.xlu0 %v1423, 3
    %v6857 = vpop.permute.xlu0 %6856
    %6858 = vrot.lane.b32.xlu0 %v1424, 3
    %v6859 = vpop.permute.xlu0 %6858
    %6860 = vrot.lane.b32.xlu0 %v1425, 3
    %v6861 = vpop.permute.xlu0 %6860
    %6862 = vrot.lane.b32.xlu0 %v1426, 3
    %v6863 = vpop.permute.xlu0 %6862
    %6864 = vrot.lane.b32.xlu0 %v1427, 3
    %v6865 = vpop.permute.xlu0 %6864
    %6866 = vrot.lane.b32.xlu0 %v1428, 3
    %v6867 = vpop.permute.xlu0 %6866
    %6868 = vrot.lane.b32.xlu0 %v1429, 3
    %v6869 = vpop.permute.xlu0 %6868
    %6870 = vrot.lane.b32.xlu0 %v1430, 3
    %v6871 = vpop.permute.xlu0 %6870
    %6872 = vrot.lane.b32.xlu0 %v1431, 3
    %v6873 = vpop.permute.xlu0 %6872
    %6874 = vrot.lane.b32.xlu0 %v1432, 3
    %v6875 = vpop.permute.xlu0 %6874
    %6876 = vrot.lane.b32.xlu0 %v1433, 3
    %v6877 = vpop.permute.xlu0 %6876
    %6878 = vrot.lane.b32.xlu0 %v1434, 3
    %v6879 = vpop.permute.xlu0 %6878
    %6880 = vrot.lane.b32.xlu0 %v1435, 3
    %v6881 = vpop.permute.xlu0 %6880
    %6882 = vrot.lane.b32.xlu0 %v1436, 3
    %v6883 = vpop.permute.xlu0 %6882
    %6884 = vrot.lane.b32.xlu0 %v1437, 3
    %v6885 = vpop.permute.xlu0 %6884
    %6886 = vrot.lane.b32.xlu0 %v1438, 3
    %v6887 = vpop.permute.xlu0 %6886
    %6888 = vrot.lane.b32.xlu0 %v1439, 3
    %v6889 = vpop.permute.xlu0 %6888
    %6890 = vrot.lane.b32.xlu0 %v1440, 3
    %v6891 = vpop.permute.xlu0 %6890
    %6892 = vrot.lane.b32.xlu0 %v1441, 3
    %v6893 = vpop.permute.xlu0 %6892
    %6894 = vrot.lane.b32.xlu0 %v1442, 3
    %v6895 = vpop.permute.xlu0 %6894
    %6896 = vrot.lane.b32.xlu0 %v1443, 3
    %v6897 = vpop.permute.xlu0 %6896
    %6898 = vrot.lane.b32.xlu0 %v1444, 3
    %v6899 = vpop.permute.xlu0 %6898
    %7028 = vrot.lane.b32.xlu0 %v1445, 6
    %v7029 = vpop.permute.xlu0 %7028
    %7030 = vrot.lane.b32.xlu0 %v1446, 6
    %v7031 = vpop.permute.xlu0 %7030
    %7032 = vrot.lane.b32.xlu0 %v1447, 6
    %v7033 = vpop.permute.xlu0 %7032
    %7034 = vrot.lane.b32.xlu0 %v1448, 6
    %v7035 = vpop.permute.xlu0 %7034
    %7036 = vrot.lane.b32.xlu0 %v1449, 6
    %v7037 = vpop.permute.xlu0 %7036
    %7038 = vrot.lane.b32.xlu0 %v1450, 6
    %v7039 = vpop.permute.xlu0 %7038
    %7040 = vrot.lane.b32.xlu0 %v1451, 6
    %v7041 = vpop.permute.xlu0 %7040
    %7042 = vrot.lane.b32.xlu0 %v1452, 6
    %v7043 = vpop.permute.xlu0 %7042
    %7044 = vrot.lane.b32.xlu0 %v1453, 6
    %v7045 = vpop.permute.xlu0 %7044
    %7046 = vrot.lane.b32.xlu0 %v1454, 6
    %v7047 = vpop.permute.xlu0 %7046
    %7048 = vrot.lane.b32.xlu0 %v1455, 6
    %v7049 = vpop.permute.xlu0 %7048
    %7050 = vrot.lane.b32.xlu0 %v1456, 6
    %v7051 = vpop.permute.xlu0 %7050
    %7052 = vrot.lane.b32.xlu0 %v1457, 6
    %v7053 = vpop.permute.xlu0 %7052
    %7054 = vrot.lane.b32.xlu0 %v1458, 6
    %v7055 = vpop.permute.xlu0 %7054
    %7056 = vrot.lane.b32.xlu0 %v1459, 6
    %v7057 = vpop.permute.xlu0 %7056
    %7058 = vrot.lane.b32.xlu0 %v1460, 6
    %v7059 = vpop.permute.xlu0 %7058
    %7060 = vrot.lane.b32.xlu0 %v1461, 6
    %v7061 = vpop.permute.xlu0 %7060
    %7062 = vrot.lane.b32.xlu0 %v1462, 6
    %v7063 = vpop.permute.xlu0 %7062
    %7064 = vrot.lane.b32.xlu0 %v1463, 6
    %v7065 = vpop.permute.xlu0 %7064
    %7066 = vrot.lane.b32.xlu0 %v1464, 6
    %v7067 = vpop.permute.xlu0 %7066
    %7068 = vrot.lane.b32.xlu0 %v1465, 6
    %v7069 = vpop.permute.xlu0 %7068
    %7070 = vrot.lane.b32.xlu0 %v1466, 6
    %v7071 = vpop.permute.xlu0 %7070
    %7072 = vrot.lane.b32.xlu0 %v1467, 6
    %v7073 = vpop.permute.xlu0 %7072
    %7074 = vrot.lane.b32.xlu0 %v1468, 6
    %v7075 = vpop.permute.xlu0 %7074
    %7076 = vrot.lane.b32.xlu0 %v1469, 6
    %v7077 = vpop.permute.xlu0 %7076
    %7078 = vrot.lane.b32.xlu0 %v1470, 6
    %v7079 = vpop.permute.xlu0 %7078
    %7080 = vrot.lane.b32.xlu0 %v1471, 6
    %v7081 = vpop.permute.xlu0 %7080
    %7082 = vrot.lane.b32.xlu0 %v1472, 6
    %v7083 = vpop.permute.xlu0 %7082
    %7084 = vrot.lane.b32.xlu0 %v1473, 6
    %v7085 = vpop.permute.xlu0 %7084
    %7086 = vrot.lane.b32.xlu0 %v1474, 6
    %v7087 = vpop.permute.xlu0 %7086
    %7088 = vrot.lane.b32.xlu0 %v1475, 6
    %v7089 = vpop.permute.xlu0 %7088
    %7090 = vrot.lane.b32.xlu0 %v1476, 6
    %v7091 = vpop.permute.xlu0 %7090
    %7092 = vrot.lane.b32.xlu0 %v1477, 6
    %v7093 = vpop.permute.xlu0 %7092
    %7094 = vrot.lane.b32.xlu0 %v1478, 6
    %v7095 = vpop.permute.xlu0 %7094
    %7096 = vrot.lane.b32.xlu0 %v1479, 6
    %v7097 = vpop.permute.xlu0 %7096
    %7098 = vrot.lane.b32.xlu0 %v1480, 6
    %v7099 = vpop.permute.xlu0 %7098
    %7100 = vrot.lane.b32.xlu0 %v1481, 6
    %v7101 = vpop.permute.xlu0 %7100
    %7102 = vrot.lane.b32.xlu0 %v1482, 6
    %v7103 = vpop.permute.xlu0 %7102
    %7104 = vrot.lane.b32.xlu0 %v1483, 6
    %v7105 = vpop.permute.xlu0 %7104
    %7106 = vrot.lane.b32.xlu0 %v1484, 6
    %v7107 = vpop.permute.xlu0 %7106
    %7108 = vrot.lane.b32.xlu0 %v1485, 6
    %v7109 = vpop.permute.xlu0 %7108
    %7110 = vrot.lane.b32.xlu0 %v1486, 6
    %v7111 = vpop.permute.xlu0 %7110
    %7112 = vrot.lane.b32.xlu0 %v1487, 6
    %v7113 = vpop.permute.xlu0 %7112
    %7114 = vrot.lane.b32.xlu0 %v1488, 6
    %v7115 = vpop.permute.xlu0 %7114
    %7116 = vrot.lane.b32.xlu0 %v1489, 6
    %v7117 = vpop.permute.xlu0 %7116
    %7118 = vrot.lane.b32.xlu0 %v1490, 6
    %v7119 = vpop.permute.xlu0 %7118
    %7120 = vrot.lane.b32.xlu0 %v1491, 6
    %v7121 = vpop.permute.xlu0 %7120
    %7122 = vrot.lane.b32.xlu0 %v1492, 6
    %v7123 = vpop.permute.xlu0 %7122
    %7124 = vrot.lane.b32.xlu0 %v1493, 6
    %v7125 = vpop.permute.xlu0 %7124
    %7126 = vrot.lane.b32.xlu0 %v1494, 6
    %v7127 = vpop.permute.xlu0 %7126
    %7128 = vrot.lane.b32.xlu0 %v1495, 6
    %v7129 = vpop.permute.xlu0 %7128
    %7130 = vrot.lane.b32.xlu0 %v1496, 6
    %v7131 = vpop.permute.xlu0 %7130
    %7132 = vrot.lane.b32.xlu0 %v1497, 6
    %v7133 = vpop.permute.xlu0 %7132
    %7134 = vrot.lane.b32.xlu0 %v1498, 6
    %v7135 = vpop.permute.xlu0 %7134
    %7136 = vrot.lane.b32.xlu0 %v1499, 6
    %v7137 = vpop.permute.xlu0 %7136
    %7138 = vrot.lane.b32.xlu0 %v1500, 6
    %v7139 = vpop.permute.xlu0 %7138
    %7140 = vrot.lane.b32.xlu0 %v1501, 6
    %v7141 = vpop.permute.xlu0 %7140
    %7142 = vrot.lane.b32.xlu0 %v1502, 6
    %v7143 = vpop.permute.xlu0 %7142
    %7144 = vrot.lane.b32.xlu0 %v1503, 6
    %v7145 = vpop.permute.xlu0 %7144
    %7146 = vrot.lane.b32.xlu0 %v1504, 6
    %v7147 = vpop.permute.xlu0 %7146
    %7148 = vrot.lane.b32.xlu0 %v1505, 6
    %v7149 = vpop.permute.xlu0 %7148
    %7150 = vrot.lane.b32.xlu0 %v1506, 6
    %v7151 = vpop.permute.xlu0 %7150
    %7152 = vrot.lane.b32.xlu0 %v1507, 6
    %v7153 = vpop.permute.xlu0 %7152
    %7154 = vrot.lane.b32.xlu0 %v1508, 6
    %v7155 = vpop.permute.xlu0 %7154
    %7284 = vrot.lane.b32.xlu0 %v1509, 9
    %v7285 = vpop.permute.xlu0 %7284
    %7286 = vrot.lane.b32.xlu0 %v1510, 9
    %v7287 = vpop.permute.xlu0 %7286
    %7288 = vrot.lane.b32.xlu0 %v1511, 9
    %v7289 = vpop.permute.xlu0 %7288
    %7290 = vrot.lane.b32.xlu0 %v1512, 9
    %v7291 = vpop.permute.xlu0 %7290
    %7292 = vrot.lane.b32.xlu0 %v1513, 9
    %v7293 = vpop.permute.xlu0 %7292
    %7294 = vrot.lane.b32.xlu0 %v1514, 9
    %v7295 = vpop.permute.xlu0 %7294
    %7296 = vrot.lane.b32.xlu0 %v1515, 9
    %v7297 = vpop.permute.xlu0 %7296
    %7298 = vrot.lane.b32.xlu0 %v1516, 9
    %v7299 = vpop.permute.xlu0 %7298
    %7300 = vrot.lane.b32.xlu0 %v1517, 9
    %v7301 = vpop.permute.xlu0 %7300
    %7302 = vrot.lane.b32.xlu0 %v1518, 9
    %v7303 = vpop.permute.xlu0 %7302
    %7304 = vrot.lane.b32.xlu0 %v1519, 9
    %v7305 = vpop.permute.xlu0 %7304
    %7306 = vrot.lane.b32.xlu0 %v1520, 9
    %v7307 = vpop.permute.xlu0 %7306
    %7308 = vrot.lane.b32.xlu0 %v1521, 9
    %v7309 = vpop.permute.xlu0 %7308
    %7310 = vrot.lane.b32.xlu0 %v1522, 9
    %v7311 = vpop.permute.xlu0 %7310
    %7312 = vrot.lane.b32.xlu0 %v1523, 9
    %v7313 = vpop.permute.xlu0 %7312
    %7314 = vrot.lane.b32.xlu0 %v1524, 9
    %v7315 = vpop.permute.xlu0 %7314
    %7316 = vrot.lane.b32.xlu0 %v1525, 9
    %v7317 = vpop.permute.xlu0 %7316
    %7318 = vrot.lane.b32.xlu0 %v1526, 9
    %v7319 = vpop.permute.xlu0 %7318
    %7320 = vrot.lane.b32.xlu0 %v1527, 9
    %v7321 = vpop.permute.xlu0 %7320
    %7322 = vrot.lane.b32.xlu0 %v1528, 9
    %v7323 = vpop.permute.xlu0 %7322
    %7324 = vrot.lane.b32.xlu0 %v1529, 9
    %v7325 = vpop.permute.xlu0 %7324
    %7326 = vrot.lane.b32.xlu0 %v1530, 9
    %v7327 = vpop.permute.xlu0 %7326
    %7328 = vrot.lane.b32.xlu0 %v1531, 9
    %v7329 = vpop.permute.xlu0 %7328
    %7330 = vrot.lane.b32.xlu0 %v1532, 9
    %v7331 = vpop.permute.xlu0 %7330
    %7332 = vrot.lane.b32.xlu0 %v1533, 9
    %v7333 = vpop.permute.xlu0 %7332
    %7334 = vrot.lane.b32.xlu0 %v1534, 9
    %v7335 = vpop.permute.xlu0 %7334
    %7336 = vrot.lane.b32.xlu0 %v1535, 9
    %v7337 = vpop.permute.xlu0 %7336
    %7338 = vrot.lane.b32.xlu0 %v1536, 9
    %v7339 = vpop.permute.xlu0 %7338
    %7340 = vrot.lane.b32.xlu0 %v1537, 9
    %v7341 = vpop.permute.xlu0 %7340
    %7342 = vrot.lane.b32.xlu0 %v1538, 9
    %v7343 = vpop.permute.xlu0 %7342
    %7344 = vrot.lane.b32.xlu0 %v1539, 9
    %v7345 = vpop.permute.xlu0 %7344
    %7346 = vrot.lane.b32.xlu0 %v1540, 9
    %v7347 = vpop.permute.xlu0 %7346
    %7348 = vrot.lane.b32.xlu0 %v1541, 9
    %v7349 = vpop.permute.xlu0 %7348
    %7350 = vrot.lane.b32.xlu0 %v1542, 9
    %v7351 = vpop.permute.xlu0 %7350
    %7352 = vrot.lane.b32.xlu0 %v1543, 9
    %v7353 = vpop.permute.xlu0 %7352
    %7354 = vrot.lane.b32.xlu0 %v1544, 9
    %v7355 = vpop.permute.xlu0 %7354
    %7356 = vrot.lane.b32.xlu0 %v1545, 9
    %v7357 = vpop.permute.xlu0 %7356
    %7358 = vrot.lane.b32.xlu0 %v1546, 9
    %v7359 = vpop.permute.xlu0 %7358
    %7360 = vrot.lane.b32.xlu0 %v1547, 9
    %v7361 = vpop.permute.xlu0 %7360
    %7362 = vrot.lane.b32.xlu0 %v1548, 9
    %v7363 = vpop.permute.xlu0 %7362
    %7364 = vrot.lane.b32.xlu0 %v1549, 9
    %v7365 = vpop.permute.xlu0 %7364
    %7366 = vrot.lane.b32.xlu0 %v1550, 9
    %v7367 = vpop.permute.xlu0 %7366
    %7368 = vrot.lane.b32.xlu0 %v1551, 9
    %v7369 = vpop.permute.xlu0 %7368
    %7370 = vrot.lane.b32.xlu0 %v1552, 9
    %v7371 = vpop.permute.xlu0 %7370
    %7372 = vrot.lane.b32.xlu0 %v1553, 9
    %v7373 = vpop.permute.xlu0 %7372
    %7374 = vrot.lane.b32.xlu0 %v1554, 9
    %v7375 = vpop.permute.xlu0 %7374
    %7376 = vrot.lane.b32.xlu0 %v1555, 9
    %v7377 = vpop.permute.xlu0 %7376
    %7378 = vrot.lane.b32.xlu0 %v1556, 9
    %v7379 = vpop.permute.xlu0 %7378
    %7380 = vrot.lane.b32.xlu0 %v1557, 9
    %v7381 = vpop.permute.xlu0 %7380
    %7382 = vrot.lane.b32.xlu0 %v1558, 9
    %v7383 = vpop.permute.xlu0 %7382
    %7384 = vrot.lane.b32.xlu0 %v1559, 9
    %v7385 = vpop.permute.xlu0 %7384
    %7386 = vrot.lane.b32.xlu0 %v1560, 9
    %v7387 = vpop.permute.xlu0 %7386
    %7388 = vrot.lane.b32.xlu0 %v1561, 9
    %v7389 = vpop.permute.xlu0 %7388
    %7390 = vrot.lane.b32.xlu0 %v1562, 9
    %v7391 = vpop.permute.xlu0 %7390
    %7392 = vrot.lane.b32.xlu0 %v1563, 9
    %v7393 = vpop.permute.xlu0 %7392
    %7394 = vrot.lane.b32.xlu0 %v1564, 9
    %v7395 = vpop.permute.xlu0 %7394
    %7396 = vrot.lane.b32.xlu0 %v1565, 9
    %v7397 = vpop.permute.xlu0 %7396
    %7398 = vrot.lane.b32.xlu0 %v1566, 9
    %v7399 = vpop.permute.xlu0 %7398
    %7400 = vrot.lane.b32.xlu0 %v1567, 9
    %v7401 = vpop.permute.xlu0 %7400
    %7402 = vrot.lane.b32.xlu0 %v1568, 9
    %v7403 = vpop.permute.xlu0 %7402
    %7404 = vrot.lane.b32.xlu0 %v1569, 9
    %v7405 = vpop.permute.xlu0 %7404
    %7406 = vrot.lane.b32.xlu0 %v1570, 9
    %v7407 = vpop.permute.xlu0 %7406
    %7408 = vrot.lane.b32.xlu0 %v1571, 9
    %v7409 = vpop.permute.xlu0 %7408
    %7410 = vrot.lane.b32.xlu0 %v1572, 9
    %v7411 = vpop.permute.xlu0 %7410
    %7540 = vrot.lane.b32.xlu0 %v1574, 12
    %v7541 = vpop.permute.xlu0 %7540
    %7542 = vrot.lane.b32.xlu0 %v1575, 12
    %v7543 = vpop.permute.xlu0 %7542
    %7544 = vrot.lane.b32.xlu0 %v1576, 12
    %v7545 = vpop.permute.xlu0 %7544
    %7546 = vrot.lane.b32.xlu0 %v1577, 12
    %v7547 = vpop.permute.xlu0 %7546
    %7548 = vrot.lane.b32.xlu0 %v1578, 12
    %v7549 = vpop.permute.xlu0 %7548
    %7550 = vrot.lane.b32.xlu0 %v1579, 12
    %v7551 = vpop.permute.xlu0 %7550
    %7552 = vrot.lane.b32.xlu0 %v1580, 12
    %v7553 = vpop.permute.xlu0 %7552
    %7554 = vrot.lane.b32.xlu0 %v1581, 12
    %v7555 = vpop.permute.xlu0 %7554
    %7556 = vrot.lane.b32.xlu0 %v1582, 12
    %v7557 = vpop.permute.xlu0 %7556
    %7558 = vrot.lane.b32.xlu0 %v1583, 12
    %v7559 = vpop.permute.xlu0 %7558
    %7560 = vrot.lane.b32.xlu0 %v1584, 12
    %v7561 = vpop.permute.xlu0 %7560
    %7562 = vrot.lane.b32.xlu0 %v1585, 12
    %v7563 = vpop.permute.xlu0 %7562
    %7564 = vrot.lane.b32.xlu0 %v1586, 12
    %v7565 = vpop.permute.xlu0 %7564
    %7566 = vrot.lane.b32.xlu0 %v1587, 12
    %v7567 = vpop.permute.xlu0 %7566
    %7568 = vrot.lane.b32.xlu0 %v1588, 12
    %v7569 = vpop.permute.xlu0 %7568
    %7570 = vrot.lane.b32.xlu0 %v1589, 12
    %v7571 = vpop.permute.xlu0 %7570
    %7572 = vrot.lane.b32.xlu0 %v1590, 12
    %v7573 = vpop.permute.xlu0 %7572
    %7574 = vrot.lane.b32.xlu0 %v1591, 12
    %v7575 = vpop.permute.xlu0 %7574
    %7576 = vrot.lane.b32.xlu0 %v1592, 12
    %v7577 = vpop.permute.xlu0 %7576
    %7578 = vrot.lane.b32.xlu0 %v1593, 12
    %v7579 = vpop.permute.xlu0 %7578
    %7580 = vrot.lane.b32.xlu0 %v1594, 12
    %v7581 = vpop.permute.xlu0 %7580
    %7582 = vrot.lane.b32.xlu0 %v1595, 12
    %v7583 = vpop.permute.xlu0 %7582
    %7584 = vrot.lane.b32.xlu0 %v1596, 12
    %v7585 = vpop.permute.xlu0 %7584
    %7586 = vrot.lane.b32.xlu0 %v1597, 12
    %v7587 = vpop.permute.xlu0 %7586
    %7588 = vrot.lane.b32.xlu0 %v1598, 12
    %v7589 = vpop.permute.xlu0 %7588
    %7590 = vrot.lane.b32.xlu0 %v1599, 12
    %v7591 = vpop.permute.xlu0 %7590
    %7592 = vrot.lane.b32.xlu0 %v1600, 12
    %v7593 = vpop.permute.xlu0 %7592
    %7594 = vrot.lane.b32.xlu0 %v1601, 12
    %v7595 = vpop.permute.xlu0 %7594
    %7596 = vrot.lane.b32.xlu0 %v1602, 12
    %v7597 = vpop.permute.xlu0 %7596
    %7598 = vrot.lane.b32.xlu0 %v1603, 12
    %v7599 = vpop.permute.xlu0 %7598
    %7600 = vrot.lane.b32.xlu0 %v1604, 12
    %v7601 = vpop.permute.xlu0 %7600
    %7602 = vrot.lane.b32.xlu0 %v1605, 12
    %v7603 = vpop.permute.xlu0 %7602
    %7604 = vrot.lane.b32.xlu0 %v1606, 12
    %v7605 = vpop.permute.xlu0 %7604
    %7606 = vrot.lane.b32.xlu0 %v1607, 12
    %v7607 = vpop.permute.xlu0 %7606
    %7608 = vrot.lane.b32.xlu0 %v1608, 12
    %v7609 = vpop.permute.xlu0 %7608
    %7610 = vrot.lane.b32.xlu0 %v1609, 12
    %v7611 = vpop.permute.xlu0 %7610
    %7612 = vrot.lane.b32.xlu0 %v1610, 12
    %v7613 = vpop.permute.xlu0 %7612
    %7614 = vrot.lane.b32.xlu0 %v1611, 12
    %v7615 = vpop.permute.xlu0 %7614
    %7616 = vrot.lane.b32.xlu0 %v1612, 12
    %v7617 = vpop.permute.xlu0 %7616
    %7618 = vrot.lane.b32.xlu0 %v1613, 12
    %v7619 = vpop.permute.xlu0 %7618
    %7620 = vrot.lane.b32.xlu0 %v1614, 12
    %v7621 = vpop.permute.xlu0 %7620
    %7622 = vrot.lane.b32.xlu0 %v1615, 12
    %v7623 = vpop.permute.xlu0 %7622
    %7624 = vrot.lane.b32.xlu0 %v1616, 12
    %v7625 = vpop.permute.xlu0 %7624
    %7626 = vrot.lane.b32.xlu0 %v1617, 12
    %v7627 = vpop.permute.xlu0 %7626
    %7628 = vrot.lane.b32.xlu0 %v1618, 12
    %v7629 = vpop.permute.xlu0 %7628
    %7630 = vrot.lane.b32.xlu0 %v1619, 12
    %v7631 = vpop.permute.xlu0 %7630
    %7632 = vrot.lane.b32.xlu0 %v1620, 12
    %v7633 = vpop.permute.xlu0 %7632
    %7634 = vrot.lane.b32.xlu0 %v1621, 12
    %v7635 = vpop.permute.xlu0 %7634
    %7636 = vrot.lane.b32.xlu0 %v1622, 12
    %v7637 = vpop.permute.xlu0 %7636
    %7638 = vrot.lane.b32.xlu0 %v1623, 12
    %v7639 = vpop.permute.xlu0 %7638
    %7640 = vrot.lane.b32.xlu0 %v1624, 12
    %v7641 = vpop.permute.xlu0 %7640
    %7642 = vrot.lane.b32.xlu0 %v1625, 12
    %v7643 = vpop.permute.xlu0 %7642
    %7644 = vrot.lane.b32.xlu0 %v1626, 12
    %v7645 = vpop.permute.xlu0 %7644
    %7646 = vrot.lane.b32.xlu0 %v1627, 12
    %v7647 = vpop.permute.xlu0 %7646
    %7648 = vrot.lane.b32.xlu0 %v1628, 12
    %v7649 = vpop.permute.xlu0 %7648
    %7650 = vrot.lane.b32.xlu0 %v1629, 12
    %v7651 = vpop.permute.xlu0 %7650
    %7652 = vrot.lane.b32.xlu0 %v1630, 12
    %v7653 = vpop.permute.xlu0 %7652
    %7654 = vrot.lane.b32.xlu0 %v1631, 12
    %v7655 = vpop.permute.xlu0 %7654
    %7656 = vrot.lane.b32.xlu0 %v1632, 12
    %v7657 = vpop.permute.xlu0 %7656
    %7658 = vrot.lane.b32.xlu0 %v1633, 12
    %v7659 = vpop.permute.xlu0 %7658
    %7660 = vrot.lane.b32.xlu0 %v1634, 12
    %v7661 = vpop.permute.xlu0 %7660
    %7662 = vrot.lane.b32.xlu0 %v1635, 12
    %v7663 = vpop.permute.xlu0 %7662
    %7664 = vrot.lane.b32.xlu0 %v1636, 12
    %v7665 = vpop.permute.xlu0 %7664
    %7666 = vrot.lane.b32.xlu0 %v1637, 12
    %v7667 = vpop.permute.xlu0 %7666
    %7796 = vrot.lane.b32.xlu0 %v1638, 15
    %v7797 = vpop.permute.xlu0 %7796
    %7798 = vrot.lane.b32.xlu0 %v1639, 15
    %v7799 = vpop.permute.xlu0 %7798
    %7800 = vrot.lane.b32.xlu0 %v1640, 15
    %v7801 = vpop.permute.xlu0 %7800
    %7802 = vrot.lane.b32.xlu0 %v1641, 15
    %v7803 = vpop.permute.xlu0 %7802
    %7804 = vrot.lane.b32.xlu0 %v1642, 15
    %v7805 = vpop.permute.xlu0 %7804
    %7806 = vrot.lane.b32.xlu0 %v1643, 15
    %v7807 = vpop.permute.xlu0 %7806
    %7808 = vrot.lane.b32.xlu0 %v1644, 15
    %v7809 = vpop.permute.xlu0 %7808
    %7810 = vrot.lane.b32.xlu0 %v1645, 15
    %v7811 = vpop.permute.xlu0 %7810
    %7812 = vrot.lane.b32.xlu0 %v1646, 15
    %v7813 = vpop.permute.xlu0 %7812
    %7814 = vrot.lane.b32.xlu0 %v1647, 15
    %v7815 = vpop.permute.xlu0 %7814
    %7816 = vrot.lane.b32.xlu0 %v1648, 15
    %v7817 = vpop.permute.xlu0 %7816
    %7818 = vrot.lane.b32.xlu0 %v1649, 15
    %v7819 = vpop.permute.xlu0 %7818
    %7820 = vrot.lane.b32.xlu0 %v1650, 15
    %v7821 = vpop.permute.xlu0 %7820
    %7822 = vrot.lane.b32.xlu0 %v1651, 15
    %v7823 = vpop.permute.xlu0 %7822
    %7824 = vrot.lane.b32.xlu0 %v1652, 15
    %v7825 = vpop.permute.xlu0 %7824
    %7826 = vrot.lane.b32.xlu0 %v1653, 15
    %v7827 = vpop.permute.xlu0 %7826
    %7828 = vrot.lane.b32.xlu0 %v1654, 15
    %v7829 = vpop.permute.xlu0 %7828
    %7830 = vrot.lane.b32.xlu0 %v1655, 15
    %v7831 = vpop.permute.xlu0 %7830
    %7832 = vrot.lane.b32.xlu0 %v1656, 15
    %v7833 = vpop.permute.xlu0 %7832
    %7834 = vrot.lane.b32.xlu0 %v1657, 15
    %v7835 = vpop.permute.xlu0 %7834
    %7836 = vrot.lane.b32.xlu0 %v1658, 15
    %v7837 = vpop.permute.xlu0 %7836
    %7838 = vrot.lane.b32.xlu0 %v1659, 15
    %v7839 = vpop.permute.xlu0 %7838
    %7840 = vrot.lane.b32.xlu0 %v1660, 15
    %v7841 = vpop.permute.xlu0 %7840
    %7842 = vrot.lane.b32.xlu0 %v1661, 15
    %v7843 = vpop.permute.xlu0 %7842
    %7844 = vrot.lane.b32.xlu0 %v1662, 15
    %v7845 = vpop.permute.xlu0 %7844
    %7846 = vrot.lane.b32.xlu0 %v1663, 15
    %v7847 = vpop.permute.xlu0 %7846
    %7848 = vrot.lane.b32.xlu0 %v1664, 15
    %v7849 = vpop.permute.xlu0 %7848
    %7850 = vrot.lane.b32.xlu0 %v1665, 15
    %v7851 = vpop.permute.xlu0 %7850
    %7852 = vrot.lane.b32.xlu0 %v1666, 15
    %v7853 = vpop.permute.xlu0 %7852
    %7854 = vrot.lane.b32.xlu0 %v1667, 15
    %v7855 = vpop.permute.xlu0 %7854
    %7856 = vrot.lane.b32.xlu0 %v1668, 15
    %v7857 = vpop.permute.xlu0 %7856
    %7858 = vrot.lane.b32.xlu0 %v1669, 15
    %v7859 = vpop.permute.xlu0 %7858
    %7860 = vrot.lane.b32.xlu0 %v1670, 15
    %v7861 = vpop.permute.xlu0 %7860
    %7862 = vrot.lane.b32.xlu0 %v1671, 15
    %v7863 = vpop.permute.xlu0 %7862
    %7864 = vrot.lane.b32.xlu0 %v1672, 15
    %v7865 = vpop.permute.xlu0 %7864
    %7866 = vrot.lane.b32.xlu0 %v1673, 15
    %v7867 = vpop.permute.xlu0 %7866
    %7868 = vrot.lane.b32.xlu0 %v1674, 15
    %v7869 = vpop.permute.xlu0 %7868
    %7870 = vrot.lane.b32.xlu0 %v1675, 15
    %v7871 = vpop.permute.xlu0 %7870
    %7872 = vrot.lane.b32.xlu0 %v1676, 15
    %v7873 = vpop.permute.xlu0 %7872
    %7874 = vrot.lane.b32.xlu0 %v1677, 15
    %v7875 = vpop.permute.xlu0 %7874
    %7876 = vrot.lane.b32.xlu0 %v1678, 15
    %v7877 = vpop.permute.xlu0 %7876
    %7878 = vrot.lane.b32.xlu0 %v1679, 15
    %v7879 = vpop.permute.xlu0 %7878
    %7880 = vrot.lane.b32.xlu0 %v1680, 15
    %v7881 = vpop.permute.xlu0 %7880
    %7882 = vrot.lane.b32.xlu0 %v1681, 15
    %v7883 = vpop.permute.xlu0 %7882
    %7884 = vrot.lane.b32.xlu0 %v1682, 15
    %v7885 = vpop.permute.xlu0 %7884
    %7886 = vrot.lane.b32.xlu0 %v1683, 15
    %v7887 = vpop.permute.xlu0 %7886
    %7888 = vrot.lane.b32.xlu0 %v1684, 15
    %v7889 = vpop.permute.xlu0 %7888
    %7890 = vrot.lane.b32.xlu0 %v1685, 15
    %v7891 = vpop.permute.xlu0 %7890
    %7892 = vrot.lane.b32.xlu0 %v1686, 15
    %v7893 = vpop.permute.xlu0 %7892
    %7894 = vrot.lane.b32.xlu0 %v1687, 15
    %v7895 = vpop.permute.xlu0 %7894
    %7896 = vrot.lane.b32.xlu0 %v1688, 15
    %v7897 = vpop.permute.xlu0 %7896
    %7898 = vrot.lane.b32.xlu0 %v1689, 15
    %v7899 = vpop.permute.xlu0 %7898
    %7900 = vrot.lane.b32.xlu0 %v1690, 15
    %v7901 = vpop.permute.xlu0 %7900
    %7902 = vrot.lane.b32.xlu0 %v1691, 15
    %v7903 = vpop.permute.xlu0 %7902
    %7904 = vrot.lane.b32.xlu0 %v1692, 15
    %v7905 = vpop.permute.xlu0 %7904
    %7906 = vrot.lane.b32.xlu0 %v1693, 15
    %v7907 = vpop.permute.xlu0 %7906
    %7908 = vrot.lane.b32.xlu0 %v1694, 15
    %v7909 = vpop.permute.xlu0 %7908
    %7910 = vrot.lane.b32.xlu0 %v1695, 15
    %v7911 = vpop.permute.xlu0 %7910
    %7912 = vrot.lane.b32.xlu0 %v1696, 15
    %v7913 = vpop.permute.xlu0 %7912
    %7914 = vrot.lane.b32.xlu0 %v1697, 15
    %v7915 = vpop.permute.xlu0 %7914
    %7916 = vrot.lane.b32.xlu0 %v1698, 15
    %v7917 = vpop.permute.xlu0 %7916
    %7918 = vrot.lane.b32.xlu0 %v1699, 15
    %v7919 = vpop.permute.xlu0 %7918
    %7920 = vrot.lane.b32.xlu0 %v1700, 15
    %v7921 = vpop.permute.xlu0 %7920
    %7922 = vrot.lane.b32.xlu0 %v1701, 15
    %v7923 = vpop.permute.xlu0 %7922
    %8052 = vrot.lane.b32.xlu0 %v1702, 18
    %v8053 = vpop.permute.xlu0 %8052
    %8054 = vrot.lane.b32.xlu0 %v1703, 18
    %v8055 = vpop.permute.xlu0 %8054
    %8056 = vrot.lane.b32.xlu0 %v1704, 18
    %v8057 = vpop.permute.xlu0 %8056
    %8058 = vrot.lane.b32.xlu0 %v1705, 18
    %v8059 = vpop.permute.xlu0 %8058
    %8060 = vrot.lane.b32.xlu0 %v1706, 18
    %v8061 = vpop.permute.xlu0 %8060
    %8062 = vrot.lane.b32.xlu0 %v1707, 18
    %v8063 = vpop.permute.xlu0 %8062
    %8064 = vrot.lane.b32.xlu0 %v1708, 18
    %v8065 = vpop.permute.xlu0 %8064
    %8066 = vrot.lane.b32.xlu0 %v1709, 18
    %v8067 = vpop.permute.xlu0 %8066
    %8068 = vrot.lane.b32.xlu0 %v1710, 18
    %v8069 = vpop.permute.xlu0 %8068
    %8070 = vrot.lane.b32.xlu0 %v1711, 18
    %v8071 = vpop.permute.xlu0 %8070
    %8072 = vrot.lane.b32.xlu0 %v1712, 18
    %v8073 = vpop.permute.xlu0 %8072
    %8074 = vrot.lane.b32.xlu0 %v1713, 18
    %v8075 = vpop.permute.xlu0 %8074
    %8076 = vrot.lane.b32.xlu0 %v1714, 18
    %v8077 = vpop.permute.xlu0 %8076
    %8078 = vrot.lane.b32.xlu0 %v1715, 18
    %v8079 = vpop.permute.xlu0 %8078
    %8080 = vrot.lane.b32.xlu0 %v1716, 18
    %v8081 = vpop.permute.xlu0 %8080
    %8082 = vrot.lane.b32.xlu0 %v1717, 18
    %v8083 = vpop.permute.xlu0 %8082
    %8084 = vrot.lane.b32.xlu0 %v1718, 18
    %v8085 = vpop.permute.xlu0 %8084
    %8086 = vrot.lane.b32.xlu0 %v1719, 18
    %v8087 = vpop.permute.xlu0 %8086
    %8088 = vrot.lane.b32.xlu0 %v1720, 18
    %v8089 = vpop.permute.xlu0 %8088
    %8090 = vrot.lane.b32.xlu0 %v1721, 18
    %v8091 = vpop.permute.xlu0 %8090
    %8092 = vrot.lane.b32.xlu0 %v1722, 18
    %v8093 = vpop.permute.xlu0 %8092
    %8094 = vrot.lane.b32.xlu0 %v1723, 18
    %v8095 = vpop.permute.xlu0 %8094
    %8096 = vrot.lane.b32.xlu0 %v1724, 18
    %v8097 = vpop.permute.xlu0 %8096
    %8098 = vrot.lane.b32.xlu0 %v1725, 18
    %v8099 = vpop.permute.xlu0 %8098
    %8100 = vrot.lane.b32.xlu0 %v1726, 18
    %v8101 = vpop.permute.xlu0 %8100
    %8102 = vrot.lane.b32.xlu0 %v1727, 18
    %v8103 = vpop.permute.xlu0 %8102
    %8104 = vrot.lane.b32.xlu0 %v1728, 18
    %v8105 = vpop.permute.xlu0 %8104
    %8106 = vrot.lane.b32.xlu0 %v1729, 18
    %v8107 = vpop.permute.xlu0 %8106
    %8108 = vrot.lane.b32.xlu0 %v1730, 18
    %v8109 = vpop.permute.xlu0 %8108
    %8110 = vrot.lane.b32.xlu0 %v1731, 18
    %v8111 = vpop.permute.xlu0 %8110
    %8112 = vrot.lane.b32.xlu0 %v1732, 18
    %v8113 = vpop.permute.xlu0 %8112
    %8114 = vrot.lane.b32.xlu0 %v1733, 18
    %v8115 = vpop.permute.xlu0 %8114
    %8116 = vrot.lane.b32.xlu0 %v1734, 18
    %v8117 = vpop.permute.xlu0 %8116
    %8118 = vrot.lane.b32.xlu0 %v1735, 18
    %v8119 = vpop.permute.xlu0 %8118
    %8120 = vrot.lane.b32.xlu0 %v1736, 18
    %v8121 = vpop.permute.xlu0 %8120
    %8122 = vrot.lane.b32.xlu0 %v1737, 18
    %v8123 = vpop.permute.xlu0 %8122
    %8124 = vrot.lane.b32.xlu0 %v1738, 18
    %v8125 = vpop.permute.xlu0 %8124
    %8126 = vrot.lane.b32.xlu0 %v1739, 18
    %v8127 = vpop.permute.xlu0 %8126
    %8128 = vrot.lane.b32.xlu0 %v1740, 18
    %v8129 = vpop.permute.xlu0 %8128
    %8130 = vrot.lane.b32.xlu0 %v1741, 18
    %v8131 = vpop.permute.xlu0 %8130
    %8132 = vrot.lane.b32.xlu0 %v1742, 18
    %v8133 = vpop.permute.xlu0 %8132
    %8134 = vrot.lane.b32.xlu0 %v1743, 18
    %v8135 = vpop.permute.xlu0 %8134
    %8136 = vrot.lane.b32.xlu0 %v1744, 18
    %v8137 = vpop.permute.xlu0 %8136
    %8138 = vrot.lane.b32.xlu0 %v1745, 18
    %v8139 = vpop.permute.xlu0 %8138
    %8140 = vrot.lane.b32.xlu0 %v1746, 18
    %v8141 = vpop.permute.xlu0 %8140
    %8142 = vrot.lane.b32.xlu0 %v1747, 18
    %v8143 = vpop.permute.xlu0 %8142
    %8144 = vrot.lane.b32.xlu0 %v1748, 18
    %v8145 = vpop.permute.xlu0 %8144
    %8146 = vrot.lane.b32.xlu0 %v1749, 18
    %v8147 = vpop.permute.xlu0 %8146
    %8148 = vrot.lane.b32.xlu0 %v1750, 18
    %v8149 = vpop.permute.xlu0 %8148
    %8150 = vrot.lane.b32.xlu0 %v1751, 18
    %v8151 = vpop.permute.xlu0 %8150
    %8152 = vrot.lane.b32.xlu0 %v1752, 18
    %v8153 = vpop.permute.xlu0 %8152
    %8154 = vrot.lane.b32.xlu0 %v1753, 18
    %v8155 = vpop.permute.xlu0 %8154
    %8156 = vrot.lane.b32.xlu0 %v1754, 18
    %v8157 = vpop.permute.xlu0 %8156
    %8158 = vrot.lane.b32.xlu0 %v1755, 18
    %v8159 = vpop.permute.xlu0 %8158
    %8160 = vrot.lane.b32.xlu0 %v1756, 18
    %v8161 = vpop.permute.xlu0 %8160
    %8162 = vrot.lane.b32.xlu0 %v1757, 18
    %v8163 = vpop.permute.xlu0 %8162
    %8164 = vrot.lane.b32.xlu0 %v1758, 18
    %v8165 = vpop.permute.xlu0 %8164
    %8166 = vrot.lane.b32.xlu0 %v1759, 18
    %v8167 = vpop.permute.xlu0 %8166
    %8168 = vrot.lane.b32.xlu0 %v1760, 18
    %v8169 = vpop.permute.xlu0 %8168
    %8170 = vrot.lane.b32.xlu0 %v1761, 18
    %v8171 = vpop.permute.xlu0 %8170
    %8172 = vrot.lane.b32.xlu0 %v1762, 18
    %v8173 = vpop.permute.xlu0 %8172
    %8174 = vrot.lane.b32.xlu0 %v1763, 18
    %v8175 = vpop.permute.xlu0 %8174
    %8176 = vrot.lane.b32.xlu0 %v1764, 18
    %v8177 = vpop.permute.xlu0 %8176
    %8178 = vrot.lane.b32.xlu0 %v1765, 18
    %v8179 = vpop.permute.xlu0 %8178
    %8308 = vrot.lane.b32.xlu0 %v1766, 21
    %v8309 = vpop.permute.xlu0 %8308
    %8310 = vrot.lane.b32.xlu0 %v1767, 21
    %v8311 = vpop.permute.xlu0 %8310
    %8312 = vrot.lane.b32.xlu0 %v1768, 21
    %v8313 = vpop.permute.xlu0 %8312
    %8314 = vrot.lane.b32.xlu0 %v1769, 21
    %v8315 = vpop.permute.xlu0 %8314
    %8316 = vrot.lane.b32.xlu0 %v1770, 21
    %v8317 = vpop.permute.xlu0 %8316
    %8318 = vrot.lane.b32.xlu0 %v1771, 21
    %v8319 = vpop.permute.xlu0 %8318
    %8320 = vrot.lane.b32.xlu0 %v1772, 21
    %v8321 = vpop.permute.xlu0 %8320
    %8322 = vrot.lane.b32.xlu0 %v1773, 21
    %v8323 = vpop.permute.xlu0 %8322
    %8324 = vrot.lane.b32.xlu0 %v1774, 21
    %v8325 = vpop.permute.xlu0 %8324
    %8326 = vrot.lane.b32.xlu0 %v1775, 21
    %v8327 = vpop.permute.xlu0 %8326
    %8328 = vrot.lane.b32.xlu0 %v1776, 21
    %v8329 = vpop.permute.xlu0 %8328
    %8330 = vrot.lane.b32.xlu0 %v1777, 21
    %v8331 = vpop.permute.xlu0 %8330
    %8332 = vrot.lane.b32.xlu0 %v1778, 21
    %v8333 = vpop.permute.xlu0 %8332
    %8334 = vrot.lane.b32.xlu0 %v1779, 21
    %v8335 = vpop.permute.xlu0 %8334
    %8336 = vrot.lane.b32.xlu0 %v1780, 21
    %v8337 = vpop.permute.xlu0 %8336
    %8338 = vrot.lane.b32.xlu0 %v1781, 21
    %v8339 = vpop.permute.xlu0 %8338
    %8340 = vrot.lane.b32.xlu0 %v1782, 21
    %v8341 = vpop.permute.xlu0 %8340
    %8342 = vrot.lane.b32.xlu0 %v1783, 21
    %v8343 = vpop.permute.xlu0 %8342
    %8344 = vrot.lane.b32.xlu0 %v1784, 21
    %v8345 = vpop.permute.xlu0 %8344
    %8346 = vrot.lane.b32.xlu0 %v1785, 21
    %v8347 = vpop.permute.xlu0 %8346
    %8348 = vrot.lane.b32.xlu0 %v1786, 21
    %v8349 = vpop.permute.xlu0 %8348
    %8350 = vrot.lane.b32.xlu0 %v1787, 21
    %v8351 = vpop.permute.xlu0 %8350
    %8352 = vrot.lane.b32.xlu0 %v1788, 21
    %v8353 = vpop.permute.xlu0 %8352
    %8354 = vrot.lane.b32.xlu0 %v1789, 21
    %v8355 = vpop.permute.xlu0 %8354
    %8356 = vrot.lane.b32.xlu0 %v1790, 21
    %v8357 = vpop.permute.xlu0 %8356
    %8358 = vrot.lane.b32.xlu0 %v1791, 21
    %v8359 = vpop.permute.xlu0 %8358
    %8360 = vrot.lane.b32.xlu0 %v1792, 21
    %v8361 = vpop.permute.xlu0 %8360
    %8362 = vrot.lane.b32.xlu0 %v1793, 21
    %v8363 = vpop.permute.xlu0 %8362
    %8364 = vrot.lane.b32.xlu0 %v1794, 21
    %v8365 = vpop.permute.xlu0 %8364
    %8366 = vrot.lane.b32.xlu0 %v1795, 21
    %v8367 = vpop.permute.xlu0 %8366
    %8368 = vrot.lane.b32.xlu0 %v1796, 21
    %v8369 = vpop.permute.xlu0 %8368
    %8370 = vrot.lane.b32.xlu0 %v1797, 21
    %v8371 = vpop.permute.xlu0 %8370
    %8372 = vrot.lane.b32.xlu0 %v1798, 21
    %v8373 = vpop.permute.xlu0 %8372
    %8374 = vrot.lane.b32.xlu0 %v1799, 21
    %v8375 = vpop.permute.xlu0 %8374
    %8376 = vrot.lane.b32.xlu0 %v1800, 21
    %v8377 = vpop.permute.xlu0 %8376
    %8378 = vrot.lane.b32.xlu0 %v1801, 21
    %v8379 = vpop.permute.xlu0 %8378
    %8380 = vrot.lane.b32.xlu0 %v1802, 21
    %v8381 = vpop.permute.xlu0 %8380
    %8382 = vrot.lane.b32.xlu0 %v1803, 21
    %v8383 = vpop.permute.xlu0 %8382
    %8384 = vrot.lane.b32.xlu0 %v1804, 21
    %v8385 = vpop.permute.xlu0 %8384
    %8386 = vrot.lane.b32.xlu0 %v1805, 21
    %v8387 = vpop.permute.xlu0 %8386
    %8388 = vrot.lane.b32.xlu0 %v1806, 21
    %v8389 = vpop.permute.xlu0 %8388
    %8390 = vrot.lane.b32.xlu0 %v1807, 21
    %v8391 = vpop.permute.xlu0 %8390
    %8392 = vrot.lane.b32.xlu0 %v1808, 21
    %v8393 = vpop.permute.xlu0 %8392
    %8394 = vrot.lane.b32.xlu0 %v1809, 21
    %v8395 = vpop.permute.xlu0 %8394
    %8396 = vrot.lane.b32.xlu0 %v1810, 21
    %v8397 = vpop.permute.xlu0 %8396
    %8398 = vrot.lane.b32.xlu0 %v1811, 21
    %v8399 = vpop.permute.xlu0 %8398
    %8400 = vrot.lane.b32.xlu0 %v1812, 21
    %v8401 = vpop.permute.xlu0 %8400
    %8402 = vrot.lane.b32.xlu0 %v1813, 21
    %v8403 = vpop.permute.xlu0 %8402
    %8404 = vrot.lane.b32.xlu0 %v1814, 21
    %v8405 = vpop.permute.xlu0 %8404
    %8406 = vrot.lane.b32.xlu0 %v1815, 21
    %v8407 = vpop.permute.xlu0 %8406
    %8408 = vrot.lane.b32.xlu0 %v1816, 21
    %v8409 = vpop.permute.xlu0 %8408
    %8410 = vrot.lane.b32.xlu0 %v1817, 21
    %v8411 = vpop.permute.xlu0 %8410
    %8412 = vrot.lane.b32.xlu0 %v1818, 21
    %v8413 = vpop.permute.xlu0 %8412
    %8414 = vrot.lane.b32.xlu0 %v1819, 21
    %v8415 = vpop.permute.xlu0 %8414
    %8416 = vrot.lane.b32.xlu0 %v1820, 21
    %v8417 = vpop.permute.xlu0 %8416
    %8418 = vrot.lane.b32.xlu0 %v1821, 21
    %v8419 = vpop.permute.xlu0 %8418
    %8420 = vrot.lane.b32.xlu0 %v1822, 21
    %v8421 = vpop.permute.xlu0 %8420
    %8422 = vrot.lane.b32.xlu0 %v1823, 21
    %v8423 = vpop.permute.xlu0 %8422
    %8424 = vrot.lane.b32.xlu0 %v1824, 21
    %v8425 = vpop.permute.xlu0 %8424
    %8426 = vrot.lane.b32.xlu0 %v1825, 21
    %v8427 = vpop.permute.xlu0 %8426
    %8428 = vrot.lane.b32.xlu0 %v1826, 21
    %v8429 = vpop.permute.xlu0 %8428
    %8430 = vrot.lane.b32.xlu0 %v1827, 21
    %v8431 = vpop.permute.xlu0 %8430
    %8432 = vrot.lane.b32.xlu0 %v1828, 21
    %v8433 = vpop.permute.xlu0 %8432
    %8434 = vrot.lane.b32.xlu0 %v1829, 21
    %v8435 = vpop.permute.xlu0 %8434
    %8564 = vrot.lane.b32.xlu0 %v1830, 24
    %v8565 = vpop.permute.xlu0 %8564
    %8566 = vrot.lane.b32.xlu0 %v1831, 24
    %v8567 = vpop.permute.xlu0 %8566
    %8568 = vrot.lane.b32.xlu0 %v1832, 24
    %v8569 = vpop.permute.xlu0 %8568
    %8570 = vrot.lane.b32.xlu0 %v1833, 24
    %v8571 = vpop.permute.xlu0 %8570
    %8572 = vrot.lane.b32.xlu0 %v1834, 24
    %v8573 = vpop.permute.xlu0 %8572
    %8574 = vrot.lane.b32.xlu0 %v1835, 24
    %v8575 = vpop.permute.xlu0 %8574
    %8576 = vrot.lane.b32.xlu0 %v1836, 24
    %v8577 = vpop.permute.xlu0 %8576
    %8578 = vrot.lane.b32.xlu0 %v1837, 24
    %v8579 = vpop.permute.xlu0 %8578
    %8580 = vrot.lane.b32.xlu0 %v1838, 24
    %v8581 = vpop.permute.xlu0 %8580
    %8582 = vrot.lane.b32.xlu0 %v1839, 24
    %v8583 = vpop.permute.xlu0 %8582
    %8584 = vrot.lane.b32.xlu0 %v1840, 24
    %v8585 = vpop.permute.xlu0 %8584
    %8586 = vrot.lane.b32.xlu0 %v1841, 24
    %v8587 = vpop.permute.xlu0 %8586
    %8588 = vrot.lane.b32.xlu0 %v1842, 24
    %v8589 = vpop.permute.xlu0 %8588
    %8590 = vrot.lane.b32.xlu0 %v1843, 24
    %v8591 = vpop.permute.xlu0 %8590
    %8592 = vrot.lane.b32.xlu0 %v1844, 24
    %v8593 = vpop.permute.xlu0 %8592
    %8594 = vrot.lane.b32.xlu0 %v1845, 24
    %v8595 = vpop.permute.xlu0 %8594
    %8596 = vrot.lane.b32.xlu0 %v1846, 24
    %v8597 = vpop.permute.xlu0 %8596
    %8598 = vrot.lane.b32.xlu0 %v1847, 24
    %v8599 = vpop.permute.xlu0 %8598
    %8600 = vrot.lane.b32.xlu0 %v1848, 24
    %v8601 = vpop.permute.xlu0 %8600
    %8602 = vrot.lane.b32.xlu0 %v1849, 24
    %v8603 = vpop.permute.xlu0 %8602
    %8604 = vrot.lane.b32.xlu0 %v1850, 24
    %v8605 = vpop.permute.xlu0 %8604
    %8606 = vrot.lane.b32.xlu0 %v1851, 24
    %v8607 = vpop.permute.xlu0 %8606
    %8608 = vrot.lane.b32.xlu0 %v1852, 24
    %v8609 = vpop.permute.xlu0 %8608
    %8610 = vrot.lane.b32.xlu0 %v1853, 24
    %v8611 = vpop.permute.xlu0 %8610
    %8612 = vrot.lane.b32.xlu0 %v1854, 24
    %v8613 = vpop.permute.xlu0 %8612
    %8614 = vrot.lane.b32.xlu0 %v1855, 24
    %v8615 = vpop.permute.xlu0 %8614
    %8616 = vrot.lane.b32.xlu0 %v1856, 24
    %v8617 = vpop.permute.xlu0 %8616
    %8618 = vrot.lane.b32.xlu0 %v1857, 24
    %v8619 = vpop.permute.xlu0 %8618
    %8620 = vrot.lane.b32.xlu0 %v1858, 24
    %v8621 = vpop.permute.xlu0 %8620
    %8622 = vrot.lane.b32.xlu0 %v1859, 24
    %v8623 = vpop.permute.xlu0 %8622
    %8624 = vrot.lane.b32.xlu0 %v1860, 24
    %v8625 = vpop.permute.xlu0 %8624
    %8626 = vrot.lane.b32.xlu0 %v1861, 24
    %v8627 = vpop.permute.xlu0 %8626
    %8628 = vrot.lane.b32.xlu0 %v1862, 24
    %v8629 = vpop.permute.xlu0 %8628
    %8630 = vrot.lane.b32.xlu0 %v1863, 24
    %v8631 = vpop.permute.xlu0 %8630
    %8632 = vrot.lane.b32.xlu0 %v1864, 24
    %v8633 = vpop.permute.xlu0 %8632
    %8634 = vrot.lane.b32.xlu0 %v1865, 24
    %v8635 = vpop.permute.xlu0 %8634
    %8636 = vrot.lane.b32.xlu0 %v1866, 24
    %v8637 = vpop.permute.xlu0 %8636
    %8638 = vrot.lane.b32.xlu0 %v1867, 24
    %v8639 = vpop.permute.xlu0 %8638
    %8640 = vrot.lane.b32.xlu0 %v1868, 24
    %v8641 = vpop.permute.xlu0 %8640
    %8642 = vrot.lane.b32.xlu0 %v1869, 24
    %v8643 = vpop.permute.xlu0 %8642
    %8644 = vrot.lane.b32.xlu0 %v1870, 24
    %v8645 = vpop.permute.xlu0 %8644
    %8646 = vrot.lane.b32.xlu0 %v1871, 24
    %v8647 = vpop.permute.xlu0 %8646
    %8648 = vrot.lane.b32.xlu0 %v1872, 24
    %v8649 = vpop.permute.xlu0 %8648
    %8650 = vrot.lane.b32.xlu0 %v1873, 24
    %v8651 = vpop.permute.xlu0 %8650
    %8652 = vrot.lane.b32.xlu0 %v1874, 24
    %v8653 = vpop.permute.xlu0 %8652
    %8654 = vrot.lane.b32.xlu0 %v1875, 24
    %v8655 = vpop.permute.xlu0 %8654
    %8656 = vrot.lane.b32.xlu0 %v1876, 24
    %v8657 = vpop.permute.xlu0 %8656
    %8658 = vrot.lane.b32.xlu0 %v1877, 24
    %v8659 = vpop.permute.xlu0 %8658
    %8660 = vrot.lane.b32.xlu0 %v1878, 24
    %v8661 = vpop.permute.xlu0 %8660
    %8662 = vrot.lane.b32.xlu0 %v1879, 24
    %v8663 = vpop.permute.xlu0 %8662
    %8664 = vrot.lane.b32.xlu0 %v1880, 24
    %v8665 = vpop.permute.xlu0 %8664
    %8666 = vrot.lane.b32.xlu0 %v1881, 24
    %v8667 = vpop.permute.xlu0 %8666
    %8668 = vrot.lane.b32.xlu0 %v1882, 24
    %v8669 = vpop.permute.xlu0 %8668
    %8670 = vrot.lane.b32.xlu0 %v1883, 24
    %v8671 = vpop.permute.xlu0 %8670
    %8672 = vrot.lane.b32.xlu0 %v1884, 24
    %v8673 = vpop.permute.xlu0 %8672
    %8674 = vrot.lane.b32.xlu0 %v1885, 24
    %v8675 = vpop.permute.xlu0 %8674
    %8676 = vrot.lane.b32.xlu0 %v1886, 24
    %v8677 = vpop.permute.xlu0 %8676
    %8678 = vrot.lane.b32.xlu0 %v1887, 24
    %v8679 = vpop.permute.xlu0 %8678
    %8680 = vrot.lane.b32.xlu0 %v1888, 24
    %v8681 = vpop.permute.xlu0 %8680
    %8682 = vrot.lane.b32.xlu0 %v1889, 24
    %v8683 = vpop.permute.xlu0 %8682
    %8684 = vrot.lane.b32.xlu0 %v1890, 24
    %v8685 = vpop.permute.xlu0 %8684
    %8686 = vrot.lane.b32.xlu0 %v1891, 24
    %v8687 = vpop.permute.xlu0 %8686
    %8688 = vrot.lane.b32.xlu0 %v1892, 24
    %v8689 = vpop.permute.xlu0 %8688
    %8690 = vrot.lane.b32.xlu0 %v1893, 24
    %v8691 = vpop.permute.xlu0 %8690
    %v8756 = vsel %vm40, %v1317, %v6773
    %v8757 = vsel %vm40, %v1318, %v6775
    %v8758 = vsel %vm40, %v1319, %v6777
    %v8759 = vsel %vm40, %v1320, %v6779
    %v8760 = vsel %vm40, %v1321, %v6781
    %v8761 = vsel %vm40, %v1322, %v6783
    %v8762 = vsel %vm40, %v1323, %v6785
    %v8763 = vsel %vm40, %v1324, %v6787
    %v8764 = vsel %vm40, %v1325, %v6789
    %v8765 = vsel %vm40, %v1326, %v6791
    %v8766 = vsel %vm40, %v1327, %v6793
    %v8767 = vsel %vm40, %v1328, %v6795
    %v8768 = vsel %vm40, %v1329, %v6797
    %v8769 = vsel %vm40, %v1330, %v6799
    %v8770 = vsel %vm40, %v1331, %v6801
    %v8771 = vsel %vm40, %v1332, %v6803
    %v8772 = vsel %vm40, %v1333, %v6805
    %v8773 = vsel %vm40, %v1334, %v6807
    %v8774 = vsel %vm40, %v1335, %v6809
    %v8775 = vsel %vm40, %v1336, %v6811
    %v8776 = vsel %vm40, %v1337, %v6813
    %v8777 = vsel %vm40, %v1338, %v6815
    %v8778 = vsel %vm40, %v1339, %v6817
    %v8779 = vsel %vm40, %v1340, %v6819
    %v8780 = vsel %vm40, %v1341, %v6821
    %v8781 = vsel %vm40, %v1342, %v6823
    %v8782 = vsel %vm40, %v1343, %v6825
    %v8783 = vsel %vm40, %v1344, %v6827
    %v8784 = vsel %vm40, %v1345, %v6829
    %v8785 = vsel %vm40, %v1346, %v6831
    %v8786 = vsel %vm40, %v1347, %v6833
    %v8787 = vsel %vm40, %v1348, %v6835
    %v8788 = vsel %vm40, %v1349, %v6837
    %v8789 = vsel %vm40, %v1350, %v6839
    %v8790 = vsel %vm40, %v1351, %v6841
    %v8791 = vsel %vm40, %v1352, %v6843
    %v8792 = vsel %vm40, %v1353, %v6845
    %v8793 = vsel %vm40, %v1354, %v6847
    %v8794 = vsel %vm40, %v1355, %v6849
    %v8795 = vsel %vm40, %v1356, %v6851
    %v8796 = vsel %vm40, %v1357, %v6853
    %v8797 = vsel %vm40, %v1358, %v6855
    %v8798 = vsel %vm40, %v1359, %v6857
    %v8799 = vsel %vm40, %v1360, %v6859
    %v8800 = vsel %vm40, %v1361, %v6861
    %v8801 = vsel %vm40, %v1362, %v6863
    %v8802 = vsel %vm40, %v1363, %v6865
    %v8803 = vsel %vm40, %v1364, %v6867
    %v8804 = vsel %vm40, %v1365, %v6869
    %v8805 = vsel %vm40, %v1366, %v6871
    %v8806 = vsel %vm40, %v1367, %v6873
    %v8807 = vsel %vm40, %v1368, %v6875
    %v8808 = vsel %vm40, %v1369, %v6877
    %v8809 = vsel %vm40, %v1370, %v6879
    %v8810 = vsel %vm40, %v1371, %v6881
    %v8811 = vsel %vm40, %v1372, %v6883
    %v8812 = vsel %vm40, %v1373, %v6885
    %v8813 = vsel %vm40, %v1374, %v6887
    %v8814 = vsel %vm40, %v1375, %v6889
    %v8815 = vsel %vm40, %v1376, %v6891
    %v8816 = vsel %vm40, %v1377, %v6893
    %v8817 = vsel %vm40, %v1378, %v6895
    %v8818 = vsel %vm40, %v1379, %v6897
    %v8819 = vsel %vm40, %v1380, %v6899
    %v8820 = vsel %vm5798, %v8756, %v7029
    %v8821 = vsel %vm5798, %v8757, %v7031
    %v8822 = vsel %vm5798, %v8758, %v7033
    %v8823 = vsel %vm5798, %v8759, %v7035
    %v8824 = vsel %vm5798, %v8760, %v7037
    %v8825 = vsel %vm5798, %v8761, %v7039
    %v8826 = vsel %vm5798, %v8762, %v7041
    %v8827 = vsel %vm5798, %v8763, %v7043
    %v8828 = vsel %vm5798, %v8764, %v7045
    %v8829 = vsel %vm5798, %v8765, %v7047
    %v8830 = vsel %vm5798, %v8766, %v7049
    %v8831 = vsel %vm5798, %v8767, %v7051
    %v8832 = vsel %vm5798, %v8768, %v7053
    %v8833 = vsel %vm5798, %v8769, %v7055
    %v8834 = vsel %vm5798, %v8770, %v7057
    %v8835 = vsel %vm5798, %v8771, %v7059
    %v8836 = vsel %vm5798, %v8772, %v7061
    %v8837 = vsel %vm5798, %v8773, %v7063
    %v8838 = vsel %vm5798, %v8774, %v7065
    %v8839 = vsel %vm5798, %v8775, %v7067
    %v8840 = vsel %vm5798, %v8776, %v7069
    %v8841 = vsel %vm5798, %v8777, %v7071
    %v8842 = vsel %vm5798, %v8778, %v7073
    %v8843 = vsel %vm5798, %v8779, %v7075
    %v8844 = vsel %vm5798, %v8780, %v7077
    %v8845 = vsel %vm5798, %v8781, %v7079
    %v8846 = vsel %vm5798, %v8782, %v7081
    %v8847 = vsel %vm5798, %v8783, %v7083
    %v8848 = vsel %vm5798, %v8784, %v7085
    %v8849 = vsel %vm5798, %v8785, %v7087
    %v8850 = vsel %vm5798, %v8786, %v7089
    %v8851 = vsel %vm5798, %v8787, %v7091
    %v8852 = vsel %vm5798, %v8788, %v7093
    %v8853 = vsel %vm5798, %v8789, %v7095
    %v8854 = vsel %vm5798, %v8790, %v7097
    %v8855 = vsel %vm5798, %v8791, %v7099
    %v8856 = vsel %vm5798, %v8792, %v7101
    %v8857 = vsel %vm5798, %v8793, %v7103
    %v8858 = vsel %vm5798, %v8794, %v7105
    %v8859 = vsel %vm5798, %v8795, %v7107
    %v8860 = vsel %vm5798, %v8796, %v7109
    %v8861 = vsel %vm5798, %v8797, %v7111
    %v8862 = vsel %vm5798, %v8798, %v7113
    %v8863 = vsel %vm5798, %v8799, %v7115
    %v8864 = vsel %vm5798, %v8800, %v7117
    %v8865 = vsel %vm5798, %v8801, %v7119
    %v8866 = vsel %vm5798, %v8802, %v7121
    %v8867 = vsel %vm5798, %v8803, %v7123
    %v8868 = vsel %vm5798, %v8804, %v7125
    %v8869 = vsel %vm5798, %v8805, %v7127
    %v8870 = vsel %vm5798, %v8806, %v7129
    %v8871 = vsel %vm5798, %v8807, %v7131
    %v8872 = vsel %vm5798, %v8808, %v7133
    %v8873 = vsel %vm5798, %v8809, %v7135
    %v8874 = vsel %vm5798, %v8810, %v7137
    %v8875 = vsel %vm5798, %v8811, %v7139
    %v8876 = vsel %vm5798, %v8812, %v7141
    %v8877 = vsel %vm5798, %v8813, %v7143
    %v8878 = vsel %vm5798, %v8814, %v7145
    %v8879 = vsel %vm5798, %v8815, %v7147
    %v8880 = vsel %vm5798, %v8816, %v7149
    %v8881 = vsel %vm5798, %v8817, %v7151
    %v8882 = vsel %vm5798, %v8818, %v7153
    %v8883 = vsel %vm5798, %v8819, %v7155
    %v8884 = vsel %vm5863, %v8820, %v7285
    %v8885 = vsel %vm5863, %v8821, %v7287
    %v8886 = vsel %vm5863, %v8822, %v7289
    %v8887 = vsel %vm5863, %v8823, %v7291
    %v8888 = vsel %vm5863, %v8824, %v7293
    %v8889 = vsel %vm5863, %v8825, %v7295
    %v8890 = vsel %vm5863, %v8826, %v7297
    %v8891 = vsel %vm5863, %v8827, %v7299
    %v8892 = vsel %vm5863, %v8828, %v7301
    %v8893 = vsel %vm5863, %v8829, %v7303
    %v8894 = vsel %vm5863, %v8830, %v7305
    %v8895 = vsel %vm5863, %v8831, %v7307
    %v8896 = vsel %vm5863, %v8832, %v7309
    %v8897 = vsel %vm5863, %v8833, %v7311
    %v8898 = vsel %vm5863, %v8834, %v7313
    %v8899 = vsel %vm5863, %v8835, %v7315
    %v8900 = vsel %vm5863, %v8836, %v7317
    %v8901 = vsel %vm5863, %v8837, %v7319
    %v8902 = vsel %vm5863, %v8838, %v7321
    %v8903 = vsel %vm5863, %v8839, %v7323
    %v8904 = vsel %vm5863, %v8840, %v7325
    %v8905 = vsel %vm5863, %v8841, %v7327
    %v8906 = vsel %vm5863, %v8842, %v7329
    %v8907 = vsel %vm5863, %v8843, %v7331
    %v8908 = vsel %vm5863, %v8844, %v7333
    %v8909 = vsel %vm5863, %v8845, %v7335
    %v8910 = vsel %vm5863, %v8846, %v7337
    %v8911 = vsel %vm5863, %v8847, %v7339
    %v8912 = vsel %vm5863, %v8848, %v7341
    %v8913 = vsel %vm5863, %v8849, %v7343
    %v8914 = vsel %vm5863, %v8850, %v7345
    %v8915 = vsel %vm5863, %v8851, %v7347
    %v8916 = vsel %vm5863, %v8852, %v7349
    %v8917 = vsel %vm5863, %v8853, %v7351
    %v8918 = vsel %vm5863, %v8854, %v7353
    %v8919 = vsel %vm5863, %v8855, %v7355
    %v8920 = vsel %vm5863, %v8856, %v7357
    %v8921 = vsel %vm5863, %v8857, %v7359
    %v8922 = vsel %vm5863, %v8858, %v7361
    %v8923 = vsel %vm5863, %v8859, %v7363
    %v8924 = vsel %vm5863, %v8860, %v7365
    %v8925 = vsel %vm5863, %v8861, %v7367
    %v8926 = vsel %vm5863, %v8862, %v7369
    %v8927 = vsel %vm5863, %v8863, %v7371
    %v8928 = vsel %vm5863, %v8864, %v7373
    %v8929 = vsel %vm5863, %v8865, %v7375
    %v8930 = vsel %vm5863, %v8866, %v7377
    %v8931 = vsel %vm5863, %v8867, %v7379
    %v8932 = vsel %vm5863, %v8868, %v7381
    %v8933 = vsel %vm5863, %v8869, %v7383
    %v8934 = vsel %vm5863, %v8870, %v7385
    %v8935 = vsel %vm5863, %v8871, %v7387
    %v8936 = vsel %vm5863, %v8872, %v7389
    %v8937 = vsel %vm5863, %v8873, %v7391
    %v8938 = vsel %vm5863, %v8874, %v7393
    %v8939 = vsel %vm5863, %v8875, %v7395
    %v8940 = vsel %vm5863, %v8876, %v7397
    %v8941 = vsel %vm5863, %v8877, %v7399
    %v8942 = vsel %vm5863, %v8878, %v7401
    %v8943 = vsel %vm5863, %v8879, %v7403
    %v8944 = vsel %vm5863, %v8880, %v7405
    %v8945 = vsel %vm5863, %v8881, %v7407
    %v8946 = vsel %vm5863, %v8882, %v7409
    %v8947 = vsel %vm5863, %v8883, %v7411
    %v8948 = vsel %vm5928, %v8884, %v7541
    %v8949 = vsel %vm5928, %v8885, %v7543
    %v8950 = vsel %vm5928, %v8886, %v7545
    %v8951 = vsel %vm5928, %v8887, %v7547
    %v8952 = vsel %vm5928, %v8888, %v7549
    %v8953 = vsel %vm5928, %v8889, %v7551
    %v8954 = vsel %vm5928, %v8890, %v7553
    %v8955 = vsel %vm5928, %v8891, %v7555
    %v8956 = vsel %vm5928, %v8892, %v7557
    %v8957 = vsel %vm5928, %v8893, %v7559
    %v8958 = vsel %vm5928, %v8894, %v7561
    %v8959 = vsel %vm5928, %v8895, %v7563
    %v8960 = vsel %vm5928, %v8896, %v7565
    %v8961 = vsel %vm5928, %v8897, %v7567
    %v8962 = vsel %vm5928, %v8898, %v7569
    %v8963 = vsel %vm5928, %v8899, %v7571
    %v8964 = vsel %vm5928, %v8900, %v7573
    %v8965 = vsel %vm5928, %v8901, %v7575
    %v8966 = vsel %vm5928, %v8902, %v7577
    %v8967 = vsel %vm5928, %v8903, %v7579
    %v8968 = vsel %vm5928, %v8904, %v7581
    %v8969 = vsel %vm5928, %v8905, %v7583
    %v8970 = vsel %vm5928, %v8906, %v7585
    %v8971 = vsel %vm5928, %v8907, %v7587
    %v8972 = vsel %vm5928, %v8908, %v7589
    %v8973 = vsel %vm5928, %v8909, %v7591
    %v8974 = vsel %vm5928, %v8910, %v7593
    %v8975 = vsel %vm5928, %v8911, %v7595
    %v8976 = vsel %vm5928, %v8912, %v7597
    %v8977 = vsel %vm5928, %v8913, %v7599
    %v8978 = vsel %vm5928, %v8914, %v7601
    %v8979 = vsel %vm5928, %v8915, %v7603
    %v8980 = vsel %vm5928, %v8916, %v7605
    %v8981 = vsel %vm5928, %v8917, %v7607
    %v8982 = vsel %vm5928, %v8918, %v7609
    %v8983 = vsel %vm5928, %v8919, %v7611
    %v8984 = vsel %vm5928, %v8920, %v7613
    %v8985 = vsel %vm5928, %v8921, %v7615
    %v8986 = vsel %vm5928, %v8922, %v7617
    %v8987 = vsel %vm5928, %v8923, %v7619
    %v8988 = vsel %vm5928, %v8924, %v7621
    %v8989 = vsel %vm5928, %v8925, %v7623
    %v8990 = vsel %vm5928, %v8926, %v7625
    %v8991 = vsel %vm5928, %v8927, %v7627
    %v8992 = vsel %vm5928, %v8928, %v7629
    %v8993 = vsel %vm5928, %v8929, %v7631
    %v8994 = vsel %vm5928, %v8930, %v7633
    %v8995 = vsel %vm5928, %v8931, %v7635
    %v8996 = vsel %vm5928, %v8932, %v7637
    %v8997 = vsel %vm5928, %v8933, %v7639
    %v8998 = vsel %vm5928, %v8934, %v7641
    %v8999 = vsel %vm5928, %v8935, %v7643
    %v9000 = vsel %vm5928, %v8936, %v7645
    %v9001 = vsel %vm5928, %v8937, %v7647
    %v9002 = vsel %vm5928, %v8938, %v7649
    %v9003 = vsel %vm5928, %v8939, %v7651
    %v9004 = vsel %vm5928, %v8940, %v7653
    %v9005 = vsel %vm5928, %v8941, %v7655
    %v9006 = vsel %vm5928, %v8942, %v7657
    %v9007 = vsel %vm5928, %v8943, %v7659
    %v9008 = vsel %vm5928, %v8944, %v7661
    %v9009 = vsel %vm5928, %v8945, %v7663
    %v9010 = vsel %vm5928, %v8946, %v7665
    %v9011 = vsel %vm5928, %v8947, %v7667
    %v9012 = vsel %vm5993, %v8948, %v7797
    %v9013 = vsel %vm5993, %v8949, %v7799
    %v9014 = vsel %vm5993, %v8950, %v7801
    %v9015 = vsel %vm5993, %v8951, %v7803
    %v9016 = vsel %vm5993, %v8952, %v7805
    %v9017 = vsel %vm5993, %v8953, %v7807
    %v9018 = vsel %vm5993, %v8954, %v7809
    %v9019 = vsel %vm5993, %v8955, %v7811
    %v9020 = vsel %vm5993, %v8956, %v7813
    %v9021 = vsel %vm5993, %v8957, %v7815
    %v9022 = vsel %vm5993, %v8958, %v7817
    %v9023 = vsel %vm5993, %v8959, %v7819
    %v9024 = vsel %vm5993, %v8960, %v7821
    %v9025 = vsel %vm5993, %v8961, %v7823
    %v9026 = vsel %vm5993, %v8962, %v7825
    %v9027 = vsel %vm5993, %v8963, %v7827
    %v9028 = vsel %vm5993, %v8964, %v7829
    %v9029 = vsel %vm5993, %v8965, %v7831
    %v9030 = vsel %vm5993, %v8966, %v7833
    %v9031 = vsel %vm5993, %v8967, %v7835
    %v9032 = vsel %vm5993, %v8968, %v7837
    %v9033 = vsel %vm5993, %v8969, %v7839
    %v9034 = vsel %vm5993, %v8970, %v7841
    %v9035 = vsel %vm5993, %v8971, %v7843
    %v9036 = vsel %vm5993, %v8972, %v7845
    %v9037 = vsel %vm5993, %v8973, %v7847
    %v9038 = vsel %vm5993, %v8974, %v7849
    %v9039 = vsel %vm5993, %v8975, %v7851
    %v9040 = vsel %vm5993, %v8976, %v7853
    %v9041 = vsel %vm5993, %v8977, %v7855
    %v9042 = vsel %vm5993, %v8978, %v7857
    %v9043 = vsel %vm5993, %v8979, %v7859
    %v9044 = vsel %vm5993, %v8980, %v7861
    %v9045 = vsel %vm5993, %v8981, %v7863
    %v9046 = vsel %vm5993, %v8982, %v7865
    %v9047 = vsel %vm5993, %v8983, %v7867
    %v9048 = vsel %vm5993, %v8984, %v7869
    %v9049 = vsel %vm5993, %v8985, %v7871
    %v9050 = vsel %vm5993, %v8986, %v7873
    %v9051 = vsel %vm5993, %v8987, %v7875
    %v9052 = vsel %vm5993, %v8988, %v7877
    %v9053 = vsel %vm5993, %v8989, %v7879
    %v9054 = vsel %vm5993, %v8990, %v7881
    %v9055 = vsel %vm5993, %v8991, %v7883
    %v9056 = vsel %vm5993, %v8992, %v7885
    %v9057 = vsel %vm5993, %v8993, %v7887
    %v9058 = vsel %vm5993, %v8994, %v7889
    %v9059 = vsel %vm5993, %v8995, %v7891
    %v9060 = vsel %vm5993, %v8996, %v7893
    %v9061 = vsel %vm5993, %v8997, %v7895
    %v9062 = vsel %vm5993, %v8998, %v7897
    %v9063 = vsel %vm5993, %v8999, %v7899
    %v9064 = vsel %vm5993, %v9000, %v7901
    %v9065 = vsel %vm5993, %v9001, %v7903
    %v9066 = vsel %vm5993, %v9002, %v7905
    %v9067 = vsel %vm5993, %v9003, %v7907
    %v9068 = vsel %vm5993, %v9004, %v7909
    %v9069 = vsel %vm5993, %v9005, %v7911
    %v9070 = vsel %vm5993, %v9006, %v7913
    %v9071 = vsel %vm5993, %v9007, %v7915
    %v9072 = vsel %vm5993, %v9008, %v7917
    %v9073 = vsel %vm5993, %v9009, %v7919
    %v9074 = vsel %vm5993, %v9010, %v7921
    %v9075 = vsel %vm5993, %v9011, %v7923
    %v9076 = vsel %vm6058, %v9012, %v8053
    %v9077 = vsel %vm6058, %v9013, %v8055
    %v9078 = vsel %vm6058, %v9014, %v8057
    %v9079 = vsel %vm6058, %v9015, %v8059
    %v9080 = vsel %vm6058, %v9016, %v8061
    %v9081 = vsel %vm6058, %v9017, %v8063
    %v9082 = vsel %vm6058, %v9018, %v8065
    %v9083 = vsel %vm6058, %v9019, %v8067
    %v9084 = vsel %vm6058, %v9020, %v8069
    %v9085 = vsel %vm6058, %v9021, %v8071
    %v9086 = vsel %vm6058, %v9022, %v8073
    %v9087 = vsel %vm6058, %v9023, %v8075
    %v9088 = vsel %vm6058, %v9024, %v8077
    %v9089 = vsel %vm6058, %v9025, %v8079
    %v9090 = vsel %vm6058, %v9026, %v8081
    %v9091 = vsel %vm6058, %v9027, %v8083
    %v9092 = vsel %vm6058, %v9028, %v8085
    %v9093 = vsel %vm6058, %v9029, %v8087
    %v9094 = vsel %vm6058, %v9030, %v8089
    %v9095 = vsel %vm6058, %v9031, %v8091
    %v9096 = vsel %vm6058, %v9032, %v8093
    %v9097 = vsel %vm6058, %v9033, %v8095
    %v9098 = vsel %vm6058, %v9034, %v8097
    %v9099 = vsel %vm6058, %v9035, %v8099
    %v9100 = vsel %vm6058, %v9036, %v8101
    %v9101 = vsel %vm6058, %v9037, %v8103
    %v9102 = vsel %vm6058, %v9038, %v8105
    %v9103 = vsel %vm6058, %v9039, %v8107
    %v9104 = vsel %vm6058, %v9040, %v8109
    %v9105 = vsel %vm6058, %v9041, %v8111
    %v9106 = vsel %vm6058, %v9042, %v8113
    %v9107 = vsel %vm6058, %v9043, %v8115
    %v9108 = vsel %vm6058, %v9044, %v8117
    %v9109 = vsel %vm6058, %v9045, %v8119
    %v9110 = vsel %vm6058, %v9046, %v8121
    %v9111 = vsel %vm6058, %v9047, %v8123
    %v9112 = vsel %vm6058, %v9048, %v8125
    %v9113 = vsel %vm6058, %v9049, %v8127
    %v9114 = vsel %vm6058, %v9050, %v8129
    %v9115 = vsel %vm6058, %v9051, %v8131
    %v9116 = vsel %vm6058, %v9052, %v8133
    %v9117 = vsel %vm6058, %v9053, %v8135
    %v9118 = vsel %vm6058, %v9054, %v8137
    %v9119 = vsel %vm6058, %v9055, %v8139
    %v9120 = vsel %vm6058, %v9056, %v8141
    %v9121 = vsel %vm6058, %v9057, %v8143
    %v9122 = vsel %vm6058, %v9058, %v8145
    %v9123 = vsel %vm6058, %v9059, %v8147
    %v9124 = vsel %vm6058, %v9060, %v8149
    %v9125 = vsel %vm6058, %v9061, %v8151
    %v9126 = vsel %vm6058, %v9062, %v8153
    %v9127 = vsel %vm6058, %v9063, %v8155
    %v9128 = vsel %vm6058, %v9064, %v8157
    %v9129 = vsel %vm6058, %v9065, %v8159
    %v9130 = vsel %vm6058, %v9066, %v8161
    %v9131 = vsel %vm6058, %v9067, %v8163
    %v9132 = vsel %vm6058, %v9068, %v8165
    %v9133 = vsel %vm6058, %v9069, %v8167
    %v9134 = vsel %vm6058, %v9070, %v8169
    %v9135 = vsel %vm6058, %v9071, %v8171
    %v9136 = vsel %vm6058, %v9072, %v8173
    %v9137 = vsel %vm6058, %v9073, %v8175
    %v9138 = vsel %vm6058, %v9074, %v8177
    %v9139 = vsel %vm6058, %v9075, %v8179
    %v9140 = vsel %vm6123, %v9076, %v8309
    %v9141 = vsel %vm6123, %v9077, %v8311
    %v9142 = vsel %vm6123, %v9078, %v8313
    %v9143 = vsel %vm6123, %v9079, %v8315
    %v9144 = vsel %vm6123, %v9080, %v8317
    %v9145 = vsel %vm6123, %v9081, %v8319
    %v9146 = vsel %vm6123, %v9082, %v8321
    %v9147 = vsel %vm6123, %v9083, %v8323
    %v9148 = vsel %vm6123, %v9084, %v8325
    %v9149 = vsel %vm6123, %v9085, %v8327
    %v9150 = vsel %vm6123, %v9086, %v8329
    %v9151 = vsel %vm6123, %v9087, %v8331
    %v9152 = vsel %vm6123, %v9088, %v8333
    %v9153 = vsel %vm6123, %v9089, %v8335
    %v9154 = vsel %vm6123, %v9090, %v8337
    %v9155 = vsel %vm6123, %v9091, %v8339
    %v9156 = vsel %vm6123, %v9092, %v8341
    %v9157 = vsel %vm6123, %v9093, %v8343
    %v9158 = vsel %vm6123, %v9094, %v8345
    %v9159 = vsel %vm6123, %v9095, %v8347
    %v9160 = vsel %vm6123, %v9096, %v8349
    %v9161 = vsel %vm6123, %v9097, %v8351
    %v9162 = vsel %vm6123, %v9098, %v8353
    %v9163 = vsel %vm6123, %v9099, %v8355
    %v9164 = vsel %vm6123, %v9100, %v8357
    %v9165 = vsel %vm6123, %v9101, %v8359
    %v9166 = vsel %vm6123, %v9102, %v8361
    %v9167 = vsel %vm6123, %v9103, %v8363
    %v9168 = vsel %vm6123, %v9104, %v8365
    %v9169 = vsel %vm6123, %v9105, %v8367
    %v9170 = vsel %vm6123, %v9106, %v8369
    %v9171 = vsel %vm6123, %v9107, %v8371
    %v9172 = vsel %vm6123, %v9108, %v8373
    %v9173 = vsel %vm6123, %v9109, %v8375
    %v9174 = vsel %vm6123, %v9110, %v8377
    %v9175 = vsel %vm6123, %v9111, %v8379
    %v9176 = vsel %vm6123, %v9112, %v8381
    %v9177 = vsel %vm6123, %v9113, %v8383
    %v9178 = vsel %vm6123, %v9114, %v8385
    %v9179 = vsel %vm6123, %v9115, %v8387
    %v9180 = vsel %vm6123, %v9116, %v8389
    %v9181 = vsel %vm6123, %v9117, %v8391
    %v9182 = vsel %vm6123, %v9118, %v8393
    %v9183 = vsel %vm6123, %v9119, %v8395
    %v9184 = vsel %vm6123, %v9120, %v8397
    %v9185 = vsel %vm6123, %v9121, %v8399
    %v9186 = vsel %vm6123, %v9122, %v8401
    %v9187 = vsel %vm6123, %v9123, %v8403
    %v9188 = vsel %vm6123, %v9124, %v8405
    %v9189 = vsel %vm6123, %v9125, %v8407
    %v9190 = vsel %vm6123, %v9126, %v8409
    %v9191 = vsel %vm6123, %v9127, %v8411
    %v9192 = vsel %vm6123, %v9128, %v8413
    %v9193 = vsel %vm6123, %v9129, %v8415
    %v9194 = vsel %vm6123, %v9130, %v8417
    %v9195 = vsel %vm6123, %v9131, %v8419
    %v9196 = vsel %vm6123, %v9132, %v8421
    %v9197 = vsel %vm6123, %v9133, %v8423
    %v9198 = vsel %vm6123, %v9134, %v8425
    %v9199 = vsel %vm6123, %v9135, %v8427
    %v9200 = vsel %vm6123, %v9136, %v8429
    %v9201 = vsel %vm6123, %v9137, %v8431
    %v9202 = vsel %vm6123, %v9138, %v8433
    %v9203 = vsel %vm6123, %v9139, %v8435
    %v9204 = vsel %vm6188, %v9140, %v8565
    %v9205 = vsel %vm6188, %v9141, %v8567
    %v9206 = vsel %vm6188, %v9142, %v8569
    %v9207 = vsel %vm6188, %v9143, %v8571
    %v9208 = vsel %vm6188, %v9144, %v8573
    %v9209 = vsel %vm6188, %v9145, %v8575
    %v9210 = vsel %vm6188, %v9146, %v8577
    %v9211 = vsel %vm6188, %v9147, %v8579
    %v9212 = vsel %vm6188, %v9148, %v8581
    %v9213 = vsel %vm6188, %v9149, %v8583
    %v9214 = vsel %vm6188, %v9150, %v8585
    %v9215 = vsel %vm6188, %v9151, %v8587
    %v9216 = vsel %vm6188, %v9152, %v8589
    %v9217 = vsel %vm6188, %v9153, %v8591
    %v9218 = vsel %vm6188, %v9154, %v8593
    %v9219 = vsel %vm6188, %v9155, %v8595
    %v9220 = vsel %vm6188, %v9156, %v8597
    %v9221 = vsel %vm6188, %v9157, %v8599
    %v9222 = vsel %vm6188, %v9158, %v8601
    %v9223 = vsel %vm6188, %v9159, %v8603
    %v9224 = vsel %vm6188, %v9160, %v8605
    %v9225 = vsel %vm6188, %v9161, %v8607
    %v9226 = vsel %vm6188, %v9162, %v8609
    %v9227 = vsel %vm6188, %v9163, %v8611
    %v9228 = vsel %vm6188, %v9164, %v8613
    %v9229 = vsel %vm6188, %v9165, %v8615
    %v9230 = vsel %vm6188, %v9166, %v8617
    %v9231 = vsel %vm6188, %v9167, %v8619
    %v9232 = vsel %vm6188, %v9168, %v8621
    %v9233 = vsel %vm6188, %v9169, %v8623
    %v9234 = vsel %vm6188, %v9170, %v8625
    %v9235 = vsel %vm6188, %v9171, %v8627
    %v9236 = vsel %vm6188, %v9172, %v8629
    %v9237 = vsel %vm6188, %v9173, %v8631
    %v9238 = vsel %vm6188, %v9174, %v8633
    %v9239 = vsel %vm6188, %v9175, %v8635
    %v9240 = vsel %vm6188, %v9176, %v8637
    %v9241 = vsel %vm6188, %v9177, %v8639
    %v9242 = vsel %vm6188, %v9178, %v8641
    %v9243 = vsel %vm6188, %v9179, %v8643
    %v9244 = vsel %vm6188, %v9180, %v8645
    %v9245 = vsel %vm6188, %v9181, %v8647
    %v9246 = vsel %vm6188, %v9182, %v8649
    %v9247 = vsel %vm6188, %v9183, %v8651
    %v9248 = vsel %vm6188, %v9184, %v8653
    %v9249 = vsel %vm6188, %v9185, %v8655
    %v9250 = vsel %vm6188, %v9186, %v8657
    %v9251 = vsel %vm6188, %v9187, %v8659
    %v9252 = vsel %vm6188, %v9188, %v8661
    %v9253 = vsel %vm6188, %v9189, %v8663
    %v9254 = vsel %vm6188, %v9190, %v8665
    %v9255 = vsel %vm6188, %v9191, %v8667
    %v9256 = vsel %vm6188, %v9192, %v8669
    %v9257 = vsel %vm6188, %v9193, %v8671
    %v9258 = vsel %vm6188, %v9194, %v8673
    %v9259 = vsel %vm6188, %v9195, %v8675
    %v9260 = vsel %vm6188, %v9196, %v8677
    %v9261 = vsel %vm6188, %v9197, %v8679
    %v9262 = vsel %vm6188, %v9198, %v8681
    %v9263 = vsel %vm6188, %v9199, %v8683
    %v9264 = vsel %vm6188, %v9200, %v8685
    %v9265 = vsel %vm6188, %v9201, %v8687
    %v9266 = vsel %vm6188, %v9202, %v8689
    %v9267 = vsel %vm6188, %v9203, %v8691
    %9332 = vrot.lane.b32.xlu0 %v9204, 48
    %v9333 = vpop.permute.xlu0 %9332
    %9334 = vrot.lane.b32.xlu0 %v9205, 48
    %v9335 = vpop.permute.xlu0 %9334
    %9336 = vrot.lane.b32.xlu0 %v9206, 48
    %v9337 = vpop.permute.xlu0 %9336
    %9338 = vrot.lane.b32.xlu0 %v9207, 48
    %v9339 = vpop.permute.xlu0 %9338
    %9340 = vrot.lane.b32.xlu0 %v9208, 48
    %v9341 = vpop.permute.xlu0 %9340
    %9342 = vrot.lane.b32.xlu0 %v9209, 48
    %v9343 = vpop.permute.xlu0 %9342
    %9344 = vrot.lane.b32.xlu0 %v9210, 48
    %v9345 = vpop.permute.xlu0 %9344
    %9346 = vrot.lane.b32.xlu0 %v9211, 48
    %v9347 = vpop.permute.xlu0 %9346
    %9348 = vrot.lane.b32.xlu0 %v9212, 48
    %v9349 = vpop.permute.xlu0 %9348
    %9350 = vrot.lane.b32.xlu0 %v9213, 48
    %v9351 = vpop.permute.xlu0 %9350
    %9352 = vrot.lane.b32.xlu0 %v9214, 48
    %v9353 = vpop.permute.xlu0 %9352
    %9354 = vrot.lane.b32.xlu0 %v9215, 48
    %v9355 = vpop.permute.xlu0 %9354
    %9356 = vrot.lane.b32.xlu0 %v9216, 48
    %v9357 = vpop.permute.xlu0 %9356
    %9358 = vrot.lane.b32.xlu0 %v9217, 48
    %v9359 = vpop.permute.xlu0 %9358
    %9360 = vrot.lane.b32.xlu0 %v9218, 48
    %v9361 = vpop.permute.xlu0 %9360
    %9362 = vrot.lane.b32.xlu0 %v9219, 48
    %v9363 = vpop.permute.xlu0 %9362
    %9364 = vrot.lane.b32.xlu0 %v9220, 48
    %v9365 = vpop.permute.xlu0 %9364
    %9366 = vrot.lane.b32.xlu0 %v9221, 48
    %v9367 = vpop.permute.xlu0 %9366
    %9368 = vrot.lane.b32.xlu0 %v9222, 48
    %v9369 = vpop.permute.xlu0 %9368
    %9370 = vrot.lane.b32.xlu0 %v9223, 48
    %v9371 = vpop.permute.xlu0 %9370
    %9372 = vrot.lane.b32.xlu0 %v9224, 48
    %v9373 = vpop.permute.xlu0 %9372
    %9374 = vrot.lane.b32.xlu0 %v9225, 48
    %v9375 = vpop.permute.xlu0 %9374
    %9376 = vrot.lane.b32.xlu0 %v9226, 48
    %v9377 = vpop.permute.xlu0 %9376
    %9378 = vrot.lane.b32.xlu0 %v9227, 48
    %v9379 = vpop.permute.xlu0 %9378
    %9380 = vrot.lane.b32.xlu0 %v9228, 48
    %v9381 = vpop.permute.xlu0 %9380
    %9382 = vrot.lane.b32.xlu0 %v9229, 48
    %v9383 = vpop.permute.xlu0 %9382
    %9384 = vrot.lane.b32.xlu0 %v9230, 48
    %v9385 = vpop.permute.xlu0 %9384
    %9386 = vrot.lane.b32.xlu0 %v9231, 48
    %v9387 = vpop.permute.xlu0 %9386
    %9388 = vrot.lane.b32.xlu0 %v9232, 48
    %v9389 = vpop.permute.xlu0 %9388
    %9390 = vrot.lane.b32.xlu0 %v9233, 48
    %v9391 = vpop.permute.xlu0 %9390
    %9392 = vrot.lane.b32.xlu0 %v9234, 48
    %v9393 = vpop.permute.xlu0 %9392
    %9394 = vrot.lane.b32.xlu0 %v9235, 48
    %v9395 = vpop.permute.xlu0 %9394
    %9396 = vrot.lane.b32.xlu0 %v9236, 48
    %v9397 = vpop.permute.xlu0 %9396
    %9398 = vrot.lane.b32.xlu0 %v9237, 48
    %v9399 = vpop.permute.xlu0 %9398
    %9400 = vrot.lane.b32.xlu0 %v9238, 48
    %v9401 = vpop.permute.xlu0 %9400
    %9402 = vrot.lane.b32.xlu0 %v9239, 48
    %v9403 = vpop.permute.xlu0 %9402
    %9404 = vrot.lane.b32.xlu0 %v9240, 48
    %v9405 = vpop.permute.xlu0 %9404
    %9406 = vrot.lane.b32.xlu0 %v9241, 48
    %v9407 = vpop.permute.xlu0 %9406
    %9408 = vrot.lane.b32.xlu0 %v9242, 48
    %v9409 = vpop.permute.xlu0 %9408
    %9410 = vrot.lane.b32.xlu0 %v9243, 48
    %v9411 = vpop.permute.xlu0 %9410
    %9412 = vrot.lane.b32.xlu0 %v9244, 48
    %v9413 = vpop.permute.xlu0 %9412
    %9414 = vrot.lane.b32.xlu0 %v9245, 48
    %v9415 = vpop.permute.xlu0 %9414
    %9416 = vrot.lane.b32.xlu0 %v9246, 48
    %v9417 = vpop.permute.xlu0 %9416
    %9418 = vrot.lane.b32.xlu0 %v9247, 48
    %v9419 = vpop.permute.xlu0 %9418
    %9420 = vrot.lane.b32.xlu0 %v9248, 48
    %v9421 = vpop.permute.xlu0 %9420
    %9422 = vrot.lane.b32.xlu0 %v9249, 48
    %v9423 = vpop.permute.xlu0 %9422
    %9424 = vrot.lane.b32.xlu0 %v9250, 48
    %v9425 = vpop.permute.xlu0 %9424
    %9426 = vrot.lane.b32.xlu0 %v9251, 48
    %v9427 = vpop.permute.xlu0 %9426
    %9428 = vrot.lane.b32.xlu0 %v9252, 48
    %v9429 = vpop.permute.xlu0 %9428
    %9430 = vrot.lane.b32.xlu0 %v9253, 48
    %v9431 = vpop.permute.xlu0 %9430
    %9432 = vrot.lane.b32.xlu0 %v9254, 48
    %v9433 = vpop.permute.xlu0 %9432
    %9434 = vrot.lane.b32.xlu0 %v9255, 48
    %v9435 = vpop.permute.xlu0 %9434
    %9436 = vrot.lane.b32.xlu0 %v9256, 48
    %v9437 = vpop.permute.xlu0 %9436
    %9438 = vrot.lane.b32.xlu0 %v9257, 48
    %v9439 = vpop.permute.xlu0 %9438
    %9440 = vrot.lane.b32.xlu0 %v9258, 48
    %v9441 = vpop.permute.xlu0 %9440
    %9442 = vrot.lane.b32.xlu0 %v9259, 48
    %v9443 = vpop.permute.xlu0 %9442
    %9444 = vrot.lane.b32.xlu0 %v9260, 48
    %v9445 = vpop.permute.xlu0 %9444
    %9446 = vrot.lane.b32.xlu0 %v9261, 48
    %v9447 = vpop.permute.xlu0 %9446
    %9448 = vrot.lane.b32.xlu0 %v9262, 48
    %v9449 = vpop.permute.xlu0 %9448
    %9450 = vrot.lane.b32.xlu0 %v9263, 48
    %v9451 = vpop.permute.xlu0 %9450
    %9452 = vrot.lane.b32.xlu0 %v9264, 48
    %v9453 = vpop.permute.xlu0 %9452
    %9454 = vrot.lane.b32.xlu0 %v9265, 48
    %v9455 = vpop.permute.xlu0 %9454
    %9456 = vrot.lane.b32.xlu0 %v9266, 48
    %v9457 = vpop.permute.xlu0 %9456
    %9458 = vrot.lane.b32.xlu0 %v9267, 48
    %v9459 = vpop.permute.xlu0 %9458
    %vm9524 = vcmask 392192
    %v9525 = vsel %vm9524, %v6644, %v9333
    %v9526 = vsel %vm9524, %v6645, %v9335
    %v9527 = vsel %vm9524, %v6646, %v9337
    %v9528 = vsel %vm9524, %v6647, %v9339
    %v9529 = vsel %vm9524, %v6648, %v9341
    %v9530 = vsel %vm9524, %v6649, %v9343
    %v9531 = vsel %vm9524, %v6650, %v9345
    %v9532 = vsel %vm9524, %v6651, %v9347
    %v9533 = vsel %vm9524, %v6652, %v9349
    %v9534 = vsel %vm9524, %v6653, %v9351
    %v9535 = vsel %vm9524, %v6654, %v9353
    %v9536 = vsel %vm9524, %v6655, %v9355
    %v9537 = vsel %vm9524, %v6656, %v9357
    %v9538 = vsel %vm9524, %v6657, %v9359
    %v9539 = vsel %vm9524, %v6658, %v9361
    %v9540 = vsel %vm9524, %v6659, %v9363
    %v9541 = vsel %vm9524, %v6660, %v9365
    %v9542 = vsel %vm9524, %v6661, %v9367
    %v9543 = vsel %vm9524, %v6662, %v9369
    %v9544 = vsel %vm9524, %v6663, %v9371
    %v9545 = vsel %vm9524, %v6664, %v9373
    %v9546 = vsel %vm9524, %v6665, %v9375
    %v9547 = vsel %vm9524, %v6666, %v9377
    %v9548 = vsel %vm9524, %v6667, %v9379
    %v9549 = vsel %vm9524, %v6668, %v9381
    %v9550 = vsel %vm9524, %v6669, %v9383
    %v9551 = vsel %vm9524, %v6670, %v9385
    %v9552 = vsel %vm9524, %v6671, %v9387
    %v9553 = vsel %vm9524, %v6672, %v9389
    %v9554 = vsel %vm9524, %v6673, %v9391
    %v9555 = vsel %vm9524, %v6674, %v9393
    %v9556 = vsel %vm9524, %v6675, %v9395
    %v9557 = vsel %vm9524, %v6676, %v9397
    %v9558 = vsel %vm9524, %v6677, %v9399
    %v9559 = vsel %vm9524, %v6678, %v9401
    %v9560 = vsel %vm9524, %v6679, %v9403
    %v9561 = vsel %vm9524, %v6680, %v9405
    %v9562 = vsel %vm9524, %v6681, %v9407
    %v9563 = vsel %vm9524, %v6682, %v9409
    %v9564 = vsel %vm9524, %v6683, %v9411
    %v9565 = vsel %vm9524, %v6684, %v9413
    %v9566 = vsel %vm9524, %v6685, %v9415
    %v9567 = vsel %vm9524, %v6686, %v9417
    %v9568 = vsel %vm9524, %v6687, %v9419
    %v9569 = vsel %vm9524, %v6688, %v9421
    %v9570 = vsel %vm9524, %v6689, %v9423
    %v9571 = vsel %vm9524, %v6690, %v9425
    %v9572 = vsel %vm9524, %v6691, %v9427
    %v9573 = vsel %vm9524, %v6692, %v9429
    %v9574 = vsel %vm9524, %v6693, %v9431
    %v9575 = vsel %vm9524, %v6694, %v9433
    %v9576 = vsel %vm9524, %v6695, %v9435
    %v9577 = vsel %vm9524, %v6696, %v9437
    %v9578 = vsel %vm9524, %v6697, %v9439
    %v9579 = vsel %vm9524, %v6698, %v9441
    %v9580 = vsel %vm9524, %v6699, %v9443
    %v9581 = vsel %vm9524, %v6700, %v9445
    %v9582 = vsel %vm9524, %v6701, %v9447
    %v9583 = vsel %vm9524, %v6702, %v9449
    %v9584 = vsel %vm9524, %v6703, %v9451
    %v9585 = vsel %vm9524, %v6704, %v9453
    %v9586 = vsel %vm9524, %v6705, %v9455
    %v9587 = vsel %vm9524, %v6706, %v9457
    %v9588 = vsel %vm9524, %v6707, %v9459
    %v9589 = vpack.c.bf16 %v9526, %v9525
    %v9590 = vpack.c.bf16 %v9528, %v9527
    %v9591 = vpack.c.bf16 %v9530, %v9529
    %v9592 = vpack.c.bf16 %v9532, %v9531
    %v9593 = vpack.c.bf16 %v9534, %v9533
    %v9594 = vpack.c.bf16 %v9536, %v9535
    %v9595 = vpack.c.bf16 %v9538, %v9537
    %v9596 = vpack.c.bf16 %v9540, %v9539
    %v9597 = vpack.c.bf16 %v9542, %v9541
    %v9598 = vpack.c.bf16 %v9544, %v9543
    %v9599 = vpack.c.bf16 %v9546, %v9545
    %v9600 = vpack.c.bf16 %v9548, %v9547
    %v9601 = vpack.c.bf16 %v9550, %v9549
    %v9602 = vpack.c.bf16 %v9552, %v9551
    %v9603 = vpack.c.bf16 %v9554, %v9553
    %v9604 = vpack.c.bf16 %v9556, %v9555
    %v9605 = vpack.c.bf16 %v9558, %v9557
    %v9606 = vpack.c.bf16 %v9560, %v9559
    %v9607 = vpack.c.bf16 %v9562, %v9561
    %v9608 = vpack.c.bf16 %v9564, %v9563
    %v9609 = vpack.c.bf16 %v9566, %v9565
    %v9610 = vpack.c.bf16 %v9568, %v9567
    %v9611 = vpack.c.bf16 %v9570, %v9569
    %v9612 = vpack.c.bf16 %v9572, %v9571
    %v9613 = vpack.c.bf16 %v9574, %v9573
    %v9614 = vpack.c.bf16 %v9576, %v9575
    %v9615 = vpack.c.bf16 %v9578, %v9577
    %v9616 = vpack.c.bf16 %v9580, %v9579
    %v9617 = vpack.c.bf16 %v9582, %v9581
    %v9618 = vpack.c.bf16 %v9584, %v9583
    %v9619 = vpack.c.bf16 %v9586, %v9585
    %v9620 = vpack.c.bf16 %v9588, %v9587
    %v9621 = vld [vmem:[%s2] sm:$0xf]
    %v9622 = vld [vmem:[%s2 + $0x4] sm:$0xf]
    %v9623 = vld [vmem:[%s2 + $0x8] sm:$0xf]
    %v9624 = vld [vmem:[%s2 + $0xc] sm:$0xf]
    %v9625 = vld [vmem:[%s2 + $0x10] sm:$0xf]
    %v9626 = vld [vmem:[%s2 + $0x14] sm:$0xf]
    %v9627 = vld [vmem:[%s2 + $0x18] sm:$0xf]
    %v9628 = vld [vmem:[%s2 + $0x1c] sm:$0xf]
    %v9629 = vld [vmem:[%s2 + $0x20] sm:$0xf]
    %v9630 = vld [vmem:[%s2 + $0x24] sm:$0x3]
    %v9641 = vunpack.c.l.b16 %v9621
    %v9642 = vunpack.c.l.b16 %v9622
    %v9643 = vunpack.c.l.b16 %v9623
    %v9644 = vunpack.c.l.b16 %v9624
    %v9645 = vunpack.c.l.b16 %v9625
    %v9646 = vunpack.c.l.b16 %v9626
    %v9647 = vunpack.c.l.b16 %v9627
    %v9648 = vunpack.c.l.b16 %v9628
    %v9649 = vunpack.c.l.b16 %v9629
    %v9650 = vunpack.c.l.b16 %v9630
    %v9651 = vpack.c.b16 %v9642, %v9641
    %v9652 = vpack.c.b16 %v9644, %v9643
    %v9653 = vpack.c.b16 %v9646, %v9645
    %v9654 = vpack.c.b16 %v9648, %v9647
    %v9655 = vpack.c.b16 %v9650, %v9649
    %vm9660 = vcmask 613376
    %v9662 = vsel %vm9660, %v9589, 0
    %v9665 = vsel %vm9660, %v9590, 0
    %v9668 = vsel %vm9660, %v9591, 0
    %v9671 = vsel %vm9660, %v9592, 0
    %v9674 = vsel %vm9660, %v9593, 0
    %v9677 = vsel %vm9660, %v9594, 0
    %v9680 = vsel %vm9660, %v9595, 0
    %v9683 = vsel %vm9660, %v9596, 0
    %v9686 = vsel %vm9660, %v9597, 0
    %v9689 = vsel %vm9660, %v9598, 0
    %v9692 = vsel %vm9660, %v9599, 0
    %v9695 = vsel %vm9660, %v9600, 0
    %v9698 = vsel %vm9660, %v9601, 0
    %v9701 = vsel %vm9660, %v9602, 0
    %v9704 = vsel %vm9660, %v9603, 0
    %v9707 = vsel %vm9660, %v9604, 0
    %v9710 = vsel %vm9660, %v9605, 0
    %v9713 = vsel %vm9660, %v9606, 0
    %v9716 = vsel %vm9660, %v9607, 0
    %v9719 = vsel %vm9660, %v9608, 0
    %v9722 = vsel %vm9660, %v9609, 0
    %v9725 = vsel %vm9660, %v9610, 0
    %v9728 = vsel %vm9660, %v9611, 0
    %v9731 = vsel %vm9660, %v9612, 0
    %v9734 = vsel %vm9660, %v9613, 0
    %v9737 = vsel %vm9660, %v9614, 0
    %v9740 = vsel %vm9660, %v9615, 0
    %v9743 = vsel %vm9660, %v9616, 0
    %v9746 = vsel %vm9660, %v9617, 0
    %v9749 = vsel %vm9660, %v9618, 0
    %v9752 = vsel %vm9660, %v9619, 0
    %v9755 = vsel %vm9660, %v9620, 0
    %vm9757 = vcmask 1044480
    %vm9758 = vcmask 1045504
    %v9759 = vsel %vm9757, 4294967295, 65535
    %v9760 = vsel %vm9758, %v9759, 0
    %v9762 = vand.u32 %v9655, %v9760
    %9764 = vmatpush.bf16.msra.mxu0 0
    %9765 = vmatpush.bf16.msra.mxu0 0
    %9766 = vmatpush.bf16.msra.mxu0 0
    %9767 = vmatpush.bf16.msra.mxu0 %v9762
    %9768 = vmatpush.bf16.msra.mxu0 %v9654
    %9769 = vmatpush.bf16.msra.mxu0 %v9653
    %9770 = vmatpush.bf16.msra.mxu0 %v9652
    %9771 = vmatpush.bf16.msra.mxu0 %v9651
    %9772 = vmatmul.bf16.gmra.mxu0 %v9662
    %v9773 = vpop.f32.mrf.mxu0
    %v9774 = vadd.f32 0.0, %v9773
    %v9775 = vpop.f32.mrf.mxu0
    %v9776 = vadd.f32 0.0, %v9775
    %9777 = vmatmul.bf16.gmra.mxu0 %v9665
    %v9778 = vpop.f32.mrf.mxu0
    %v9779 = vadd.f32 0.0, %v9778
    %v9780 = vpop.f32.mrf.mxu0
    %v9781 = vadd.f32 0.0, %v9780
    %9782 = vmatmul.bf16.gmra.mxu0 %v9668
    %v9783 = vpop.f32.mrf.mxu0
    %v9784 = vadd.f32 0.0, %v9783
    %v9785 = vpop.f32.mrf.mxu0
    %v9786 = vadd.f32 0.0, %v9785
    %9787 = vmatmul.bf16.gmra.mxu0 %v9671
    %v9788 = vpop.f32.mrf.mxu0
    %v9789 = vadd.f32 0.0, %v9788
    %v9790 = vpop.f32.mrf.mxu0
    %v9791 = vadd.f32 0.0, %v9790
    %9792 = vmatmul.bf16.gmra.mxu0 %v9674
    %v9793 = vpop.f32.mrf.mxu0
    %v9794 = vadd.f32 0.0, %v9793
    %v9795 = vpop.f32.mrf.mxu0
    %v9796 = vadd.f32 0.0, %v9795
    %9797 = vmatmul.bf16.gmra.mxu0 %v9677
    %v9798 = vpop.f32.mrf.mxu0
    %v9799 = vadd.f32 0.0, %v9798
    %v9800 = vpop.f32.mrf.mxu0
    %v9801 = vadd.f32 0.0, %v9800
    %9802 = vmatmul.bf16.gmra.mxu0 %v9680
    %v9803 = vpop.f32.mrf.mxu0
    %v9804 = vadd.f32 0.0, %v9803
    %v9805 = vpop.f32.mrf.mxu0
    %v9806 = vadd.f32 0.0, %v9805
    %9807 = vmatmul.bf16.gmra.mxu0 %v9683
    %v9808 = vpop.f32.mrf.mxu0
    %v9809 = vadd.f32 0.0, %v9808
    %v9810 = vpop.f32.mrf.mxu0
    %v9811 = vadd.f32 0.0, %v9810
    %9812 = vmatmul.bf16.gmra.mxu0 %v9686
    %v9813 = vpop.f32.mrf.mxu0
    %v9814 = vadd.f32 0.0, %v9813
    %v9815 = vpop.f32.mrf.mxu0
    %v9816 = vadd.f32 0.0, %v9815
    %9817 = vmatmul.bf16.gmra.mxu0 %v9689
    %v9818 = vpop.f32.mrf.mxu0
    %v9819 = vadd.f32 0.0, %v9818
    %v9820 = vpop.f32.mrf.mxu0
    %v9821 = vadd.f32 0.0, %v9820
    %9822 = vmatmul.bf16.gmra.mxu0 %v9692
    %v9823 = vpop.f32.mrf.mxu0
    %v9824 = vadd.f32 0.0, %v9823
    %v9825 = vpop.f32.mrf.mxu0
    %v9826 = vadd.f32 0.0, %v9825
    %9827 = vmatmul.bf16.gmra.mxu0 %v9695
    %v9828 = vpop.f32.mrf.mxu0
    %v9829 = vadd.f32 0.0, %v9828
    %v9830 = vpop.f32.mrf.mxu0
    %v9831 = vadd.f32 0.0, %v9830
    %9832 = vmatmul.bf16.gmra.mxu0 %v9698
    %v9833 = vpop.f32.mrf.mxu0
    %v9834 = vadd.f32 0.0, %v9833
    %v9835 = vpop.f32.mrf.mxu0
    %v9836 = vadd.f32 0.0, %v9835
    %9837 = vmatmul.bf16.gmra.mxu0 %v9701
    %v9838 = vpop.f32.mrf.mxu0
    %v9839 = vadd.f32 0.0, %v9838
    %v9840 = vpop.f32.mrf.mxu0
    %v9841 = vadd.f32 0.0, %v9840
    %9842 = vmatmul.bf16.gmra.mxu0 %v9704
    %v9843 = vpop.f32.mrf.mxu0
    %v9844 = vadd.f32 0.0, %v9843
    %v9845 = vpop.f32.mrf.mxu0
    %v9846 = vadd.f32 0.0, %v9845
    %9847 = vmatmul.bf16.gmra.mxu0 %v9707
    %v9848 = vpop.f32.mrf.mxu0
    %v9849 = vadd.f32 0.0, %v9848
    %v9850 = vpop.f32.mrf.mxu0
    %v9851 = vadd.f32 0.0, %v9850
    %9852 = vmatmul.bf16.gmra.mxu0 %v9710
    %v9853 = vpop.f32.mrf.mxu0
    %v9854 = vadd.f32 0.0, %v9853
    %v9855 = vpop.f32.mrf.mxu0
    %v9856 = vadd.f32 0.0, %v9855
    %9857 = vmatmul.bf16.gmra.mxu0 %v9713
    %v9858 = vpop.f32.mrf.mxu0
    %v9859 = vadd.f32 0.0, %v9858
    %v9860 = vpop.f32.mrf.mxu0
    %v9861 = vadd.f32 0.0, %v9860
    %9862 = vmatmul.bf16.gmra.mxu0 %v9716
    %v9863 = vpop.f32.mrf.mxu0
    %v9864 = vadd.f32 0.0, %v9863
    %v9865 = vpop.f32.mrf.mxu0
    %v9866 = vadd.f32 0.0, %v9865
    %9867 = vmatmul.bf16.gmra.mxu0 %v9719
    %v9868 = vpop.f32.mrf.mxu0
    %v9869 = vadd.f32 0.0, %v9868
    %v9870 = vpop.f32.mrf.mxu0
    %v9871 = vadd.f32 0.0, %v9870
    %9872 = vmatmul.bf16.gmra.mxu0 %v9722
    %v9873 = vpop.f32.mrf.mxu0
    %v9874 = vadd.f32 0.0, %v9873
    %v9875 = vpop.f32.mrf.mxu0
    %v9876 = vadd.f32 0.0, %v9875
    %9877 = vmatmul.bf16.gmra.mxu0 %v9725
    %v9878 = vpop.f32.mrf.mxu0
    %v9879 = vadd.f32 0.0, %v9878
    %v9880 = vpop.f32.mrf.mxu0
    %v9881 = vadd.f32 0.0, %v9880
    %9882 = vmatmul.bf16.gmra.mxu0 %v9728
    %v9883 = vpop.f32.mrf.mxu0
    %v9884 = vadd.f32 0.0, %v9883
    %v9885 = vpop.f32.mrf.mxu0
    %v9886 = vadd.f32 0.0, %v9885
    %9887 = vmatmul.bf16.gmra.mxu0 %v9731
    %v9888 = vpop.f32.mrf.mxu0
    %v9889 = vadd.f32 0.0, %v9888
    %v9890 = vpop.f32.mrf.mxu0
    %v9891 = vadd.f32 0.0, %v9890
    %9892 = vmatmul.bf16.gmra.mxu0 %v9734
    %v9893 = vpop.f32.mrf.mxu0
    %v9894 = vadd.f32 0.0, %v9893
    %v9895 = vpop.f32.mrf.mxu0
    %v9896 = vadd.f32 0.0, %v9895
    %9897 = vmatmul.bf16.gmra.mxu0 %v9737
    %v9898 = vpop.f32.mrf.mxu0
    %v9899 = vadd.f32 0.0, %v9898
    %v9900 = vpop.f32.mrf.mxu0
    %v9901 = vadd.f32 0.0, %v9900
    %9902 = vmatmul.bf16.gmra.mxu0 %v9740
    %v9903 = vpop.f32.mrf.mxu0
    %v9904 = vadd.f32 0.0, %v9903
    %v9905 = vpop.f32.mrf.mxu0
    %v9906 = vadd.f32 0.0, %v9905
    %9907 = vmatmul.bf16.gmra.mxu0 %v9743
    %v9908 = vpop.f32.mrf.mxu0
    %v9909 = vadd.f32 0.0, %v9908
    %v9910 = vpop.f32.mrf.mxu0
    %v9911 = vadd.f32 0.0, %v9910
    %9912 = vmatmul.bf16.gmra.mxu0 %v9746
    %v9913 = vpop.f32.mrf.mxu0
    %v9914 = vadd.f32 0.0, %v9913
    %v9915 = vpop.f32.mrf.mxu0
    %v9916 = vadd.f32 0.0, %v9915
    %9917 = vmatmul.bf16.gmra.mxu0 %v9749
    %v9918 = vpop.f32.mrf.mxu0
    %v9919 = vadd.f32 0.0, %v9918
    %v9920 = vpop.f32.mrf.mxu0
    %v9921 = vadd.f32 0.0, %v9920
    %9922 = vmatmul.bf16.gmra.mxu0 %v9752
    %v9923 = vpop.f32.mrf.mxu0
    %v9924 = vadd.f32 0.0, %v9923
    %v9925 = vpop.f32.mrf.mxu0
    %v9926 = vadd.f32 0.0, %v9925
    %9927 = vmatmul.bf16.gmra.mxu0 %v9755
    %v9928 = vpop.f32.mrf.mxu0
    %v9929 = vadd.f32 0.0, %v9928
    %v9930 = vpop.f32.mrf.mxu0
    %v9931 = vadd.f32 0.0, %v9930
    %9932 = vdwg.mxu0
    %vm9933 = vcmask 80896
    %9934 = vst.msk [vmem:[#allocation3] sm:$0xff] %vm9933, %v9774
    %9935 = vst.msk [vmem:[#allocation3 + $0x8] sm:$0xff] %vm9933, %v9776
    %9936 = vst.msk [vmem:[#allocation3 + $0x10] sm:$0xff] %vm9933, %v9779
    %9937 = vst.msk [vmem:[#allocation3 + $0x18] sm:$0xff] %vm9933, %v9781
    %9938 = vst.msk [vmem:[#allocation3 + $0x20] sm:$0xff] %vm9933, %v9784
    %9939 = vst.msk [vmem:[#allocation3 + $0x28] sm:$0xff] %vm9933, %v9786
    %9940 = vst.msk [vmem:[#allocation3 + $0x30] sm:$0xff] %vm9933, %v9789
    %9941 = vst.msk [vmem:[#allocation3 + $0x38] sm:$0xff] %vm9933, %v9791
    %9942 = vst.msk [vmem:[#allocation3 + $0x40] sm:$0xff] %vm9933, %v9794
    %9943 = vst.msk [vmem:[#allocation3 + $0x48] sm:$0xff] %vm9933, %v9796
    %9944 = vst.msk [vmem:[#allocation3 + $0x50] sm:$0xff] %vm9933, %v9799
    %9945 = vst.msk [vmem:[#allocation3 + $0x58] sm:$0xff] %vm9933, %v9801
    %9946 = vst.msk [vmem:[#allocation3 + $0x60] sm:$0xff] %vm9933, %v9804
    %9947 = vst.msk [vmem:[#allocation3 + $0x68] sm:$0xff] %vm9933, %v9806
    %9948 = vst.msk [vmem:[#allocation3 + $0x70] sm:$0xff] %vm9933, %v9809
    %9949 = vst.msk [vmem:[#allocation3 + $0x78] sm:$0xff] %vm9933, %v9811
    %9950 = vst.msk [vmem:[#allocation3 + $0x80] sm:$0xff] %vm9933, %v9814
    %9951 = vst.msk [vmem:[#allocation3 + $0x88] sm:$0xff] %vm9933, %v9816
    %9952 = vst.msk [vmem:[#allocation3 + $0x90] sm:$0xff] %vm9933, %v9819
    %9953 = vst.msk [vmem:[#allocation3 + $0x98] sm:$0xff] %vm9933, %v9821
    %9954 = vst.msk [vmem:[#allocation3 + $0xa0] sm:$0xff] %vm9933, %v9824
    %9955 = vst.msk [vmem:[#allocation3 + $0xa8] sm:$0xff] %vm9933, %v9826
    %9956 = vst.msk [vmem:[#allocation3 + $0xb0] sm:$0xff] %vm9933, %v9829
    %9957 = vst.msk [vmem:[#allocation3 + $0xb8] sm:$0xff] %vm9933, %v9831
    %9958 = vst.msk [vmem:[#allocation3 + $0xc0] sm:$0xff] %vm9933, %v9834
    %9959 = vst.msk [vmem:[#allocation3 + $0xc8] sm:$0xff] %vm9933, %v9836
    %9960 = vst.msk [vmem:[#allocation3 + $0xd0] sm:$0xff] %vm9933, %v9839
    %9961 = vst.msk [vmem:[#allocation3 + $0xd8] sm:$0xff] %vm9933, %v9841
    %9962 = vst.msk [vmem:[#allocation3 + $0xe0] sm:$0xff] %vm9933, %v9844
    %9963 = vst.msk [vmem:[#allocation3 + $0xe8] sm:$0xff] %vm9933, %v9846
    %9964 = vst.msk [vmem:[#allocation3 + $0xf0] sm:$0xff] %vm9933, %v9849
    %9965 = vst.msk [vmem:[#allocation3 + $0xf8] sm:$0xff] %vm9933, %v9851
    %9966 = vst.msk [vmem:[#allocation3 + $0x100] sm:$0xff] %vm9933, %v9854
    %9967 = vst.msk [vmem:[#allocation3 + $0x108] sm:$0xff] %vm9933, %v9856
    %9968 = vst.msk [vmem:[#allocation3 + $0x110] sm:$0xff] %vm9933, %v9859
    %9969 = vst.msk [vmem:[#allocation3 + $0x118] sm:$0xff] %vm9933, %v9861
    %9970 = vst.msk [vmem:[#allocation3 + $0x120] sm:$0xff] %vm9933, %v9864
    %9971 = vst.msk [vmem:[#allocation3 + $0x128] sm:$0xff] %vm9933, %v9866
    %9972 = vst.msk [vmem:[#allocation3 + $0x130] sm:$0xff] %vm9933, %v9869
    %9973 = vst.msk [vmem:[#allocation3 + $0x138] sm:$0xff] %vm9933, %v9871
    %9974 = vst.msk [vmem:[#allocation3 + $0x140] sm:$0xff] %vm9933, %v9874
    %9975 = vst.msk [vmem:[#allocation3 + $0x148] sm:$0xff] %vm9933, %v9876
    %9976 = vst.msk [vmem:[#allocation3 + $0x150] sm:$0xff] %vm9933, %v9879
    %9977 = vst.msk [vmem:[#allocation3 + $0x158] sm:$0xff] %vm9933, %v9881
    %9978 = vst.msk [vmem:[#allocation3 + $0x160] sm:$0xff] %vm9933, %v9884
    %9979 = vst.msk [vmem:[#allocation3 + $0x168] sm:$0xff] %vm9933, %v9886
    %9980 = vst.msk [vmem:[#allocation3 + $0x170] sm:$0xff] %vm9933, %v9889
    %9981 = vst.msk [vmem:[#allocation3 + $0x178] sm:$0xff] %vm9933, %v9891
    %9982 = vst.msk [vmem:[#allocation3 + $0x180] sm:$0xff] %vm9933, %v9894
    %9983 = vst.msk [vmem:[#allocation3 + $0x188] sm:$0xff] %vm9933, %v9896
    %9984 = vst.msk [vmem:[#allocation3 + $0x190] sm:$0xff] %vm9933, %v9899
    %9985 = vst.msk [vmem:[#allocation3 + $0x198] sm:$0xff] %vm9933, %v9901
    %9986 = vst.msk [vmem:[#allocation3 + $0x1a0] sm:$0xff] %vm9933, %v9904
    %9987 = vst.msk [vmem:[#allocation3 + $0x1a8] sm:$0xff] %vm9933, %v9906
    %9988 = vst.msk [vmem:[#allocation3 + $0x1b0] sm:$0xff] %vm9933, %v9909
    %9989 = vst.msk [vmem:[#allocation3 + $0x1b8] sm:$0xff] %vm9933, %v9911
    %9990 = vst.msk [vmem:[#allocation3 + $0x1c0] sm:$0xff] %vm9933, %v9914
    %9991 = vst.msk [vmem:[#allocation3 + $0x1c8] sm:$0xff] %vm9933, %v9916
    %9992 = vst.msk [vmem:[#allocation3 + $0x1d0] sm:$0xff] %vm9933, %v9919
    %9993 = vst.msk [vmem:[#allocation3 + $0x1d8] sm:$0xff] %vm9933, %v9921
    %9994 = vst.msk [vmem:[#allocation3 + $0x1e0] sm:$0xff] %vm9933, %v9924
    %9995 = vst.msk [vmem:[#allocation3 + $0x1e8] sm:$0xff] %vm9933, %v9926
    %9996 = vst.msk [vmem:[#allocation3 + $0x1f0] sm:$0xff] %vm9933, %v9929
    %9997 = vst.msk [vmem:[#allocation3 + $0x1f8] sm:$0xff] %vm9933, %v9931
    %v9998 = vld [vmem:[#allocation3] ss:$2 sm:$0xff]
    %s9999 = scalar_lea.vmem [#allocation3], 32
    %v10000 = vld [vmem:[%s9999] ss:$2 sm:$0xff]
    %s10001 = scalar_lea.vmem [#allocation3], 64
    %v10002 = vld [vmem:[%s10001] ss:$2 sm:$0xff]
    %s10003 = scalar_lea.vmem [#allocation3], 96
    %v10004 = vld [vmem:[%s10003] ss:$2 sm:$0xff]
    %s10005 = scalar_lea.vmem [#allocation3], 128
    %v10006 = vld [vmem:[%s10005] ss:$2 sm:$0xff]
    %s10007 = scalar_lea.vmem [#allocation3], 160
    %v10008 = vld [vmem:[%s10007] ss:$2 sm:$0xff]
    %s10009 = scalar_lea.vmem [#allocation3], 192
    %v10010 = vld [vmem:[%s10009] ss:$2 sm:$0xff]
    %s10011 = scalar_lea.vmem [#allocation3], 224
    %v10012 = vld [vmem:[%s10011] ss:$2 sm:$0xff]
    %s10013 = scalar_lea.vmem [#allocation3], 256
    %v10014 = vld [vmem:[%s10013] ss:$2 sm:$0xff]
    %s10015 = scalar_lea.vmem [#allocation3], 288
    %v10016 = vld [vmem:[%s10015] ss:$2 sm:$0xff]
    %s10017 = scalar_lea.vmem [#allocation3], 320
    %v10018 = vld [vmem:[%s10017] ss:$2 sm:$0xff]
    %s10019 = scalar_lea.vmem [#allocation3], 352
    %v10020 = vld [vmem:[%s10019] ss:$2 sm:$0xff]
    %s10021 = scalar_lea.vmem [#allocation3], 384
    %v10022 = vld [vmem:[%s10021] ss:$2 sm:$0xff]
    %s10023 = scalar_lea.vmem [#allocation3], 416
    %v10024 = vld [vmem:[%s10023] ss:$2 sm:$0xff]
    %s10025 = scalar_lea.vmem [#allocation3], 448
    %v10026 = vld [vmem:[%s10025] ss:$2 sm:$0xff]
    %s10027 = scalar_lea.vmem [#allocation3], 480
    %v10028 = vld [vmem:[%s10027] ss:$2 sm:$0xff]
    %s10029 = scalar_lea.vmem [#allocation3], 1
    %v10030 = vld [vmem:[%s10029] ss:$2 sm:$0xff]
    %s10031 = scalar_lea.vmem [#allocation3], 33
    %v10032 = vld [vmem:[%s10031] ss:$2 sm:$0xff]
    %s10033 = scalar_lea.vmem [#allocation3], 65
    %v10034 = vld [vmem:[%s10033] ss:$2 sm:$0xff]
    %s10035 = scalar_lea.vmem [#allocation3], 97
    %v10036 = vld [vmem:[%s10035] ss:$2 sm:$0xff]
    %s10037 = scalar_lea.vmem [#allocation3], 129
    %v10038 = vld [vmem:[%s10037] ss:$2 sm:$0xff]
    %s10039 = scalar_lea.vmem [#allocation3], 161
    %v10040 = vld [vmem:[%s10039] ss:$2 sm:$0xff]
    %s10041 = scalar_lea.vmem [#allocation3], 193
    %v10042 = vld [vmem:[%s10041] ss:$2 sm:$0xff]
    %s10043 = scalar_lea.vmem [#allocation3], 225
    %v10044 = vld [vmem:[%s10043] ss:$2 sm:$0xff]
    %s10045 = scalar_lea.vmem [#allocation3], 257
    %v10046 = vld [vmem:[%s10045] ss:$2 sm:$0xff]
    %s10047 = scalar_lea.vmem [#allocation3], 289
    %v10048 = vld [vmem:[%s10047] ss:$2 sm:$0xff]
    %s10049 = scalar_lea.vmem [#allocation3], 321
    %v10050 = vld [vmem:[%s10049] ss:$2 sm:$0xff]
    %s10051 = scalar_lea.vmem [#allocation3], 353
    %v10052 = vld [vmem:[%s10051] ss:$2 sm:$0xff]
    %s10053 = scalar_lea.vmem [#allocation3], 385
    %v10054 = vld [vmem:[%s10053] ss:$2 sm:$0xff]
    %s10055 = scalar_lea.vmem [#allocation3], 417
    %v10056 = vld [vmem:[%s10055] ss:$2 sm:$0xff]
    %s10057 = scalar_lea.vmem [#allocation3], 449
    %v10058 = vld [vmem:[%s10057] ss:$2 sm:$0xff]
    %s10059 = scalar_lea.vmem [#allocation3], 481
    %v10060 = vld [vmem:[%s10059] ss:$2 sm:$0xff]
    %v10061 = vmax.f32 %v9998, %v10030
    %v10062 = vmax.f32 %v10000, %v10032
    %v10063 = vmax.f32 %v10002, %v10034
    %v10064 = vmax.f32 %v10004, %v10036
    %v10065 = vmax.f32 %v10006, %v10038
    %v10066 = vmax.f32 %v10008, %v10040
    %v10067 = vmax.f32 %v10010, %v10042
    %v10068 = vmax.f32 %v10012, %v10044
    %v10069 = vmax.f32 %v10014, %v10046
    %v10070 = vmax.f32 %v10016, %v10048
    %v10071 = vmax.f32 %v10018, %v10050
    %v10072 = vmax.f32 %v10020, %v10052
    %v10073 = vmax.f32 %v10022, %v10054
    %v10074 = vmax.f32 %v10024, %v10056
    %v10075 = vmax.f32 %v10026, %v10058
    %v10076 = vmax.f32 %v10028, %v10060
    %s10077 = scalar_lea.vmem [#allocation3], 16
    %v10078 = vld [vmem:[%s10077] ss:$2 sm:$0xff]
    %s10079 = scalar_lea.vmem %s10077, 32 [#allocation3]
    %v10080 = vld [vmem:[%s10079] ss:$2 sm:$0xff]
    %s10081 = scalar_lea.vmem %s10077, 64 [#allocation3]
    %v10082 = vld [vmem:[%s10081] ss:$2 sm:$0xff]
    %s10083 = scalar_lea.vmem %s10077, 96 [#allocation3]
    %v10084 = vld [vmem:[%s10083] ss:$2 sm:$0xff]
    %s10085 = scalar_lea.vmem %s10077, 128 [#allocation3]
    %v10086 = vld [vmem:[%s10085] ss:$2 sm:$0xff]
    %s10087 = scalar_lea.vmem %s10077, 160 [#allocation3]
    %v10088 = vld [vmem:[%s10087] ss:$2 sm:$0xff]
    %s10089 = scalar_lea.vmem %s10077, 192 [#allocation3]
    %v10090 = vld [vmem:[%s10089] ss:$2 sm:$0xff]
    %s10091 = scalar_lea.vmem %s10077, 224 [#allocation3]
    %v10092 = vld [vmem:[%s10091] ss:$2 sm:$0xff]
    %s10093 = scalar_lea.vmem %s10077, 256 [#allocation3]
    %v10094 = vld [vmem:[%s10093] ss:$2 sm:$0xff]
    %s10095 = scalar_lea.vmem %s10077, 288 [#allocation3]
    %v10096 = vld [vmem:[%s10095] ss:$2 sm:$0xff]
    %s10097 = scalar_lea.vmem %s10077, 320 [#allocation3]
    %v10098 = vld [vmem:[%s10097] ss:$2 sm:$0xff]
    %s10099 = scalar_lea.vmem %s10077, 352 [#allocation3]
    %v10100 = vld [vmem:[%s10099] ss:$2 sm:$0xff]
    %s10101 = scalar_lea.vmem %s10077, 384 [#allocation3]
    %v10102 = vld [vmem:[%s10101] ss:$2 sm:$0xff]
    %s10103 = scalar_lea.vmem %s10077, 416 [#allocation3]
    %v10104 = vld [vmem:[%s10103] ss:$2 sm:$0xff]
    %s10105 = scalar_lea.vmem %s10077, 448 [#allocation3]
    %v10106 = vld [vmem:[%s10105] ss:$2 sm:$0xff]
    %s10107 = scalar_lea.vmem %s10077, 480 [#allocation3]
    %v10108 = vld [vmem:[%s10107] ss:$2 sm:$0xff]
    %v10109 = vmax.f32 %v10061, %v10078
    %v10110 = vmax.f32 %v10062, %v10080
    %v10111 = vmax.f32 %v10063, %v10082
    %v10112 = vmax.f32 %v10064, %v10084
    %v10113 = vmax.f32 %v10065, %v10086
    %v10114 = vmax.f32 %v10066, %v10088
    %v10115 = vmax.f32 %v10067, %v10090
    %v10116 = vmax.f32 %v10068, %v10092
    %v10117 = vmax.f32 %v10069, %v10094
    %v10118 = vmax.f32 %v10070, %v10096
    %v10119 = vmax.f32 %v10071, %v10098
    %v10120 = vmax.f32 %v10072, %v10100
    %v10121 = vmax.f32 %v10073, %v10102
    %v10122 = vmax.f32 %v10074, %v10104
    %v10123 = vmax.f32 %v10075, %v10106
    %v10124 = vmax.f32 %v10076, %v10108
    %s10125 = scalar_lea.vmem %s10077, 1 [#allocation3]
    %v10126 = vld [vmem:[%s10125] ss:$2 sm:$0xff]
    %s10127 = scalar_lea.vmem %s10077, 33 [#allocation3]
    %v10128 = vld [vmem:[%s10127] ss:$2 sm:$0xff]
    %s10129 = scalar_lea.vmem %s10077, 65 [#allocation3]
    %v10130 = vld [vmem:[%s10129] ss:$2 sm:$0xff]
    %s10131 = scalar_lea.vmem %s10077, 97 [#allocation3]
    %v10132 = vld [vmem:[%s10131] ss:$2 sm:$0xff]
    %s10133 = scalar_lea.vmem %s10077, 129 [#allocation3]
    %v10134 = vld [vmem:[%s10133] ss:$2 sm:$0xff]
    %s10135 = scalar_lea.vmem %s10077, 161 [#allocation3]
    %v10136 = vld [vmem:[%s10135] ss:$2 sm:$0xff]
    %s10137 = scalar_lea.vmem %s10077, 193 [#allocation3]
    %v10138 = vld [vmem:[%s10137] ss:$2 sm:$0xff]
    %s10139 = scalar_lea.vmem %s10077, 225 [#allocation3]
    %v10140 = vld [vmem:[%s10139] ss:$2 sm:$0xff]
    %s10141 = scalar_lea.vmem %s10077, 257 [#allocation3]
    %v10142 = vld [vmem:[%s10141] ss:$2 sm:$0xff]
    %s10143 = scalar_lea.vmem %s10077, 289 [#allocation3]
    %v10144 = vld [vmem:[%s10143] ss:$2 sm:$0xff]
    %s10145 = scalar_lea.vmem %s10077, 321 [#allocation3]
    %v10146 = vld [vmem:[%s10145] ss:$2 sm:$0xff]
    %s10147 = scalar_lea.vmem %s10077, 353 [#allocation3]
    %v10148 = vld [vmem:[%s10147] ss:$2 sm:$0xff]
    %s10149 = scalar_lea.vmem %s10077, 385 [#allocation3]
    %v10150 = vld [vmem:[%s10149] ss:$2 sm:$0xff]
    %s10151 = scalar_lea.vmem %s10077, 417 [#allocation3]
    %v10152 = vld [vmem:[%s10151] ss:$2 sm:$0xff]
    %s10153 = scalar_lea.vmem %s10077, 449 [#allocation3]
    %v10154 = vld [vmem:[%s10153] ss:$2 sm:$0xff]
    %s10155 = scalar_lea.vmem %s10077, 481 [#allocation3]
    %v10156 = vld [vmem:[%s10155] ss:$2 sm:$0xff]
    %v10157 = vmax.f32 %v10109, %v10126
    %v10158 = vmax.f32 %v10110, %v10128
    %v10159 = vmax.f32 %v10111, %v10130
    %v10160 = vmax.f32 %v10112, %v10132
    %v10161 = vmax.f32 %v10113, %v10134
    %v10162 = vmax.f32 %v10114, %v10136
    %v10163 = vmax.f32 %v10115, %v10138
    %v10164 = vmax.f32 %v10116, %v10140
    %v10165 = vmax.f32 %v10117, %v10142
    %v10166 = vmax.f32 %v10118, %v10144
    %v10167 = vmax.f32 %v10119, %v10146
    %v10168 = vmax.f32 %v10120, %v10148
    %v10169 = vmax.f32 %v10121, %v10150
    %v10170 = vmax.f32 %v10122, %v10152
    %v10171 = vmax.f32 %v10123, %v10154
    %v10172 = vmax.f32 %v10124, %v10156
    %v10173 = vld [vmem:[%s3] sm:$0x1]
    %v10175 = vperm.slane %v10173, 0
    %v10177 = vadd.f32 %v10157, %v10175
    %v10178 = vadd.f32 %v10158, %v10175
    %v10179 = vadd.f32 %v10159, %v10175
    %v10180 = vadd.f32 %v10160, %v10175
    %v10181 = vadd.f32 %v10161, %v10175
    %v10182 = vadd.f32 %v10162, %v10175
    %v10183 = vadd.f32 %v10163, %v10175
    %v10184 = vadd.f32 %v10164, %v10175
    %v10185 = vadd.f32 %v10165, %v10175
    %v10186 = vadd.f32 %v10166, %v10175
    %v10187 = vadd.f32 %v10167, %v10175
    %v10188 = vadd.f32 %v10168, %v10175
    %v10189 = vadd.f32 %v10169, %v10175
    %v10190 = vadd.f32 %v10170, %v10175
    %v10191 = vadd.f32 %v10171, %v10175
    %v10192 = vadd.f32 %v10172, %v10175
    %10193 = vst.msk [vmem:[#allocation4] sm:$0xff] %vm9933, 0.0
    %vm10194 = vcmask 74752
    %10195 = vst.msk [vmem:[#allocation4 + $0x8] sm:$0x3] %vm10194, 0.0
    %10196 = vst.msk [vmem:[#allocation4 + $0x10] sm:$0xff] %vm9933, 0.0
    %10197 = vst.msk [vmem:[#allocation4 + $0x18] sm:$0x3] %vm10194, 0.0
    %10198 = vst.msk [vmem:[#allocation4 + $0x20] sm:$0xff] %vm9933, 0.0
    %10199 = vst.msk [vmem:[#allocation4 + $0x28] sm:$0x3] %vm10194, 0.0
    %10200 = vst.msk [vmem:[#allocation4 + $0x30] sm:$0xff] %vm9933, 0.0
    %10201 = vst.msk [vmem:[#allocation4 + $0x38] sm:$0x3] %vm10194, 0.0
    %10202 = vst.msk [vmem:[#allocation4 + $0x40] sm:$0xff] %vm9933, 0.0
    %10203 = vst.msk [vmem:[#allocation4 + $0x48] sm:$0x3] %vm10194, 0.0
    %10204 = vst.msk [vmem:[#allocation4 + $0x50] sm:$0xff] %vm9933, 0.0
    %10205 = vst.msk [vmem:[#allocation4 + $0x58] sm:$0x3] %vm10194, 0.0
    %10206 = vst.msk [vmem:[#allocation4 + $0x60] sm:$0xff] %vm9933, 0.0
    %10207 = vst.msk [vmem:[#allocation4 + $0x68] sm:$0x3] %vm10194, 0.0
    %10208 = vst.msk [vmem:[#allocation4 + $0x70] sm:$0xff] %vm9933, 0.0
    %10209 = vst.msk [vmem:[#allocation4 + $0x78] sm:$0x3] %vm10194, 0.0
    %10210 = vst.msk [vmem:[#allocation4 + $0x80] sm:$0xff] %vm9933, 0.0
    %10211 = vst.msk [vmem:[#allocation4 + $0x88] sm:$0x3] %vm10194, 0.0
    %10212 = vst.msk [vmem:[#allocation4 + $0x90] sm:$0xff] %vm9933, 0.0
    %10213 = vst.msk [vmem:[#allocation4 + $0x98] sm:$0x3] %vm10194, 0.0
    %10214 = vst.msk [vmem:[#allocation4 + $0xa0] sm:$0xff] %vm9933, 0.0
    %10215 = vst.msk [vmem:[#allocation4 + $0xa8] sm:$0x3] %vm10194, 0.0
    %10216 = vst.msk [vmem:[#allocation4 + $0xb0] sm:$0xff] %vm9933, 0.0
    %10217 = vst.msk [vmem:[#allocation4 + $0xb8] sm:$0x3] %vm10194, 0.0
    %10218 = vst.msk [vmem:[#allocation4 + $0xc0] sm:$0xff] %vm9933, 0.0
    %10219 = vst.msk [vmem:[#allocation4 + $0xc8] sm:$0x3] %vm10194, 0.0
    %10220 = vst.msk [vmem:[#allocation4 + $0xd0] sm:$0xff] %vm9933, 0.0
    %10221 = vst.msk [vmem:[#allocation4 + $0xd8] sm:$0x3] %vm10194, 0.0
    %10222 = vst.msk [vmem:[#allocation4 + $0xe0] sm:$0xff] %vm9933, 0.0
    %10223 = vst.msk [vmem:[#allocation4 + $0xe8] sm:$0x3] %vm10194, 0.0
    %10224 = vst.msk [vmem:[#allocation4 + $0xf0] sm:$0xff] %vm9933, 0.0
    %10225 = vst.msk [vmem:[#allocation4 + $0xf8] sm:$0x3] %vm10194, 0.0
    %10226 = vst.msk [vmem:[#allocation4 + $0x100] sm:$0xff] %vm9933, 0.0
    %10227 = vst.msk [vmem:[#allocation4 + $0x108] sm:$0x3] %vm10194, 0.0
    %10228 = vst.msk [vmem:[#allocation4 + $0x110] sm:$0xff] %vm9933, 0.0
    %10229 = vst.msk [vmem:[#allocation4 + $0x118] sm:$0x3] %vm10194, 0.0
    %10230 = vst.msk [vmem:[#allocation4 + $0x120] sm:$0xff] %vm9933, 0.0
    %10231 = vst.msk [vmem:[#allocation4 + $0x128] sm:$0x3] %vm10194, 0.0
    %10232 = vst.msk [vmem:[#allocation4 + $0x130] sm:$0xff] %vm9933, 0.0
    %10233 = vst.msk [vmem:[#allocation4 + $0x138] sm:$0x3] %vm10194, 0.0
    %s10234 = scalar_lea.vmem [#allocation4], 16
    %10235 = vst.msk [vmem:[%s10234 + $0x1] sm:$0xff] %vm9933, %v10177
    %10236 = vst.msk [vmem:[%s10234 + $0x11] sm:$0xff] %vm9933, %v10178
    %10237 = vst.msk [vmem:[%s10234 + $0x21] sm:$0xff] %vm9933, %v10179
    %10238 = vst.msk [vmem:[%s10234 + $0x31] sm:$0xff] %vm9933, %v10180
    %10239 = vst.msk [vmem:[%s10234 + $0x41] sm:$0xff] %vm9933, %v10181
    %10240 = vst.msk [vmem:[%s10234 + $0x51] sm:$0xff] %vm9933, %v10182
    %10241 = vst.msk [vmem:[%s10234 + $0x61] sm:$0xff] %vm9933, %v10183
    %10242 = vst.msk [vmem:[%s10234 + $0x71] sm:$0xff] %vm9933, %v10184
    %10243 = vst.msk [vmem:[%s10234 + $0xa1] sm:$0xff] %vm9933, %v10185
    %10244 = vst.msk [vmem:[%s10234 + $0xb1] sm:$0xff] %vm9933, %v10186
    %10245 = vst.msk [vmem:[%s10234 + $0xc1] sm:$0xff] %vm9933, %v10187
    %10246 = vst.msk [vmem:[%s10234 + $0xd1] sm:$0xff] %vm9933, %v10188
    %10247 = vst.msk [vmem:[%s10234 + $0xe1] sm:$0xff] %vm9933, %v10189
    %10248 = vst.msk [vmem:[%s10234 + $0xf1] sm:$0xff] %vm9933, %v10190
    %10249 = vst.msk [vmem:[%s10234 + $0x101] sm:$0xff] %vm9933, %v10191
    %10250 = vst.msk [vmem:[%s10234 + $0x111] sm:$0xff] %vm9933, %v10192
    %v10251 = vld [vmem:[#allocation4] sm:$0xff]
    %v10252 = vld [vmem:[#allocation4 + $0x10] sm:$0xff]
    %v10253 = vld [vmem:[#allocation4 + $0x20] sm:$0xff]
    %v10254 = vld [vmem:[#allocation4 + $0x30] sm:$0xff]
    %v10255 = vld [vmem:[#allocation4 + $0x40] sm:$0xff]
    %v10256 = vld [vmem:[#allocation4 + $0x50] sm:$0xff]
    %v10257 = vld [vmem:[#allocation4 + $0x60] sm:$0xff]
    %v10258 = vld [vmem:[#allocation4 + $0x70] sm:$0xff]
    %v10259 = vld [vmem:[#allocation4 + $0xa0] sm:$0xff]
    %v10260 = vld [vmem:[#allocation4 + $0xb0] sm:$0xff]
    %v10261 = vld [vmem:[#allocation4 + $0xc0] sm:$0xff]
    %v10262 = vld [vmem:[#allocation4 + $0xd0] sm:$0xff]
    %v10263 = vld [vmem:[#allocation4 + $0xe0] sm:$0xff]
    %v10264 = vld [vmem:[#allocation4 + $0xf0] sm:$0xff]
    %v10265 = vld [vmem:[#allocation4 + $0x100] sm:$0xff]
    %v10266 = vld [vmem:[#allocation4 + $0x110] sm:$0xff]
    %v10267 = vld [vmem:[#allocation4 + $0x1] sm:$0xff]
    %v10268 = vld [vmem:[#allocation4 + $0x11] sm:$0xff]
    %v10269 = vld [vmem:[#allocation4 + $0x21] sm:$0xff]
    %v10270 = vld [vmem:[#allocation4 + $0x31] sm:$0xff]
    %v10271 = vld [vmem:[#allocation4 + $0x41] sm:$0xff]
    %v10272 = vld [vmem:[#allocation4 + $0x51] sm:$0xff]
    %v10273 = vld [vmem:[#allocation4 + $0x61] sm:$0xff]
    %v10274 = vld [vmem:[#allocation4 + $0x71] sm:$0xff]
    %v10275 = vld [vmem:[#allocation4 + $0xa1] sm:$0xff]
    %v10276 = vld [vmem:[#allocation4 + $0xb1] sm:$0xff]
    %v10277 = vld [vmem:[#allocation4 + $0xc1] sm:$0xff]
    %v10278 = vld [vmem:[#allocation4 + $0xd1] sm:$0xff]
    %v10279 = vld [vmem:[#allocation4 + $0xe1] sm:$0xff]
    %v10280 = vld [vmem:[#allocation4 + $0xf1] sm:$0xff]
    %v10281 = vld [vmem:[#allocation4 + $0x101] sm:$0xff]
    %v10282 = vld [vmem:[#allocation4 + $0x111] sm:$0xff]
    %v10283 = vld [vmem:[#allocation4 + $0x2] sm:$0xff]
    %v10284 = vld [vmem:[#allocation4 + $0x12] sm:$0xff]
    %v10285 = vld [vmem:[#allocation4 + $0x22] sm:$0xff]
    %v10286 = vld [vmem:[#allocation4 + $0x32] sm:$0xff]
    %v10287 = vld [vmem:[#allocation4 + $0x42] sm:$0xff]
    %v10288 = vld [vmem:[#allocation4 + $0x52] sm:$0xff]
    %v10289 = vld [vmem:[#allocation4 + $0x62] sm:$0xff]
    %v10290 = vld [vmem:[#allocation4 + $0x72] sm:$0xff]
    %v10291 = vld [vmem:[#allocation4 + $0xa2] sm:$0xff]
    %v10292 = vld [vmem:[#allocation4 + $0xb2] sm:$0xff]
    %v10293 = vld [vmem:[#allocation4 + $0xc2] sm:$0xff]
    %v10294 = vld [vmem:[#allocation4 + $0xd2] sm:$0xff]
    %v10295 = vld [vmem:[#allocation4 + $0xe2] sm:$0xff]
    %v10296 = vld [vmem:[#allocation4 + $0xf2] sm:$0xff]
    %v10297 = vld [vmem:[#allocation4 + $0x102] sm:$0xff]
    %v10298 = vld [vmem:[#allocation4 + $0x112] sm:$0xff]
    %v10299 = vld [vmem:[%s10234] sm:$0xff]
    %v10300 = vld [vmem:[%s10234 + $0x10] sm:$0xff]
    %v10301 = vld [vmem:[%s10234 + $0x20] sm:$0xff]
    %v10302 = vld [vmem:[%s10234 + $0x30] sm:$0xff]
    %v10303 = vld [vmem:[%s10234 + $0x40] sm:$0xff]
    %v10304 = vld [vmem:[%s10234 + $0x50] sm:$0xff]
    %v10305 = vld [vmem:[%s10234 + $0x60] sm:$0xff]
    %v10306 = vld [vmem:[%s10234 + $0x70] sm:$0xff]
    %v10307 = vld [vmem:[%s10234 + $0xa0] sm:$0xff]
    %v10308 = vld [vmem:[%s10234 + $0xb0] sm:$0xff]
    %v10309 = vld [vmem:[%s10234 + $0xc0] sm:$0xff]
    %v10310 = vld [vmem:[%s10234 + $0xd0] sm:$0xff]
    %v10311 = vld [vmem:[%s10234 + $0xe0] sm:$0xff]
    %v10312 = vld [vmem:[%s10234 + $0xf0] sm:$0xff]
    %v10313 = vld [vmem:[%s10234 + $0x100] sm:$0xff]
    %v10314 = vld [vmem:[%s10234 + $0x110] sm:$0xff]
    %v10315 = vld [vmem:[%s10234 + $0x1] sm:$0xff]
    %v10316 = vld [vmem:[%s10234 + $0x11] sm:$0xff]
    %v10317 = vld [vmem:[%s10234 + $0x21] sm:$0xff]
    %v10318 = vld [vmem:[%s10234 + $0x31] sm:$0xff]
    %v10319 = vld [vmem:[%s10234 + $0x41] sm:$0xff]
    %v10320 = vld [vmem:[%s10234 + $0x51] sm:$0xff]
    %v10321 = vld [vmem:[%s10234 + $0x61] sm:$0xff]
    %v10322 = vld [vmem:[%s10234 + $0x71] sm:$0xff]
    %v10323 = vld [vmem:[%s10234 + $0xa1] sm:$0xff]
    %v10324 = vld [vmem:[%s10234 + $0xb1] sm:$0xff]
    %v10325 = vld [vmem:[%s10234 + $0xc1] sm:$0xff]
    %v10326 = vld [vmem:[%s10234 + $0xd1] sm:$0xff]
    %v10327 = vld [vmem:[%s10234 + $0xe1] sm:$0xff]
    %v10328 = vld [vmem:[%s10234 + $0xf1] sm:$0xff]
    %v10329 = vld [vmem:[%s10234 + $0x101] sm:$0xff]
    %v10330 = vld [vmem:[%s10234 + $0x111] sm:$0xff]
    %v10331 = vld [vmem:[%s10234 + $0x2] sm:$0xff]
    %v10332 = vld [vmem:[%s10234 + $0x12] sm:$0xff]
    %v10333 = vld [vmem:[%s10234 + $0x22] sm:$0xff]
    %v10334 = vld [vmem:[%s10234 + $0x32] sm:$0xff]
    %v10335 = vld [vmem:[%s10234 + $0x42] sm:$0xff]
    %v10336 = vld [vmem:[%s10234 + $0x52] sm:$0xff]
    %v10337 = vld [vmem:[%s10234 + $0x62] sm:$0xff]
    %v10338 = vld [vmem:[%s10234 + $0x72] sm:$0xff]
    %v10339 = vld [vmem:[%s10234 + $0xa2] sm:$0xff]
    %v10340 = vld [vmem:[%s10234 + $0xb2] sm:$0xff]
    %v10341 = vld [vmem:[%s10234 + $0xc2] sm:$0xff]
    %v10342 = vld [vmem:[%s10234 + $0xd2] sm:$0xff]
    %v10343 = vld [vmem:[%s10234 + $0xe2] sm:$0xff]
    %v10344 = vld [vmem:[%s10234 + $0xf2] sm:$0xff]
    %v10345 = vld [vmem:[%s10234 + $0x102] sm:$0xff]
    %v10346 = vld [vmem:[%s10234 + $0x112] sm:$0xff]
    %s10347 = scalar_lea.vmem [#allocation4], 32
    %v10348 = vld [vmem:[%s10347] sm:$0xff]
    %v10349 = vld [vmem:[%s10347 + $0x10] sm:$0xff]
    %v10350 = vld [vmem:[%s10347 + $0x20] sm:$0xff]
    %v10351 = vld [vmem:[%s10347 + $0x30] sm:$0xff]
    %v10352 = vld [vmem:[%s10347 + $0x40] sm:$0xff]
    %v10353 = vld [vmem:[%s10347 + $0x50] sm:$0xff]
    %v10354 = vld [vmem:[%s10347 + $0x60] sm:$0xff]
    %v10355 = vld [vmem:[%s10347 + $0x70] sm:$0xff]
    %v10356 = vld [vmem:[%s10347 + $0xa0] sm:$0xff]
    %v10357 = vld [vmem:[%s10347 + $0xb0] sm:$0xff]
    %v10358 = vld [vmem:[%s10347 + $0xc0] sm:$0xff]
    %v10359 = vld [vmem:[%s10347 + $0xd0] sm:$0xff]
    %v10360 = vld [vmem:[%s10347 + $0xe0] sm:$0xff]
    %v10361 = vld [vmem:[%s10347 + $0xf0] sm:$0xff]
    %v10362 = vld [vmem:[%s10347 + $0x100] sm:$0xff]
    %v10363 = vld [vmem:[%s10347 + $0x110] sm:$0xff]
    %v10364 = vld [vmem:[%s10347 + $0x1] sm:$0xff]
    %v10365 = vld [vmem:[%s10347 + $0x11] sm:$0xff]
    %v10366 = vld [vmem:[%s10347 + $0x21] sm:$0xff]
    %v10367 = vld [vmem:[%s10347 + $0x31] sm:$0xff]
    %v10368 = vld [vmem:[%s10347 + $0x41] sm:$0xff]
    %v10369 = vld [vmem:[%s10347 + $0x51] sm:$0xff]
    %v10370 = vld [vmem:[%s10347 + $0x61] sm:$0xff]
    %v10371 = vld [vmem:[%s10347 + $0x71] sm:$0xff]
    %v10372 = vld [vmem:[%s10347 + $0xa1] sm:$0xff]
    %v10373 = vld [vmem:[%s10347 + $0xb1] sm:$0xff]
    %v10374 = vld [vmem:[%s10347 + $0xc1] sm:$0xff]
    %v10375 = vld [vmem:[%s10347 + $0xd1] sm:$0xff]
    %v10376 = vld [vmem:[%s10347 + $0xe1] sm:$0xff]
    %v10377 = vld [vmem:[%s10347 + $0xf1] sm:$0xff]
    %v10378 = vld [vmem:[%s10347 + $0x101] sm:$0xff]
    %v10379 = vld [vmem:[%s10347 + $0x111] sm:$0xff]
    %v10380 = vld [vmem:[%s10347 + $0x2] sm:$0xff]
    %v10381 = vld [vmem:[%s10347 + $0x12] sm:$0xff]
    %v10382 = vld [vmem:[%s10347 + $0x22] sm:$0xff]
    %v10383 = vld [vmem:[%s10347 + $0x32] sm:$0xff]
    %v10384 = vld [vmem:[%s10347 + $0x42] sm:$0xff]
    %v10385 = vld [vmem:[%s10347 + $0x52] sm:$0xff]
    %v10386 = vld [vmem:[%s10347 + $0x62] sm:$0xff]
    %v10387 = vld [vmem:[%s10347 + $0x72] sm:$0xff]
    %v10388 = vld [vmem:[%s10347 + $0xa2] sm:$0xff]
    %v10389 = vld [vmem:[%s10347 + $0xb2] sm:$0xff]
    %v10390 = vld [vmem:[%s10347 + $0xc2] sm:$0xff]
    %v10391 = vld [vmem:[%s10347 + $0xd2] sm:$0xff]
    %v10392 = vld [vmem:[%s10347 + $0xe2] sm:$0xff]
    %v10393 = vld [vmem:[%s10347 + $0xf2] sm:$0xff]
    %v10394 = vld [vmem:[%s10347 + $0x102] sm:$0xff]
    %v10395 = vld [vmem:[%s10347 + $0x112] sm:$0xff]
    %10412 = vrot.lane.b32.xlu0 %v10267, 10
    %v10413 = vpop.permute.xlu0 %10412
    %10414 = vrot.lane.b32.xlu0 %v10268, 10
    %v10415 = vpop.permute.xlu0 %10414
    %10416 = vrot.lane.b32.xlu0 %v10269, 10
    %v10417 = vpop.permute.xlu0 %10416
    %10418 = vrot.lane.b32.xlu0 %v10270, 10
    %v10419 = vpop.permute.xlu0 %10418
    %10420 = vrot.lane.b32.xlu0 %v10271, 10
    %v10421 = vpop.permute.xlu0 %10420
    %10422 = vrot.lane.b32.xlu0 %v10272, 10
    %v10423 = vpop.permute.xlu0 %10422
    %10424 = vrot.lane.b32.xlu0 %v10273, 10
    %v10425 = vpop.permute.xlu0 %10424
    %10426 = vrot.lane.b32.xlu0 %v10274, 10
    %v10427 = vpop.permute.xlu0 %10426
    %10428 = vrot.lane.b32.xlu0 %v10275, 10
    %v10429 = vpop.permute.xlu0 %10428
    %10430 = vrot.lane.b32.xlu0 %v10276, 10
    %v10431 = vpop.permute.xlu0 %10430
    %10432 = vrot.lane.b32.xlu0 %v10277, 10
    %v10433 = vpop.permute.xlu0 %10432
    %10434 = vrot.lane.b32.xlu0 %v10278, 10
    %v10435 = vpop.permute.xlu0 %10434
    %10436 = vrot.lane.b32.xlu0 %v10279, 10
    %v10437 = vpop.permute.xlu0 %10436
    %10438 = vrot.lane.b32.xlu0 %v10280, 10
    %v10439 = vpop.permute.xlu0 %10438
    %10440 = vrot.lane.b32.xlu0 %v10281, 10
    %v10441 = vpop.permute.xlu0 %10440
    %10442 = vrot.lane.b32.xlu0 %v10282, 10
    %v10443 = vpop.permute.xlu0 %10442
    %10476 = vrot.lane.b32.xlu0 %v10283, 20
    %v10477 = vpop.permute.xlu0 %10476
    %10478 = vrot.lane.b32.xlu0 %v10284, 20
    %v10479 = vpop.permute.xlu0 %10478
    %10480 = vrot.lane.b32.xlu0 %v10285, 20
    %v10481 = vpop.permute.xlu0 %10480
    %10482 = vrot.lane.b32.xlu0 %v10286, 20
    %v10483 = vpop.permute.xlu0 %10482
    %10484 = vrot.lane.b32.xlu0 %v10287, 20
    %v10485 = vpop.permute.xlu0 %10484
    %10486 = vrot.lane.b32.xlu0 %v10288, 20
    %v10487 = vpop.permute.xlu0 %10486
    %10488 = vrot.lane.b32.xlu0 %v10289, 20
    %v10489 = vpop.permute.xlu0 %10488
    %10490 = vrot.lane.b32.xlu0 %v10290, 20
    %v10491 = vpop.permute.xlu0 %10490
    %10492 = vrot.lane.b32.xlu0 %v10291, 20
    %v10493 = vpop.permute.xlu0 %10492
    %10494 = vrot.lane.b32.xlu0 %v10292, 20
    %v10495 = vpop.permute.xlu0 %10494
    %10496 = vrot.lane.b32.xlu0 %v10293, 20
    %v10497 = vpop.permute.xlu0 %10496
    %10498 = vrot.lane.b32.xlu0 %v10294, 20
    %v10499 = vpop.permute.xlu0 %10498
    %10500 = vrot.lane.b32.xlu0 %v10295, 20
    %v10501 = vpop.permute.xlu0 %10500
    %10502 = vrot.lane.b32.xlu0 %v10296, 20
    %v10503 = vpop.permute.xlu0 %10502
    %10504 = vrot.lane.b32.xlu0 %v10297, 20
    %v10505 = vpop.permute.xlu0 %10504
    %10506 = vrot.lane.b32.xlu0 %v10298, 20
    %v10507 = vpop.permute.xlu0 %10506
    %10540 = vrot.lane.b32.xlu0 %v10299, 30
    %v10541 = vpop.permute.xlu0 %10540
    %10542 = vrot.lane.b32.xlu0 %v10300, 30
    %v10543 = vpop.permute.xlu0 %10542
    %10544 = vrot.lane.b32.xlu0 %v10301, 30
    %v10545 = vpop.permute.xlu0 %10544
    %10546 = vrot.lane.b32.xlu0 %v10302, 30
    %v10547 = vpop.permute.xlu0 %10546
    %10548 = vrot.lane.b32.xlu0 %v10303, 30
    %v10549 = vpop.permute.xlu0 %10548
    %10550 = vrot.lane.b32.xlu0 %v10304, 30
    %v10551 = vpop.permute.xlu0 %10550
    %10552 = vrot.lane.b32.xlu0 %v10305, 30
    %v10553 = vpop.permute.xlu0 %10552
    %10554 = vrot.lane.b32.xlu0 %v10306, 30
    %v10555 = vpop.permute.xlu0 %10554
    %10556 = vrot.lane.b32.xlu0 %v10307, 30
    %v10557 = vpop.permute.xlu0 %10556
    %10558 = vrot.lane.b32.xlu0 %v10308, 30
    %v10559 = vpop.permute.xlu0 %10558
    %10560 = vrot.lane.b32.xlu0 %v10309, 30
    %v10561 = vpop.permute.xlu0 %10560
    %10562 = vrot.lane.b32.xlu0 %v10310, 30
    %v10563 = vpop.permute.xlu0 %10562
    %10564 = vrot.lane.b32.xlu0 %v10311, 30
    %v10565 = vpop.permute.xlu0 %10564
    %10566 = vrot.lane.b32.xlu0 %v10312, 30
    %v10567 = vpop.permute.xlu0 %10566
    %10568 = vrot.lane.b32.xlu0 %v10313, 30
    %v10569 = vpop.permute.xlu0 %10568
    %10570 = vrot.lane.b32.xlu0 %v10314, 30
    %v10571 = vpop.permute.xlu0 %10570
    %10604 = vrot.lane.b32.xlu0 %v10315, 40
    %v10605 = vpop.permute.xlu0 %10604
    %10606 = vrot.lane.b32.xlu0 %v10316, 40
    %v10607 = vpop.permute.xlu0 %10606
    %10608 = vrot.lane.b32.xlu0 %v10317, 40
    %v10609 = vpop.permute.xlu0 %10608
    %10610 = vrot.lane.b32.xlu0 %v10318, 40
    %v10611 = vpop.permute.xlu0 %10610
    %10612 = vrot.lane.b32.xlu0 %v10319, 40
    %v10613 = vpop.permute.xlu0 %10612
    %10614 = vrot.lane.b32.xlu0 %v10320, 40
    %v10615 = vpop.permute.xlu0 %10614
    %10616 = vrot.lane.b32.xlu0 %v10321, 40
    %v10617 = vpop.permute.xlu0 %10616
    %10618 = vrot.lane.b32.xlu0 %v10322, 40
    %v10619 = vpop.permute.xlu0 %10618
    %10620 = vrot.lane.b32.xlu0 %v10323, 40
    %v10621 = vpop.permute.xlu0 %10620
    %10622 = vrot.lane.b32.xlu0 %v10324, 40
    %v10623 = vpop.permute.xlu0 %10622
    %10624 = vrot.lane.b32.xlu0 %v10325, 40
    %v10625 = vpop.permute.xlu0 %10624
    %10626 = vrot.lane.b32.xlu0 %v10326, 40
    %v10627 = vpop.permute.xlu0 %10626
    %10628 = vrot.lane.b32.xlu0 %v10327, 40
    %v10629 = vpop.permute.xlu0 %10628
    %10630 = vrot.lane.b32.xlu0 %v10328, 40
    %v10631 = vpop.permute.xlu0 %10630
    %10632 = vrot.lane.b32.xlu0 %v10329, 40
    %v10633 = vpop.permute.xlu0 %10632
    %10634 = vrot.lane.b32.xlu0 %v10330, 40
    %v10635 = vpop.permute.xlu0 %10634
    %10668 = vrot.lane.b32.xlu0 %v10331, 50
    %v10669 = vpop.permute.xlu0 %10668
    %10670 = vrot.lane.b32.xlu0 %v10332, 50
    %v10671 = vpop.permute.xlu0 %10670
    %10672 = vrot.lane.b32.xlu0 %v10333, 50
    %v10673 = vpop.permute.xlu0 %10672
    %10674 = vrot.lane.b32.xlu0 %v10334, 50
    %v10675 = vpop.permute.xlu0 %10674
    %10676 = vrot.lane.b32.xlu0 %v10335, 50
    %v10677 = vpop.permute.xlu0 %10676
    %10678 = vrot.lane.b32.xlu0 %v10336, 50
    %v10679 = vpop.permute.xlu0 %10678
    %10680 = vrot.lane.b32.xlu0 %v10337, 50
    %v10681 = vpop.permute.xlu0 %10680
    %10682 = vrot.lane.b32.xlu0 %v10338, 50
    %v10683 = vpop.permute.xlu0 %10682
    %10684 = vrot.lane.b32.xlu0 %v10339, 50
    %v10685 = vpop.permute.xlu0 %10684
    %10686 = vrot.lane.b32.xlu0 %v10340, 50
    %v10687 = vpop.permute.xlu0 %10686
    %10688 = vrot.lane.b32.xlu0 %v10341, 50
    %v10689 = vpop.permute.xlu0 %10688
    %10690 = vrot.lane.b32.xlu0 %v10342, 50
    %v10691 = vpop.permute.xlu0 %10690
    %10692 = vrot.lane.b32.xlu0 %v10343, 50
    %v10693 = vpop.permute.xlu0 %10692
    %10694 = vrot.lane.b32.xlu0 %v10344, 50
    %v10695 = vpop.permute.xlu0 %10694
    %10696 = vrot.lane.b32.xlu0 %v10345, 50
    %v10697 = vpop.permute.xlu0 %10696
    %10698 = vrot.lane.b32.xlu0 %v10346, 50
    %v10699 = vpop.permute.xlu0 %10698
    %10732 = vrot.lane.b32.xlu0 %v10348, 60
    %v10733 = vpop.permute.xlu0 %10732
    %10734 = vrot.lane.b32.xlu0 %v10349, 60
    %v10735 = vpop.permute.xlu0 %10734
    %10736 = vrot.lane.b32.xlu0 %v10350, 60
    %v10737 = vpop.permute.xlu0 %10736
    %10738 = vrot.lane.b32.xlu0 %v10351, 60
    %v10739 = vpop.permute.xlu0 %10738
    %10740 = vrot.lane.b32.xlu0 %v10352, 60
    %v10741 = vpop.permute.xlu0 %10740
    %10742 = vrot.lane.b32.xlu0 %v10353, 60
    %v10743 = vpop.permute.xlu0 %10742
    %10744 = vrot.lane.b32.xlu0 %v10354, 60
    %v10745 = vpop.permute.xlu0 %10744
    %10746 = vrot.lane.b32.xlu0 %v10355, 60
    %v10747 = vpop.permute.xlu0 %10746
    %10748 = vrot.lane.b32.xlu0 %v10356, 60
    %v10749 = vpop.permute.xlu0 %10748
    %10750 = vrot.lane.b32.xlu0 %v10357, 60
    %v10751 = vpop.permute.xlu0 %10750
    %10752 = vrot.lane.b32.xlu0 %v10358, 60
    %v10753 = vpop.permute.xlu0 %10752
    %10754 = vrot.lane.b32.xlu0 %v10359, 60
    %v10755 = vpop.permute.xlu0 %10754
    %10756 = vrot.lane.b32.xlu0 %v10360, 60
    %v10757 = vpop.permute.xlu0 %10756
    %10758 = vrot.lane.b32.xlu0 %v10361, 60
    %v10759 = vpop.permute.xlu0 %10758
    %10760 = vrot.lane.b32.xlu0 %v10362, 60
    %v10761 = vpop.permute.xlu0 %10760
    %10762 = vrot.lane.b32.xlu0 %v10363, 60
    %v10763 = vpop.permute.xlu0 %10762
    %10796 = vrot.lane.b32.xlu0 %v10364, 70
    %v10797 = vpop.permute.xlu0 %10796
    %10798 = vrot.lane.b32.xlu0 %v10365, 70
    %v10799 = vpop.permute.xlu0 %10798
    %10800 = vrot.lane.b32.xlu0 %v10366, 70
    %v10801 = vpop.permute.xlu0 %10800
    %10802 = vrot.lane.b32.xlu0 %v10367, 70
    %v10803 = vpop.permute.xlu0 %10802
    %10804 = vrot.lane.b32.xlu0 %v10368, 70
    %v10805 = vpop.permute.xlu0 %10804
    %10806 = vrot.lane.b32.xlu0 %v10369, 70
    %v10807 = vpop.permute.xlu0 %10806
    %10808 = vrot.lane.b32.xlu0 %v10370, 70
    %v10809 = vpop.permute.xlu0 %10808
    %10810 = vrot.lane.b32.xlu0 %v10371, 70
    %v10811 = vpop.permute.xlu0 %10810
    %10812 = vrot.lane.b32.xlu0 %v10372, 70
    %v10813 = vpop.permute.xlu0 %10812
    %10814 = vrot.lane.b32.xlu0 %v10373, 70
    %v10815 = vpop.permute.xlu0 %10814
    %10816 = vrot.lane.b32.xlu0 %v10374, 70
    %v10817 = vpop.permute.xlu0 %10816
    %10818 = vrot.lane.b32.xlu0 %v10375, 70
    %v10819 = vpop.permute.xlu0 %10818
    %10820 = vrot.lane.b32.xlu0 %v10376, 70
    %v10821 = vpop.permute.xlu0 %10820
    %10822 = vrot.lane.b32.xlu0 %v10377, 70
    %v10823 = vpop.permute.xlu0 %10822
    %10824 = vrot.lane.b32.xlu0 %v10378, 70
    %v10825 = vpop.permute.xlu0 %10824
    %10826 = vrot.lane.b32.xlu0 %v10379, 70
    %v10827 = vpop.permute.xlu0 %10826
    %10860 = vrot.lane.b32.xlu0 %v10380, 80
    %v10861 = vpop.permute.xlu0 %10860
    %10862 = vrot.lane.b32.xlu0 %v10381, 80
    %v10863 = vpop.permute.xlu0 %10862
    %10864 = vrot.lane.b32.xlu0 %v10382, 80
    %v10865 = vpop.permute.xlu0 %10864
    %10866 = vrot.lane.b32.xlu0 %v10383, 80
    %v10867 = vpop.permute.xlu0 %10866
    %10868 = vrot.lane.b32.xlu0 %v10384, 80
    %v10869 = vpop.permute.xlu0 %10868
    %10870 = vrot.lane.b32.xlu0 %v10385, 80
    %v10871 = vpop.permute.xlu0 %10870
    %10872 = vrot.lane.b32.xlu0 %v10386, 80
    %v10873 = vpop.permute.xlu0 %10872
    %10874 = vrot.lane.b32.xlu0 %v10387, 80
    %v10875 = vpop.permute.xlu0 %10874
    %10876 = vrot.lane.b32.xlu0 %v10388, 80
    %v10877 = vpop.permute.xlu0 %10876
    %10878 = vrot.lane.b32.xlu0 %v10389, 80
    %v10879 = vpop.permute.xlu0 %10878
    %10880 = vrot.lane.b32.xlu0 %v10390, 80
    %v10881 = vpop.permute.xlu0 %10880
    %10882 = vrot.lane.b32.xlu0 %v10391, 80
    %v10883 = vpop.permute.xlu0 %10882
    %10884 = vrot.lane.b32.xlu0 %v10392, 80
    %v10885 = vpop.permute.xlu0 %10884
    %10886 = vrot.lane.b32.xlu0 %v10393, 80
    %v10887 = vpop.permute.xlu0 %10886
    %10888 = vrot.lane.b32.xlu0 %v10394, 80
    %v10889 = vpop.permute.xlu0 %10888
    %10890 = vrot.lane.b32.xlu0 %v10395, 80
    %v10891 = vpop.permute.xlu0 %10890
    %v10908 = vsel %vm9933, %v10251, %v10413
    %v10909 = vsel %vm9933, %v10252, %v10415
    %v10910 = vsel %vm9933, %v10253, %v10417
    %v10911 = vsel %vm9933, %v10254, %v10419
    %v10912 = vsel %vm9933, %v10255, %v10421
    %v10913 = vsel %vm9933, %v10256, %v10423
    %v10914 = vsel %vm9933, %v10257, %v10425
    %v10915 = vsel %vm9933, %v10258, %v10427
    %v10916 = vsel %vm9933, %v10259, %v10429
    %v10917 = vsel %vm9933, %v10260, %v10431
    %v10918 = vsel %vm9933, %v10261, %v10433
    %v10919 = vsel %vm9933, %v10262, %v10435
    %v10920 = vsel %vm9933, %v10263, %v10437
    %v10921 = vsel %vm9933, %v10264, %v10439
    %v10922 = vsel %vm9933, %v10265, %v10441
    %v10923 = vsel %vm9933, %v10266, %v10443
    %vm10924 = vcmask 162816
    %v10925 = vsel %vm10924, %v10908, %v10477
    %v10926 = vsel %vm10924, %v10909, %v10479
    %v10927 = vsel %vm10924, %v10910, %v10481
    %v10928 = vsel %vm10924, %v10911, %v10483
    %v10929 = vsel %vm10924, %v10912, %v10485
    %v10930 = vsel %vm10924, %v10913, %v10487
    %v10931 = vsel %vm10924, %v10914, %v10489
    %v10932 = vsel %vm10924, %v10915, %v10491
    %v10933 = vsel %vm10924, %v10916, %v10493
    %v10934 = vsel %vm10924, %v10917, %v10495
    %v10935 = vsel %vm10924, %v10918, %v10497
    %v10936 = vsel %vm10924, %v10919, %v10499
    %v10937 = vsel %vm10924, %v10920, %v10501
    %v10938 = vsel %vm10924, %v10921, %v10503
    %v10939 = vsel %vm10924, %v10922, %v10505
    %v10940 = vsel %vm10924, %v10923, %v10507
    %v10941 = vsel %vm6318, %v10925, %v10541
    %v10942 = vsel %vm6318, %v10926, %v10543
    %v10943 = vsel %vm6318, %v10927, %v10545
    %v10944 = vsel %vm6318, %v10928, %v10547
    %v10945 = vsel %vm6318, %v10929, %v10549
    %v10946 = vsel %vm6318, %v10930, %v10551
    %v10947 = vsel %vm6318, %v10931, %v10553
    %v10948 = vsel %vm6318, %v10932, %v10555
    %v10949 = vsel %vm6318, %v10933, %v10557
    %v10950 = vsel %vm6318, %v10934, %v10559
    %v10951 = vsel %vm6318, %v10935, %v10561
    %v10952 = vsel %vm6318, %v10936, %v10563
    %v10953 = vsel %vm6318, %v10937, %v10565
    %v10954 = vsel %vm6318, %v10938, %v10567
    %v10955 = vsel %vm6318, %v10939, %v10569
    %v10956 = vsel %vm6318, %v10940, %v10571
    %vm10957 = vcmask 326656
    %v10958 = vsel %vm10957, %v10941, %v10605
    %v10959 = vsel %vm10957, %v10942, %v10607
    %v10960 = vsel %vm10957, %v10943, %v10609
    %v10961 = vsel %vm10957, %v10944, %v10611
    %v10962 = vsel %vm10957, %v10945, %v10613
    %v10963 = vsel %vm10957, %v10946, %v10615
    %v10964 = vsel %vm10957, %v10947, %v10617
    %v10965 = vsel %vm10957, %v10948, %v10619
    %v10966 = vsel %vm10957, %v10949, %v10621
    %v10967 = vsel %vm10957, %v10950, %v10623
    %v10968 = vsel %vm10957, %v10951, %v10625
    %v10969 = vsel %vm10957, %v10952, %v10627
    %v10970 = vsel %vm10957, %v10953, %v10629
    %v10971 = vsel %vm10957, %v10954, %v10631
    %v10972 = vsel %vm10957, %v10955, %v10633
    %v10973 = vsel %vm10957, %v10956, %v10635
    %vm10974 = vcmask 408576
    %v10975 = vsel %vm10974, %v10958, %v10669
    %v10976 = vsel %vm10974, %v10959, %v10671
    %v10977 = vsel %vm10974, %v10960, %v10673
    %v10978 = vsel %vm10974, %v10961, %v10675
    %v10979 = vsel %vm10974, %v10962, %v10677
    %v10980 = vsel %vm10974, %v10963, %v10679
    %v10981 = vsel %vm10974, %v10964, %v10681
    %v10982 = vsel %vm10974, %v10965, %v10683
    %v10983 = vsel %vm10974, %v10966, %v10685
    %v10984 = vsel %vm10974, %v10967, %v10687
    %v10985 = vsel %vm10974, %v10968, %v10689
    %v10986 = vsel %vm10974, %v10969, %v10691
    %v10987 = vsel %vm10974, %v10970, %v10693
    %v10988 = vsel %vm10974, %v10971, %v10695
    %v10989 = vsel %vm10974, %v10972, %v10697
    %v10990 = vsel %vm10974, %v10973, %v10699
    %vm10991 = vcmask 490496
    %v10992 = vsel %vm10991, %v10975, %v10733
    %v10993 = vsel %vm10991, %v10976, %v10735
    %v10994 = vsel %vm10991, %v10977, %v10737
    %v10995 = vsel %vm10991, %v10978, %v10739
    %v10996 = vsel %vm10991, %v10979, %v10741
    %v10997 = vsel %vm10991, %v10980, %v10743
    %v10998 = vsel %vm10991, %v10981, %v10745
    %v10999 = vsel %vm10991, %v10982, %v10747
    %v11000 = vsel %vm10991, %v10983, %v10749
    %v11001 = vsel %vm10991, %v10984, %v10751
    %v11002 = vsel %vm10991, %v10985, %v10753
    %v11003 = vsel %vm10991, %v10986, %v10755
    %v11004 = vsel %vm10991, %v10987, %v10757
    %v11005 = vsel %vm10991, %v10988, %v10759
    %v11006 = vsel %vm10991, %v10989, %v10761
    %v11007 = vsel %vm10991, %v10990, %v10763
    %vm11008 = vcmask 572416
    %v11009 = vsel %vm11008, %v10992, %v10797
    %v11010 = vsel %vm11008, %v10993, %v10799
    %v11011 = vsel %vm11008, %v10994, %v10801
    %v11012 = vsel %vm11008, %v10995, %v10803
    %v11013 = vsel %vm11008, %v10996, %v10805
    %v11014 = vsel %vm11008, %v10997, %v10807
    %v11015 = vsel %vm11008, %v10998, %v10809
    %v11016 = vsel %vm11008, %v10999, %v10811
    %v11017 = vsel %vm11008, %v11000, %v10813
    %v11018 = vsel %vm11008, %v11001, %v10815
    %v11019 = vsel %vm11008, %v11002, %v10817
    %v11020 = vsel %vm11008, %v11003, %v10819
    %v11021 = vsel %vm11008, %v11004, %v10821
    %v11022 = vsel %vm11008, %v11005, %v10823
    %v11023 = vsel %vm11008, %v11006, %v10825
    %v11024 = vsel %vm11008, %v11007, %v10827
    %vm11025 = vcmask 654336
    %v11026 = vsel %vm11025, %v11009, %v10861
    %v11027 = vsel %vm11025, %v11010, %v10863
    %v11028 = vsel %vm11025, %v11011, %v10865
    %v11029 = vsel %vm11025, %v11012, %v10867
    %v11030 = vsel %vm11025, %v11013, %v10869
    %v11031 = vsel %vm11025, %v11014, %v10871
    %v11032 = vsel %vm11025, %v11015, %v10873
    %v11033 = vsel %vm11025, %v11016, %v10875
    %v11034 = vsel %vm11025, %v11017, %v10877
    %v11035 = vsel %vm11025, %v11018, %v10879
    %v11036 = vsel %vm11025, %v11019, %v10881
    %v11037 = vsel %vm11025, %v11020, %v10883
    %v11038 = vsel %vm11025, %v11021, %v10885
    %v11039 = vsel %vm11025, %v11022, %v10887
    %v11040 = vsel %vm11025, %v11023, %v10889
    %v11041 = vsel %vm11025, %v11024, %v10891
    %v11042 = vpack.c.bf16 %v11027, %v11026
    %v11043 = vpack.c.bf16 %v11029, %v11028
    %v11044 = vpack.c.bf16 %v11031, %v11030
    %v11045 = vpack.c.bf16 %v11033, %v11032
    %v11046 = vpack.c.bf16 %v11035, %v11034
    %v11047 = vpack.c.bf16 %v11037, %v11036
    %v11048 = vpack.c.bf16 %v11039, %v11038
    %v11049 = vpack.c.bf16 %v11041, %v11040
    %v11050 = vld [vmem:[%s4] sm:$0xf]
    %v11051 = vld [vmem:[%s4 + $0x4] sm:$0xf]
    %v11052 = vld [vmem:[%s4 + $0x8] sm:$0xf]
    %v11053 = vld [vmem:[%s4 + $0xc] sm:$0xf]
    %v11054 = vld [vmem:[%s4 + $0x10] sm:$0xf]
    %v11055 = vld [vmem:[%s4 + $0x14] sm:$0xf]
    %v11056 = vld [vmem:[%s4 + $0x18] sm:$0xf]
    %v11057 = vld [vmem:[%s4 + $0x1c] sm:$0xf]
    %v11058 = vld [vmem:[%s4 + $0x20] sm:$0xf]
    %v11059 = vld [vmem:[%s4 + $0x24] sm:$0xf]
    %v11060 = vld [vmem:[%s4 + $0x28] sm:$0xf]
    %v11061 = vld [vmem:[%s4 + $0x2c] sm:$0x1]
    %v11074 = vunpack.c.l.b16 %v11050
    %v11075 = vunpack.c.l.b16 %v11051
    %v11076 = vunpack.c.l.b16 %v11052
    %v11077 = vunpack.c.l.b16 %v11053
    %v11078 = vunpack.c.l.b16 %v11054
    %v11079 = vunpack.c.l.b16 %v11055
    %v11080 = vunpack.c.l.b16 %v11056
    %v11081 = vunpack.c.l.b16 %v11057
    %v11082 = vunpack.c.l.b16 %v11058
    %v11083 = vunpack.c.l.b16 %v11059
    %v11084 = vunpack.c.l.b16 %v11060
    %v11085 = vunpack.c.l.b16 %v11061
    %v11086 = vpack.c.b16 %v11075, %v11074
    %v11087 = vpack.c.b16 %v11077, %v11076
    %v11088 = vpack.c.b16 %v11079, %v11078
    %v11089 = vpack.c.b16 %v11081, %v11080
    %v11090 = vpack.c.b16 %v11083, %v11082
    %v11091 = vpack.c.b16 %v11085, %v11084
    %vm11097 = vcmask 736256
    %v11099 = vsel %vm11097, %v11042, 0
    %v11102 = vsel %vm11097, %v11043, 0
    %v11105 = vsel %vm11097, %v11044, 0
    %v11108 = vsel %vm11097, %v11045, 0
    %v11111 = vsel %vm11097, %v11046, 0
    %v11114 = vsel %vm11097, %v11047, 0
    %v11117 = vsel %vm11097, %v11048, 0
    %v11120 = vsel %vm11097, %v11049, 0
    %v11123 = vsel %vm9757, %v11091, 0
    %11125 = vmatpush.bf16.msra.mxu0 0
    %11126 = vmatpush.bf16.msra.mxu0 0
    %11127 = vmatpush.bf16.msra.mxu0 %v11123
    %11128 = vmatpush.bf16.msra.mxu0 %v11090
    %11129 = vmatpush.bf16.msra.mxu0 %v11089
    %11130 = vmatpush.bf16.msra.mxu0 %v11088
    %11131 = vmatpush.bf16.msra.mxu0 %v11087
    %11132 = vmatpush.bf16.msra.mxu0 %v11086
    %11133 = vmatmul.bf16.gmra.mxu0 %v11099
    %v11134 = vpop.f32.mrf.mxu0
    %v11135 = vadd.f32 0.0, %v11134
    %v11136 = vpop.f32.mrf.mxu0
    %v11137 = vadd.f32 0.0, %v11136
    %11138 = vmatmul.bf16.gmra.mxu0 %v11102
    %v11139 = vpop.f32.mrf.mxu0
    %v11140 = vadd.f32 0.0, %v11139
    %v11141 = vpop.f32.mrf.mxu0
    %v11142 = vadd.f32 0.0, %v11141
    %11143 = vmatmul.bf16.gmra.mxu0 %v11105
    %v11144 = vpop.f32.mrf.mxu0
    %v11145 = vadd.f32 0.0, %v11144
    %v11146 = vpop.f32.mrf.mxu0
    %v11147 = vadd.f32 0.0, %v11146
    %11148 = vmatmul.bf16.gmra.mxu0 %v11108
    %v11149 = vpop.f32.mrf.mxu0
    %v11150 = vadd.f32 0.0, %v11149
    %v11151 = vpop.f32.mrf.mxu0
    %v11152 = vadd.f32 0.0, %v11151
    %11153 = vmatmul.bf16.gmra.mxu0 %v11111
    %v11154 = vpop.f32.mrf.mxu0
    %v11155 = vadd.f32 0.0, %v11154
    %v11156 = vpop.f32.mrf.mxu0
    %v11157 = vadd.f32 0.0, %v11156
    %11158 = vmatmul.bf16.gmra.mxu0 %v11114
    %v11159 = vpop.f32.mrf.mxu0
    %v11160 = vadd.f32 0.0, %v11159
    %v11161 = vpop.f32.mrf.mxu0
    %v11162 = vadd.f32 0.0, %v11161
    %11163 = vmatmul.bf16.gmra.mxu0 %v11117
    %v11164 = vpop.f32.mrf.mxu0
    %v11165 = vadd.f32 0.0, %v11164
    %v11166 = vpop.f32.mrf.mxu0
    %v11167 = vadd.f32 0.0, %v11166
    %11168 = vmatmul.bf16.gmra.mxu0 %v11120
    %v11169 = vpop.f32.mrf.mxu0
    %v11170 = vadd.f32 0.0, %v11169
    %v11171 = vpop.f32.mrf.mxu0
    %v11172 = vadd.f32 0.0, %v11171
    %11173 = vdwg.mxu0
    %11174 = vst.msk [vmem:[#allocation5] sm:$0xff] %vm10924, %v11135
    %11175 = vst.msk [vmem:[#allocation5 + $0x8] sm:$0xff] %vm10924, %v11137
    %11176 = vst.msk [vmem:[#allocation5 + $0x10] sm:$0xff] %vm10924, %v11140
    %11177 = vst.msk [vmem:[#allocation5 + $0x18] sm:$0xff] %vm10924, %v11142
    %11178 = vst.msk [vmem:[#allocation5 + $0x20] sm:$0xff] %vm10924, %v11145
    %11179 = vst.msk [vmem:[#allocation5 + $0x28] sm:$0xff] %vm10924, %v11147
    %11180 = vst.msk [vmem:[#allocation5 + $0x30] sm:$0xff] %vm10924, %v11150
    %11181 = vst.msk [vmem:[#allocation5 + $0x38] sm:$0xff] %vm10924, %v11152
    %11182 = vst.msk [vmem:[#allocation5 + $0x40] sm:$0xff] %vm10924, %v11155
    %11183 = vst.msk [vmem:[#allocation5 + $0x48] sm:$0xff] %vm10924, %v11157
    %11184 = vst.msk [vmem:[#allocation5 + $0x50] sm:$0xff] %vm10924, %v11160
    %11185 = vst.msk [vmem:[#allocation5 + $0x58] sm:$0xff] %vm10924, %v11162
    %11186 = vst.msk [vmem:[#allocation5 + $0x60] sm:$0xff] %vm10924, %v11165
    %11187 = vst.msk [vmem:[#allocation5 + $0x68] sm:$0xff] %vm10924, %v11167
    %11188 = vst.msk [vmem:[#allocation5 + $0x70] sm:$0xff] %vm10924, %v11170
    %11189 = vst.msk [vmem:[#allocation5 + $0x78] sm:$0xff] %vm10924, %v11172
    %v11190 = vld [vmem:[#allocation5] ss:$2 sm:$0xf]
    %s11191 = scalar_lea.vmem [#allocation5], 16
    %v11192 = vld [vmem:[%s11191] ss:$2 sm:$0xf]
    %s11193 = scalar_lea.vmem [#allocation5], 32
    %v11194 = vld [vmem:[%s11193] ss:$2 sm:$0xf]
    %s11195 = scalar_lea.vmem [#allocation5], 48
    %v11196 = vld [vmem:[%s11195] ss:$2 sm:$0xf]
    %s11197 = scalar_lea.vmem [#allocation5], 64
    %v11198 = vld [vmem:[%s11197] ss:$2 sm:$0xf]
    %s11199 = scalar_lea.vmem [#allocation5], 80
    %v11200 = vld [vmem:[%s11199] ss:$2 sm:$0xf]
    %s11201 = scalar_lea.vmem [#allocation5], 96
    %v11202 = vld [vmem:[%s11201] ss:$2 sm:$0xf]
    %s11203 = scalar_lea.vmem [#allocation5], 112
    %v11204 = vld [vmem:[%s11203] ss:$2 sm:$0xf]
    %s11205 = scalar_lea.vmem [#allocation5], 1
    %v11206 = vld [vmem:[%s11205] ss:$2 sm:$0xf]
    %s11207 = scalar_lea.vmem [#allocation5], 17
    %v11208 = vld [vmem:[%s11207] ss:$2 sm:$0xf]
    %s11209 = scalar_lea.vmem [#allocation5], 33
    %v11210 = vld [vmem:[%s11209] ss:$2 sm:$0xf]
    %s11211 = scalar_lea.vmem [#allocation5], 49
    %v11212 = vld [vmem:[%s11211] ss:$2 sm:$0xf]
    %s11213 = scalar_lea.vmem [#allocation5], 65
    %v11214 = vld [vmem:[%s11213] ss:$2 sm:$0xf]
    %s11215 = scalar_lea.vmem [#allocation5], 81
    %v11216 = vld [vmem:[%s11215] ss:$2 sm:$0xf]
    %s11217 = scalar_lea.vmem [#allocation5], 97
    %v11218 = vld [vmem:[%s11217] ss:$2 sm:$0xf]
    %s11219 = scalar_lea.vmem [#allocation5], 113
    %v11220 = vld [vmem:[%s11219] ss:$2 sm:$0xf]
    %v11221 = vmax.f32 %v11190, %v11206
    %v11222 = vmax.f32 %v11192, %v11208
    %v11223 = vmax.f32 %v11194, %v11210
    %v11224 = vmax.f32 %v11196, %v11212
    %v11225 = vmax.f32 %v11198, %v11214
    %v11226 = vmax.f32 %v11200, %v11216
    %v11227 = vmax.f32 %v11202, %v11218
    %v11228 = vmax.f32 %v11204, %v11220
    %s11229 = scalar_lea.vmem [#allocation5], 8
    %v11230 = vld [vmem:[%s11229] ss:$2 sm:$0xf]
    %s11231 = scalar_lea.vmem %s11229, 16 [#allocation5]
    %v11232 = vld [vmem:[%s11231] ss:$2 sm:$0xf]
    %s11233 = scalar_lea.vmem %s11229, 32 [#allocation5]
    %v11234 = vld [vmem:[%s11233] ss:$2 sm:$0xf]
    %s11235 = scalar_lea.vmem %s11229, 48 [#allocation5]
    %v11236 = vld [vmem:[%s11235] ss:$2 sm:$0xf]
    %s11237 = scalar_lea.vmem %s11229, 64 [#allocation5]
    %v11238 = vld [vmem:[%s11237] ss:$2 sm:$0xf]
    %s11239 = scalar_lea.vmem %s11229, 80 [#allocation5]
    %v11240 = vld [vmem:[%s11239] ss:$2 sm:$0xf]
    %s11241 = scalar_lea.vmem %s11229, 96 [#allocation5]
    %v11242 = vld [vmem:[%s11241] ss:$2 sm:$0xf]
    %s11243 = scalar_lea.vmem %s11229, 112 [#allocation5]
    %v11244 = vld [vmem:[%s11243] ss:$2 sm:$0xf]
    %v11245 = vmax.f32 %v11221, %v11230
    %v11246 = vmax.f32 %v11222, %v11232
    %v11247 = vmax.f32 %v11223, %v11234
    %v11248 = vmax.f32 %v11224, %v11236
    %v11249 = vmax.f32 %v11225, %v11238
    %v11250 = vmax.f32 %v11226, %v11240
    %v11251 = vmax.f32 %v11227, %v11242
    %v11252 = vmax.f32 %v11228, %v11244
    %s11253 = scalar_lea.vmem %s11229, 1 [#allocation5]
    %v11254 = vld [vmem:[%s11253] ss:$2 sm:$0xf]
    %s11255 = scalar_lea.vmem %s11229, 17 [#allocation5]
    %v11256 = vld [vmem:[%s11255] ss:$2 sm:$0xf]
    %s11257 = scalar_lea.vmem %s11229, 33 [#allocation5]
    %v11258 = vld [vmem:[%s11257] ss:$2 sm:$0xf]
    %s11259 = scalar_lea.vmem %s11229, 49 [#allocation5]
    %v11260 = vld [vmem:[%s11259] ss:$2 sm:$0xf]
    %s11261 = scalar_lea.vmem %s11229, 65 [#allocation5]
    %v11262 = vld [vmem:[%s11261] ss:$2 sm:$0xf]
    %s11263 = scalar_lea.vmem %s11229, 81 [#allocation5]
    %v11264 = vld [vmem:[%s11263] ss:$2 sm:$0xf]
    %s11265 = scalar_lea.vmem %s11229, 97 [#allocation5]
    %v11266 = vld [vmem:[%s11265] ss:$2 sm:$0xf]
    %s11267 = scalar_lea.vmem %s11229, 113 [#allocation5]
    %v11268 = vld [vmem:[%s11267] ss:$2 sm:$0xf]
    %v11269 = vmax.f32 %v11245, %v11254
    %v11270 = vmax.f32 %v11246, %v11256
    %v11271 = vmax.f32 %v11247, %v11258
    %v11272 = vmax.f32 %v11248, %v11260
    %v11273 = vmax.f32 %v11249, %v11262
    %v11274 = vmax.f32 %v11250, %v11264
    %v11275 = vmax.f32 %v11251, %v11266
    %v11276 = vmax.f32 %v11252, %v11268
    %v11277 = vld [vmem:[%s5] sm:$0x1]
    %v11279 = vperm.slane %v11277, 0
    %v11281 = vadd.f32 %v11269, %v11279
    %v11282 = vadd.f32 %v11270, %v11279
    %v11283 = vadd.f32 %v11271, %v11279
    %v11284 = vadd.f32 %v11272, %v11279
    %v11285 = vadd.f32 %v11273, %v11279
    %v11286 = vadd.f32 %v11274, %v11279
    %v11287 = vadd.f32 %v11275, %v11279
    %v11288 = vadd.f32 %v11276, %v11279
    %v11289 = vmax.f32 %v11281, 0.0
    %v11290 = vmax.f32 %v11282, 0.0
    %v11291 = vmax.f32 %v11283, 0.0
    %v11292 = vmax.f32 %v11284, 0.0
    %v11293 = vmax.f32 %v11285, 0.0
    %v11294 = vmax.f32 %v11286, 0.0
    %v11295 = vmax.f32 %v11287, 0.0
    %v11296 = vmax.f32 %v11288, 0.0
    %vm11297 = vcmask 158720
    %11298 = vst.msk [vmem:[#allocation6] sm:$0xf] %vm11297, %v11289
    %11299 = vst.msk [vmem:[#allocation6 + $0x4] sm:$0xf] %vm11297, %v11290
    %11300 = vst.msk [vmem:[#allocation6 + $0x8] sm:$0xf] %vm11297, %v11291
    %11301 = vst.msk [vmem:[#allocation6 + $0xc] sm:$0xf] %vm11297, %v11292
    %11302 = vst.msk [vmem:[#allocation6 + $0x10] sm:$0xf] %vm11297, %v11293
    %11303 = vst.msk [vmem:[#allocation6 + $0x14] sm:$0xf] %vm11297, %v11294
    %11304 = vst.msk [vmem:[#allocation6 + $0x18] sm:$0xf] %vm11297, %v11295
    %11305 = vst.msk [vmem:[#allocation6 + $0x1c] sm:$0xf] %vm11297, %v11296
    %v11306 = vld [vmem:[#allocation6] sm:$0x1]
    %v11307 = vld [vmem:[#allocation6 + $0x10] sm:$0x1]
    %v11308 = vld [vmem:[#allocation6 + $0x1] sm:$0x1]
    %v11309 = vld [vmem:[#allocation6 + $0x11] sm:$0x1]
    %v11310 = vld [vmem:[#allocation6 + $0x2] sm:$0x1]
    %v11311 = vld [vmem:[#allocation6 + $0x12] sm:$0x1]
    %v11312 = vld [vmem:[#allocation6 + $0x3] sm:$0x1]
    %v11313 = vld [vmem:[#allocation6 + $0x13] sm:$0x1]
    %s11314 = scalar_lea.vmem [#allocation6], 4
    %v11315 = vld [vmem:[%s11314] sm:$0x1]
    %v11316 = vld [vmem:[%s11314 + $0x10] sm:$0x1]
    %v11317 = vld [vmem:[%s11314 + $0x1] sm:$0x1]
    %v11318 = vld [vmem:[%s11314 + $0x11] sm:$0x1]
    %v11319 = vld [vmem:[%s11314 + $0x2] sm:$0x1]
    %v11320 = vld [vmem:[%s11314 + $0x12] sm:$0x1]
    %v11321 = vld [vmem:[%s11314 + $0x3] sm:$0x1]
    %v11322 = vld [vmem:[%s11314 + $0x13] sm:$0x1]
    %s11323 = scalar_lea.vmem [#allocation6], 8
    %v11324 = vld [vmem:[%s11323] sm:$0x1]
    %v11325 = vld [vmem:[%s11323 + $0x10] sm:$0x1]
    %v11326 = vld [vmem:[%s11323 + $0x1] sm:$0x1]
    %v11327 = vld [vmem:[%s11323 + $0x11] sm:$0x1]
    %v11328 = vld [vmem:[%s11323 + $0x2] sm:$0x1]
    %v11329 = vld [vmem:[%s11323 + $0x12] sm:$0x1]
    %v11330 = vld [vmem:[%s11323 + $0x3] sm:$0x1]
    %v11331 = vld [vmem:[%s11323 + $0x13] sm:$0x1]
    %s11332 = scalar_lea.vmem [#allocation6], 12
    %v11333 = vld [vmem:[%s11332] sm:$0x1]
    %v11334 = vld [vmem:[%s11332 + $0x10] sm:$0x1]
    %v11335 = vld [vmem:[%s11332 + $0x1] sm:$0x1]
    %v11336 = vld [vmem:[%s11332 + $0x11] sm:$0x1]
    %v11337 = vld [vmem:[%s11332 + $0x2] sm:$0x1]
    %v11338 = vld [vmem:[%s11332 + $0x12] sm:$0x1]
    %v11339 = vld [vmem:[%s11332 + $0x3] sm:$0x1]
    %v11340 = vld [vmem:[%s11332 + $0x13] sm:$0x1]
    %v11343 = vrot.slane %v11307, 7
    %vm11344 = vcmask 1041409
    %v11345 = vsel %vm11344, %v11343, %v11306
    %v11349 = vrot.slane %v11309, 7
    %v11350 = vsel %vm11344, %v11349, %v11308
    %11351 = vrot.lane.b32.xlu0 %v11350, 20
    %v11352 = vpop.permute.xlu0 %11351
    %v11356 = vrot.slane %v11311, 7
    %v11357 = vsel %vm11344, %v11356, %v11310
    %11358 = vrot.lane.b32.xlu0 %v11357, 40
    %v11359 = vpop.permute.xlu0 %11358
    %v11363 = vrot.slane %v11313, 7
    %v11364 = vsel %vm11344, %v11363, %v11312
    %11365 = vrot.lane.b32.xlu0 %v11364, 60
    %v11366 = vpop.permute.xlu0 %11365
    %v11370 = vrot.slane %v11316, 7
    %v11371 = vsel %vm11344, %v11370, %v11315
    %11372 = vrot.lane.b32.xlu0 %v11371, 80
    %v11373 = vpop.permute.xlu0 %11372
    %v11377 = vrot.slane %v11318, 7
    %v11378 = vsel %vm11344, %v11377, %v11317
    %11379 = vrot.lane.b32.xlu0 %v11378, 100
    %v11380 = vpop.permute.xlu0 %11379
    %v11384 = vrot.slane %v11320, 7
    %v11385 = vsel %vm11344, %v11384, %v11319
    %11386 = vrot.lane.b32.xlu0 %v11385, 120
    %v11387 = vpop.permute.xlu0 %11386
    %v11391 = vrot.slane %v11322, 7
    %v11392 = vsel %vm11344, %v11391, %v11321
    %11393 = vrot.lane.b32.xlu0 %v11392, 12
    %v11394 = vpop.permute.xlu0 %11393
    %v11398 = vrot.slane %v11325, 7
    %v11399 = vsel %vm11344, %v11398, %v11324
    %11400 = vrot.lane.b32.xlu0 %v11399, 32
    %v11401 = vpop.permute.xlu0 %11400
    %v11405 = vrot.slane %v11327, 7
    %v11406 = vsel %vm11344, %v11405, %v11326
    %11407 = vrot.lane.b32.xlu0 %v11406, 52
    %v11408 = vpop.permute.xlu0 %11407
    %v11412 = vrot.slane %v11329, 7
    %v11413 = vsel %vm11344, %v11412, %v11328
    %11414 = vrot.lane.b32.xlu0 %v11413, 72
    %v11415 = vpop.permute.xlu0 %11414
    %v11419 = vrot.slane %v11331, 7
    %v11420 = vsel %vm11344, %v11419, %v11330
    %11421 = vrot.lane.b32.xlu0 %v11420, 92
    %v11422 = vpop.permute.xlu0 %11421
    %v11426 = vrot.slane %v11334, 7
    %v11427 = vsel %vm11344, %v11426, %v11333
    %11428 = vrot.lane.b32.xlu0 %v11427, 112
    %v11429 = vpop.permute.xlu0 %11428
    %v11433 = vrot.slane %v11336, 7
    %v11434 = vsel %vm11344, %v11433, %v11335
    %11435 = vrot.lane.b32.xlu0 %v11434, 4
    %v11436 = vpop.permute.xlu0 %11435
    %v11440 = vrot.slane %v11338, 7
    %v11441 = vsel %vm11344, %v11440, %v11337
    %11442 = vrot.lane.b32.xlu0 %v11441, 24
    %v11443 = vpop.permute.xlu0 %11442
    %v11447 = vrot.slane %v11340, 7
    %v11448 = vsel %vm11344, %v11447, %v11339
    %11449 = vrot.lane.b32.xlu0 %v11448, 44
    %v11450 = vpop.permute.xlu0 %11449
    %v11452 = vsel %vm10924, %v11345, %v11352
    %v11453 = vsel %vm10957, %v11452, %v11359
    %v11454 = vsel %vm10991, %v11453, %v11366
    %v11455 = vsel %vm11025, %v11454, %v11373
    %vm11456 = vcmask 818176
    %v11457 = vsel %vm11456, %v11455, %v11380
    %vm11458 = vcmask 982016
    %v11459 = vsel %vm11458, %v11457, %v11387
    %v11460 = vsel %vm5928, %v11387, %v11394
    %vm11461 = vcmask 261120
    %v11462 = vsel %vm11461, %v11460, %v11401
    %vm11463 = vcmask 424960
    %v11464 = vsel %vm11463, %v11462, %v11408
    %vm11465 = vcmask 588800
    %v11466 = vsel %vm11465, %v11464, %v11415
    %vm11467 = vcmask 752640
    %v11468 = vsel %vm11467, %v11466, %v11422
    %vm11469 = vcmask 916480
    %v11470 = vsel %vm11469, %v11468, %v11429
    %vm11471 = vcmask 31744
    %v11472 = vsel %vm11471, %v11429, %v11436
    %v11473 = vsel %vm6188, %v11472, %v11443
    %vm11474 = vcmask 359424
    %v11475 = vsel %vm11474, %v11473, %v11450
    %v11476 = vpack.c.bf16 %v11459, %v11459
    %v11477 = vpack.c.bf16 %v11470, %v11470
    %v11478 = vpack.c.bf16 %v11475, %v11475
    %v11479 = vld [vmem:[%s6] sm:$0xff]
    %v11480 = vld [vmem:[%s6 + $0x8] sm:$0xff]
    %v11481 = vld [vmem:[%s6 + $0x10] sm:$0xff]
    %v11482 = vld [vmem:[%s6 + $0x18] sm:$0xff]
    %v11483 = vld [vmem:[%s6 + $0x20] sm:$0xff]
    %v11484 = vld [vmem:[%s6 + $0x28] sm:$0xff]
    %v11485 = vld [vmem:[%s6 + $0x30] sm:$0xff]
    %v11486 = vld [vmem:[%s6 + $0x38] sm:$0xff]
    %v11487 = vld [vmem:[%s6 + $0x40] sm:$0xff]
    %v11488 = vld [vmem:[%s6 + $0x48] sm:$0xff]
    %v11489 = vld [vmem:[%s6 + $0x50] sm:$0xff]
    %v11490 = vld [vmem:[%s6 + $0x58] sm:$0xff]
    %v11491 = vld [vmem:[%s6 + $0x60] sm:$0xff]
    %v11492 = vld [vmem:[%s6 + $0x68] sm:$0xff]
    %v11493 = vld [vmem:[%s6 + $0x70] sm:$0xff]
    %v11494 = vld [vmem:[%s6 + $0x78] sm:$0xff]
    %v11495 = vld [vmem:[%s6 + $0x80] sm:$0xff]
    %v11496 = vld [vmem:[%s6 + $0x88] sm:$0xff]
    %v11497 = vld [vmem:[%s6 + $0x90] sm:$0xff]
    %v11498 = vld [vmem:[%s6 + $0x98] sm:$0xff]
    %v11499 = vld [vmem:[%s6 + $0xa0] sm:$0xff]
    %v11500 = vld [vmem:[%s6 + $0xa8] sm:$0xff]
    %v11501 = vld [vmem:[%s6 + $0xb0] sm:$0xff]
    %v11502 = vld [vmem:[%s6 + $0xb8] sm:$0xff]
    %v11503 = vld [vmem:[%s6 + $0xc0] sm:$0xff]
    %v11504 = vld [vmem:[%s6 + $0xc8] sm:$0xff]
    %v11505 = vld [vmem:[%s6 + $0xd0] sm:$0xff]
    %v11506 = vld [vmem:[%s6 + $0xd8] sm:$0xff]
    %v11507 = vld [vmem:[%s6 + $0xe0] sm:$0xff]
    %v11508 = vld [vmem:[%s6 + $0xe8] sm:$0xff]
    %v11509 = vld [vmem:[%s6 + $0xf0] sm:$0xff]
    %v11510 = vld [vmem:[%s6 + $0xf8] sm:$0xff]
    %v11511 = vld [vmem:[%s6 + $0x100] sm:$0xff]
    %v11512 = vld [vmem:[%s6 + $0x108] sm:$0xff]
    %v11513 = vld [vmem:[%s6 + $0x110] sm:$0xff]
    %v11514 = vld [vmem:[%s6 + $0x118] sm:$0xff]
    %v11515 = vld [vmem:[%s6 + $0x120] sm:$0xff]
    %v11516 = vld [vmem:[%s6 + $0x128] sm:$0xff]
    %v11517 = vld [vmem:[%s6 + $0x130] sm:$0xff]
    %v11518 = vld [vmem:[%s6 + $0x138] sm:$0xff]
    %v11519 = vld [vmem:[%s1] sm:$0x3]
    %v11520 = vpack.c.bf16 %v11519, %v11519
    %v11521 = vld [vmem:[%s7] sm:$0xff]
    %v11523 = vunpack.c.l.b16 %v11521
    %v11524 = vunpack.c.h.b16 %v11521
    %v11525 = vpack.c.b16 %v11523, %v11523
    %v11526 = vpack.c.b16 %v11524, %v11524
    %vm11527 = vcmask 64512
    %v11529 = vsel %vm11527, %v11520, 0
    %vm11531 = vcmask 1043456
    %v11533 = vsel %vm11531, %v11525, 0
    %v11536 = vsel %vm11531, %v11526, 0
    %11538 = vmatpush.bf16.msra.mxu0 0
    %11539 = vmatpush.bf16.msra.mxu0 0
    %11540 = vmatpush.bf16.msra.mxu0 0
    %11541 = vmatpush.bf16.msra.mxu0 0
    %11542 = vmatpush.bf16.msra.mxu0 0
    %11543 = vmatpush.bf16.msra.mxu0 0
    %11544 = vmatpush.bf16.msra.mxu0 0
    %11545 = vmatpush.bf16.msra.mxu0 %v11533
    %11546 = vmatmul.bf16.gmra.mxu0 %v11529
    %v11547 = vpop.f32.mrf.mxu0
    %v11548 = vadd.f32 0.0, %v11547
    %v11549 = vpop.f32.mrf.mxu0
    %11550 = vdwg.mxu0
    %11551 = vmatpush.bf16.msra.mxu0 0
    %11552 = vmatpush.bf16.msra.mxu0 0
    %11553 = vmatpush.bf16.msra.mxu0 0
    %11554 = vmatpush.bf16.msra.mxu0 0
    %11555 = vmatpush.bf16.msra.mxu0 0
    %11556 = vmatpush.bf16.msra.mxu0 0
    %11557 = vmatpush.bf16.msra.mxu0 0
    %11558 = vmatpush.bf16.msra.mxu0 %v11536
    %11559 = vmatmul.bf16.gmra.mxu0 %v11529
    %v11560 = vpop.f32.mrf.mxu0
    %v11561 = vadd.f32 0.0, %v11560
    %v11562 = vpop.f32.mrf.mxu0
    %11563 = vdwg.mxu0
    %v11604 = vunpack.c.l.b16 %v11479
    %v11605 = vunpack.c.h.b16 %v11479
    %v11606 = vunpack.c.l.b16 %v11480
    %v11607 = vunpack.c.h.b16 %v11480
    %v11608 = vunpack.c.l.b16 %v11481
    %v11609 = vunpack.c.h.b16 %v11481
    %v11610 = vunpack.c.l.b16 %v11482
    %v11611 = vunpack.c.h.b16 %v11482
    %v11612 = vunpack.c.l.b16 %v11483
    %v11613 = vunpack.c.h.b16 %v11483
    %v11614 = vunpack.c.l.b16 %v11484
    %v11615 = vunpack.c.h.b16 %v11484
    %v11616 = vunpack.c.l.b16 %v11485
    %v11617 = vunpack.c.h.b16 %v11485
    %v11618 = vunpack.c.l.b16 %v11486
    %v11619 = vunpack.c.h.b16 %v11486
    %v11620 = vunpack.c.l.b16 %v11487
    %v11621 = vunpack.c.h.b16 %v11487
    %v11622 = vunpack.c.l.b16 %v11488
    %v11623 = vunpack.c.h.b16 %v11488
    %v11624 = vunpack.c.l.b16 %v11489
    %v11625 = vunpack.c.h.b16 %v11489
    %v11626 = vunpack.c.l.b16 %v11490
    %v11627 = vunpack.c.h.b16 %v11490
    %v11628 = vunpack.c.l.b16 %v11491
    %v11629 = vunpack.c.h.b16 %v11491
    %v11630 = vunpack.c.l.b16 %v11492
    %v11631 = vunpack.c.h.b16 %v11492
    %v11632 = vunpack.c.l.b16 %v11493
    %v11633 = vunpack.c.h.b16 %v11493
    %v11634 = vunpack.c.l.b16 %v11494
    %v11635 = vunpack.c.h.b16 %v11494
    %v11636 = vunpack.c.l.b16 %v11495
    %v11637 = vunpack.c.h.b16 %v11495
    %v11638 = vunpack.c.l.b16 %v11496
    %v11639 = vunpack.c.h.b16 %v11496
    %v11640 = vunpack.c.l.b16 %v11497
    %v11641 = vunpack.c.h.b16 %v11497
    %v11642 = vunpack.c.l.b16 %v11498
    %v11643 = vunpack.c.h.b16 %v11498
    %v11644 = vunpack.c.l.b16 %v11499
    %v11645 = vunpack.c.h.b16 %v11499
    %v11646 = vunpack.c.l.b16 %v11500
    %v11647 = vunpack.c.h.b16 %v11500
    %v11648 = vunpack.c.l.b16 %v11501
    %v11649 = vunpack.c.h.b16 %v11501
    %v11650 = vunpack.c.l.b16 %v11502
    %v11651 = vunpack.c.h.b16 %v11502
    %v11652 = vunpack.c.l.b16 %v11503
    %v11653 = vunpack.c.h.b16 %v11503
    %v11654 = vunpack.c.l.b16 %v11504
    %v11655 = vunpack.c.h.b16 %v11504
    %v11656 = vunpack.c.l.b16 %v11505
    %v11657 = vunpack.c.h.b16 %v11505
    %v11658 = vunpack.c.l.b16 %v11506
    %v11659 = vunpack.c.h.b16 %v11506
    %v11660 = vunpack.c.l.b16 %v11507
    %v11661 = vunpack.c.h.b16 %v11507
    %v11662 = vunpack.c.l.b16 %v11508
    %v11663 = vunpack.c.h.b16 %v11508
    %v11664 = vunpack.c.l.b16 %v11509
    %v11665 = vunpack.c.h.b16 %v11509
    %v11666 = vunpack.c.l.b16 %v11510
    %v11667 = vunpack.c.h.b16 %v11510
    %v11668 = vunpack.c.l.b16 %v11511
    %v11669 = vunpack.c.h.b16 %v11511
    %v11670 = vunpack.c.l.b16 %v11512
    %v11671 = vunpack.c.h.b16 %v11512
    %v11672 = vunpack.c.l.b16 %v11513
    %v11673 = vunpack.c.h.b16 %v11513
    %v11674 = vunpack.c.l.b16 %v11514
    %v11675 = vunpack.c.h.b16 %v11514
    %v11676 = vunpack.c.l.b16 %v11515
    %v11677 = vunpack.c.h.b16 %v11515
    %v11678 = vunpack.c.l.b16 %v11516
    %v11679 = vunpack.c.h.b16 %v11516
    %v11680 = vunpack.c.l.b16 %v11517
    %v11681 = vunpack.c.h.b16 %v11517
    %v11682 = vunpack.c.l.b16 %v11518
    %v11683 = vunpack.c.h.b16 %v11518
    %v11684 = vpack.c.b16 %v11606, %v11604
    %v11685 = vpack.c.b16 %v11607, %v11605
    %v11686 = vpack.c.b16 %v11610, %v11608
    %v11687 = vpack.c.b16 %v11611, %v11609
    %v11688 = vpack.c.b16 %v11614, %v11612
    %v11689 = vpack.c.b16 %v11615, %v11613
    %v11690 = vpack.c.b16 %v11618, %v11616
    %v11691 = vpack.c.b16 %v11619, %v11617
    %v11692 = vpack.c.b16 %v11622, %v11620
    %v11693 = vpack.c.b16 %v11623, %v11621
    %v11694 = vpack.c.b16 %v11626, %v11624
    %v11695 = vpack.c.b16 %v11627, %v11625
    %v11696 = vpack.c.b16 %v11630, %v11628
    %v11697 = vpack.c.b16 %v11631, %v11629
    %v11698 = vpack.c.b16 %v11634, %v11632
    %v11699 = vpack.c.b16 %v11635, %v11633
    %v11700 = vpack.c.b16 %v11638, %v11636
    %v11701 = vpack.c.b16 %v11639, %v11637
    %v11702 = vpack.c.b16 %v11642, %v11640
    %v11703 = vpack.c.b16 %v11643, %v11641
    %v11704 = vpack.c.b16 %v11646, %v11644
    %v11705 = vpack.c.b16 %v11647, %v11645
    %v11706 = vpack.c.b16 %v11650, %v11648
    %v11707 = vpack.c.b16 %v11651, %v11649
    %v11708 = vpack.c.b16 %v11654, %v11652
    %v11709 = vpack.c.b16 %v11655, %v11653
    %v11710 = vpack.c.b16 %v11658, %v11656
    %v11711 = vpack.c.b16 %v11659, %v11657
    %v11712 = vpack.c.b16 %v11662, %v11660
    %v11713 = vpack.c.b16 %v11663, %v11661
    %v11714 = vpack.c.b16 %v11666, %v11664
    %v11715 = vpack.c.b16 %v11667, %v11665
    %v11716 = vpack.c.b16 %v11670, %v11668
    %v11717 = vpack.c.b16 %v11671, %v11669
    %v11718 = vpack.c.b16 %v11674, %v11672
    %v11719 = vpack.c.b16 %v11675, %v11673
    %v11720 = vpack.c.b16 %v11678, %v11676
    %v11721 = vpack.c.b16 %v11679, %v11677
    %v11722 = vpack.c.b16 %v11682, %v11680
    %v11723 = vpack.c.b16 %v11683, %v11681
    %vm11764 = vcmask 523264
    %v11766 = vsel %vm11764, %v11478, 0
    %11768 = vmatpush.bf16.msra.mxu0 %v11698
    %11769 = vmatpush.bf16.msra.mxu0 %v11696
    %11770 = vmatpush.bf16.msra.mxu0 %v11694
    %11771 = vmatpush.bf16.msra.mxu0 %v11692
    %11772 = vmatpush.bf16.msra.mxu0 %v11690
    %11773 = vmatpush.bf16.msra.mxu0 %v11688
    %11774 = vmatpush.bf16.msra.mxu0 %v11686
    %11775 = vmatpush.bf16.msra.mxu0 %v11684
    %11776 = vmatmul.bf16.gmra.mxu0 %v11476
    %v11777 = vpop.f32.mrf.mxu0
    %v11778 = vadd.f32 %v11548, %v11777
    %v11779 = vpop.f32.mrf.mxu0
    %11780 = vdwg.mxu0
    %11781 = vmatpush.bf16.msra.mxu0 %v11714
    %11782 = vmatpush.bf16.msra.mxu0 %v11712
    %11783 = vmatpush.bf16.msra.mxu0 %v11710
    %11784 = vmatpush.bf16.msra.mxu0 %v11708
    %11785 = vmatpush.bf16.msra.mxu0 %v11706
    %11786 = vmatpush.bf16.msra.mxu0 %v11704
    %11787 = vmatpush.bf16.msra.mxu0 %v11702
    %11788 = vmatpush.bf16.msra.mxu0 %v11700
    %11789 = vmatmul.bf16.gmra.mxu0 %v11477
    %v11790 = vpop.f32.mrf.mxu0
    %v11791 = vadd.f32 %v11778, %v11790
    %v11792 = vpop.f32.mrf.mxu0
    %11793 = vdwg.mxu0
    %11794 = vmatpush.bf16.msra.mxu0 0
    %11795 = vmatpush.bf16.msra.mxu0 0
    %11796 = vmatpush.bf16.msra.mxu0 0
    %11797 = vmatpush.bf16.msra.mxu0 0
    %11798 = vmatpush.bf16.msra.mxu0 %v11722
    %11799 = vmatpush.bf16.msra.mxu0 %v11720
    %11800 = vmatpush.bf16.msra.mxu0 %v11718
    %11801 = vmatpush.bf16.msra.mxu0 %v11716
    %11802 = vmatmul.bf16.gmra.mxu0 %v11766
    %v11803 = vpop.f32.mrf.mxu0
    %v11804 = vadd.f32 %v11791, %v11803
    %v11805 = vpop.f32.mrf.mxu0
    %11806 = vdwg.mxu0
    %11807 = vmatpush.bf16.msra.mxu0 %v11699
    %11808 = vmatpush.bf16.msra.mxu0 %v11697
    %11809 = vmatpush.bf16.msra.mxu0 %v11695
    %11810 = vmatpush.bf16.msra.mxu0 %v11693
    %11811 = vmatpush.bf16.msra.mxu0 %v11691
    %11812 = vmatpush.bf16.msra.mxu0 %v11689
    %11813 = vmatpush.bf16.msra.mxu0 %v11687
    %11814 = vmatpush.bf16.msra.mxu0 %v11685
    %11815 = vmatmul.bf16.gmra.mxu0 %v11476
    %v11816 = vpop.f32.mrf.mxu0
    %v11817 = vadd.f32 %v11561, %v11816
    %v11818 = vpop.f32.mrf.mxu0
    %11819 = vdwg.mxu0
    %11820 = vmatpush.bf16.msra.mxu0 %v11715
    %11821 = vmatpush.bf16.msra.mxu0 %v11713
    %11822 = vmatpush.bf16.msra.mxu0 %v11711
    %11823 = vmatpush.bf16.msra.mxu0 %v11709
    %11824 = vmatpush.bf16.msra.mxu0 %v11707
    %11825 = vmatpush.bf16.msra.mxu0 %v11705
    %11826 = vmatpush.bf16.msra.mxu0 %v11703
    %11827 = vmatpush.bf16.msra.mxu0 %v11701
    %11828 = vmatmul.bf16.gmra.mxu0 %v11477
    %v11829 = vpop.f32.mrf.mxu0
    %v11830 = vadd.f32 %v11817, %v11829
    %v11831 = vpop.f32.mrf.mxu0
    %11832 = vdwg.mxu0
    %11833 = vmatpush.bf16.msra.mxu0 0
    %11834 = vmatpush.bf16.msra.mxu0 0
    %11835 = vmatpush.bf16.msra.mxu0 0
    %11836 = vmatpush.bf16.msra.mxu0 0
    %11837 = vmatpush.bf16.msra.mxu0 %v11723
    %11838 = vmatpush.bf16.msra.mxu0 %v11721
    %11839 = vmatpush.bf16.msra.mxu0 %v11719
    %11840 = vmatpush.bf16.msra.mxu0 %v11717
    %11841 = vmatmul.bf16.gmra.mxu0 %v11766
    %v11842 = vpop.f32.mrf.mxu0
    %v11843 = vadd.f32 %v11830, %v11842
    %v11844 = vpop.f32.mrf.mxu0
    %11845 = vdwg.mxu0
    %v11846 = vld [vmem:[%s8] sm:$0x3]
    %v11848 = vperm.slane %v11846, 0
    %v11849 = vperm.slane %v11846, 1
    %v11852 = vadd.f32 %v11804, %v11848
    %v11853 = vadd.f32 %v11843, %v11849
    %v11854 = vmax.f32 %v11852, 0.0
    %v11855 = vmax.f32 %v11853, 0.0
    %v11856 = vpack.c.bf16 %v11854, %v11854
    %v11857 = vpack.c.bf16 %v11855, %v11855
    %v11858 = vld [vmem:[%s9] sm:$0xf]
    %v11859 = vld [vmem:[%s9 + $0x4] sm:$0xf]
    %v11860 = vld [vmem:[%s9 + $0x8] sm:$0xf]
    %v11861 = vld [vmem:[%s9 + $0xc] sm:$0xf]
    %v11862 = vld [vmem:[%s9 + $0x10] sm:$0xf]
    %v11863 = vld [vmem:[%s9 + $0x14] sm:$0xf]
    %v11864 = vld [vmem:[%s9 + $0x18] sm:$0xf]
    %v11865 = vld [vmem:[%s9 + $0x1c] sm:$0xf]
    %v11866 = vld [vmem:[%s9 + $0x20] sm:$0xf]
    %v11867 = vld [vmem:[%s9 + $0x24] sm:$0xf]
    %v11868 = vld [vmem:[%s9 + $0x28] sm:$0xf]
    %v11869 = vld [vmem:[%s9 + $0x2c] sm:$0xf]
    %v11870 = vld [vmem:[%s9 + $0x30] sm:$0xf]
    %v11871 = vld [vmem:[%s9 + $0x34] sm:$0xf]
    %v11872 = vld [vmem:[%s9 + $0x38] sm:$0xf]
    %v11873 = vld [vmem:[%s9 + $0x3c] sm:$0xf]
    %v11874 = vld [vmem:[%s9 + $0x40] sm:$0xf]
    %v11875 = vld [vmem:[%s9 + $0x44] sm:$0xf]
    %v11876 = vld [vmem:[%s9 + $0x48] sm:$0xf]
    %v11877 = vld [vmem:[%s9 + $0x4c] sm:$0xf]
    %v11878 = vld [vmem:[%s9 + $0x50] sm:$0xf]
    %v11879 = vld [vmem:[%s9 + $0x54] sm:$0xf]
    %v11880 = vld [vmem:[%s9 + $0x58] sm:$0xf]
    %v11881 = vld [vmem:[%s9 + $0x5c] sm:$0xf]
    %v11882 = vld [vmem:[%s9 + $0x60] sm:$0xf]
    %v11883 = vld [vmem:[%s10] sm:$0x1]
    %v11885 = vperm.slane %v11883, 0
    %v11912 = vunpack.c.l.b16 %v11858
    %v11913 = vunpack.c.l.b16 %v11859
    %v11914 = vunpack.c.l.b16 %v11860
    %v11915 = vunpack.c.l.b16 %v11861
    %v11916 = vunpack.c.l.b16 %v11862
    %v11917 = vunpack.c.l.b16 %v11863
    %v11918 = vunpack.c.l.b16 %v11864
    %v11919 = vunpack.c.l.b16 %v11865
    %v11920 = vunpack.c.l.b16 %v11866
    %v11921 = vunpack.c.l.b16 %v11867
    %v11922 = vunpack.c.l.b16 %v11868
    %v11923 = vunpack.c.l.b16 %v11869
    %v11924 = vunpack.c.l.b16 %v11870
    %v11925 = vunpack.c.l.b16 %v11871
    %v11926 = vunpack.c.l.b16 %v11872
    %v11927 = vunpack.c.l.b16 %v11873
    %v11928 = vunpack.c.l.b16 %v11874
    %v11929 = vunpack.c.l.b16 %v11875
    %v11930 = vunpack.c.l.b16 %v11876
    %v11931 = vunpack.c.l.b16 %v11877
    %v11932 = vunpack.c.l.b16 %v11878
    %v11933 = vunpack.c.l.b16 %v11879
    %v11934 = vunpack.c.l.b16 %v11880
    %v11935 = vunpack.c.l.b16 %v11881
    %v11936 = vunpack.c.l.b16 %v11882
    %v11937 = vpack.c.b16 %v11913, %v11912
    %v11938 = vpack.c.b16 %v11915, %v11914
    %v11939 = vpack.c.b16 %v11917, %v11916
    %v11940 = vpack.c.b16 %v11919, %v11918
    %v11941 = vpack.c.b16 %v11921, %v11920
    %v11942 = vpack.c.b16 %v11923, %v11922
    %v11943 = vpack.c.b16 %v11925, %v11924
    %v11944 = vpack.c.b16 %v11927, %v11926
    %v11945 = vpack.c.b16 %v11929, %v11928
    %v11946 = vpack.c.b16 %v11931, %v11930
    %v11947 = vpack.c.b16 %v11933, %v11932
    %v11948 = vpack.c.b16 %v11935, %v11934
    %v11949 = vpack.c.b16 %v11936, %v11936
    %v11963 = vsel %vm11465, %v11857, 0
    %v11966 = vsel %vm11531, %v11949, 0
    %11968 = vmatpush.bf16.msra.mxu0 %v11944
    %11969 = vmatpush.bf16.msra.mxu0 %v11943
    %11970 = vmatpush.bf16.msra.mxu0 %v11942
    %11971 = vmatpush.bf16.msra.mxu0 %v11941
    %11972 = vmatpush.bf16.msra.mxu0 %v11940
    %11973 = vmatpush.bf16.msra.mxu0 %v11939
    %11974 = vmatpush.bf16.msra.mxu0 %v11938
    %11975 = vmatpush.bf16.msra.mxu0 %v11937
    %11976 = vmatmul.bf16.gmra.mxu0 %v11856
    %v11977 = vpop.f32.mrf.mxu0
    %v11978 = vadd.f32 %v11885, %v11977
    %v11979 = vpop.f32.mrf.mxu0
    %11980 = vdwg.mxu0
    %11981 = vmatpush.bf16.msra.mxu0 0
    %11982 = vmatpush.bf16.msra.mxu0 0
    %11983 = vmatpush.bf16.msra.mxu0 0
    %11984 = vmatpush.bf16.msra.mxu0 %v11966
    %11985 = vmatpush.bf16.msra.mxu0 %v11948
    %11986 = vmatpush.bf16.msra.mxu0 %v11947
    %11987 = vmatpush.bf16.msra.mxu0 %v11946
    %11988 = vmatpush.bf16.msra.mxu0 %v11945
    %11989 = vmatmul.bf16.gmra.mxu0 %v11963
    %v11990 = vpop.f32.mrf.mxu0
    %v11991 = vadd.f32 %v11978, %v11990
    %v11992 = vpop.f32.mrf.mxu0
    %11993 = vdwg.mxu0
    %vm11994 = vcmask 50176
    %11995 = vst.msk [vmem:[#allocation7] sm:$0x3] %vm11994, %v11991
    // Predicated region
    $region46: #{dcnn_forward.1} parent=1 // pred_check
      _
    $region47: #{dcnn_forward.1} parent=1 // pred_check_branch
      %11997 = sbr.rel (0) target = $region49
    $region48: #{dcnn_forward.1} parent=1 // pred_region
      %11999 = vsyncadd [#allocation8], 0
      %s12001 = sshll.u32 [#allocation7], 4
      %s12002 = int_to_ptr.vmem [resolvable:$true] %s12001
      %s12003 = sshll.u32 %s11, 4
      %s12004 = int_to_ptr.hbm [resolvable:$true] %s12003
      %12006 = dma.vmem_to_hbm [thread:$0]  %s12002, 32, %s12004, [#allocation8]
    $region49: #{dcnn_forward.1} parent=1 // pred_fallthru
      _
    // Predicated region
    $region50: #{dcnn_forward.1} parent=1 // pred_check
      _
    $region51: #{dcnn_forward.1} parent=1 // pred_check_branch
      %12008 = sbr.rel (0) target = $region53
    $region52: #{dcnn_forward.1} parent=1 // pred_region
      %12010 = dma.done [#allocation8], 32
    $region53: #{dcnn_forward.1} parent=1 // pred_fallthru
      _
    %12011 = vsyncpa [#allocation8], 1

</llo_original>
